<compile_context>
chip_gen: v7x
topology: tpu7x:2x2x1
jax: 0.10.0
libtpu: 0.0.40
codegen_flags: <defaults>
</compile_context>

<pallas_src>
import functools

import jax
import jax.numpy as jnp
from jax import lax
from jax.experimental import pallas as pl
from jax.experimental.pallas import tpu as pltpu

LEAKY_SLOPE = 0.1
BN_EPS = 1e-5
LANE = 128


def _round_up(x, m):
    return (x + m - 1) // m * m


def _pick_div(total, prefs):
    """Largest preferred tile that divides `total` (total is a multiple of 128)."""
    for t in prefs:
        if t <= total and total % t == 0:
            return t
    return total


def _pick_tm(M):
    """M tile for the 1x1 matmul; keeps >=2 M blocks when possible (v7x megacore)."""
    if M >= 1024:
        return 512
    if M >= 512:
        return 256
    if M >= 256:
        return 128
    if M >= 16:
        return _round_up((M + 1) // 2, 8)
    return _round_up(max(M, 8), 8)


# ---------------------------------------------------------------------------
# 1x1 CBL: tiled matmul + bias + LeakyReLU  (M, N, K grid; f32 accumulator)
# Activations and weights are bf16; accumulation f32 on the MXU.
# ---------------------------------------------------------------------------
def _cbl1x1_kernel(x_ref, w_ref, b_ref, o_ref, acc_ref):
    k = pl.program_id(2)

    @pl.when(k == 0)
    def _():
        acc_ref[...] = jnp.zeros_like(acc_ref)

    acc_ref[...] += jnp.dot(x_ref[...], w_ref[...],
                            preferred_element_type=jnp.float32)

    @pl.when(k == pl.num_programs(2) - 1)
    def _():
        y = acc_ref[...] + b_ref[...]
        o_ref[...] = jnp.where(y >= 0, y, LEAKY_SLOPE * y).astype(o_ref.dtype)


def _cbl_1x1(x2d, w2d, bias, *, tm, out_dtype):
    M, K = x2d.shape
    K2, Nc = w2d.shape
    assert K == K2 and M % tm == 0 and K % LANE == 0 and Nc % LANE == 0
    if M // tm < 2:
        tn = _pick_div(Nc, (256, 128))     # keep some cout tiles for megacore
    else:
        tn = _pick_div(Nc, (512, 256, 128))
    tk = _pick_div(K, (1024, 512, 256, 128))
    return pl.pallas_call(
        _cbl1x1_kernel,
        out_shape=jax.ShapeDtypeStruct((M, Nc), out_dtype),
        grid_spec=pltpu.PrefetchScalarGridSpec(
            num_scalar_prefetch=0,
            grid=(M // tm, Nc // tn, K // tk),
            in_specs=[
                pl.BlockSpec((tm, tk), lambda i, j, k: (i, k)),   # activations (bf16)
                pl.BlockSpec((tk, tn), lambda i, j, k: (k, j)),   # BN-folded weights (bf16)
                pl.BlockSpec((1, tn), lambda i, j, k: (0, j)),    # folded BN bias (f32)
            ],
            out_specs=pl.BlockSpec((tm, tn), lambda i, j, k: (i, j)),
            scratch_shapes=[pltpu.VMEM((tm, tn), jnp.float32)],
        ),
        compiler_params=pltpu.CompilerParams(
            dimension_semantics=("parallel", "parallel", "arbitrary")),
    )(x2d, w2d, bias)


# ---------------------------------------------------------------------------
# 3x3 CBL: in-kernel spatial padding + in-kernel im2col (9 shifted matmuls)
# grid = (batch blocks, cout tiles, cin tiles); nb images share each weight
# fetch; f32 accumulator in VMEM; bias + LeakyReLU epilogue at last k.
# ---------------------------------------------------------------------------
def _make_cbl3x3_kernel(nb, H, W):
    HW = H * W

    def kernel(x_ref, w_ref, b_ref, o_ref, xpad_ref, acc_ref):
        k = pl.program_id(2)
        tk = x_ref.shape[-1]

        @pl.when(k == 0)
        def _():
            # Zero the padded scratch once per output block; only the interior
            # is rewritten below, so the halo stays zero across all k steps.
            xpad_ref[...] = jnp.zeros_like(xpad_ref)
            acc_ref[...] = jnp.zeros_like(acc_ref)

        # In-VMEM spatial padding: copy interior, halo already zero.
        xpad_ref[:, 1:H + 1, 1:W + 1, :] = x_ref[...]

        for n in range(nb):
            for dx in range(3):
                # One dx-shifted, row-flattened operand; dy taps are then
                # contiguous row slices (start dy*W) -> far fewer relayouts.
                shifted = xpad_ref[n, :, dx:dx + W, :].reshape((H + 2) * W, tk)
                for dy in range(3):
                    patch = shifted[dy * W:dy * W + HW, :]
                    acc_ref[n] += jnp.dot(patch, w_ref[dy * 3 + dx],
                                          preferred_element_type=jnp.float32)

        @pl.when(k == pl.num_programs(2) - 1)
        def _():
            y = acc_ref[...] + b_ref[...]
            y = jnp.where(y >= 0, y, LEAKY_SLOPE * y)
            o_ref[...] = y.reshape(nb, H, W, y.shape[-1]).astype(o_ref.dtype)

    return kernel


def _pick_nb(N, H, W, tk, tn):
    """Largest batch block whose activation-side VMEM stays modest (~6 MiB)."""
    budget = 6 * 1024 * 1024
    per_img = ((H + 2) * (W + 2) * tk * 2       # padded scratch (bf16)
               + 2 * H * W * tk * 2             # double-buffered input (bf16)
               + H * W * tn * 4                 # f32 accumulator
               + 2 * H * W * tn * 2)            # double-buffered output (bf16)
    nb = max(1, min(N, budget // max(per_img, 1)))
    while N % nb:
        nb -= 1
    return nb


def _cbl_3x3(x_nhwc, w9, bias, *, out_dtype):
    # x_nhwc: (N, H, W, K) bf16 (channels lane-padded, no spatial pad)
    # w9:     (9, K, Nc) bf16 (BN scale folded), bias: (1, Nc) f32
    N, H, W, K = x_nhwc.shape
    _, K2, Nc = w9.shape
    assert K == K2 and K % LANE == 0 and Nc % LANE == 0
    tn = _pick_div(Nc, (512, 256, 128))
    tk = _pick_div(K, (256, 128))
    nb = _pick_nb(N, H, W, tk, tn)
    HW = H * W
    return pl.pallas_call(
        _make_cbl3x3_kernel(nb, H, W),
        out_shape=jax.ShapeDtypeStruct((N, H, W, Nc), out_dtype),
        grid_spec=pltpu.PrefetchScalarGridSpec(
            num_scalar_prefetch=0,
            grid=(N // nb, Nc // tn, K // tk),
            in_specs=[
                pl.BlockSpec((nb, H, W, tk), lambda b, j, k: (b, 0, 0, k)),
                pl.BlockSpec((9, tk, tn), lambda b, j, k: (0, k, j)),
                pl.BlockSpec((1, tn), lambda b, j, k: (0, j)),
            ],
            out_specs=pl.BlockSpec((nb, H, W, tn), lambda b, j, k: (b, 0, 0, j)),
            scratch_shapes=[
                pltpu.VMEM((nb, H + 2, W + 2, tk), jnp.bfloat16),  # padded tile
                pltpu.VMEM((nb, HW, tn), jnp.float32),             # accumulator
            ],
        ),
        compiler_params=pltpu.CompilerParams(
            dimension_semantics=("parallel", "parallel", "arbitrary")),
    )(x_nhwc, w9, bias)


# ---------------------------------------------------------------------------
# Weight preparation (outside jit): fold BN, pad channels to 128, cast bf16.
# ---------------------------------------------------------------------------
def _prepare_cbl(params):
    w, gamma, beta, rmean, rvar = params
    kh, kw, cin, cout = w.shape
    scale = gamma / jnp.sqrt(rvar + BN_EPS)
    bias = beta - rmean * scale
    cin_pad = _round_up(cin, LANE)
    cout_pad = _round_up(cout, LANE)
    w_fold = w * scale                                        # fold BN scale
    w_pad = jnp.zeros((kh, kw, cin_pad, cout_pad), jnp.float32)
    w_pad = w_pad.at[:, :, :cin, :cout].set(w_fold)
    b_pad = jnp.zeros((1, cout_pad), jnp.float32).at[0, :cout].set(bias)
    if kh == 1:
        w_prep = w_pad.reshape(cin_pad, cout_pad).astype(jnp.bfloat16)
    else:
        w_prep = w_pad.reshape(9, cin_pad, cout_pad).astype(jnp.bfloat16)
    return (w_prep, b_pad)


def prepare_yolo_block(params):
    conv, predict = params
    return ([_prepare_cbl(p) for p in conv], [_prepare_cbl(p) for p in predict])


def _apply_cbl(x_nhwc, w_prep, bias, *, out_dtype):
    if w_prep.ndim == 2:                      # 1x1 conv
        n, h, wd, c = x_nhwc.shape
        M = n * h * wd
        tm = _pick_tm(M)
        M_pad = _round_up(M, tm)
        x2d = x_nhwc.reshape(M, c)
        if M_pad != M:                        # rare; only for odd spatial sizes
            x2d = jnp.pad(x2d, ((0, M_pad - M), (0, 0)))
        y2d = _cbl_1x1(x2d, w_prep, bias, tm=tm, out_dtype=out_dtype)
        return y2d[:M].reshape(n, h, wd, w_prep.shape[1])
    return _cbl_3x3(x_nhwc, w_prep, bias, out_dtype=out_dtype)


# ---------------------------------------------------------------------------
# Parameter construction (matches nn.Module __init__ shapes)
# ---------------------------------------------------------------------------
def init_cbl(key, cin, cout, k):
    kw_, kg, kb, km, kv = jax.random.split(key, 5)
    w = jax.random.normal(kw_, (k, k, cin, cout), jnp.float32) \
        * (2.0 / (k * k * cin)) ** 0.5                        # HWIO
    gamma = 1.0 + 0.1 * jax.random.normal(kg, (cout,), jnp.float32)
    beta = 0.1 * jax.random.normal(kb, (cout,), jnp.float32)
    rmean = 0.1 * jax.random.normal(km, (cout,), jnp.float32)
    rvar = 0.9 + 0.1 * jnp.abs(jax.random.normal(kv, (cout,), jnp.float32))
    return (w, gamma, beta, rmean, rvar)


def init_yolo_block(key, in_ch, out_ch, classes_num):
    ks = jax.random.split(key, 7)
    conv = [
        init_cbl(ks[0], in_ch, out_ch, 1),
        init_cbl(ks[1], out_ch, in_ch, 3),
        init_cbl(ks[2], in_ch, out_ch, 1),
        init_cbl(ks[3], out_ch, in_ch, 3),
        init_cbl(ks[4], in_ch, out_ch, 1),
    ]
    predict = [
        init_cbl(ks[5], out_ch, in_ch, 3),
        init_cbl(ks[6], in_ch, 3 * (5 + classes_num), 1),
    ]
    return (conv, predict)


# ---------------------------------------------------------------------------
# Forward: NCHW f32 in -> NHWC bf16 chain of 7 fused CBL kernels -> NCHW out.
# trunk_c / pred_c (true unpadded channel counts) are static (closed over).
# ---------------------------------------------------------------------------
def yolo_block_forward(x_nchw, prepared, *, trunk_c, pred_c, need_branch=True):
    conv_p, pred_p = prepared
    x = jnp.transpose(x_nchw, (0, 2, 3, 1)).astype(jnp.float32)   # NCHW -> NHWC
    c_in = x.shape[-1]
    x = jnp.pad(x, ((0, 0), (0, 0), (0, 0), (0, _round_up(c_in, LANE) - c_in)))
    x = x.astype(jnp.bfloat16)                # bf16 activation storage

    for wp, bp in conv_p:
        x = _apply_cbl(x, wp, bp, out_dtype=jnp.bfloat16)
    xp = x
    for idx, (wp, bp) in enumerate(pred_p):
        last = idx == len(pred_p) - 1
        xp = _apply_cbl(xp, wp, bp,
                        out_dtype=jnp.float32 if last else jnp.bfloat16)

    x_out = jnp.transpose(x[..., :trunk_c].astype(jnp.float32), (0, 3, 1, 2))
    xp_out = jnp.transpose(xp[..., :pred_c], (0, 3, 1, 2))
    if need_branch:
        return (x_out, xp_out)
    return xp_out


# ---------------------------------------------------------------------------
# Pure-JAX reference (lax.conv) mirroring the kernel's bf16 storage/rounding
# ---------------------------------------------------------------------------
def _ref_cbl(x_nhwc, params, *, round_out):
    w, gamma, beta, rmean, rvar = params
    scale = gamma / jnp.sqrt(rvar + BN_EPS)
    bias = beta - rmean * scale
    w_f = (w * scale).astype(jnp.bfloat16).astype(jnp.float32)
    pad = "SAME" if w.shape[0] == 3 else "VALID"
    y = lax.conv_general_dilated(
        x_nhwc, w_f, window_strides=(1, 1), padding=pad,
        dimension_numbers=("NHWC", "HWIO", "NHWC"))
    y = y + bias
    y = jnp.where(y >= 0, y, LEAKY_SLOPE * y)
    if round_out:
        y = y.astype(jnp.bfloat16).astype(jnp.float32)
    return y


def _ref_forward(x_nchw, params):
    conv, predict = params
    x = jnp.transpose(x_nchw, (0, 2, 3, 1))
    x = x.astype(jnp.bfloat16).astype(jnp.float32)
    for p in conv:
        x = _ref_cbl(x, p, round_out=True)
    xp = x
    for i, p in enumerate(predict):
        xp = _ref_cbl(xp, p, round_out=(i < len(predict) - 1))
    return jnp.transpose(x, (0, 3, 1, 2)), jnp.transpose(xp, (0, 3, 1, 2))


if __name__ == "__main__":
    key = jax.random.PRNGKey(0)
    kx, kp = jax.random.split(key)

    N, IN_CH, H, W = 2, 8, 16, 16
    OUT_CH = 4
    CLASSES = 2

    x = jax.random.normal(kx, (N, IN_CH, H, W), jnp.float32)
    params = init_yolo_block(kp, IN_CH, OUT_CH, CLASSES)

    # Weight prep (BN fold, pad, bf16 cast) happens once, outside the jit.
    prepared = prepare_yolo_block(params)

    fwd = jax.jit(functools.partial(
        yolo_block_forward,
        trunk_c=OUT_CH, pred_c=3 * (5 + CLASSES), need_branch=True))
    x_branch, x_predict = fwd(x, prepared)
    jax.block_until_ready((x_branch, x_predict))

    assert x_branch.shape == (N, OUT_CH, H, W)
    assert x_predict.shape == (N, 3 * (5 + CLASSES), H, W)

    ref_branch, ref_predict = _ref_forward(x, params)
    err_b = float(jnp.max(jnp.abs(x_branch - ref_branch)))
    err_p = float(jnp.max(jnp.abs(x_predict - ref_predict)))
    assert jnp.allclose(x_branch, ref_branch, atol=2e-2, rtol=2e-2), err_b
    assert jnp.allclose(x_predict, ref_predict, atol=2e-2, rtol=2e-2), err_p

    print("KERNEL_OK")
</pallas_src>

<mosaic_0001>
module attributes {stable_mosaic.version = 11 : i64} {
  func.func @_cbl1x1_kernel(%arg0: i32, %arg1: i32, %arg2: i32, %arg3: memref<256x128xbf16, #tpu.memory_space<vmem>>, %arg4: memref<128x128xbf16, #tpu.memory_space<vmem>>, %arg5: memref<1x128xf32, #tpu.memory_space<vmem>>, %arg6: memref<256x128xbf16, #tpu.memory_space<vmem>>, %arg7: memref<256x128xf32, #tpu.memory_space<vmem>>) attributes {dimension_semantics = [#tpu.dimension_semantics<parallel>, #tpu.dimension_semantics<parallel>, #tpu.dimension_semantics<arbitrary>], iteration_bounds = array<i64: 2, 1, 1>, scalar_prefetch = 0 : i64, scratch_operands = 1 : i64, tpu.core_type = #tpu.core_type<tc>, window_params = [{transform_indices = @transform_0, window_bounds = array<i64: 256, 128>}, {transform_indices = @transform_1, window_bounds = array<i64: 128, 128>}, {transform_indices = @transform_2, window_bounds = array<i64: 1, 128>}, {transform_indices = @transform_3, window_bounds = array<i64: 256, 128>}]} {
    %c0_i32 = arith.constant 0 : i32
    %0 = arith.cmpi eq, %arg2, %c0_i32 : i32
    %1 = arith.extui %0 : i1 to i32
    %c0_i32_0 = arith.constant 0 : i32
    %2 = arith.cmpi ne, %1, %c0_i32_0 : i32
    scf.if %2 {
      %cst_10 = arith.constant 0.000000e+00 : f32
      %12 = vector.broadcast %cst_10 : f32 to vector<256x128xf32>
      %c0_11 = arith.constant 0 : index
      %c0_12 = arith.constant 0 : index
      %13 = vector.load %arg7[%c0_11, %c0_12] : memref<256x128xf32, #tpu.memory_space<vmem>>, vector<256x128xf32>
      tpu.vector_store %arg7[%c0_11, %c0_12], %12 {strides = array<i32>} : memref<256x128xf32, #tpu.memory_space<vmem>>, vector<256x128xf32>,
    } else {
    }
    %c0 = arith.constant 0 : index
    %c0_1 = arith.constant 0 : index
    %3 = vector.load %arg7[%c0, %c0_1] : memref<256x128xf32, #tpu.memory_space<vmem>>, vector<256x128xf32>
    %c0_2 = arith.constant 0 : index
    %c0_3 = arith.constant 0 : index
    %4 = vector.load %arg3[%c0_2, %c0_3] : memref<256x128xbf16, #tpu.memory_space<vmem>>, vector<256x128xbf16>
    %c0_4 = arith.constant 0 : index
    %c0_5 = arith.constant 0 : index
    %5 = vector.load %arg4[%c0_4, %c0_5] : memref<128x128xbf16, #tpu.memory_space<vmem>>, vector<128x128xbf16>
    %cst = arith.constant dense<0.000000e+00> : vector<256x128xf32>
    %6 = tpu.matmul %4, %5, %cst {dimension_numbers = #tpu.dot_dimension_numbers<[1], [0], [0], [1], [0, 0, 1, 1], [], []>} : vector<256x128xbf16>, vector<128x128xbf16>, vector<256x128xf32> -> vector<256x128xf32>
    %7 = arith.addf %3, %6 : vector<256x128xf32>
    %c0_6 = arith.constant 0 : index
    %c0_7 = arith.constant 0 : index
    %8 = vector.load %arg7[%c0_6, %c0_7] : memref<256x128xf32, #tpu.memory_space<vmem>>, vector<256x128xf32>
    tpu.vector_store %arg7[%c0_6, %c0_7], %7 {strides = array<i32>} : memref<256x128xf32, #tpu.memory_space<vmem>>, vector<256x128xf32>,
    %c0_i32_8 = arith.constant 0 : i32
    %9 = arith.cmpi eq, %arg2, %c0_i32_8 : i32
    %10 = arith.extui %9 : i1 to i32
    %c0_i32_9 = arith.constant 0 : i32
    %11 = arith.cmpi ne, %10, %c0_i32_9 : i32
    scf.if %11 {
      %c0_10 = arith.constant 0 : index
      %c0_11 = arith.constant 0 : index
      %12 = vector.load %arg7[%c0_10, %c0_11] : memref<256x128xf32, #tpu.memory_space<vmem>>, vector<256x128xf32>
      %c0_12 = arith.constant 0 : index
      %c0_13 = arith.constant 0 : index
      %13 = vector.load %arg5[%c0_12, %c0_13] : memref<1x128xf32, #tpu.memory_space<vmem>>, vector<1x128xf32>
      %14 = vector.broadcast %13 : vector<1x128xf32> to vector<256x128xf32>
      %15 = arith.addf %12, %14 : vector<256x128xf32>
      %cst_14 = arith.constant 0.000000e+00 : f32
      %16 = vector.broadcast %cst_14 : f32 to vector<256x128xf32>
      %17 = arith.cmpf oge, %15, %16 : vector<256x128xf32>
      %cst_15 = arith.constant 1.000000e-01 : f32
      %18 = vector.broadcast %cst_15 : f32 to vector<256x128xf32>
      %19 = arith.mulf %18, %15 : vector<256x128xf32>
      %20 = arith.select %17, %15, %19 : vector<256x128xi1>, vector<256x128xf32>
      %21 = arith.truncf %20 : vector<256x128xf32> to vector<256x128xbf16>
      %c0_16 = arith.constant 0 : index
      %c0_17 = arith.constant 0 : index
      %22 = vector.load %arg6[%c0_16, %c0_17] : memref<256x128xbf16, #tpu.memory_space<vmem>>, vector<256x128xbf16>
      tpu.vector_store %arg6[%c0_16, %c0_17], %21 {strides = array<i32>} : memref<256x128xbf16, #tpu.memory_space<vmem>>, vector<256x128xbf16>,
    } else {
    }
    return
  }
  func.func @transform_0(%arg0: i32, %arg1: i32, %arg2: i32) -> (i32, i32) {
    %c0_i32 = arith.constant 0 : i32
    return %arg0, %arg2 : i32, i32
  }
  func.func @transform_1(%arg0: i32, %arg1: i32, %arg2: i32) -> (i32, i32) {
    %c0_i32 = arith.constant 0 : i32
    return %arg2, %arg1 : i32, i32
  }
  func.func @transform_2(%arg0: i32, %arg1: i32, %arg2: i32) -> (i32, i32) {
    %c0_i32 = arith.constant 0 : i32
    %c0_i32_0 = arith.constant 0 : i32
    return %c0_i32, %arg1 : i32, i32
  }
  func.func @transform_3(%arg0: i32, %arg1: i32, %arg2: i32) -> (i32, i32) {
    %c0_i32 = arith.constant 0 : i32
    return %arg0, %arg1 : i32, i32
  }
}

module attributes {stable_mosaic.version = 11 : i64} {
  func.func @kernel(%arg0: i32, %arg1: i32, %arg2: i32, %arg3: memref<2x16x16x128xbf16, #tpu.memory_space<vmem>>, %arg4: memref<9x128x128xbf16, #tpu.memory_space<vmem>>, %arg5: memref<1x128xf32, #tpu.memory_space<vmem>>, %arg6: memref<2x16x16x128xbf16, #tpu.memory_space<vmem>>, %arg7: memref<2x18x18x128xbf16, #tpu.memory_space<vmem>>, %arg8: memref<2x256x128xf32, #tpu.memory_space<vmem>>) attributes {dimension_semantics = [#tpu.dimension_semantics<parallel>, #tpu.dimension_semantics<parallel>, #tpu.dimension_semantics<arbitrary>], iteration_bounds = array<i64: 1, 1, 1>, scalar_prefetch = 0 : i64, scratch_operands = 2 : i64, tpu.core_type = #tpu.core_type<tc>, window_params = [{transform_indices = @transform_0, window_bounds = array<i64: 2, 16, 16, 128>}, {transform_indices = @transform_1, window_bounds = array<i64: 9, 128, 128>}, {transform_indices = @transform_2, window_bounds = array<i64: 1, 128>}, {transform_indices = @transform_3, window_bounds = array<i64: 2, 16, 16, 128>}]} {
    %c0_i32 = arith.constant 0 : i32
    %0 = arith.cmpi eq, %arg2, %c0_i32 : i32
    %1 = arith.extui %0 : i1 to i32
    %c0_i32_0 = arith.constant 0 : i32
    %2 = arith.cmpi ne, %1, %c0_i32_0 : i32
    scf.if %2 {
      %cst_205 = arith.constant 0.000000e+00 : bf16
      %206 = vector.broadcast %cst_205 : bf16 to vector<2x18x18x128xbf16>
      %c0_206 = arith.constant 0 : index
      %c0_207 = arith.constant 0 : index
      %c0_208 = arith.constant 0 : index
      %c0_209 = arith.constant 0 : index
      %207 = vector.load %arg7[%c0_206, %c0_207, %c0_208, %c0_209] : memref<2x18x18x128xbf16, #tpu.memory_space<vmem>>, vector<2x18x18x128xbf16>
      tpu.vector_store %arg7[%c0_206, %c0_207, %c0_208, %c0_209], %206 {strides = array<i32>} : memref<2x18x18x128xbf16, #tpu.memory_space<vmem>>, vector<2x18x18x128xbf16>,
      %cst_210 = arith.constant 0.000000e+00 : f32
      %208 = vector.broadcast %cst_210 : f32 to vector<2x256x128xf32>
      %c0_211 = arith.constant 0 : index
      %c0_212 = arith.constant 0 : index
      %c0_213 = arith.constant 0 : index
      %209 = vector.load %arg8[%c0_211, %c0_212, %c0_213] : memref<2x256x128xf32, #tpu.memory_space<vmem>>, vector<2x256x128xf32>
      tpu.vector_store %arg8[%c0_211, %c0_212, %c0_213], %208 {strides = array<i32>} : memref<2x256x128xf32, #tpu.memory_space<vmem>>, vector<2x256x128xf32>,
    } else {
    }
    %c0 = arith.constant 0 : index
    %c0_1 = arith.constant 0 : index
    %c0_2 = arith.constant 0 : index
    %c0_3 = arith.constant 0 : index
    %3 = vector.load %arg3[%c0, %c0_1, %c0_2, %c0_3] : memref<2x16x16x128xbf16, #tpu.memory_space<vmem>>, vector<2x16x16x128xbf16>
    %c0_4 = arith.constant 0 : index
    %c1 = arith.constant 1 : index
    %c1_5 = arith.constant 1 : index
    %c0_6 = arith.constant 0 : index
    %4 = vector.load %arg7[%c0_4, %c1, %c1_5, %c0_6] : memref<2x18x18x128xbf16, #tpu.memory_space<vmem>>, vector<2x16x16x128xbf16>
    tpu.vector_store %arg7[%c0_4, %c1, %c1_5, %c0_6], %3 {strides = array<i32>} : memref<2x18x18x128xbf16, #tpu.memory_space<vmem>>, vector<2x16x16x128xbf16>,
    %c0_7 = arith.constant 0 : index
    %c0_8 = arith.constant 0 : index
    %c0_9 = arith.constant 0 : index
    %c0_10 = arith.constant 0 : index
    %5 = vector.load %arg7[%c0_7, %c0_8, %c0_9, %c0_10] : memref<2x18x18x128xbf16, #tpu.memory_space<vmem>>, vector<1x18x16x128xbf16>
    %6 = vector.shape_cast %5 : vector<1x18x16x128xbf16> to vector<18x16x128xbf16>
    %7 = vector.shape_cast %6 : vector<18x16x128xbf16> to vector<288x128xbf16>
    %8 = vector.extract_strided_slice %7 {offsets = [0, 0], sizes = [256, 128], strides = [1, 1]} : vector<288x128xbf16> to vector<256x128xbf16>
    %c0_11 = arith.constant 0 : index
    %c0_12 = arith.constant 0 : index
    %c0_13 = arith.constant 0 : index
    %9 = vector.load %arg8[%c0_11, %c0_12, %c0_13] : memref<2x256x128xf32, #tpu.memory_space<vmem>>, vector<1x256x128xf32>
    %10 = vector.shape_cast %9 : vector<1x256x128xf32> to vector<256x128xf32>
    %c0_14 = arith.constant 0 : index
    %c0_15 = arith.constant 0 : index
    %c0_16 = arith.constant 0 : index
    %11 = vector.load %arg4[%c0_14, %c0_15, %c0_16] : memref<9x128x128xbf16, #tpu.memory_space<vmem>>, vector<1x128x128xbf16>
    %12 = vector.shape_cast %11 : vector<1x128x128xbf16> to vector<128x128xbf16>
    %cst = arith.constant dense<0.000000e+00> : vector<256x128xf32>
    %13 = tpu.matmul %8, %12, %cst {dimension_numbers = #tpu.dot_dimension_numbers<[1], [0], [0], [1], [0, 0, 1, 1], [], []>} : vector<256x128xbf16>, vector<128x128xbf16>, vector<256x128xf32> -> vector<256x128xf32>
    %14 = arith.addf %10, %13 : vector<256x128xf32>
    %c0_17 = arith.constant 0 : index
    %c0_18 = arith.constant 0 : index
    %c0_19 = arith.constant 0 : index
    %15 = vector.load %arg8[%c0_17, %c0_18, %c0_19] : memref<2x256x128xf32, #tpu.memory_space<vmem>>, vector<1x256x128xf32>
    %16 = vector.shape_cast %15 : vector<1x256x128xf32> to vector<256x128xf32>
    %17 = vector.shape_cast %14 : vector<256x128xf32> to vector<1x256x128xf32>
    tpu.vector_store %arg8[%c0_17, %c0_18, %c0_19], %17 {strides = array<i32>} : memref<2x256x128xf32, #tpu.memory_space<vmem>>, vector<1x256x128xf32>,
    %18 = vector.extract_strided_slice %7 {offsets = [16, 0], sizes = [256, 128], strides = [1, 1]} : vector<288x128xbf16> to vector<256x128xbf16>
    %c0_20 = arith.constant 0 : index
    %c0_21 = arith.constant 0 : index
    %c0_22 = arith.constant 0 : index
    %19 = vector.load %arg8[%c0_20, %c0_21, %c0_22] : memref<2x256x128xf32, #tpu.memory_space<vmem>>, vector<1x256x128xf32>
    %20 = vector.shape_cast %19 : vector<1x256x128xf32> to vector<256x128xf32>
    %c3 = arith.constant 3 : index
    %c0_23 = arith.constant 0 : index
    %c0_24 = arith.constant 0 : index
    %21 = vector.load %arg4[%c3, %c0_23, %c0_24] : memref<9x128x128xbf16, #tpu.memory_space<vmem>>, vector<1x128x128xbf16>
    %22 = vector.shape_cast %21 : vector<1x128x128xbf16> to vector<128x128xbf16>
    %cst_25 = arith.constant dense<0.000000e+00> : vector<256x128xf32>
    %23 = tpu.matmul %18, %22, %cst_25 {dimension_numbers = #tpu.dot_dimension_numbers<[1], [0], [0], [1], [0, 0, 1, 1], [], []>} : vector<256x128xbf16>, vector<128x128xbf16>, vector<256x128xf32> -> vector<256x128xf32>
    %24 = arith.addf %20, %23 : vector<256x128xf32>
    %c0_26 = arith.constant 0 : index
    %c0_27 = arith.constant 0 : index
    %c0_28 = arith.constant 0 : index
    %25 = vector.load %arg8[%c0_26, %c0_27, %c0_28] : memref<2x256x128xf32, #tpu.memory_space<vmem>>, vector<1x256x128xf32>
    %26 = vector.shape_cast %25 : vector<1x256x128xf32> to vector<256x128xf32>
    %27 = vector.shape_cast %24 : vector<256x128xf32> to vector<1x256x128xf32>
    tpu.vector_store %arg8[%c0_26, %c0_27, %c0_28], %27 {strides = array<i32>} : memref<2x256x128xf32, #tpu.memory_space<vmem>>, vector<1x256x128xf32>,
    %28 = vector.extract_strided_slice %7 {offsets = [32, 0], sizes = [256, 128], strides = [1, 1]} : vector<288x128xbf16> to vector<256x128xbf16>
    %c0_29 = arith.constant 0 : index
    %c0_30 = arith.constant 0 : index
    %c0_31 = arith.constant 0 : index
    %29 = vector.load %arg8[%c0_29, %c0_30, %c0_31] : memref<2x256x128xf32, #tpu.memory_space<vmem>>, vector<1x256x128xf32>
    %30 = vector.shape_cast %29 : vector<1x256x128xf32> to vector<256x128xf32>
    %c6 = arith.constant 6 : index
    %c0_32 = arith.constant 0 : index
    %c0_33 = arith.constant 0 : index
    %31 = vector.load %arg4[%c6, %c0_32, %c0_33] : memref<9x128x128xbf16, #tpu.memory_space<vmem>>, vector<1x128x128xbf16>
    %32 = vector.shape_cast %31 : vector<1x128x128xbf16> to vector<128x128xbf16>
    %cst_34 = arith.constant dense<0.000000e+00> : vector<256x128xf32>
    %33 = tpu.matmul %28, %32, %cst_34 {dimension_numbers = #tpu.dot_dimension_numbers<[1], [0], [0], [1], [0, 0, 1, 1], [], []>} : vector<256x128xbf16>, vector<128x128xbf16>, vector<256x128xf32> -> vector<256x128xf32>
    %34 = arith.addf %30, %33 : vector<256x128xf32>
    %c0_35 = arith.constant 0 : index
    %c0_36 = arith.constant 0 : index
    %c0_37 = arith.constant 0 : index
    %35 = vector.load %arg8[%c0_35, %c0_36, %c0_37] : memref<2x256x128xf32, #tpu.memory_space<vmem>>, vector<1x256x128xf32>
    %36 = vector.shape_cast %35 : vector<1x256x128xf32> to vector<256x128xf32>
    %37 = vector.shape_cast %34 : vector<256x128xf32> to vector<1x256x128xf32>
    tpu.vector_store %arg8[%c0_35, %c0_36, %c0_37], %37 {strides = array<i32>} : memref<2x256x128xf32, #tpu.memory_space<vmem>>, vector<1x256x128xf32>,
    %c0_38 = arith.constant 0 : index
    %c0_39 = arith.constant 0 : index
    %c1_40 = arith.constant 1 : index
    %c0_41 = arith.constant 0 : index
    %38 = vector.load %arg7[%c0_38, %c0_39, %c1_40, %c0_41] : memref<2x18x18x128xbf16, #tpu.memory_space<vmem>>, vector<1x18x16x128xbf16>
    %39 = vector.shape_cast %38 : vector<1x18x16x128xbf16> to vector<18x16x128xbf16>
    %40 = vector.shape_cast %39 : vector<18x16x128xbf16> to vector<288x128xbf16>
    %41 = vector.extract_strided_slice %40 {offsets = [0, 0], sizes = [256, 128], strides = [1, 1]} : vector<288x128xbf16> to vector<256x128xbf16>
    %c0_42 = arith.constant 0 : index
    %c0_43 = arith.constant 0 : index
    %c0_44 = arith.constant 0 : index
    %42 = vector.load %arg8[%c0_42, %c0_43, %c0_44] : memref<2x256x128xf32, #tpu.memory_space<vmem>>, vector<1x256x128xf32>
    %43 = vector.shape_cast %42 : vector<1x256x128xf32> to vector<256x128xf32>
    %c1_45 = arith.constant 1 : index
    %c0_46 = arith.constant 0 : index
    %c0_47 = arith.constant 0 : index
    %44 = vector.load %arg4[%c1_45, %c0_46, %c0_47] : memref<9x128x128xbf16, #tpu.memory_space<vmem>>, vector<1x128x128xbf16>
    %45 = vector.shape_cast %44 : vector<1x128x128xbf16> to vector<128x128xbf16>
    %cst_48 = arith.constant dense<0.000000e+00> : vector<256x128xf32>
    %46 = tpu.matmul %41, %45, %cst_48 {dimension_numbers = #tpu.dot_dimension_numbers<[1], [0], [0], [1], [0, 0, 1, 1], [], []>} : vector<256x128xbf16>, vector<128x128xbf16>, vector<256x128xf32> -> vector<256x128xf32>
    %47 = arith.addf %43, %46 : vector<256x128xf32>
    %c0_49 = arith.constant 0 : index
    %c0_50 = arith.constant 0 : index
    %c0_51 = arith.constant 0 : index
    %48 = vector.load %arg8[%c0_49, %c0_50, %c0_51] : memref<2x256x128xf32, #tpu.memory_space<vmem>>, vector<1x256x128xf32>
    %49 = vector.shape_cast %48 : vector<1x256x128xf32> to vector<256x128xf32>
    %50 = vector.shape_cast %47 : vector<256x128xf32> to vector<1x256x128xf32>
    tpu.vector_store %arg8[%c0_49, %c0_50, %c0_51], %50 {strides = array<i32>} : memref<2x256x128xf32, #tpu.memory_space<vmem>>, vector<1x256x128xf32>,
    %51 = vector.extract_strided_slice %40 {offsets = [16, 0], sizes = [256, 128], strides = [1, 1]} : vector<288x128xbf16> to vector<256x128xbf16>
    %c0_52 = arith.constant 0 : index
    %c0_53 = arith.constant 0 : index
    %c0_54 = arith.constant 0 : index
    %52 = vector.load %arg8[%c0_52, %c0_53, %c0_54] : memref<2x256x128xf32, #tpu.memory_space<vmem>>, vector<1x256x128xf32>
    %53 = vector.shape_cast %52 : vector<1x256x128xf32> to vector<256x128xf32>
    %c4 = arith.constant 4 : index
    %c0_55 = arith.constant 0 : index
    %c0_56 = arith.constant 0 : index
    %54 = vector.load %arg4[%c4, %c0_55, %c0_56] : memref<9x128x128xbf16, #tpu.memory_space<vmem>>, vector<1x128x128xbf16>
    %55 = vector.shape_cast %54 : vector<1x128x128xbf16> to vector<128x128xbf16>
    %cst_57 = arith.constant dense<0.000000e+00> : vector<256x128xf32>
    %56 = tpu.matmul %51, %55, %cst_57 {dimension_numbers = #tpu.dot_dimension_numbers<[1], [0], [0], [1], [0, 0, 1, 1], [], []>} : vector<256x128xbf16>, vector<128x128xbf16>, vector<256x128xf32> -> vector<256x128xf32>
    %57 = arith.addf %53, %56 : vector<256x128xf32>
    %c0_58 = arith.constant 0 : index
    %c0_59 = arith.constant 0 : index
    %c0_60 = arith.constant 0 : index
    %58 = vector.load %arg8[%c0_58, %c0_59, %c0_60] : memref<2x256x128xf32, #tpu.memory_space<vmem>>, vector<1x256x128xf32>
    %59 = vector.shape_cast %58 : vector<1x256x128xf32> to vector<256x128xf32>
    %60 = vector.shape_cast %57 : vector<256x128xf32> to vector<1x256x128xf32>
    tpu.vector_store %arg8[%c0_58, %c0_59, %c0_60], %60 {strides = array<i32>} : memref<2x256x128xf32, #tpu.memory_space<vmem>>, vector<1x256x128xf32>,
    %61 = vector.extract_strided_slice %40 {offsets = [32, 0], sizes = [256, 128], strides = [1, 1]} : vector<288x128xbf16> to vector<256x128xbf16>
    %c0_61 = arith.constant 0 : index
    %c0_62 = arith.constant 0 : index
    %c0_63 = arith.constant 0 : index
    %62 = vector.load %arg8[%c0_61, %c0_62, %c0_63] : memref<2x256x128xf32, #tpu.memory_space<vmem>>, vector<1x256x128xf32>
    %63 = vector.shape_cast %62 : vector<1x256x128xf32> to vector<256x128xf32>
    %c7 = arith.constant 7 : index
    %c0_64 = arith.constant 0 : index
    %c0_65 = arith.constant 0 : index
    %64 = vector.load %arg4[%c7, %c0_64, %c0_65] : memref<9x128x128xbf16, #tpu.memory_space<vmem>>, vector<1x128x128xbf16>
    %65 = vector.shape_cast %64 : vector<1x128x128xbf16> to vector<128x128xbf16>
    %cst_66 = arith.constant dense<0.000000e+00> : vector<256x128xf32>
    %66 = tpu.matmul %61, %65, %cst_66 {dimension_numbers = #tpu.dot_dimension_numbers<[1], [0], [0], [1], [0, 0, 1, 1], [], []>} : vector<256x128xbf16>, vector<128x128xbf16>, vector<256x128xf32> -> vector<256x128xf32>
    %67 = arith.addf %63, %66 : vector<256x128xf32>
    %c0_67 = arith.constant 0 : index
    %c0_68 = arith.constant 0 : index
    %c0_69 = arith.constant 0 : index
    %68 = vector.load %arg8[%c0_67, %c0_68, %c0_69] : memref<2x256x128xf32, #tpu.memory_space<vmem>>, vector<1x256x128xf32>
    %69 = vector.shape_cast %68 : vector<1x256x128xf32> to vector<256x128xf32>
    %70 = vector.shape_cast %67 : vector<256x128xf32> to vector<1x256x128xf32>
    tpu.vector_store %arg8[%c0_67, %c0_68, %c0_69], %70 {strides = array<i32>} : memref<2x256x128xf32, #tpu.memory_space<vmem>>, vector<1x256x128xf32>,
    %c0_70 = arith.constant 0 : index
    %c0_71 = arith.constant 0 : index
    %c2 = arith.constant 2 : index
    %c0_72 = arith.constant 0 : index
    %71 = vector.load %arg7[%c0_70, %c0_71, %c2, %c0_72] : memref<2x18x18x128xbf16, #tpu.memory_space<vmem>>, vector<1x18x16x128xbf16>
    %72 = vector.shape_cast %71 : vector<1x18x16x128xbf16> to vector<18x16x128xbf16>
    %73 = vector.shape_cast %72 : vector<18x16x128xbf16> to vector<288x128xbf16>
    %74 = vector.extract_strided_slice %73 {offsets = [0, 0], sizes = [256, 128], strides = [1, 1]} : vector<288x128xbf16> to vector<256x128xbf16>
    %c0_73 = arith.constant 0 : index
    %c0_74 = arith.constant 0 : index
    %c0_75 = arith.constant 0 : index
    %75 = vector.load %arg8[%c0_73, %c0_74, %c0_75] : memref<2x256x128xf32, #tpu.memory_space<vmem>>, vector<1x256x128xf32>
    %76 = vector.shape_cast %75 : vector<1x256x128xf32> to vector<256x128xf32>
    %c2_76 = arith.constant 2 : index
    %c0_77 = arith.constant 0 : index
    %c0_78 = arith.constant 0 : index
    %77 = vector.load %arg4[%c2_76, %c0_77, %c0_78] : memref<9x128x128xbf16, #tpu.memory_space<vmem>>, vector<1x128x128xbf16>
    %78 = vector.shape_cast %77 : vector<1x128x128xbf16> to vector<128x128xbf16>
    %cst_79 = arith.constant dense<0.000000e+00> : vector<256x128xf32>
    %79 = tpu.matmul %74, %78, %cst_79 {dimension_numbers = #tpu.dot_dimension_numbers<[1], [0], [0], [1], [0, 0, 1, 1], [], []>} : vector<256x128xbf16>, vector<128x128xbf16>, vector<256x128xf32> -> vector<256x128xf32>
    %80 = arith.addf %76, %79 : vector<256x128xf32>
    %c0_80 = arith.constant 0 : index
    %c0_81 = arith.constant 0 : index
    %c0_82 = arith.constant 0 : index
    %81 = vector.load %arg8[%c0_80, %c0_81, %c0_82] : memref<2x256x128xf32, #tpu.memory_space<vmem>>, vector<1x256x128xf32>
    %82 = vector.shape_cast %81 : vector<1x256x128xf32> to vector<256x128xf32>
    %83 = vector.shape_cast %80 : vector<256x128xf32> to vector<1x256x128xf32>
    tpu.vector_store %arg8[%c0_80, %c0_81, %c0_82], %83 {strides = array<i32>} : memref<2x256x128xf32, #tpu.memory_space<vmem>>, vector<1x256x128xf32>,
    %84 = vector.extract_strided_slice %73 {offsets = [16, 0], sizes = [256, 128], strides = [1, 1]} : vector<288x128xbf16> to vector<256x128xbf16>
    %c0_83 = arith.constant 0 : index
    %c0_84 = arith.constant 0 : index
    %c0_85 = arith.constant 0 : index
    %85 = vector.load %arg8[%c0_83, %c0_84, %c0_85] : memref<2x256x128xf32, #tpu.memory_space<vmem>>, vector<1x256x128xf32>
    %86 = vector.shape_cast %85 : vector<1x256x128xf32> to vector<256x128xf32>
    %c5 = arith.constant 5 : index
    %c0_86 = arith.constant 0 : index
    %c0_87 = arith.constant 0 : index
    %87 = vector.load %arg4[%c5, %c0_86, %c0_87] : memref<9x128x128xbf16, #tpu.memory_space<vmem>>, vector<1x128x128xbf16>
    %88 = vector.shape_cast %87 : vector<1x128x128xbf16> to vector<128x128xbf16>
    %cst_88 = arith.constant dense<0.000000e+00> : vector<256x128xf32>
    %89 = tpu.matmul %84, %88, %cst_88 {dimension_numbers = #tpu.dot_dimension_numbers<[1], [0], [0], [1], [0, 0, 1, 1], [], []>} : vector<256x128xbf16>, vector<128x128xbf16>, vector<256x128xf32> -> vector<256x128xf32>
    %90 = arith.addf %86, %89 : vector<256x128xf32>
    %c0_89 = arith.constant 0 : index
    %c0_90 = arith.constant 0 : index
    %c0_91 = arith.constant 0 : index
    %91 = vector.load %arg8[%c0_89, %c0_90, %c0_91] : memref<2x256x128xf32, #tpu.memory_space<vmem>>, vector<1x256x128xf32>
    %92 = vector.shape_cast %91 : vector<1x256x128xf32> to vector<256x128xf32>
    %93 = vector.shape_cast %90 : vector<256x128xf32> to vector<1x256x128xf32>
    tpu.vector_store %arg8[%c0_89, %c0_90, %c0_91], %93 {strides = array<i32>} : memref<2x256x128xf32, #tpu.memory_space<vmem>>, vector<1x256x128xf32>,
    %94 = vector.extract_strided_slice %73 {offsets = [32, 0], sizes = [256, 128], strides = [1, 1]} : vector<288x128xbf16> to vector<256x128xbf16>
    %c0_92 = arith.constant 0 : index
    %c0_93 = arith.constant 0 : index
    %c0_94 = arith.constant 0 : index
    %95 = vector.load %arg8[%c0_92, %c0_93, %c0_94] : memref<2x256x128xf32, #tpu.memory_space<vmem>>, vector<1x256x128xf32>
    %96 = vector.shape_cast %95 : vector<1x256x128xf32> to vector<256x128xf32>
    %c8 = arith.constant 8 : index
    %c0_95 = arith.constant 0 : index
    %c0_96 = arith.constant 0 : index
    %97 = vector.load %arg4[%c8, %c0_95, %c0_96] : memref<9x128x128xbf16, #tpu.memory_space<vmem>>, vector<1x128x128xbf16>
    %98 = vector.shape_cast %97 : vector<1x128x128xbf16> to vector<128x128xbf16>
    %cst_97 = arith.constant dense<0.000000e+00> : vector<256x128xf32>
    %99 = tpu.matmul %94, %98, %cst_97 {dimension_numbers = #tpu.dot_dimension_numbers<[1], [0], [0], [1], [0, 0, 1, 1], [], []>} : vector<256x128xbf16>, vector<128x128xbf16>, vector<256x128xf32> -> vector<256x128xf32>
    %100 = arith.addf %96, %99 : vector<256x128xf32>
    %c0_98 = arith.constant 0 : index
    %c0_99 = arith.constant 0 : index
    %c0_100 = arith.constant 0 : index
    %101 = vector.load %arg8[%c0_98, %c0_99, %c0_100] : memref<2x256x128xf32, #tpu.memory_space<vmem>>, vector<1x256x128xf32>
    %102 = vector.shape_cast %101 : vector<1x256x128xf32> to vector<256x128xf32>
    %103 = vector.shape_cast %100 : vector<256x128xf32> to vector<1x256x128xf32>
    tpu.vector_store %arg8[%c0_98, %c0_99, %c0_100], %103 {strides = array<i32>} : memref<2x256x128xf32, #tpu.memory_space<vmem>>, vector<1x256x128xf32>,
    %c1_101 = arith.constant 1 : index
    %c0_102 = arith.constant 0 : index
    %c0_103 = arith.constant 0 : index
    %c0_104 = arith.constant 0 : index
    %104 = vector.load %arg7[%c1_101, %c0_102, %c0_103, %c0_104] : memref<2x18x18x128xbf16, #tpu.memory_space<vmem>>, vector<1x18x16x128xbf16>
    %105 = vector.shape_cast %104 : vector<1x18x16x128xbf16> to vector<18x16x128xbf16>
    %106 = vector.shape_cast %105 : vector<18x16x128xbf16> to vector<288x128xbf16>
    %107 = vector.extract_strided_slice %106 {offsets = [0, 0], sizes = [256, 128], strides = [1, 1]} : vector<288x128xbf16> to vector<256x128xbf16>
    %c1_105 = arith.constant 1 : index
    %c0_106 = arith.constant 0 : index
    %c0_107 = arith.constant 0 : index
    %108 = vector.load %arg8[%c1_105, %c0_106, %c0_107] : memref<2x256x128xf32, #tpu.memory_space<vmem>>, vector<1x256x128xf32>
    %109 = vector.shape_cast %108 : vector<1x256x128xf32> to vector<256x128xf32>
    %c0_108 = arith.constant 0 : index
    %c0_109 = arith.constant 0 : index
    %c0_110 = arith.constant 0 : index
    %110 = vector.load %arg4[%c0_108, %c0_109, %c0_110] : memref<9x128x128xbf16, #tpu.memory_space<vmem>>, vector<1x128x128xbf16>
    %111 = vector.shape_cast %110 : vector<1x128x128xbf16> to vector<128x128xbf16>
    %cst_111 = arith.constant dense<0.000000e+00> : vector<256x128xf32>
    %112 = tpu.matmul %107, %111, %cst_111 {dimension_numbers = #tpu.dot_dimension_numbers<[1], [0], [0], [1], [0, 0, 1, 1], [], []>} : vector<256x128xbf16>, vector<128x128xbf16>, vector<256x128xf32> -> vector<256x128xf32>
    %113 = arith.addf %109, %112 : vector<256x128xf32>
    %c1_112 = arith.constant 1 : index
    %c0_113 = arith.constant 0 : index
    %c0_114 = arith.constant 0 : index
    %114 = vector.load %arg8[%c1_112, %c0_113, %c0_114] : memref<2x256x128xf32, #tpu.memory_space<vmem>>, vector<1x256x128xf32>
    %115 = vector.shape_cast %114 : vector<1x256x128xf32> to vector<256x128xf32>
    %116 = vector.shape_cast %113 : vector<256x128xf32> to vector<1x256x128xf32>
    tpu.vector_store %arg8[%c1_112, %c0_113, %c0_114], %116 {strides = array<i32>} : memref<2x256x128xf32, #tpu.memory_space<vmem>>, vector<1x256x128xf32>,
    %117 = vector.extract_strided_slice %106 {offsets = [16, 0], sizes = [256, 128], strides = [1, 1]} : vector<288x128xbf16> to vector<256x128xbf16>
    %c1_115 = arith.constant 1 : index
    %c0_116 = arith.constant 0 : index
    %c0_117 = arith.constant 0 : index
    %118 = vector.load %arg8[%c1_115, %c0_116, %c0_117] : memref<2x256x128xf32, #tpu.memory_space<vmem>>, vector<1x256x128xf32>
    %119 = vector.shape_cast %118 : vector<1x256x128xf32> to vector<256x128xf32>
    %c3_118 = arith.constant 3 : index
    %c0_119 = arith.constant 0 : index
    %c0_120 = arith.constant 0 : index
    %120 = vector.load %arg4[%c3_118, %c0_119, %c0_120] : memref<9x128x128xbf16, #tpu.memory_space<vmem>>, vector<1x128x128xbf16>
    %121 = vector.shape_cast %120 : vector<1x128x128xbf16> to vector<128x128xbf16>
    %cst_121 = arith.constant dense<0.000000e+00> : vector<256x128xf32>
    %122 = tpu.matmul %117, %121, %cst_121 {dimension_numbers = #tpu.dot_dimension_numbers<[1], [0], [0], [1], [0, 0, 1, 1], [], []>} : vector<256x128xbf16>, vector<128x128xbf16>, vector<256x128xf32> -> vector<256x128xf32>
    %123 = arith.addf %119, %122 : vector<256x128xf32>
    %c1_122 = arith.constant 1 : index
    %c0_123 = arith.constant 0 : index
    %c0_124 = arith.constant 0 : index
    %124 = vector.load %arg8[%c1_122, %c0_123, %c0_124] : memref<2x256x128xf32, #tpu.memory_space<vmem>>, vector<1x256x128xf32>
    %125 = vector.shape_cast %124 : vector<1x256x128xf32> to vector<256x128xf32>
    %126 = vector.shape_cast %123 : vector<256x128xf32> to vector<1x256x128xf32>
    tpu.vector_store %arg8[%c1_122, %c0_123, %c0_124], %126 {strides = array<i32>} : memref<2x256x128xf32, #tpu.memory_space<vmem>>, vector<1x256x128xf32>,
    %127 = vector.extract_strided_slice %106 {offsets = [32, 0], sizes = [256, 128], strides = [1, 1]} : vector<288x128xbf16> to vector<256x128xbf16>
    %c1_125 = arith.constant 1 : index
    %c0_126 = arith.constant 0 : index
    %c0_127 = arith.constant 0 : index
    %128 = vector.load %arg8[%c1_125, %c0_126, %c0_127] : memref<2x256x128xf32, #tpu.memory_space<vmem>>, vector<1x256x128xf32>
    %129 = vector.shape_cast %128 : vector<1x256x128xf32> to vector<256x128xf32>
    %c6_128 = arith.constant 6 : index
    %c0_129 = arith.constant 0 : index
    %c0_130 = arith.constant 0 : index
    %130 = vector.load %arg4[%c6_128, %c0_129, %c0_130] : memref<9x128x128xbf16, #tpu.memory_space<vmem>>, vector<1x128x128xbf16>
    %131 = vector.shape_cast %130 : vector<1x128x128xbf16> to vector<128x128xbf16>
    %cst_131 = arith.constant dense<0.000000e+00> : vector<256x128xf32>
    %132 = tpu.matmul %127, %131, %cst_131 {dimension_numbers = #tpu.dot_dimension_numbers<[1], [0], [0], [1], [0, 0, 1, 1], [], []>} : vector<256x128xbf16>, vector<128x128xbf16>, vector<256x128xf32> -> vector<256x128xf32>
    %133 = arith.addf %129, %132 : vector<256x128xf32>
    %c1_132 = arith.constant 1 : index
    %c0_133 = arith.constant 0 : index
    %c0_134 = arith.constant 0 : index
    %134 = vector.load %arg8[%c1_132, %c0_133, %c0_134] : memref<2x256x128xf32, #tpu.memory_space<vmem>>, vector<1x256x128xf32>
    %135 = vector.shape_cast %134 : vector<1x256x128xf32> to vector<256x128xf32>
    %136 = vector.shape_cast %133 : vector<256x128xf32> to vector<1x256x128xf32>
    tpu.vector_store %arg8[%c1_132, %c0_133, %c0_134], %136 {strides = array<i32>} : memref<2x256x128xf32, #tpu.memory_space<vmem>>, vector<1x256x128xf32>,
    %c1_135 = arith.constant 1 : index
    %c0_136 = arith.constant 0 : index
    %c1_137 = arith.constant 1 : index
    %c0_138 = arith.constant 0 : index
    %137 = vector.load %arg7[%c1_135, %c0_136, %c1_137, %c0_138] : memref<2x18x18x128xbf16, #tpu.memory_space<vmem>>, vector<1x18x16x128xbf16>
    %138 = vector.shape_cast %137 : vector<1x18x16x128xbf16> to vector<18x16x128xbf16>
    %139 = vector.shape_cast %138 : vector<18x16x128xbf16> to vector<288x128xbf16>
    %140 = vector.extract_strided_slice %139 {offsets = [0, 0], sizes = [256, 128], strides = [1, 1]} : vector<288x128xbf16> to vector<256x128xbf16>
    %c1_139 = arith.constant 1 : index
    %c0_140 = arith.constant 0 : index
    %c0_141 = arith.constant 0 : index
    %141 = vector.load %arg8[%c1_139, %c0_140, %c0_141] : memref<2x256x128xf32, #tpu.memory_space<vmem>>, vector<1x256x128xf32>
    %142 = vector.shape_cast %141 : vector<1x256x128xf32> to vector<256x128xf32>
    %c1_142 = arith.constant 1 : index
    %c0_143 = arith.constant 0 : index
    %c0_144 = arith.constant 0 : index
    %143 = vector.load %arg4[%c1_142, %c0_143, %c0_144] : memref<9x128x128xbf16, #tpu.memory_space<vmem>>, vector<1x128x128xbf16>
    %144 = vector.shape_cast %143 : vector<1x128x128xbf16> to vector<128x128xbf16>
    %cst_145 = arith.constant dense<0.000000e+00> : vector<256x128xf32>
    %145 = tpu.matmul %140, %144, %cst_145 {dimension_numbers = #tpu.dot_dimension_numbers<[1], [0], [0], [1], [0, 0, 1, 1], [], []>} : vector<256x128xbf16>, vector<128x128xbf16>, vector<256x128xf32> -> vector<256x128xf32>
    %146 = arith.addf %142, %145 : vector<256x128xf32>
    %c1_146 = arith.constant 1 : index
    %c0_147 = arith.constant 0 : index
    %c0_148 = arith.constant 0 : index
    %147 = vector.load %arg8[%c1_146, %c0_147, %c0_148] : memref<2x256x128xf32, #tpu.memory_space<vmem>>, vector<1x256x128xf32>
    %148 = vector.shape_cast %147 : vector<1x256x128xf32> to vector<256x128xf32>
    %149 = vector.shape_cast %146 : vector<256x128xf32> to vector<1x256x128xf32>
    tpu.vector_store %arg8[%c1_146, %c0_147, %c0_148], %149 {strides = array<i32>} : memref<2x256x128xf32, #tpu.memory_space<vmem>>, vector<1x256x128xf32>,
    %150 = vector.extract_strided_slice %139 {offsets = [16, 0], sizes = [256, 128], strides = [1, 1]} : vector<288x128xbf16> to vector<256x128xbf16>
    %c1_149 = arith.constant 1 : index
    %c0_150 = arith.constant 0 : index
    %c0_151 = arith.constant 0 : index
    %151 = vector.load %arg8[%c1_149, %c0_150, %c0_151] : memref<2x256x128xf32, #tpu.memory_space<vmem>>, vector<1x256x128xf32>
    %152 = vector.shape_cast %151 : vector<1x256x128xf32> to vector<256x128xf32>
    %c4_152 = arith.constant 4 : index
    %c0_153 = arith.constant 0 : index
    %c0_154 = arith.constant 0 : index
    %153 = vector.load %arg4[%c4_152, %c0_153, %c0_154] : memref<9x128x128xbf16, #tpu.memory_space<vmem>>, vector<1x128x128xbf16>
    %154 = vector.shape_cast %153 : vector<1x128x128xbf16> to vector<128x128xbf16>
    %cst_155 = arith.constant dense<0.000000e+00> : vector<256x128xf32>
    %155 = tpu.matmul %150, %154, %cst_155 {dimension_numbers = #tpu.dot_dimension_numbers<[1], [0], [0], [1], [0, 0, 1, 1], [], []>} : vector<256x128xbf16>, vector<128x128xbf16>, vector<256x128xf32> -> vector<256x128xf32>
    %156 = arith.addf %152, %155 : vector<256x128xf32>
    %c1_156 = arith.constant 1 : index
    %c0_157 = arith.constant 0 : index
    %c0_158 = arith.constant 0 : index
    %157 = vector.load %arg8[%c1_156, %c0_157, %c0_158] : memref<2x256x128xf32, #tpu.memory_space<vmem>>, vector<1x256x128xf32>
    %158 = vector.shape_cast %157 : vector<1x256x128xf32> to vector<256x128xf32>
    %159 = vector.shape_cast %156 : vector<256x128xf32> to vector<1x256x128xf32>
    tpu.vector_store %arg8[%c1_156, %c0_157, %c0_158], %159 {strides = array<i32>} : memref<2x256x128xf32, #tpu.memory_space<vmem>>, vector<1x256x128xf32>,
    %160 = vector.extract_strided_slice %139 {offsets = [32, 0], sizes = [256, 128], strides = [1, 1]} : vector<288x128xbf16> to vector<256x128xbf16>
    %c1_159 = arith.constant 1 : index
    %c0_160 = arith.constant 0 : index
    %c0_161 = arith.constant 0 : index
    %161 = vector.load %arg8[%c1_159, %c0_160, %c0_161] : memref<2x256x128xf32, #tpu.memory_space<vmem>>, vector<1x256x128xf32>
    %162 = vector.shape_cast %161 : vector<1x256x128xf32> to vector<256x128xf32>
    %c7_162 = arith.constant 7 : index
    %c0_163 = arith.constant 0 : index
    %c0_164 = arith.constant 0 : index
    %163 = vector.load %arg4[%c7_162, %c0_163, %c0_164] : memref<9x128x128xbf16, #tpu.memory_space<vmem>>, vector<1x128x128xbf16>
    %164 = vector.shape_cast %163 : vector<1x128x128xbf16> to vector<128x128xbf16>
    %cst_165 = arith.constant dense<0.000000e+00> : vector<256x128xf32>
    %165 = tpu.matmul %160, %164, %cst_165 {dimension_numbers = #tpu.dot_dimension_numbers<[1], [0], [0], [1], [0, 0, 1, 1], [], []>} : vector<256x128xbf16>, vector<128x128xbf16>, vector<256x128xf32> -> vector<256x128xf32>
    %166 = arith.addf %162, %165 : vector<256x128xf32>
    %c1_166 = arith.constant 1 : index
    %c0_167 = arith.constant 0 : index
    %c0_168 = arith.constant 0 : index
    %167 = vector.load %arg8[%c1_166, %c0_167, %c0_168] : memref<2x256x128xf32, #tpu.memory_space<vmem>>, vector<1x256x128xf32>
    %168 = vector.shape_cast %167 : vector<1x256x128xf32> to vector<256x128xf32>
    %169 = vector.shape_cast %166 : vector<256x128xf32> to vector<1x256x128xf32>
    tpu.vector_store %arg8[%c1_166, %c0_167, %c0_168], %169 {strides = array<i32>} : memref<2x256x128xf32, #tpu.memory_space<vmem>>, vector<1x256x128xf32>,
    %c1_169 = arith.constant 1 : index
    %c0_170 = arith.constant 0 : index
    %c2_171 = arith.constant 2 : index
    %c0_172 = arith.constant 0 : index
    %170 = vector.load %arg7[%c1_169, %c0_170, %c2_171, %c0_172] : memref<2x18x18x128xbf16, #tpu.memory_space<vmem>>, vector<1x18x16x128xbf16>
    %171 = vector.shape_cast %170 : vector<1x18x16x128xbf16> to vector<18x16x128xbf16>
    %172 = vector.shape_cast %171 : vector<18x16x128xbf16> to vector<288x128xbf16>
    %173 = vector.extract_strided_slice %172 {offsets = [0, 0], sizes = [256, 128], strides = [1, 1]} : vector<288x128xbf16> to vector<256x128xbf16>
    %c1_173 = arith.constant 1 : index
    %c0_174 = arith.constant 0 : index
    %c0_175 = arith.constant 0 : index
    %174 = vector.load %arg8[%c1_173, %c0_174, %c0_175] : memref<2x256x128xf32, #tpu.memory_space<vmem>>, vector<1x256x128xf32>
    %175 = vector.shape_cast %174 : vector<1x256x128xf32> to vector<256x128xf32>
    %c2_176 = arith.constant 2 : index
    %c0_177 = arith.constant 0 : index
    %c0_178 = arith.constant 0 : index
    %176 = vector.load %arg4[%c2_176, %c0_177, %c0_178] : memref<9x128x128xbf16, #tpu.memory_space<vmem>>, vector<1x128x128xbf16>
    %177 = vector.shape_cast %176 : vector<1x128x128xbf16> to vector<128x128xbf16>
    %cst_179 = arith.constant dense<0.000000e+00> : vector<256x128xf32>
    %178 = tpu.matmul %173, %177, %cst_179 {dimension_numbers = #tpu.dot_dimension_numbers<[1], [0], [0], [1], [0, 0, 1, 1], [], []>} : vector<256x128xbf16>, vector<128x128xbf16>, vector<256x128xf32> -> vector<256x128xf32>
    %179 = arith.addf %175, %178 : vector<256x128xf32>
    %c1_180 = arith.constant 1 : index
    %c0_181 = arith.constant 0 : index
    %c0_182 = arith.constant 0 : index
    %180 = vector.load %arg8[%c1_180, %c0_181, %c0_182] : memref<2x256x128xf32, #tpu.memory_space<vmem>>, vector<1x256x128xf32>
    %181 = vector.shape_cast %180 : vector<1x256x128xf32> to vector<256x128xf32>
    %182 = vector.shape_cast %179 : vector<256x128xf32> to vector<1x256x128xf32>
    tpu.vector_store %arg8[%c1_180, %c0_181, %c0_182], %182 {strides = array<i32>} : memref<2x256x128xf32, #tpu.memory_space<vmem>>, vector<1x256x128xf32>,
    %183 = vector.extract_strided_slice %172 {offsets = [16, 0], sizes = [256, 128], strides = [1, 1]} : vector<288x128xbf16> to vector<256x128xbf16>
    %c1_183 = arith.constant 1 : index
    %c0_184 = arith.constant 0 : index
    %c0_185 = arith.constant 0 : index
    %184 = vector.load %arg8[%c1_183, %c0_184, %c0_185] : memref<2x256x128xf32, #tpu.memory_space<vmem>>, vector<1x256x128xf32>
    %185 = vector.shape_cast %184 : vector<1x256x128xf32> to vector<256x128xf32>
    %c5_186 = arith.constant 5 : index
    %c0_187 = arith.constant 0 : index
    %c0_188 = arith.constant 0 : index
    %186 = vector.load %arg4[%c5_186, %c0_187, %c0_188] : memref<9x128x128xbf16, #tpu.memory_space<vmem>>, vector<1x128x128xbf16>
    %187 = vector.shape_cast %186 : vector<1x128x128xbf16> to vector<128x128xbf16>
    %cst_189 = arith.constant dense<0.000000e+00> : vector<256x128xf32>
    %188 = tpu.matmul %183, %187, %cst_189 {dimension_numbers = #tpu.dot_dimension_numbers<[1], [0], [0], [1], [0, 0, 1, 1], [], []>} : vector<256x128xbf16>, vector<128x128xbf16>, vector<256x128xf32> -> vector<256x128xf32>
    %189 = arith.addf %185, %188 : vector<256x128xf32>
    %c1_190 = arith.constant 1 : index
    %c0_191 = arith.constant 0 : index
    %c0_192 = arith.constant 0 : index
    %190 = vector.load %arg8[%c1_190, %c0_191, %c0_192] : memref<2x256x128xf32, #tpu.memory_space<vmem>>, vector<1x256x128xf32>
    %191 = vector.shape_cast %190 : vector<1x256x128xf32> to vector<256x128xf32>
    %192 = vector.shape_cast %189 : vector<256x128xf32> to vector<1x256x128xf32>
    tpu.vector_store %arg8[%c1_190, %c0_191, %c0_192], %192 {strides = array<i32>} : memref<2x256x128xf32, #tpu.memory_space<vmem>>, vector<1x256x128xf32>,
    %193 = vector.extract_strided_slice %172 {offsets = [32, 0], sizes = [256, 128], strides = [1, 1]} : vector<288x128xbf16> to vector<256x128xbf16>
    %c1_193 = arith.constant 1 : index
    %c0_194 = arith.constant 0 : index
    %c0_195 = arith.constant 0 : index
    %194 = vector.load %arg8[%c1_193, %c0_194, %c0_195] : memref<2x256x128xf32, #tpu.memory_space<vmem>>, vector<1x256x128xf32>
    %195 = vector.shape_cast %194 : vector<1x256x128xf32> to vector<256x128xf32>
    %c8_196 = arith.constant 8 : index
    %c0_197 = arith.constant 0 : index
    %c0_198 = arith.constant 0 : index
    %196 = vector.load %arg4[%c8_196, %c0_197, %c0_198] : memref<9x128x128xbf16, #tpu.memory_space<vmem>>, vector<1x128x128xbf16>
    %197 = vector.shape_cast %196 : vector<1x128x128xbf16> to vector<128x128xbf16>
    %cst_199 = arith.constant dense<0.000000e+00> : vector<256x128xf32>
    %198 = tpu.matmul %193, %197, %cst_199 {dimension_numbers = #tpu.dot_dimension_numbers<[1], [0], [0], [1], [0, 0, 1, 1], [], []>} : vector<256x128xbf16>, vector<128x128xbf16>, vector<256x128xf32> -> vector<256x128xf32>
    %199 = arith.addf %195, %198 : vector<256x128xf32>
    %c1_200 = arith.constant 1 : index
    %c0_201 = arith.constant 0 : index
    %c0_202 = arith.constant 0 : index
    %200 = vector.load %arg8[%c1_200, %c0_201, %c0_202] : memref<2x256x128xf32, #tpu.memory_space<vmem>>, vector<1x256x128xf32>
    %201 = vector.shape_cast %200 : vector<1x256x128xf32> to vector<256x128xf32>
    %202 = vector.shape_cast %199 : vector<256x128xf32> to vector<1x256x128xf32>
    tpu.vector_store %arg8[%c1_200, %c0_201, %c0_202], %202 {strides = array<i32>} : memref<2x256x128xf32, #tpu.memory_space<vmem>>, vector<1x256x128xf32>,
    %c0_i32_203 = arith.constant 0 : i32
    %203 = arith.cmpi eq, %arg2, %c0_i32_203 : i32
    %204 = arith.extui %203 : i1 to i32
    %c0_i32_204 = arith.constant 0 : i32
    %205 = arith.cmpi ne, %204, %c0_i32_204 : i32
    scf.if %205 {
      %c0_205 = arith.constant 0 : index
      %c0_206 = arith.constant 0 : index
      %c0_207 = arith.constant 0 : index
      %206 = vector.load %arg8[%c0_205, %c0_206, %c0_207] : memref<2x256x128xf32, #tpu.memory_space<vmem>>, vector<2x256x128xf32>
      %c0_208 = arith.constant 0 : index
      %c0_209 = arith.constant 0 : index
      %207 = vector.load %arg5[%c0_208, %c0_209] : memref<1x128xf32, #tpu.memory_space<vmem>>, vector<1x128xf32>
      %208 = vector.shape_cast %207 : vector<1x128xf32> to vector<1x1x128xf32>
      %209 = vector.broadcast %208 : vector<1x1x128xf32> to vector<2x256x128xf32>
      %210 = arith.addf %206, %209 : vector<2x256x128xf32>
      %cst_210 = arith.constant 0.000000e+00 : f32
      %211 = vector.broadcast %cst_210 : f32 to vector<2x256x128xf32>
      %212 = arith.cmpf oge, %210, %211 : vector<2x256x128xf32>
      %cst_211 = arith.constant 1.000000e-01 : f32
      %213 = vector.broadcast %cst_211 : f32 to vector<2x256x128xf32>
      %214 = arith.mulf %213, %210 : vector<2x256x128xf32>
      %215 = arith.select %212, %210, %214 : vector<2x256x128xi1>, vector<2x256x128xf32>
      %216 = vector.shape_cast %215 : vector<2x256x128xf32> to vector<2x16x16x128xf32>
      %217 = arith.truncf %216 : vector<2x16x16x128xf32> to vector<2x16x16x128xbf16>
      %c0_212 = arith.constant 0 : index
      %c0_213 = arith.constant 0 : index
      %c0_214 = arith.constant 0 : index
      %c0_215 = arith.constant 0 : index
      %218 = vector.load %arg6[%c0_212, %c0_213, %c0_214, %c0_215] : memref<2x16x16x128xbf16, #tpu.memory_space<vmem>>, vector<2x16x16x128xbf16>
      tpu.vector_store %arg6[%c0_212, %c0_213, %c0_214, %c0_215], %217 {strides = array<i32>} : memref<2x16x16x128xbf16, #tpu.memory_space<vmem>>, vector<2x16x16x128xbf16>,
    } else {
    }
    return
  }
  func.func @transform_0(%arg0: i32, %arg1: i32, %arg2: i32) -> (i32, i32, i32, i32) {
    %c0_i32 = arith.constant 0 : i32
    %c0_i32_0 = arith.constant 0 : i32
    %c0_i32_1 = arith.constant 0 : i32
    return %arg0, %c0_i32, %c0_i32_0, %arg2 : i32, i32, i32, i32
  }
  func.func @transform_1(%arg0: i32, %arg1: i32, %arg2: i32) -> (i32, i32, i32) {
    %c0_i32 = arith.constant 0 : i32
    %c0_i32_0 = arith.constant 0 : i32
    return %c0_i32, %arg2, %arg1 : i32, i32, i32
  }
  func.func @transform_2(%arg0: i32, %arg1: i32, %arg2: i32) -> (i32, i32) {
    %c0_i32 = arith.constant 0 : i32
    %c0_i32_0 = arith.constant 0 : i32
    return %c0_i32, %arg1 : i32, i32
  }
  func.func @transform_3(%arg0: i32, %arg1: i32, %arg2: i32) -> (i32, i32, i32, i32) {
    %c0_i32 = arith.constant 0 : i32
    %c0_i32_0 = arith.constant 0 : i32
    %c0_i32_1 = arith.constant 0 : i32
    return %arg0, %c0_i32, %c0_i32_0, %arg1 : i32, i32, i32, i32
  }
}

module attributes {stable_mosaic.version = 11 : i64} {
  func.func @_cbl1x1_kernel(%arg0: i32, %arg1: i32, %arg2: i32, %arg3: memref<256x128xbf16, #tpu.memory_space<vmem>>, %arg4: memref<128x128xbf16, #tpu.memory_space<vmem>>, %arg5: memref<1x128xf32, #tpu.memory_space<vmem>>, %arg6: memref<256x128xf32, #tpu.memory_space<vmem>>, %arg7: memref<256x128xf32, #tpu.memory_space<vmem>>) attributes {dimension_semantics = [#tpu.dimension_semantics<parallel>, #tpu.dimension_semantics<parallel>, #tpu.dimension_semantics<arbitrary>], iteration_bounds = array<i64: 2, 1, 1>, scalar_prefetch = 0 : i64, scratch_operands = 1 : i64, tpu.core_type = #tpu.core_type<tc>, window_params = [{transform_indices = @transform_0, window_bounds = array<i64: 256, 128>}, {transform_indices = @transform_1, window_bounds = array<i64: 128, 128>}, {transform_indices = @transform_2, window_bounds = array<i64: 1, 128>}, {transform_indices = @transform_3, window_bounds = array<i64: 256, 128>}]} {
    %c0_i32 = arith.constant 0 : i32
    %0 = arith.cmpi eq, %arg2, %c0_i32 : i32
    %1 = arith.extui %0 : i1 to i32
    %c0_i32_0 = arith.constant 0 : i32
    %2 = arith.cmpi ne, %1, %c0_i32_0 : i32
    scf.if %2 {
      %cst_10 = arith.constant 0.000000e+00 : f32
      %12 = vector.broadcast %cst_10 : f32 to vector<256x128xf32>
      %c0_11 = arith.constant 0 : index
      %c0_12 = arith.constant 0 : index
      %13 = vector.load %arg7[%c0_11, %c0_12] : memref<256x128xf32, #tpu.memory_space<vmem>>, vector<256x128xf32>
      tpu.vector_store %arg7[%c0_11, %c0_12], %12 {strides = array<i32>} : memref<256x128xf32, #tpu.memory_space<vmem>>, vector<256x128xf32>,
    } else {
    }
    %c0 = arith.constant 0 : index
    %c0_1 = arith.constant 0 : index
    %3 = vector.load %arg7[%c0, %c0_1] : memref<256x128xf32, #tpu.memory_space<vmem>>, vector<256x128xf32>
    %c0_2 = arith.constant 0 : index
    %c0_3 = arith.constant 0 : index
    %4 = vector.load %arg3[%c0_2, %c0_3] : memref<256x128xbf16, #tpu.memory_space<vmem>>, vector<256x128xbf16>
    %c0_4 = arith.constant 0 : index
    %c0_5 = arith.constant 0 : index
    %5 = vector.load %arg4[%c0_4, %c0_5] : memref<128x128xbf16, #tpu.memory_space<vmem>>, vector<128x128xbf16>
    %cst = arith.constant dense<0.000000e+00> : vector<256x128xf32>
    %6 = tpu.matmul %4, %5, %cst {dimension_numbers = #tpu.dot_dimension_numbers<[1], [0], [0], [1], [0, 0, 1, 1], [], []>} : vector<256x128xbf16>, vector<128x128xbf16>, vector<256x128xf32> -> vector<256x128xf32>
    %7 = arith.addf %3, %6 : vector<256x128xf32>
    %c0_6 = arith.constant 0 : index
    %c0_7 = arith.constant 0 : index
    %8 = vector.load %arg7[%c0_6, %c0_7] : memref<256x128xf32, #tpu.memory_space<vmem>>, vector<256x128xf32>
    tpu.vector_store %arg7[%c0_6, %c0_7], %7 {strides = array<i32>} : memref<256x128xf32, #tpu.memory_space<vmem>>, vector<256x128xf32>,
    %c0_i32_8 = arith.constant 0 : i32
    %9 = arith.cmpi eq, %arg2, %c0_i32_8 : i32
    %10 = arith.extui %9 : i1 to i32
    %c0_i32_9 = arith.constant 0 : i32
    %11 = arith.cmpi ne, %10, %c0_i32_9 : i32
    scf.if %11 {
      %c0_10 = arith.constant 0 : index
      %c0_11 = arith.constant 0 : index
      %12 = vector.load %arg7[%c0_10, %c0_11] : memref<256x128xf32, #tpu.memory_space<vmem>>, vector<256x128xf32>
      %c0_12 = arith.constant 0 : index
      %c0_13 = arith.constant 0 : index
      %13 = vector.load %arg5[%c0_12, %c0_13] : memref<1x128xf32, #tpu.memory_space<vmem>>, vector<1x128xf32>
      %14 = vector.broadcast %13 : vector<1x128xf32> to vector<256x128xf32>
      %15 = arith.addf %12, %14 : vector<256x128xf32>
      %cst_14 = arith.constant 0.000000e+00 : f32
      %16 = vector.broadcast %cst_14 : f32 to vector<256x128xf32>
      %17 = arith.cmpf oge, %15, %16 : vector<256x128xf32>
      %cst_15 = arith.constant 1.000000e-01 : f32
      %18 = vector.broadcast %cst_15 : f32 to vector<256x128xf32>
      %19 = arith.mulf %18, %15 : vector<256x128xf32>
      %20 = arith.select %17, %15, %19 : vector<256x128xi1>, vector<256x128xf32>
      %c0_16 = arith.constant 0 : index
      %c0_17 = arith.constant 0 : index
      %21 = vector.load %arg6[%c0_16, %c0_17] : memref<256x128xf32, #tpu.memory_space<vmem>>, vector<256x128xf32>
      tpu.vector_store %arg6[%c0_16, %c0_17], %20 {strides = array<i32>} : memref<256x128xf32, #tpu.memory_space<vmem>>, vector<256x128xf32>,
    } else {
    }
    return
  }
  func.func @transform_0(%arg0: i32, %arg1: i32, %arg2: i32) -> (i32, i32) {
    %c0_i32 = arith.constant 0 : i32
    return %arg0, %arg2 : i32, i32
  }
  func.func @transform_1(%arg0: i32, %arg1: i32, %arg2: i32) -> (i32, i32) {
    %c0_i32 = arith.constant 0 : i32
    return %arg2, %arg1 : i32, i32
  }
  func.func @transform_2(%arg0: i32, %arg1: i32, %arg2: i32) -> (i32, i32) {
    %c0_i32 = arith.constant 0 : i32
    %c0_i32_0 = arith.constant 0 : i32
    return %c0_i32, %arg1 : i32, i32
  }
  func.func @transform_3(%arg0: i32, %arg1: i32, %arg2: i32) -> (i32, i32) {
    %c0_i32 = arith.constant 0 : i32
    return %arg0, %arg1 : i32, i32
  }
}

</mosaic_0001>

<llo_original>
// kernel: yolo_block_forward.7
$region0: #{yolo_block_forward.7}
  #allocation0 [shape = 'u32[]', space=smem, size = 0x4, offset = 0x4, fixed_abs, tag = 'smem constant byte address 0x4 - core index']
  #allocation1 [shape = 'u32[144,128]{1,0:T(1,128)}', space=vmem, size = 0x12000, scoped, tag = 'internal scratch']
  #allocation2 [shape = 'f32[256,128]{1,0:T(8,128)}', space=vmem, size = 0x20000, scoped, tag = 'scratch operand']
  %s0 = inlined_call_operand.vmem [shape: bf16[512,128], index: 0, kind: input, shape index: {}]
  %s1 = inlined_call_operand.vmem [shape: bf16[128,128], index: 1, kind: input, shape index: {}]
  %s2 = inlined_call_operand.vmem [shape: f32[1,128], index: 2, kind: input, shape index: {}]
  %s3 = inlined_call_operand.vmem [shape: bf16[512,128], index: 3, kind: output, shape index: {}]
  %s4 = sld [smem:[#allocation0]]
  $region53: #{yolo_block_forward.7} parent=0
    _
  %s6 = ssub.s32 1, %s4
  %s7 = scalar_select 0, %s6, %s4
  loop: start=0, step=1, limit=4
  $region2: #{yolo_block_forward.7} parent=0 // loop_pre_header
    _
  $region3: #{yolo_block_forward.7} parent=0 // loop_header
    %s9 = sphi 0, %s13
    %p10 = scmp.ge.s32.totalorder %s9, 4
    %s16 = sphi 0, %s35
    %s17 = sphi 0, %s31
    %s18 = sphi 0, %s27
    %s19 = sphi 0, %s16
    %s20 = sphi 0, %s17
    %s21 = sphi 0, %s18
    %s22 = sphi 0, %s19
    %s23 = sphi 0, %s20
    %s24 = sphi 0, %s21
    %s40 = sphi 0, %s42
    %s43 = sphi 0, %s40
    %s44 = sphi 0, %s43
    %s60 = sphi 0, %s44
    %s68 = sphi 0, %s70
    %s71 = sphi 0, %s68
    %s72 = sphi 0, %s71
    %s88 = sphi 0, %s72
    %s94 = sphi 0, %s96
    %s97 = sphi 0, %s94
    %s98 = sphi 0, %s97
    %s114 = sphi 0, %s98
    %s122 = sphi 0, %s124
    %s125 = sphi 0, %s122
    %s126 = sphi 0, %s125
    %s142 = sphi 0, %s126
  $region4: #{yolo_block_forward.7} parent=0 // loop_header_branch
    %12 = sbr.rel (%p10) target = $region8
  $region5: #{yolo_block_forward.7} parent=0 // loop_body
    %s14 = ssub.s32 %s9, 1
    %s15 = ssub.s32 %s9, 2
    %s25 = sadd.s32 1, %s18
    %p26 = scmp.ge.s32.totalorder %s25, 1
    %s27 = scalar_select %p26, 0, %s25
    %s28 = sadd.s32 1, %s17
    %s29 = scalar_select %p26, %s28, %s17
    %p30 = scmp.ge.s32.totalorder %s29, 1
    %s31 = scalar_select %p30, 0, %s29
    %s32 = sadd.s32 1, %s16
    %s33 = scalar_select %p30, %s32, %s16
    %p34 = scmp.ge.s32.totalorder %s33, 2
    %s35 = scalar_select %p34, 0, %s33
    %s36 = ssub.s32 %s16, %s35
    %s37 = ssub.s32 %s18, %s27
    %s38 = sor.u32 %s36, %s37
    %p39 = scmp.eq.s32.totalorder %s38, 0
    %s41 = sadd.s32 %s40, 1
    %s42 = scalar_select %p39, %s40, %s41
    %p45 = pneg %p39
    %p46 = scmp.eq.s32.totalorder %s9, 1
    %p47 = por %p45, %p46
    %p48 = scmp.ne.s32.totalorder %s40, %s43
    %p49 = scmp.eq.s32.totalorder %s9, 0
    %p50 = por %p48, %p49
    %p51 = scmp.ne.s32.totalorder %s40, %s43
    %p52 = scmp.eq.s32.totalorder %s14, 1
    %p53 = por %p51, %p52
    %p54 = scmp.ne.s32.totalorder %s43, %s44
    %p55 = scmp.eq.s32.totalorder %s14, 0
    %p56 = por %p54, %p55
    %p57 = scmp.ne.s32.totalorder %s43, %s44
    %p58 = scmp.eq.s32.totalorder %s15, 1
    %p59 = por %p57, %p58
    %p61 = scmp.ne.s32.totalorder %s44, %s60
    %p62 = scmp.eq.s32.totalorder %s15, 0
    %p63 = por %p61, %p62
    %s64 = ssub.s32 %s18, %s27
    %s65 = ssub.s32 %s17, %s31
    %s66 = sor.u32 %s64, %s65
    %p67 = scmp.eq.s32.totalorder %s66, 0
    %s69 = sadd.s32 %s68, 1
    %s70 = scalar_select %p67, %s68, %s69
    %p73 = pneg %p67
    %p74 = scmp.eq.s32.totalorder %s9, 1
    %p75 = por %p73, %p74
    %p76 = scmp.ne.s32.totalorder %s68, %s71
    %p77 = scmp.eq.s32.totalorder %s9, 0
    %p78 = por %p76, %p77
    %p79 = scmp.ne.s32.totalorder %s68, %s71
    %p80 = scmp.eq.s32.totalorder %s14, 1
    %p81 = por %p79, %p80
    %p82 = scmp.ne.s32.totalorder %s71, %s72
    %p83 = scmp.eq.s32.totalorder %s14, 0
    %p84 = por %p82, %p83
    %p85 = scmp.ne.s32.totalorder %s71, %s72
    %p86 = scmp.eq.s32.totalorder %s15, 1
    %p87 = por %p85, %p86
    %p89 = scmp.ne.s32.totalorder %s72, %s88
    %p90 = scmp.eq.s32.totalorder %s15, 0
    %p91 = por %p89, %p90
    %s92 = ssub.s32 %s17, %s31
    %p93 = scmp.eq.s32.totalorder %s92, 0
    %s95 = sadd.s32 %s94, 1
    %s96 = scalar_select %p93, %s94, %s95
    %p99 = pneg %p93
    %p100 = scmp.eq.s32.totalorder %s9, 1
    %p101 = por %p99, %p100
    %p102 = scmp.ne.s32.totalorder %s94, %s97
    %p103 = scmp.eq.s32.totalorder %s9, 0
    %p104 = por %p102, %p103
    %p105 = scmp.ne.s32.totalorder %s94, %s97
    %p106 = scmp.eq.s32.totalorder %s14, 1
    %p107 = por %p105, %p106
    %p108 = scmp.ne.s32.totalorder %s97, %s98
    %p109 = scmp.eq.s32.totalorder %s14, 0
    %p110 = por %p108, %p109
    %p111 = scmp.ne.s32.totalorder %s97, %s98
    %p112 = scmp.eq.s32.totalorder %s15, 1
    %p113 = por %p111, %p112
    %p115 = scmp.ne.s32.totalorder %s98, %s114
    %p116 = scmp.eq.s32.totalorder %s15, 0
    %p117 = por %p115, %p116
    %s118 = ssub.s32 %s16, %s35
    %s119 = ssub.s32 %s17, %s31
    %s120 = sor.u32 %s118, %s119
    %p121 = scmp.eq.s32.totalorder %s120, 0
    %s123 = sadd.s32 %s122, 1
    %s124 = scalar_select %p121, %s122, %s123
    %p127 = pneg %p121
    %p128 = scmp.eq.s32.totalorder %s9, 1
    %p129 = por %p127, %p128
    %p130 = scmp.ne.s32.totalorder %s122, %s125
    %p131 = scmp.eq.s32.totalorder %s9, 0
    %p132 = por %p130, %p131
    %p133 = scmp.ne.s32.totalorder %s122, %s125
    %p134 = scmp.eq.s32.totalorder %s14, 1
    %p135 = por %p133, %p134
    %p136 = scmp.ne.s32.totalorder %s125, %s126
    %p137 = scmp.eq.s32.totalorder %s14, 0
    %p138 = por %p136, %p137
    %p139 = scmp.ne.s32.totalorder %s125, %s126
    %p140 = scmp.eq.s32.totalorder %s15, 1
    %p141 = por %p139, %p140
    %p143 = scmp.ne.s32.totalorder %s126, %s142
    %p144 = scmp.eq.s32.totalorder %s15, 0
    %p145 = por %p143, %p144
    %p146 = scmp.le.s32.totalorder 1, %s9
    %p147 = scmp.lt.s32.totalorder %s9, 3
    %p148 = pnand %p146, %p147
    %p149 = pneg %p148
    // Predicated region
    $region9: #{yolo_block_forward.7} parent=5 // pred_check
      _
    $region10: #{yolo_block_forward.7} parent=5 // pred_check_branch
      %151 = sbr.rel (%p148) target = $region12
    $region11: #{yolo_block_forward.7} parent=5 // pred_region
      %s152 = ssub.s32 %s9, 1
      // Predicated region
      $region13: #{yolo_block_forward.7} parent=11 // pred_check
        %p153 = pneg %p84
      $region14: #{yolo_block_forward.7} parent=11 // pred_check_branch
        %155 = sbr.rel (%p153) target = $region16
      $region15: #{yolo_block_forward.7} parent=11 // pred_region
        %s156 = smul.u32 16, %s21
        %p157 = scmp.lt.s32.totalorder %s156, 15
        %s158 = scalar_select %p157, %s156, 15
        %p159 = scmp.lt.s32.totalorder %s20, 0
        %s160 = scalar_select %p159, %s20, 0
        %s161 = sadd.s32 %s160, %s158
        %s162 = smul.addr %s161, 4
        %s163 = scalar_lea.vmem %s1, %s162
        %s164 = smul.u32 16, %s21
      $region16: #{yolo_block_forward.7} parent=11 // pred_fallthru
        _
      // Predicated region
      $region17: #{yolo_block_forward.7} parent=11 // pred_check
        %p165 = pneg %p110
      $region18: #{yolo_block_forward.7} parent=11 // pred_check_branch
        %167 = sbr.rel (%p165) target = $region20
      $region19: #{yolo_block_forward.7} parent=11 // pred_region
        %p168 = scmp.lt.s32.totalorder %s20, 0
        %s169 = scalar_select %p168, %s20, 0
        %s170 = scalar_lea.vmem %s2, %s169
      $region20: #{yolo_block_forward.7} parent=11 // pred_fallthru
        _
    $region12: #{yolo_block_forward.7} parent=5 // pred_fallthru
      _
    %p171 = scmp.lt.s32.totalorder %s9, 2
    // Predicated region
    $region21: #{yolo_block_forward.7} parent=5 // pred_check
      %p172 = pneg %p171
    $region22: #{yolo_block_forward.7} parent=5 // pred_check_branch
      %174 = sbr.rel (%p172) target = $region24
    $region23: #{yolo_block_forward.7} parent=5 // pred_region
      // Predicated region
      $region25: #{yolo_block_forward.7} parent=23 // pred_check
        %p175 = pneg %p50
      $region26: #{yolo_block_forward.7} parent=23 // pred_check_branch
        %177 = sbr.rel (%p175) target = $region28
      $region27: #{yolo_block_forward.7} parent=23 // pred_region
        %s178 = smul.u32 32, %s16
        %p179 = scmp.lt.s32.totalorder %s178, 63
        %s180 = scalar_select %p179, %s178, 63
        %p181 = scmp.lt.s32.totalorder %s18, 0
        %s182 = scalar_select %p181, %s18, 0
        %s183 = sadd.s32 %s182, %s180
        %s184 = smul.addr %s183, 4
        %s185 = scalar_lea.vmem %s0, %s184
        %s186 = smul.u32 32, %s16
      $region28: #{yolo_block_forward.7} parent=23 // pred_fallthru
        _
    $region24: #{yolo_block_forward.7} parent=5 // pred_fallthru
      _
    %p187 = scmp.le.s32.totalorder 1, %s9
    %p188 = scmp.lt.s32.totalorder %s9, 3
    %p189 = pnand %p187, %p188
    %p190 = pneg %p189
    // Predicated region
    $region29: #{yolo_block_forward.7} parent=5 // pred_check
      _
    $region30: #{yolo_block_forward.7} parent=5 // pred_check_branch
      %192 = sbr.rel (%p189) target = $region32
    $region31: #{yolo_block_forward.7} parent=5 // pred_region
      %s193 = ssub.s32 %s9, 1
      %s194 = smul.u32 32, %s19
      %p195 = scmp.lt.s32.totalorder %s194, 63
      %s196 = scalar_select %p195, %s194, 63
      %p197 = scmp.lt.s32.totalorder %s21, 0
      %s198 = scalar_select %p197, %s21, 0
      %s199 = sadd.s32 %s198, %s196
      %s200 = smul.addr %s199, 4
      %s201 = scalar_lea.vmem %s0, %s200
      %p202 = pneg %p56
      %p203 = pneg %p53
      %s204 = smul.u32 16, %s21
      %p205 = scmp.lt.s32.totalorder %s204, 15
      %s206 = scalar_select %p205, %s204, 15
      %p207 = scmp.lt.s32.totalorder %s20, 0
      %s208 = scalar_select %p207, %s20, 0
      %s209 = sadd.s32 %s208, %s206
      %s210 = smul.addr %s209, 4
      %s211 = scalar_lea.vmem %s1, %s210
      %p212 = pneg %p84
      %p213 = pneg %p81
      %p214 = scmp.lt.s32.totalorder %s20, 0
      %s215 = scalar_select %p214, %s20, 0
      %s216 = scalar_lea.vmem %s2, %s215
      %p217 = pneg %p110
      %p218 = pneg %p107
      %p219 = pneg %p138
      %p220 = pneg %p135
      %s221 = smul.u32 32, %s19
      %p222 = scmp.lt.s32.totalorder %s221, 63
      %s223 = scalar_select %p222, %s221, 63
      %p224 = scmp.lt.s32.totalorder %s20, 0
      %s225 = scalar_select %p224, %s20, 0
      %s226 = sadd.s32 %s225, %s223
      %s227 = smul.addr %s226, 4
      %s228 = scalar_lea.vmem %s3, %s227
      %s229 = smul.u32 32, %s19
      %p230 = scmp.lt.s32.totalorder %s229, 63
      %s231 = scalar_select %p230, %s229, 63
      %p232 = scmp.lt.s32.totalorder %s21, 0
      %s233 = scalar_select %p232, %s21, 0
      %s234 = sadd.s32 %s233, %s231
      %s235 = smul.addr %s234, 4
      %s236 = scalar_lea.vmem %s0, %s235
      %s237 = smul.u32 32, %s19
      %s238 = smul.u32 16, %s21
      %p239 = scmp.lt.s32.totalorder %s238, 15
      %s240 = scalar_select %p239, %s238, 15
      %p241 = scmp.lt.s32.totalorder %s20, 0
      %s242 = scalar_select %p241, %s20, 0
      %s243 = sadd.s32 %s242, %s240
      %s244 = smul.addr %s243, 4
      %s245 = scalar_lea.vmem %s1, %s244
      %s246 = smul.u32 16, %s21
      %p247 = scmp.lt.s32.totalorder %s20, 0
      %s248 = scalar_select %p247, %s20, 0
      %s249 = scalar_lea.vmem %s2, %s248
      %s250 = smul.u32 32, %s19
      %p251 = scmp.lt.s32.totalorder %s250, 63
      %s252 = scalar_select %p251, %s250, 63
      %p253 = scmp.lt.s32.totalorder %s20, 0
      %s254 = scalar_select %p253, %s20, 0
      %s255 = sadd.s32 %s254, %s252
      %s256 = smul.addr %s255, 4
      %s257 = scalar_lea.vmem %s3, %s256
      %s258 = smul.u32 32, %s19
      %p260 = scmp.eq.s32.totalorder %s21, 0
      // Predicated region
      $region33: #{yolo_block_forward.7} parent=31 // pred_check
        %p261 = pneg %p260
      $region34: #{yolo_block_forward.7} parent=31 // pred_check_branch
        %263 = sbr.rel (%p261) target = $region36
      $region35: #{yolo_block_forward.7} parent=31 // pred_region
        %264 = vst [vmem:[#allocation2] sm:$0xff] 0.0
        %265 = vst [vmem:[#allocation2 + $0x8] sm:$0xff] 0.0
        %266 = vst [vmem:[#allocation2 + $0x10] sm:$0xff] 0.0
        %267 = vst [vmem:[#allocation2 + $0x18] sm:$0xff] 0.0
        %268 = vst [vmem:[#allocation2 + $0x20] sm:$0xff] 0.0
        %269 = vst [vmem:[#allocation2 + $0x28] sm:$0xff] 0.0
        %270 = vst [vmem:[#allocation2 + $0x30] sm:$0xff] 0.0
        %271 = vst [vmem:[#allocation2 + $0x38] sm:$0xff] 0.0
        %272 = vst [vmem:[#allocation2 + $0x40] sm:$0xff] 0.0
        %273 = vst [vmem:[#allocation2 + $0x48] sm:$0xff] 0.0
        %274 = vst [vmem:[#allocation2 + $0x50] sm:$0xff] 0.0
        %275 = vst [vmem:[#allocation2 + $0x58] sm:$0xff] 0.0
        %276 = vst [vmem:[#allocation2 + $0x60] sm:$0xff] 0.0
        %277 = vst [vmem:[#allocation2 + $0x68] sm:$0xff] 0.0
        %278 = vst [vmem:[#allocation2 + $0x70] sm:$0xff] 0.0
        %279 = vst [vmem:[#allocation2 + $0x78] sm:$0xff] 0.0
        %280 = vst [vmem:[#allocation2 + $0x80] sm:$0xff] 0.0
        %281 = vst [vmem:[#allocation2 + $0x88] sm:$0xff] 0.0
        %282 = vst [vmem:[#allocation2 + $0x90] sm:$0xff] 0.0
        %283 = vst [vmem:[#allocation2 + $0x98] sm:$0xff] 0.0
        %284 = vst [vmem:[#allocation2 + $0xa0] sm:$0xff] 0.0
        %285 = vst [vmem:[#allocation2 + $0xa8] sm:$0xff] 0.0
        %286 = vst [vmem:[#allocation2 + $0xb0] sm:$0xff] 0.0
        %287 = vst [vmem:[#allocation2 + $0xb8] sm:$0xff] 0.0
        %288 = vst [vmem:[#allocation2 + $0xc0] sm:$0xff] 0.0
        %289 = vst [vmem:[#allocation2 + $0xc8] sm:$0xff] 0.0
        %290 = vst [vmem:[#allocation2 + $0xd0] sm:$0xff] 0.0
        %291 = vst [vmem:[#allocation2 + $0xd8] sm:$0xff] 0.0
        %292 = vst [vmem:[#allocation2 + $0xe0] sm:$0xff] 0.0
        %293 = vst [vmem:[#allocation2 + $0xe8] sm:$0xff] 0.0
        %294 = vst [vmem:[#allocation2 + $0xf0] sm:$0xff] 0.0
        %295 = vst [vmem:[#allocation2 + $0xf8] sm:$0xff] 0.0
      $region36: #{yolo_block_forward.7} parent=31 // pred_fallthru
        _
      %v296 = vld [vmem:[#allocation2] sm:$0xff]
      %v297 = vld [vmem:[#allocation2 + $0x8] sm:$0xff]
      %v298 = vld [vmem:[#allocation2 + $0x10] sm:$0xff]
      %v299 = vld [vmem:[#allocation2 + $0x18] sm:$0xff]
      %v300 = vld [vmem:[#allocation2 + $0x20] sm:$0xff]
      %v301 = vld [vmem:[#allocation2 + $0x28] sm:$0xff]
      %v302 = vld [vmem:[#allocation2 + $0x30] sm:$0xff]
      %v303 = vld [vmem:[#allocation2 + $0x38] sm:$0xff]
      %v304 = vld [vmem:[#allocation2 + $0x40] sm:$0xff]
      %v305 = vld [vmem:[#allocation2 + $0x48] sm:$0xff]
      %v306 = vld [vmem:[#allocation2 + $0x50] sm:$0xff]
      %v307 = vld [vmem:[#allocation2 + $0x58] sm:$0xff]
      %v308 = vld [vmem:[#allocation2 + $0x60] sm:$0xff]
      %v309 = vld [vmem:[#allocation2 + $0x68] sm:$0xff]
      %v310 = vld [vmem:[#allocation2 + $0x70] sm:$0xff]
      %v311 = vld [vmem:[#allocation2 + $0x78] sm:$0xff]
      %v312 = vld [vmem:[#allocation2 + $0x80] sm:$0xff]
      %v313 = vld [vmem:[#allocation2 + $0x88] sm:$0xff]
      %v314 = vld [vmem:[#allocation2 + $0x90] sm:$0xff]
      %v315 = vld [vmem:[#allocation2 + $0x98] sm:$0xff]
      %v316 = vld [vmem:[#allocation2 + $0xa0] sm:$0xff]
      %v317 = vld [vmem:[#allocation2 + $0xa8] sm:$0xff]
      %v318 = vld [vmem:[#allocation2 + $0xb0] sm:$0xff]
      %v319 = vld [vmem:[#allocation2 + $0xb8] sm:$0xff]
      %v320 = vld [vmem:[#allocation2 + $0xc0] sm:$0xff]
      %v321 = vld [vmem:[#allocation2 + $0xc8] sm:$0xff]
      %v322 = vld [vmem:[#allocation2 + $0xd0] sm:$0xff]
      %v323 = vld [vmem:[#allocation2 + $0xd8] sm:$0xff]
      %v324 = vld [vmem:[#allocation2 + $0xe0] sm:$0xff]
      %v325 = vld [vmem:[#allocation2 + $0xe8] sm:$0xff]
      %v326 = vld [vmem:[#allocation2 + $0xf0] sm:$0xff]
      %v327 = vld [vmem:[#allocation2 + $0xf8] sm:$0xff]
      %v328 = vld [vmem:[%s236] sm:$0xf]
      %v329 = vld [vmem:[%s236 + $0x4] sm:$0xf]
      %v330 = vld [vmem:[%s236 + $0x8] sm:$0xf]
      %v331 = vld [vmem:[%s236 + $0xc] sm:$0xf]
      %v332 = vld [vmem:[%s236 + $0x10] sm:$0xf]
      %v333 = vld [vmem:[%s236 + $0x14] sm:$0xf]
      %v334 = vld [vmem:[%s236 + $0x18] sm:$0xf]
      %v335 = vld [vmem:[%s236 + $0x1c] sm:$0xf]
      %v336 = vld [vmem:[%s236 + $0x20] sm:$0xf]
      %v337 = vld [vmem:[%s236 + $0x24] sm:$0xf]
      %v338 = vld [vmem:[%s236 + $0x28] sm:$0xf]
      %v339 = vld [vmem:[%s236 + $0x2c] sm:$0xf]
      %v340 = vld [vmem:[%s236 + $0x30] sm:$0xf]
      %v341 = vld [vmem:[%s236 + $0x34] sm:$0xf]
      %v342 = vld [vmem:[%s236 + $0x38] sm:$0xf]
      %v343 = vld [vmem:[%s236 + $0x3c] sm:$0xf]
      %v344 = vld [vmem:[%s236 + $0x40] sm:$0xf]
      %v345 = vld [vmem:[%s236 + $0x44] sm:$0xf]
      %v346 = vld [vmem:[%s236 + $0x48] sm:$0xf]
      %v347 = vld [vmem:[%s236 + $0x4c] sm:$0xf]
      %v348 = vld [vmem:[%s236 + $0x50] sm:$0xf]
      %v349 = vld [vmem:[%s236 + $0x54] sm:$0xf]
      %v350 = vld [vmem:[%s236 + $0x58] sm:$0xf]
      %v351 = vld [vmem:[%s236 + $0x5c] sm:$0xf]
      %v352 = vld [vmem:[%s236 + $0x60] sm:$0xf]
      %v353 = vld [vmem:[%s236 + $0x64] sm:$0xf]
      %v354 = vld [vmem:[%s236 + $0x68] sm:$0xf]
      %v355 = vld [vmem:[%s236 + $0x6c] sm:$0xf]
      %v356 = vld [vmem:[%s236 + $0x70] sm:$0xf]
      %v357 = vld [vmem:[%s236 + $0x74] sm:$0xf]
      %v358 = vld [vmem:[%s236 + $0x78] sm:$0xf]
      %v359 = vld [vmem:[%s236 + $0x7c] sm:$0xf]
      %v360 = vld [vmem:[%s245] sm:$0xf]
      %v361 = vld [vmem:[%s245 + $0x4] sm:$0xf]
      %v362 = vld [vmem:[%s245 + $0x8] sm:$0xf]
      %v363 = vld [vmem:[%s245 + $0xc] sm:$0xf]
      %v364 = vld [vmem:[%s245 + $0x10] sm:$0xf]
      %v365 = vld [vmem:[%s245 + $0x14] sm:$0xf]
      %v366 = vld [vmem:[%s245 + $0x18] sm:$0xf]
      %v367 = vld [vmem:[%s245 + $0x1c] sm:$0xf]
      %v368 = vld [vmem:[%s245 + $0x20] sm:$0xf]
      %v369 = vld [vmem:[%s245 + $0x24] sm:$0xf]
      %v370 = vld [vmem:[%s245 + $0x28] sm:$0xf]
      %v371 = vld [vmem:[%s245 + $0x2c] sm:$0xf]
      %v372 = vld [vmem:[%s245 + $0x30] sm:$0xf]
      %v373 = vld [vmem:[%s245 + $0x34] sm:$0xf]
      %v374 = vld [vmem:[%s245 + $0x38] sm:$0xf]
      %v375 = vld [vmem:[%s245 + $0x3c] sm:$0xf]
      %v408 = vunpack.c.l.b16 %v328
      %v409 = vunpack.c.l.b16 %v329
      %v410 = vunpack.c.l.b16 %v330
      %v411 = vunpack.c.l.b16 %v331
      %v412 = vunpack.c.l.b16 %v332
      %v413 = vunpack.c.l.b16 %v333
      %v414 = vunpack.c.l.b16 %v334
      %v415 = vunpack.c.l.b16 %v335
      %v416 = vunpack.c.l.b16 %v336
      %v417 = vunpack.c.l.b16 %v337
      %v418 = vunpack.c.l.b16 %v338
      %v419 = vunpack.c.l.b16 %v339
      %v420 = vunpack.c.l.b16 %v340
      %v421 = vunpack.c.l.b16 %v341
      %v422 = vunpack.c.l.b16 %v342
      %v423 = vunpack.c.l.b16 %v343
      %v424 = vunpack.c.l.b16 %v344
      %v425 = vunpack.c.l.b16 %v345
      %v426 = vunpack.c.l.b16 %v346
      %v427 = vunpack.c.l.b16 %v347
      %v428 = vunpack.c.l.b16 %v348
      %v429 = vunpack.c.l.b16 %v349
      %v430 = vunpack.c.l.b16 %v350
      %v431 = vunpack.c.l.b16 %v351
      %v432 = vunpack.c.l.b16 %v352
      %v433 = vunpack.c.l.b16 %v353
      %v434 = vunpack.c.l.b16 %v354
      %v435 = vunpack.c.l.b16 %v355
      %v436 = vunpack.c.l.b16 %v356
      %v437 = vunpack.c.l.b16 %v357
      %v438 = vunpack.c.l.b16 %v358
      %v439 = vunpack.c.l.b16 %v359
      %v440 = vpack.c.b16 %v409, %v408
      %v441 = vpack.c.b16 %v411, %v410
      %v442 = vpack.c.b16 %v413, %v412
      %v443 = vpack.c.b16 %v415, %v414
      %v444 = vpack.c.b16 %v417, %v416
      %v445 = vpack.c.b16 %v419, %v418
      %v446 = vpack.c.b16 %v421, %v420
      %v447 = vpack.c.b16 %v423, %v422
      %v448 = vpack.c.b16 %v425, %v424
      %v449 = vpack.c.b16 %v427, %v426
      %v450 = vpack.c.b16 %v429, %v428
      %v451 = vpack.c.b16 %v431, %v430
      %v452 = vpack.c.b16 %v433, %v432
      %v453 = vpack.c.b16 %v435, %v434
      %v454 = vpack.c.b16 %v437, %v436
      %v455 = vpack.c.b16 %v439, %v438
      %v488 = vunpack.c.l.b16 %v360
      %v489 = vunpack.c.l.b16 %v361
      %v490 = vunpack.c.l.b16 %v362
      %v491 = vunpack.c.l.b16 %v363
      %v492 = vunpack.c.l.b16 %v364
      %v493 = vunpack.c.l.b16 %v365
      %v494 = vunpack.c.l.b16 %v366
      %v495 = vunpack.c.l.b16 %v367
      %v496 = vunpack.c.l.b16 %v368
      %v497 = vunpack.c.l.b16 %v369
      %v498 = vunpack.c.l.b16 %v370
      %v499 = vunpack.c.l.b16 %v371
      %v500 = vunpack.c.l.b16 %v372
      %v501 = vunpack.c.l.b16 %v373
      %v502 = vunpack.c.l.b16 %v374
      %v503 = vunpack.c.l.b16 %v375
      %v504 = vpack.c.b16 %v489, %v488
      %v505 = vpack.c.b16 %v491, %v490
      %v506 = vpack.c.b16 %v493, %v492
      %v507 = vpack.c.b16 %v495, %v494
      %v508 = vpack.c.b16 %v497, %v496
      %v509 = vpack.c.b16 %v499, %v498
      %v510 = vpack.c.b16 %v501, %v500
      %v511 = vpack.c.b16 %v503, %v502
      %520 = vmatprep.subr.bf16.mxu0 0
      %521 = vmatpush1.bf16.msra.mxu0 %v504
      %522 = vmatprep.subr.bf16.mxu0 0
      %523 = vmatpush1.bf16.msra.mxu0 %v505
      %524 = vmatprep.subr.bf16.mxu0 0
      %525 = vmatpush1.bf16.msra.mxu0 %v506
      %526 = vmatprep.subr.bf16.mxu0 0
      %527 = vmatpush1.bf16.msra.mxu0 %v507
      %528 = vmatprep.subr.bf16.mxu0 0
      %529 = vmatpush1.bf16.msra.mxu0 %v508
      %530 = vmatprep.subr.bf16.mxu0 0
      %531 = vmatpush1.bf16.msra.mxu0 %v509
      %532 = vmatprep.subr.bf16.mxu0 0
      %533 = vmatpush1.bf16.msra.mxu0 %v510
      %534 = vmatprep.subr.bf16.mxu0 0
      %535 = vmatpush1.bf16.msra.mxu0 %v511
      %536 = vmatprep.subr.bf16.mxu0 0
      %537 = vmatpush1.bf16.msra.mxu0 0
      %538 = vmatprep.subr.bf16.mxu0 0
      %539 = vmatpush1.bf16.msra.mxu0 0
      %540 = vmatprep.subr.bf16.mxu0 0
      %541 = vmatpush1.bf16.msra.mxu0 0
      %542 = vmatprep.subr.bf16.mxu0 0
      %543 = vmatpush1.bf16.msra.mxu0 0
      %544 = vmatprep.subr.bf16.mxu0 0
      %545 = vmatpush1.bf16.msra.mxu0 0
      %546 = vmatprep.subr.bf16.mxu0 0
      %547 = vmatpush1.bf16.msra.mxu0 0
      %548 = vmatprep.subr.bf16.mxu0 0
      %549 = vmatpush1.bf16.msra.mxu0 0
      %550 = vmatprep.subr.bf16.mxu0 0
      %551 = vmatpush1.bf16.msra.mxu0 0
      %552 = vmatprep.mubr.bf16.mxu0 0
      %553 = vmatmul.mubr.bf16.gmra.mrb[0].mxu0 %v440
      %v554 = vpop.f32.mrb[0].mxu0
      %v555 = vadd.f32 0.0, %v554
      %v556 = vpop.f32.mrb[0].mxu0
      %v557 = vpop.f32.mrb[0].mxu0
      %v558 = vadd.f32 0.0, %v557
      %v559 = vpop.f32.mrb[0].mxu0
      %560 = vmatprep.mubr.bf16.mxu0 0
      %561 = vmatmul.mubr.bf16.gmra.mrb[0].mxu0 %v441
      %v562 = vpop.f32.mrb[0].mxu0
      %v563 = vadd.f32 0.0, %v562
      %v564 = vpop.f32.mrb[0].mxu0
      %v565 = vpop.f32.mrb[0].mxu0
      %v566 = vadd.f32 0.0, %v565
      %v567 = vpop.f32.mrb[0].mxu0
      %568 = vmatprep.mubr.bf16.mxu0 0
      %569 = vmatmul.mubr.bf16.gmra.mrb[0].mxu0 %v442
      %v570 = vpop.f32.mrb[0].mxu0
      %v571 = vadd.f32 0.0, %v570
      %v572 = vpop.f32.mrb[0].mxu0
      %v573 = vpop.f32.mrb[0].mxu0
      %v574 = vadd.f32 0.0, %v573
      %v575 = vpop.f32.mrb[0].mxu0
      %576 = vmatprep.mubr.bf16.mxu0 0
      %577 = vmatmul.mubr.bf16.gmra.mrb[0].mxu0 %v443
      %v578 = vpop.f32.mrb[0].mxu0
      %v579 = vadd.f32 0.0, %v578
      %v580 = vpop.f32.mrb[0].mxu0
      %v581 = vpop.f32.mrb[0].mxu0
      %v582 = vadd.f32 0.0, %v581
      %v583 = vpop.f32.mrb[0].mxu0
      %584 = vmatprep.mubr.bf16.mxu0 0
      %585 = vmatmul.mubr.bf16.gmra.mrb[0].mxu0 %v444
      %v586 = vpop.f32.mrb[0].mxu0
      %v587 = vadd.f32 0.0, %v586
      %v588 = vpop.f32.mrb[0].mxu0
      %v589 = vpop.f32.mrb[0].mxu0
      %v590 = vadd.f32 0.0, %v589
      %v591 = vpop.f32.mrb[0].mxu0
      %592 = vmatprep.mubr.bf16.mxu0 0
      %593 = vmatmul.mubr.bf16.gmra.mrb[0].mxu0 %v445
      %v594 = vpop.f32.mrb[0].mxu0
      %v595 = vadd.f32 0.0, %v594
      %v596 = vpop.f32.mrb[0].mxu0
      %v597 = vpop.f32.mrb[0].mxu0
      %v598 = vadd.f32 0.0, %v597
      %v599 = vpop.f32.mrb[0].mxu0
      %600 = vmatprep.mubr.bf16.mxu0 0
      %601 = vmatmul.mubr.bf16.gmra.mrb[0].mxu0 %v446
      %v602 = vpop.f32.mrb[0].mxu0
      %v603 = vadd.f32 0.0, %v602
      %v604 = vpop.f32.mrb[0].mxu0
      %v605 = vpop.f32.mrb[0].mxu0
      %v606 = vadd.f32 0.0, %v605
      %v607 = vpop.f32.mrb[0].mxu0
      %608 = vmatprep.mubr.bf16.mxu0 0
      %609 = vmatmul.mubr.bf16.gmra.mrb[0].mxu0 %v447
      %v610 = vpop.f32.mrb[0].mxu0
      %v611 = vadd.f32 0.0, %v610
      %v612 = vpop.f32.mrb[0].mxu0
      %v613 = vpop.f32.mrb[0].mxu0
      %v614 = vadd.f32 0.0, %v613
      %v615 = vpop.f32.mrb[0].mxu0
      %616 = vmatprep.mubr.bf16.mxu0 0
      %617 = vmatmul.mubr.bf16.gmra.mrb[0].mxu0 %v448
      %v618 = vpop.f32.mrb[0].mxu0
      %v619 = vadd.f32 0.0, %v618
      %v620 = vpop.f32.mrb[0].mxu0
      %v621 = vpop.f32.mrb[0].mxu0
      %v622 = vadd.f32 0.0, %v621
      %v623 = vpop.f32.mrb[0].mxu0
      %624 = vmatprep.mubr.bf16.mxu0 0
      %625 = vmatmul.mubr.bf16.gmra.mrb[0].mxu0 %v449
      %v626 = vpop.f32.mrb[0].mxu0
      %v627 = vadd.f32 0.0, %v626
      %v628 = vpop.f32.mrb[0].mxu0
      %v629 = vpop.f32.mrb[0].mxu0
      %v630 = vadd.f32 0.0, %v629
      %v631 = vpop.f32.mrb[0].mxu0
      %632 = vmatprep.mubr.bf16.mxu0 0
      %633 = vmatmul.mubr.bf16.gmra.mrb[0].mxu0 %v450
      %v634 = vpop.f32.mrb[0].mxu0
      %v635 = vadd.f32 0.0, %v634
      %v636 = vpop.f32.mrb[0].mxu0
      %v637 = vpop.f32.mrb[0].mxu0
      %v638 = vadd.f32 0.0, %v637
      %v639 = vpop.f32.mrb[0].mxu0
      %640 = vmatprep.mubr.bf16.mxu0 0
      %641 = vmatmul.mubr.bf16.gmra.mrb[0].mxu0 %v451
      %v642 = vpop.f32.mrb[0].mxu0
      %v643 = vadd.f32 0.0, %v642
      %v644 = vpop.f32.mrb[0].mxu0
      %v645 = vpop.f32.mrb[0].mxu0
      %v646 = vadd.f32 0.0, %v645
      %v647 = vpop.f32.mrb[0].mxu0
      %648 = vmatprep.mubr.bf16.mxu0 0
      %649 = vmatmul.mubr.bf16.gmra.mrb[0].mxu0 %v452
      %v650 = vpop.f32.mrb[0].mxu0
      %v651 = vadd.f32 0.0, %v650
      %v652 = vpop.f32.mrb[0].mxu0
      %v653 = vpop.f32.mrb[0].mxu0
      %v654 = vadd.f32 0.0, %v653
      %v655 = vpop.f32.mrb[0].mxu0
      %656 = vmatprep.mubr.bf16.mxu0 0
      %657 = vmatmul.mubr.bf16.gmra.mrb[0].mxu0 %v453
      %v658 = vpop.f32.mrb[0].mxu0
      %v659 = vadd.f32 0.0, %v658
      %v660 = vpop.f32.mrb[0].mxu0
      %v661 = vpop.f32.mrb[0].mxu0
      %v662 = vadd.f32 0.0, %v661
      %v663 = vpop.f32.mrb[0].mxu0
      %664 = vmatprep.mubr.bf16.mxu0 0
      %665 = vmatmul.mubr.bf16.gmra.mrb[0].mxu0 %v454
      %v666 = vpop.f32.mrb[0].mxu0
      %v667 = vadd.f32 0.0, %v666
      %v668 = vpop.f32.mrb[0].mxu0
      %v669 = vpop.f32.mrb[0].mxu0
      %v670 = vadd.f32 0.0, %v669
      %v671 = vpop.f32.mrb[0].mxu0
      %672 = vmatprep.mubr.bf16.mxu0 0
      %673 = vmatmul.mubr.bf16.gmra.mrb[0].mxu0 %v455
      %v674 = vpop.f32.mrb[0].mxu0
      %v675 = vadd.f32 0.0, %v674
      %v676 = vpop.f32.mrb[0].mxu0
      %v677 = vpop.f32.mrb[0].mxu0
      %v678 = vadd.f32 0.0, %v677
      %v679 = vpop.f32.mrb[0].mxu0
      %680 = vdwg.mxu0
      %v681 = vadd.f32 %v296, %v555
      %v682 = vadd.f32 %v297, %v558
      %v683 = vadd.f32 %v298, %v563
      %v684 = vadd.f32 %v299, %v566
      %v685 = vadd.f32 %v300, %v571
      %v686 = vadd.f32 %v301, %v574
      %v687 = vadd.f32 %v302, %v579
      %v688 = vadd.f32 %v303, %v582
      %v689 = vadd.f32 %v304, %v587
      %v690 = vadd.f32 %v305, %v590
      %v691 = vadd.f32 %v306, %v595
      %v692 = vadd.f32 %v307, %v598
      %v693 = vadd.f32 %v308, %v603
      %v694 = vadd.f32 %v309, %v606
      %v695 = vadd.f32 %v310, %v611
      %v696 = vadd.f32 %v311, %v614
      %v697 = vadd.f32 %v312, %v619
      %v698 = vadd.f32 %v313, %v622
      %v699 = vadd.f32 %v314, %v627
      %v700 = vadd.f32 %v315, %v630
      %v701 = vadd.f32 %v316, %v635
      %v702 = vadd.f32 %v317, %v638
      %v703 = vadd.f32 %v318, %v643
      %v704 = vadd.f32 %v319, %v646
      %v705 = vadd.f32 %v320, %v651
      %v706 = vadd.f32 %v321, %v654
      %v707 = vadd.f32 %v322, %v659
      %v708 = vadd.f32 %v323, %v662
      %v709 = vadd.f32 %v324, %v667
      %v710 = vadd.f32 %v325, %v670
      %v711 = vadd.f32 %v326, %v675
      %v712 = vadd.f32 %v327, %v678
      %713 = vst [vmem:[#allocation2] sm:$0xff] %v681
      %714 = vst [vmem:[#allocation2 + $0x8] sm:$0xff] %v682
      %715 = vst [vmem:[#allocation2 + $0x10] sm:$0xff] %v683
      %716 = vst [vmem:[#allocation2 + $0x18] sm:$0xff] %v684
      %717 = vst [vmem:[#allocation2 + $0x20] sm:$0xff] %v685
      %718 = vst [vmem:[#allocation2 + $0x28] sm:$0xff] %v686
      %719 = vst [vmem:[#allocation2 + $0x30] sm:$0xff] %v687
      %720 = vst [vmem:[#allocation2 + $0x38] sm:$0xff] %v688
      %721 = vst [vmem:[#allocation2 + $0x40] sm:$0xff] %v689
      %722 = vst [vmem:[#allocation2 + $0x48] sm:$0xff] %v690
      %723 = vst [vmem:[#allocation2 + $0x50] sm:$0xff] %v691
      %724 = vst [vmem:[#allocation2 + $0x58] sm:$0xff] %v692
      %725 = vst [vmem:[#allocation2 + $0x60] sm:$0xff] %v693
      %726 = vst [vmem:[#allocation2 + $0x68] sm:$0xff] %v694
      %727 = vst [vmem:[#allocation2 + $0x70] sm:$0xff] %v695
      %728 = vst [vmem:[#allocation2 + $0x78] sm:$0xff] %v696
      %729 = vst [vmem:[#allocation2 + $0x80] sm:$0xff] %v697
      %730 = vst [vmem:[#allocation2 + $0x88] sm:$0xff] %v698
      %731 = vst [vmem:[#allocation2 + $0x90] sm:$0xff] %v699
      %732 = vst [vmem:[#allocation2 + $0x98] sm:$0xff] %v700
      %733 = vst [vmem:[#allocation2 + $0xa0] sm:$0xff] %v701
      %734 = vst [vmem:[#allocation2 + $0xa8] sm:$0xff] %v702
      %735 = vst [vmem:[#allocation2 + $0xb0] sm:$0xff] %v703
      %736 = vst [vmem:[#allocation2 + $0xb8] sm:$0xff] %v704
      %737 = vst [vmem:[#allocation2 + $0xc0] sm:$0xff] %v705
      %738 = vst [vmem:[#allocation2 + $0xc8] sm:$0xff] %v706
      %739 = vst [vmem:[#allocation2 + $0xd0] sm:$0xff] %v707
      %740 = vst [vmem:[#allocation2 + $0xd8] sm:$0xff] %v708
      %741 = vst [vmem:[#allocation2 + $0xe0] sm:$0xff] %v709
      %742 = vst [vmem:[#allocation2 + $0xe8] sm:$0xff] %v710
      %743 = vst [vmem:[#allocation2 + $0xf0] sm:$0xff] %v711
      %744 = vst [vmem:[#allocation2 + $0xf8] sm:$0xff] %v712
      // Predicated region
      $region37: #{yolo_block_forward.7} parent=31 // pred_check
        %p745 = pneg %p260
      $region38: #{yolo_block_forward.7} parent=31 // pred_check_branch
        %747 = sbr.rel (%p745) target = $region40
      $region39: #{yolo_block_forward.7} parent=31 // pred_region
        %v748 = vld [vmem:[#allocation2] sm:$0xff]
        %v749 = vld [vmem:[#allocation2 + $0x8] sm:$0xff]
        %v750 = vld [vmem:[#allocation2 + $0x10] sm:$0xff]
        %v751 = vld [vmem:[#allocation2 + $0x18] sm:$0xff]
        %v752 = vld [vmem:[#allocation2 + $0x20] sm:$0xff]
        %v753 = vld [vmem:[#allocation2 + $0x28] sm:$0xff]
        %v754 = vld [vmem:[#allocation2 + $0x30] sm:$0xff]
        %v755 = vld [vmem:[#allocation2 + $0x38] sm:$0xff]
        %v756 = vld [vmem:[#allocation2 + $0x40] sm:$0xff]
        %v757 = vld [vmem:[#allocation2 + $0x48] sm:$0xff]
        %v758 = vld [vmem:[#allocation2 + $0x50] sm:$0xff]
        %v759 = vld [vmem:[#allocation2 + $0x58] sm:$0xff]
        %v760 = vld [vmem:[#allocation2 + $0x60] sm:$0xff]
        %v761 = vld [vmem:[#allocation2 + $0x68] sm:$0xff]
        %v762 = vld [vmem:[#allocation2 + $0x70] sm:$0xff]
        %v763 = vld [vmem:[#allocation2 + $0x78] sm:$0xff]
        %v764 = vld [vmem:[#allocation2 + $0x80] sm:$0xff]
        %v765 = vld [vmem:[#allocation2 + $0x88] sm:$0xff]
        %v766 = vld [vmem:[#allocation2 + $0x90] sm:$0xff]
        %v767 = vld [vmem:[#allocation2 + $0x98] sm:$0xff]
        %v768 = vld [vmem:[#allocation2 + $0xa0] sm:$0xff]
        %v769 = vld [vmem:[#allocation2 + $0xa8] sm:$0xff]
        %v770 = vld [vmem:[#allocation2 + $0xb0] sm:$0xff]
        %v771 = vld [vmem:[#allocation2 + $0xb8] sm:$0xff]
        %v772 = vld [vmem:[#allocation2 + $0xc0] sm:$0xff]
        %v773 = vld [vmem:[#allocation2 + $0xc8] sm:$0xff]
        %v774 = vld [vmem:[#allocation2 + $0xd0] sm:$0xff]
        %v775 = vld [vmem:[#allocation2 + $0xd8] sm:$0xff]
        %v776 = vld [vmem:[#allocation2 + $0xe0] sm:$0xff]
        %v777 = vld [vmem:[#allocation2 + $0xe8] sm:$0xff]
        %v778 = vld [vmem:[#allocation2 + $0xf0] sm:$0xff]
        %v779 = vld [vmem:[#allocation2 + $0xf8] sm:$0xff]
        %v780 = vld [vmem:[%s249] sm:$0x1]
        %v782 = vlaneseq
        %v783 = vshrl.u32 %v782, 7
        %v784 = vsub.s32 0, %v783
        %v785 = vrot.slane %v780, %v784
        %v787 = vadd.f32 %v748, %v785
        %v788 = vadd.f32 %v749, %v785
        %v789 = vadd.f32 %v750, %v785
        %v790 = vadd.f32 %v751, %v785
        %v791 = vadd.f32 %v752, %v785
        %v792 = vadd.f32 %v753, %v785
        %v793 = vadd.f32 %v754, %v785
        %v794 = vadd.f32 %v755, %v785
        %v795 = vadd.f32 %v756, %v785
        %v796 = vadd.f32 %v757, %v785
        %v797 = vadd.f32 %v758, %v785
        %v798 = vadd.f32 %v759, %v785
        %v799 = vadd.f32 %v760, %v785
        %v800 = vadd.f32 %v761, %v785
        %v801 = vadd.f32 %v762, %v785
        %v802 = vadd.f32 %v763, %v785
        %v803 = vadd.f32 %v764, %v785
        %v804 = vadd.f32 %v765, %v785
        %v805 = vadd.f32 %v766, %v785
        %v806 = vadd.f32 %v767, %v785
        %v807 = vadd.f32 %v768, %v785
        %v808 = vadd.f32 %v769, %v785
        %v809 = vadd.f32 %v770, %v785
        %v810 = vadd.f32 %v771, %v785
        %v811 = vadd.f32 %v772, %v785
        %v812 = vadd.f32 %v773, %v785
        %v813 = vadd.f32 %v774, %v785
        %v814 = vadd.f32 %v775, %v785
        %v815 = vadd.f32 %v776, %v785
        %v816 = vadd.f32 %v777, %v785
        %v817 = vadd.f32 %v778, %v785
        %v818 = vadd.f32 %v779, %v785
        %vm819 = vcmp.ge.f32.partialorder %v787, 0.0
        %vm820 = vcmp.ge.f32.partialorder %v788, 0.0
        %vm821 = vcmp.ge.f32.partialorder %v789, 0.0
        %vm822 = vcmp.ge.f32.partialorder %v790, 0.0
        %vm823 = vcmp.ge.f32.partialorder %v791, 0.0
        %vm824 = vcmp.ge.f32.partialorder %v792, 0.0
        %vm825 = vcmp.ge.f32.partialorder %v793, 0.0
        %vm826 = vcmp.ge.f32.partialorder %v794, 0.0
        %vm827 = vcmp.ge.f32.partialorder %v795, 0.0
        %vm828 = vcmp.ge.f32.partialorder %v796, 0.0
        %vm829 = vcmp.ge.f32.partialorder %v797, 0.0
        %vm830 = vcmp.ge.f32.partialorder %v798, 0.0
        %vm831 = vcmp.ge.f32.partialorder %v799, 0.0
        %vm832 = vcmp.ge.f32.partialorder %v800, 0.0
        %vm833 = vcmp.ge.f32.partialorder %v801, 0.0
        %vm834 = vcmp.ge.f32.partialorder %v802, 0.0
        %vm835 = vcmp.ge.f32.partialorder %v803, 0.0
        %vm836 = vcmp.ge.f32.partialorder %v804, 0.0
        %vm837 = vcmp.ge.f32.partialorder %v805, 0.0
        %vm838 = vcmp.ge.f32.partialorder %v806, 0.0
        %vm839 = vcmp.ge.f32.partialorder %v807, 0.0
        %vm840 = vcmp.ge.f32.partialorder %v808, 0.0
        %vm841 = vcmp.ge.f32.partialorder %v809, 0.0
        %vm842 = vcmp.ge.f32.partialorder %v810, 0.0
        %vm843 = vcmp.ge.f32.partialorder %v811, 0.0
        %vm844 = vcmp.ge.f32.partialorder %v812, 0.0
        %vm845 = vcmp.ge.f32.partialorder %v813, 0.0
        %vm846 = vcmp.ge.f32.partialorder %v814, 0.0
        %vm847 = vcmp.ge.f32.partialorder %v815, 0.0
        %vm848 = vcmp.ge.f32.partialorder %v816, 0.0
        %vm849 = vcmp.ge.f32.partialorder %v817, 0.0
        %vm850 = vcmp.ge.f32.partialorder %v818, 0.0
        %v851 = vmul.f32 %v787, 0.1
        %v852 = vmul.f32 %v788, 0.1
        %v853 = vmul.f32 %v789, 0.1
        %v854 = vmul.f32 %v790, 0.1
        %v855 = vmul.f32 %v791, 0.1
        %v856 = vmul.f32 %v792, 0.1
        %v857 = vmul.f32 %v793, 0.1
        %v858 = vmul.f32 %v794, 0.1
        %v859 = vmul.f32 %v795, 0.1
        %v860 = vmul.f32 %v796, 0.1
        %v861 = vmul.f32 %v797, 0.1
        %v862 = vmul.f32 %v798, 0.1
        %v863 = vmul.f32 %v799, 0.1
        %v864 = vmul.f32 %v800, 0.1
        %v865 = vmul.f32 %v801, 0.1
        %v866 = vmul.f32 %v802, 0.1
        %v867 = vmul.f32 %v803, 0.1
        %v868 = vmul.f32 %v804, 0.1
        %v869 = vmul.f32 %v805, 0.1
        %v870 = vmul.f32 %v806, 0.1
        %v871 = vmul.f32 %v807, 0.1
        %v872 = vmul.f32 %v808, 0.1
        %v873 = vmul.f32 %v809, 0.1
        %v874 = vmul.f32 %v810, 0.1
        %v875 = vmul.f32 %v811, 0.1
        %v876 = vmul.f32 %v812, 0.1
        %v877 = vmul.f32 %v813, 0.1
        %v878 = vmul.f32 %v814, 0.1
        %v879 = vmul.f32 %v815, 0.1
        %v880 = vmul.f32 %v816, 0.1
        %v881 = vmul.f32 %v817, 0.1
        %v882 = vmul.f32 %v818, 0.1
        %v883 = vsel %vm819, %v787, %v851
        %v884 = vsel %vm820, %v788, %v852
        %v885 = vsel %vm821, %v789, %v853
        %v886 = vsel %vm822, %v790, %v854
        %v887 = vsel %vm823, %v791, %v855
        %v888 = vsel %vm824, %v792, %v856
        %v889 = vsel %vm825, %v793, %v857
        %v890 = vsel %vm826, %v794, %v858
        %v891 = vsel %vm827, %v795, %v859
        %v892 = vsel %vm828, %v796, %v860
        %v893 = vsel %vm829, %v797, %v861
        %v894 = vsel %vm830, %v798, %v862
        %v895 = vsel %vm831, %v799, %v863
        %v896 = vsel %vm832, %v800, %v864
        %v897 = vsel %vm833, %v801, %v865
        %v898 = vsel %vm834, %v802, %v866
        %v899 = vsel %vm835, %v803, %v867
        %v900 = vsel %vm836, %v804, %v868
        %v901 = vsel %vm837, %v805, %v869
        %v902 = vsel %vm838, %v806, %v870
        %v903 = vsel %vm839, %v807, %v871
        %v904 = vsel %vm840, %v808, %v872
        %v905 = vsel %vm841, %v809, %v873
        %v906 = vsel %vm842, %v810, %v874
        %v907 = vsel %vm843, %v811, %v875
        %v908 = vsel %vm844, %v812, %v876
        %v909 = vsel %vm845, %v813, %v877
        %v910 = vsel %vm846, %v814, %v878
        %v911 = vsel %vm847, %v815, %v879
        %v912 = vsel %vm848, %v816, %v880
        %v913 = vsel %vm849, %v817, %v881
        %v914 = vsel %vm850, %v818, %v882
        %v915 = vpack.c.bf16 %v884, %v883
        %v916 = vpack.c.bf16 %v886, %v885
        %v917 = vpack.c.bf16 %v888, %v887
        %v918 = vpack.c.bf16 %v890, %v889
        %v919 = vpack.c.bf16 %v892, %v891
        %v920 = vpack.c.bf16 %v894, %v893
        %v921 = vpack.c.bf16 %v896, %v895
        %v922 = vpack.c.bf16 %v898, %v897
        %v923 = vpack.c.bf16 %v900, %v899
        %v924 = vpack.c.bf16 %v902, %v901
        %v925 = vpack.c.bf16 %v904, %v903
        %v926 = vpack.c.bf16 %v906, %v905
        %v927 = vpack.c.bf16 %v908, %v907
        %v928 = vpack.c.bf16 %v910, %v909
        %v929 = vpack.c.bf16 %v912, %v911
        %v930 = vpack.c.bf16 %v914, %v913
        %v947 = vunpack.c.l.b16 %v915
        %v948 = vunpack.c.h.b16 %v915
        %v949 = vunpack.c.l.b16 %v916
        %v950 = vunpack.c.h.b16 %v916
        %v951 = vunpack.c.l.b16 %v917
        %v952 = vunpack.c.h.b16 %v917
        %v953 = vunpack.c.l.b16 %v918
        %v954 = vunpack.c.h.b16 %v918
        %v955 = vunpack.c.l.b16 %v919
        %v956 = vunpack.c.h.b16 %v919
        %v957 = vunpack.c.l.b16 %v920
        %v958 = vunpack.c.h.b16 %v920
        %v959 = vunpack.c.l.b16 %v921
        %v960 = vunpack.c.h.b16 %v921
        %v961 = vunpack.c.l.b16 %v922
        %v962 = vunpack.c.h.b16 %v922
        %v963 = vunpack.c.l.b16 %v923
        %v964 = vunpack.c.h.b16 %v923
        %v965 = vunpack.c.l.b16 %v924
        %v966 = vunpack.c.h.b16 %v924
        %v967 = vunpack.c.l.b16 %v925
        %v968 = vunpack.c.h.b16 %v925
        %v969 = vunpack.c.l.b16 %v926
        %v970 = vunpack.c.h.b16 %v926
        %v971 = vunpack.c.l.b16 %v927
        %v972 = vunpack.c.h.b16 %v927
        %v973 = vunpack.c.l.b16 %v928
        %v974 = vunpack.c.h.b16 %v928
        %v975 = vunpack.c.l.b16 %v929
        %v976 = vunpack.c.h.b16 %v929
        %v977 = vunpack.c.l.b16 %v930
        %v978 = vunpack.c.h.b16 %v930
        %v979 = vpack.c.b16 %v947, %v947
        %v980 = vpack.c.b16 %v948, %v948
        %v981 = vpack.c.b16 %v949, %v949
        %v982 = vpack.c.b16 %v950, %v950
        %v983 = vpack.c.b16 %v951, %v951
        %v984 = vpack.c.b16 %v952, %v952
        %v985 = vpack.c.b16 %v953, %v953
        %v986 = vpack.c.b16 %v954, %v954
        %v987 = vpack.c.b16 %v955, %v955
        %v988 = vpack.c.b16 %v956, %v956
        %v989 = vpack.c.b16 %v957, %v957
        %v990 = vpack.c.b16 %v958, %v958
        %v991 = vpack.c.b16 %v959, %v959
        %v992 = vpack.c.b16 %v960, %v960
        %v993 = vpack.c.b16 %v961, %v961
        %v994 = vpack.c.b16 %v962, %v962
        %v995 = vpack.c.b16 %v963, %v963
        %v996 = vpack.c.b16 %v964, %v964
        %v997 = vpack.c.b16 %v965, %v965
        %v998 = vpack.c.b16 %v966, %v966
        %v999 = vpack.c.b16 %v967, %v967
        %v1000 = vpack.c.b16 %v968, %v968
        %v1001 = vpack.c.b16 %v969, %v969
        %v1002 = vpack.c.b16 %v970, %v970
        %v1003 = vpack.c.b16 %v971, %v971
        %v1004 = vpack.c.b16 %v972, %v972
        %v1005 = vpack.c.b16 %v973, %v973
        %v1006 = vpack.c.b16 %v974, %v974
        %v1007 = vpack.c.b16 %v975, %v975
        %v1008 = vpack.c.b16 %v976, %v976
        %v1009 = vpack.c.b16 %v977, %v977
        %v1010 = vpack.c.b16 %v978, %v978
        %1043 = vst [vmem:[%s257] sm:$0xf] %v979
        %1044 = vst [vmem:[%s257 + $0x4] sm:$0xf] %v980
        %1045 = vst [vmem:[%s257 + $0x8] sm:$0xf] %v981
        %1046 = vst [vmem:[%s257 + $0xc] sm:$0xf] %v982
        %1047 = vst [vmem:[%s257 + $0x10] sm:$0xf] %v983
        %1048 = vst [vmem:[%s257 + $0x14] sm:$0xf] %v984
        %1049 = vst [vmem:[%s257 + $0x18] sm:$0xf] %v985
        %1050 = vst [vmem:[%s257 + $0x1c] sm:$0xf] %v986
        %1051 = vst [vmem:[%s257 + $0x20] sm:$0xf] %v987
        %1052 = vst [vmem:[%s257 + $0x24] sm:$0xf] %v988
        %1053 = vst [vmem:[%s257 + $0x28] sm:$0xf] %v989
        %1054 = vst [vmem:[%s257 + $0x2c] sm:$0xf] %v990
        %1055 = vst [vmem:[%s257 + $0x30] sm:$0xf] %v991
        %1056 = vst [vmem:[%s257 + $0x34] sm:$0xf] %v992
        %1057 = vst [vmem:[%s257 + $0x38] sm:$0xf] %v993
        %1058 = vst [vmem:[%s257 + $0x3c] sm:$0xf] %v994
        %1059 = vst [vmem:[%s257 + $0x40] sm:$0xf] %v995
        %1060 = vst [vmem:[%s257 + $0x44] sm:$0xf] %v996
        %1061 = vst [vmem:[%s257 + $0x48] sm:$0xf] %v997
        %1062 = vst [vmem:[%s257 + $0x4c] sm:$0xf] %v998
        %1063 = vst [vmem:[%s257 + $0x50] sm:$0xf] %v999
        %1064 = vst [vmem:[%s257 + $0x54] sm:$0xf] %v1000
        %1065 = vst [vmem:[%s257 + $0x58] sm:$0xf] %v1001
        %1066 = vst [vmem:[%s257 + $0x5c] sm:$0xf] %v1002
        %1067 = vst [vmem:[%s257 + $0x60] sm:$0xf] %v1003
        %1068 = vst [vmem:[%s257 + $0x64] sm:$0xf] %v1004
        %1069 = vst [vmem:[%s257 + $0x68] sm:$0xf] %v1005
        %1070 = vst [vmem:[%s257 + $0x6c] sm:$0xf] %v1006
        %1071 = vst [vmem:[%s257 + $0x70] sm:$0xf] %v1007
        %1072 = vst [vmem:[%s257 + $0x74] sm:$0xf] %v1008
        %1073 = vst [vmem:[%s257 + $0x78] sm:$0xf] %v1009
        %1074 = vst [vmem:[%s257 + $0x7c] sm:$0xf] %v1010
      $region40: #{yolo_block_forward.7} parent=31 // pred_fallthru
        _
      %s1075 = smul.u32 32, %s19
      %p1076 = scmp.lt.s32.totalorder %s1075, 63
      %s1077 = scalar_select %p1076, %s1075, 63
      %p1078 = scmp.lt.s32.totalorder %s20, 0
      %s1079 = scalar_select %p1078, %s20, 0
      %s1080 = sadd.s32 %s1079, %s1077
      %s1081 = smul.addr %s1080, 4
      %s1082 = scalar_lea.vmem %s3, %s1081
      // Predicated region
      $region41: #{yolo_block_forward.7} parent=31 // pred_check
        %p1083 = pneg %p135
      $region42: #{yolo_block_forward.7} parent=31 // pred_check_branch
        %1085 = sbr.rel (%p1083) target = $region44
      $region43: #{yolo_block_forward.7} parent=31 // pred_region
        %s1086 = smul.u32 32, %s19
      $region44: #{yolo_block_forward.7} parent=31 // pred_fallthru
        _
    $region32: #{yolo_block_forward.7} parent=5 // pred_fallthru
      _
    %p1087 = scmp.le.s32.totalorder 2, %s9
    // Predicated region
    $region45: #{yolo_block_forward.7} parent=5 // pred_check
      %p1088 = pneg %p1087
    $region46: #{yolo_block_forward.7} parent=5 // pred_check_branch
      %1090 = sbr.rel (%p1088) target = $region48
    $region47: #{yolo_block_forward.7} parent=5 // pred_region
      %s1091 = ssub.s32 %s9, 2
      // Predicated region
      $region49: #{yolo_block_forward.7} parent=47 // pred_check
        %p1092 = pneg %p141
      $region50: #{yolo_block_forward.7} parent=47 // pred_check_branch
        %1094 = sbr.rel (%p1092) target = $region52
      $region51: #{yolo_block_forward.7} parent=47 // pred_region
        %s1095 = smul.u32 32, %s22
        %p1096 = scmp.lt.s32.totalorder %s1095, 63
        %s1097 = scalar_select %p1096, %s1095, 63
        %p1098 = scmp.lt.s32.totalorder %s23, 0
        %s1099 = scalar_select %p1098, %s23, 0
        %s1100 = sadd.s32 %s1099, %s1097
        %s1101 = smul.addr %s1100, 4
        %s1102 = scalar_lea.vmem %s3, %s1101
      $region52: #{yolo_block_forward.7} parent=47 // pred_fallthru
        _
    $region48: #{yolo_block_forward.7} parent=5 // pred_fallthru
      _
  $region6: #{yolo_block_forward.7} parent=0 // loop_footer
    %s13 = sadd.s32 1, %s9
  $region7: #{yolo_block_forward.7} parent=0 // loop_footer_branch
    %8 = sbr.rel target = $region3
  $region8: #{yolo_block_forward.7} parent=0 // loop_exit
    _

// kernel: yolo_block_forward.13
$region0: #{yolo_block_forward.13}
  #allocation0 [shape = 'u32[]', space=smem, size = 0x4, offset = 0x4, fixed_abs, tag = 'smem constant byte address 0x4 - core index']
  #allocation1 [shape = 'u32[144,128]{1,0:T(1,128)}', space=vmem, size = 0x12000, scoped, tag = 'internal scratch']
  #allocation2 [shape = 'f32[256,128]{1,0:T(8,128)}', space=vmem, size = 0x20000, scoped, tag = 'scratch operand']
  %s0 = inlined_call_operand.vmem [shape: bf16[512,128], index: 0, kind: input, shape index: {}]
  %s1 = inlined_call_operand.vmem [shape: bf16[128,128], index: 1, kind: input, shape index: {}]
  %s2 = inlined_call_operand.vmem [shape: f32[1,128], index: 2, kind: input, shape index: {}]
  %s3 = inlined_call_operand.vmem [shape: f32[512,128], index: 3, kind: output, shape index: {}]
  %s4 = sld [smem:[#allocation0]]
  $region53: #{yolo_block_forward.13} parent=0
    _
  %s6 = ssub.s32 1, %s4
  %s7 = scalar_select 0, %s6, %s4
  loop: start=0, step=1, limit=4
  $region2: #{yolo_block_forward.13} parent=0 // loop_pre_header
    _
  $region3: #{yolo_block_forward.13} parent=0 // loop_header
    %s9 = sphi 0, %s13
    %p10 = scmp.ge.s32.totalorder %s9, 4
    %s16 = sphi 0, %s35
    %s17 = sphi 0, %s31
    %s18 = sphi 0, %s27
    %s19 = sphi 0, %s16
    %s20 = sphi 0, %s17
    %s21 = sphi 0, %s18
    %s22 = sphi 0, %s19
    %s23 = sphi 0, %s20
    %s24 = sphi 0, %s21
    %s40 = sphi 0, %s42
    %s43 = sphi 0, %s40
    %s44 = sphi 0, %s43
    %s60 = sphi 0, %s44
    %s68 = sphi 0, %s70
    %s71 = sphi 0, %s68
    %s72 = sphi 0, %s71
    %s88 = sphi 0, %s72
    %s94 = sphi 0, %s96
    %s97 = sphi 0, %s94
    %s98 = sphi 0, %s97
    %s114 = sphi 0, %s98
    %s122 = sphi 0, %s124
    %s125 = sphi 0, %s122
    %s126 = sphi 0, %s125
    %s142 = sphi 0, %s126
  $region4: #{yolo_block_forward.13} parent=0 // loop_header_branch
    %12 = sbr.rel (%p10) target = $region8
  $region5: #{yolo_block_forward.13} parent=0 // loop_body
    %s14 = ssub.s32 %s9, 1
    %s15 = ssub.s32 %s9, 2
    %s25 = sadd.s32 1, %s18
    %p26 = scmp.ge.s32.totalorder %s25, 1
    %s27 = scalar_select %p26, 0, %s25
    %s28 = sadd.s32 1, %s17
    %s29 = scalar_select %p26, %s28, %s17
    %p30 = scmp.ge.s32.totalorder %s29, 1
    %s31 = scalar_select %p30, 0, %s29
    %s32 = sadd.s32 1, %s16
    %s33 = scalar_select %p30, %s32, %s16
    %p34 = scmp.ge.s32.totalorder %s33, 2
    %s35 = scalar_select %p34, 0, %s33
    %s36 = ssub.s32 %s16, %s35
    %s37 = ssub.s32 %s18, %s27
    %s38 = sor.u32 %s36, %s37
    %p39 = scmp.eq.s32.totalorder %s38, 0
    %s41 = sadd.s32 %s40, 1
    %s42 = scalar_select %p39, %s40, %s41
    %p45 = pneg %p39
    %p46 = scmp.eq.s32.totalorder %s9, 1
    %p47 = por %p45, %p46
    %p48 = scmp.ne.s32.totalorder %s40, %s43
    %p49 = scmp.eq.s32.totalorder %s9, 0
    %p50 = por %p48, %p49
    %p51 = scmp.ne.s32.totalorder %s40, %s43
    %p52 = scmp.eq.s32.totalorder %s14, 1
    %p53 = por %p51, %p52
    %p54 = scmp.ne.s32.totalorder %s43, %s44
    %p55 = scmp.eq.s32.totalorder %s14, 0
    %p56 = por %p54, %p55
    %p57 = scmp.ne.s32.totalorder %s43, %s44
    %p58 = scmp.eq.s32.totalorder %s15, 1
    %p59 = por %p57, %p58
    %p61 = scmp.ne.s32.totalorder %s44, %s60
    %p62 = scmp.eq.s32.totalorder %s15, 0
    %p63 = por %p61, %p62
    %s64 = ssub.s32 %s18, %s27
    %s65 = ssub.s32 %s17, %s31
    %s66 = sor.u32 %s64, %s65
    %p67 = scmp.eq.s32.totalorder %s66, 0
    %s69 = sadd.s32 %s68, 1
    %s70 = scalar_select %p67, %s68, %s69
    %p73 = pneg %p67
    %p74 = scmp.eq.s32.totalorder %s9, 1
    %p75 = por %p73, %p74
    %p76 = scmp.ne.s32.totalorder %s68, %s71
    %p77 = scmp.eq.s32.totalorder %s9, 0
    %p78 = por %p76, %p77
    %p79 = scmp.ne.s32.totalorder %s68, %s71
    %p80 = scmp.eq.s32.totalorder %s14, 1
    %p81 = por %p79, %p80
    %p82 = scmp.ne.s32.totalorder %s71, %s72
    %p83 = scmp.eq.s32.totalorder %s14, 0
    %p84 = por %p82, %p83
    %p85 = scmp.ne.s32.totalorder %s71, %s72
    %p86 = scmp.eq.s32.totalorder %s15, 1
    %p87 = por %p85, %p86
    %p89 = scmp.ne.s32.totalorder %s72, %s88
    %p90 = scmp.eq.s32.totalorder %s15, 0
    %p91 = por %p89, %p90
    %s92 = ssub.s32 %s17, %s31
    %p93 = scmp.eq.s32.totalorder %s92, 0
    %s95 = sadd.s32 %s94, 1
    %s96 = scalar_select %p93, %s94, %s95
    %p99 = pneg %p93
    %p100 = scmp.eq.s32.totalorder %s9, 1
    %p101 = por %p99, %p100
    %p102 = scmp.ne.s32.totalorder %s94, %s97
    %p103 = scmp.eq.s32.totalorder %s9, 0
    %p104 = por %p102, %p103
    %p105 = scmp.ne.s32.totalorder %s94, %s97
    %p106 = scmp.eq.s32.totalorder %s14, 1
    %p107 = por %p105, %p106
    %p108 = scmp.ne.s32.totalorder %s97, %s98
    %p109 = scmp.eq.s32.totalorder %s14, 0
    %p110 = por %p108, %p109
    %p111 = scmp.ne.s32.totalorder %s97, %s98
    %p112 = scmp.eq.s32.totalorder %s15, 1
    %p113 = por %p111, %p112
    %p115 = scmp.ne.s32.totalorder %s98, %s114
    %p116 = scmp.eq.s32.totalorder %s15, 0
    %p117 = por %p115, %p116
    %s118 = ssub.s32 %s16, %s35
    %s119 = ssub.s32 %s17, %s31
    %s120 = sor.u32 %s118, %s119
    %p121 = scmp.eq.s32.totalorder %s120, 0
    %s123 = sadd.s32 %s122, 1
    %s124 = scalar_select %p121, %s122, %s123
    %p127 = pneg %p121
    %p128 = scmp.eq.s32.totalorder %s9, 1
    %p129 = por %p127, %p128
    %p130 = scmp.ne.s32.totalorder %s122, %s125
    %p131 = scmp.eq.s32.totalorder %s9, 0
    %p132 = por %p130, %p131
    %p133 = scmp.ne.s32.totalorder %s122, %s125
    %p134 = scmp.eq.s32.totalorder %s14, 1
    %p135 = por %p133, %p134
    %p136 = scmp.ne.s32.totalorder %s125, %s126
    %p137 = scmp.eq.s32.totalorder %s14, 0
    %p138 = por %p136, %p137
    %p139 = scmp.ne.s32.totalorder %s125, %s126
    %p140 = scmp.eq.s32.totalorder %s15, 1
    %p141 = por %p139, %p140
    %p143 = scmp.ne.s32.totalorder %s126, %s142
    %p144 = scmp.eq.s32.totalorder %s15, 0
    %p145 = por %p143, %p144
    %p146 = scmp.le.s32.totalorder 1, %s9
    %p147 = scmp.lt.s32.totalorder %s9, 3
    %p148 = pnand %p146, %p147
    %p149 = pneg %p148
    // Predicated region
    $region9: #{yolo_block_forward.13} parent=5 // pred_check
      _
    $region10: #{yolo_block_forward.13} parent=5 // pred_check_branch
      %151 = sbr.rel (%p148) target = $region12
    $region11: #{yolo_block_forward.13} parent=5 // pred_region
      %s152 = ssub.s32 %s9, 1
      // Predicated region
      $region13: #{yolo_block_forward.13} parent=11 // pred_check
        %p153 = pneg %p84
      $region14: #{yolo_block_forward.13} parent=11 // pred_check_branch
        %155 = sbr.rel (%p153) target = $region16
      $region15: #{yolo_block_forward.13} parent=11 // pred_region
        %s156 = smul.u32 16, %s21
        %p157 = scmp.lt.s32.totalorder %s156, 15
        %s158 = scalar_select %p157, %s156, 15
        %p159 = scmp.lt.s32.totalorder %s20, 0
        %s160 = scalar_select %p159, %s20, 0
        %s161 = sadd.s32 %s160, %s158
        %s162 = smul.addr %s161, 4
        %s163 = scalar_lea.vmem %s1, %s162
        %s164 = smul.u32 16, %s21
      $region16: #{yolo_block_forward.13} parent=11 // pred_fallthru
        _
      // Predicated region
      $region17: #{yolo_block_forward.13} parent=11 // pred_check
        %p165 = pneg %p110
      $region18: #{yolo_block_forward.13} parent=11 // pred_check_branch
        %167 = sbr.rel (%p165) target = $region20
      $region19: #{yolo_block_forward.13} parent=11 // pred_region
        %p168 = scmp.lt.s32.totalorder %s20, 0
        %s169 = scalar_select %p168, %s20, 0
        %s170 = scalar_lea.vmem %s2, %s169
      $region20: #{yolo_block_forward.13} parent=11 // pred_fallthru
        _
    $region12: #{yolo_block_forward.13} parent=5 // pred_fallthru
      _
    %p171 = scmp.lt.s32.totalorder %s9, 2
    // Predicated region
    $region21: #{yolo_block_forward.13} parent=5 // pred_check
      %p172 = pneg %p171
    $region22: #{yolo_block_forward.13} parent=5 // pred_check_branch
      %174 = sbr.rel (%p172) target = $region24
    $region23: #{yolo_block_forward.13} parent=5 // pred_region
      // Predicated region
      $region25: #{yolo_block_forward.13} parent=23 // pred_check
        %p175 = pneg %p50
      $region26: #{yolo_block_forward.13} parent=23 // pred_check_branch
        %177 = sbr.rel (%p175) target = $region28
      $region27: #{yolo_block_forward.13} parent=23 // pred_region
        %s178 = smul.u32 32, %s16
        %p179 = scmp.lt.s32.totalorder %s178, 63
        %s180 = scalar_select %p179, %s178, 63
        %p181 = scmp.lt.s32.totalorder %s18, 0
        %s182 = scalar_select %p181, %s18, 0
        %s183 = sadd.s32 %s182, %s180
        %s184 = smul.addr %s183, 4
        %s185 = scalar_lea.vmem %s0, %s184
        %s186 = smul.u32 32, %s16
      $region28: #{yolo_block_forward.13} parent=23 // pred_fallthru
        _
    $region24: #{yolo_block_forward.13} parent=5 // pred_fallthru
      _
    %p187 = scmp.le.s32.totalorder 1, %s9
    %p188 = scmp.lt.s32.totalorder %s9, 3
    %p189 = pnand %p187, %p188
    %p190 = pneg %p189
    // Predicated region
    $region29: #{yolo_block_forward.13} parent=5 // pred_check
      _
    $region30: #{yolo_block_forward.13} parent=5 // pred_check_branch
      %192 = sbr.rel (%p189) target = $region32
    $region31: #{yolo_block_forward.13} parent=5 // pred_region
      %s193 = ssub.s32 %s9, 1
      %s194 = smul.u32 32, %s19
      %p195 = scmp.lt.s32.totalorder %s194, 63
      %s196 = scalar_select %p195, %s194, 63
      %p197 = scmp.lt.s32.totalorder %s21, 0
      %s198 = scalar_select %p197, %s21, 0
      %s199 = sadd.s32 %s198, %s196
      %s200 = smul.addr %s199, 4
      %s201 = scalar_lea.vmem %s0, %s200
      %p202 = pneg %p56
      %p203 = pneg %p53
      %s204 = smul.u32 16, %s21
      %p205 = scmp.lt.s32.totalorder %s204, 15
      %s206 = scalar_select %p205, %s204, 15
      %p207 = scmp.lt.s32.totalorder %s20, 0
      %s208 = scalar_select %p207, %s20, 0
      %s209 = sadd.s32 %s208, %s206
      %s210 = smul.addr %s209, 4
      %s211 = scalar_lea.vmem %s1, %s210
      %p212 = pneg %p84
      %p213 = pneg %p81
      %p214 = scmp.lt.s32.totalorder %s20, 0
      %s215 = scalar_select %p214, %s20, 0
      %s216 = scalar_lea.vmem %s2, %s215
      %p217 = pneg %p110
      %p218 = pneg %p107
      %p219 = pneg %p138
      %p220 = pneg %p135
      %s221 = smul.u32 32, %s19
      %p222 = scmp.lt.s32.totalorder %s221, 63
      %s223 = scalar_select %p222, %s221, 63
      %p224 = scmp.lt.s32.totalorder %s20, 0
      %s225 = scalar_select %p224, %s20, 0
      %s226 = sadd.s32 %s225, %s223
      %s227 = smul.addr %s226, 8
      %s228 = scalar_lea.vmem %s3, %s227
      %s229 = smul.u32 32, %s19
      %p230 = scmp.lt.s32.totalorder %s229, 63
      %s231 = scalar_select %p230, %s229, 63
      %p232 = scmp.lt.s32.totalorder %s21, 0
      %s233 = scalar_select %p232, %s21, 0
      %s234 = sadd.s32 %s233, %s231
      %s235 = smul.addr %s234, 4
      %s236 = scalar_lea.vmem %s0, %s235
      %s237 = smul.u32 32, %s19
      %s238 = smul.u32 16, %s21
      %p239 = scmp.lt.s32.totalorder %s238, 15
      %s240 = scalar_select %p239, %s238, 15
      %p241 = scmp.lt.s32.totalorder %s20, 0
      %s242 = scalar_select %p241, %s20, 0
      %s243 = sadd.s32 %s242, %s240
      %s244 = smul.addr %s243, 4
      %s245 = scalar_lea.vmem %s1, %s244
      %s246 = smul.u32 16, %s21
      %p247 = scmp.lt.s32.totalorder %s20, 0
      %s248 = scalar_select %p247, %s20, 0
      %s249 = scalar_lea.vmem %s2, %s248
      %s250 = smul.u32 32, %s19
      %p251 = scmp.lt.s32.totalorder %s250, 63
      %s252 = scalar_select %p251, %s250, 63
      %p253 = scmp.lt.s32.totalorder %s20, 0
      %s254 = scalar_select %p253, %s20, 0
      %s255 = sadd.s32 %s254, %s252
      %s256 = smul.addr %s255, 8
      %s257 = scalar_lea.vmem %s3, %s256
      %s258 = smul.u32 32, %s19
      %p260 = scmp.eq.s32.totalorder %s21, 0
      // Predicated region
      $region33: #{yolo_block_forward.13} parent=31 // pred_check
        %p261 = pneg %p260
      $region34: #{yolo_block_forward.13} parent=31 // pred_check_branch
        %263 = sbr.rel (%p261) target = $region36
      $region35: #{yolo_block_forward.13} parent=31 // pred_region
        %264 = vst [vmem:[#allocation2] sm:$0xff] 0.0
        %265 = vst [vmem:[#allocation2 + $0x8] sm:$0xff] 0.0
        %266 = vst [vmem:[#allocation2 + $0x10] sm:$0xff] 0.0
        %267 = vst [vmem:[#allocation2 + $0x18] sm:$0xff] 0.0
        %268 = vst [vmem:[#allocation2 + $0x20] sm:$0xff] 0.0
        %269 = vst [vmem:[#allocation2 + $0x28] sm:$0xff] 0.0
        %270 = vst [vmem:[#allocation2 + $0x30] sm:$0xff] 0.0
        %271 = vst [vmem:[#allocation2 + $0x38] sm:$0xff] 0.0
        %272 = vst [vmem:[#allocation2 + $0x40] sm:$0xff] 0.0
        %273 = vst [vmem:[#allocation2 + $0x48] sm:$0xff] 0.0
        %274 = vst [vmem:[#allocation2 + $0x50] sm:$0xff] 0.0
        %275 = vst [vmem:[#allocation2 + $0x58] sm:$0xff] 0.0
        %276 = vst [vmem:[#allocation2 + $0x60] sm:$0xff] 0.0
        %277 = vst [vmem:[#allocation2 + $0x68] sm:$0xff] 0.0
        %278 = vst [vmem:[#allocation2 + $0x70] sm:$0xff] 0.0
        %279 = vst [vmem:[#allocation2 + $0x78] sm:$0xff] 0.0
        %280 = vst [vmem:[#allocation2 + $0x80] sm:$0xff] 0.0
        %281 = vst [vmem:[#allocation2 + $0x88] sm:$0xff] 0.0
        %282 = vst [vmem:[#allocation2 + $0x90] sm:$0xff] 0.0
        %283 = vst [vmem:[#allocation2 + $0x98] sm:$0xff] 0.0
        %284 = vst [vmem:[#allocation2 + $0xa0] sm:$0xff] 0.0
        %285 = vst [vmem:[#allocation2 + $0xa8] sm:$0xff] 0.0
        %286 = vst [vmem:[#allocation2 + $0xb0] sm:$0xff] 0.0
        %287 = vst [vmem:[#allocation2 + $0xb8] sm:$0xff] 0.0
        %288 = vst [vmem:[#allocation2 + $0xc0] sm:$0xff] 0.0
        %289 = vst [vmem:[#allocation2 + $0xc8] sm:$0xff] 0.0
        %290 = vst [vmem:[#allocation2 + $0xd0] sm:$0xff] 0.0
        %291 = vst [vmem:[#allocation2 + $0xd8] sm:$0xff] 0.0
        %292 = vst [vmem:[#allocation2 + $0xe0] sm:$0xff] 0.0
        %293 = vst [vmem:[#allocation2 + $0xe8] sm:$0xff] 0.0
        %294 = vst [vmem:[#allocation2 + $0xf0] sm:$0xff] 0.0
        %295 = vst [vmem:[#allocation2 + $0xf8] sm:$0xff] 0.0
      $region36: #{yolo_block_forward.13} parent=31 // pred_fallthru
        _
      %v296 = vld [vmem:[#allocation2] sm:$0xff]
      %v297 = vld [vmem:[#allocation2 + $0x8] sm:$0xff]
      %v298 = vld [vmem:[#allocation2 + $0x10] sm:$0xff]
      %v299 = vld [vmem:[#allocation2 + $0x18] sm:$0xff]
      %v300 = vld [vmem:[#allocation2 + $0x20] sm:$0xff]
      %v301 = vld [vmem:[#allocation2 + $0x28] sm:$0xff]
      %v302 = vld [vmem:[#allocation2 + $0x30] sm:$0xff]
      %v303 = vld [vmem:[#allocation2 + $0x38] sm:$0xff]
      %v304 = vld [vmem:[#allocation2 + $0x40] sm:$0xff]
      %v305 = vld [vmem:[#allocation2 + $0x48] sm:$0xff]
      %v306 = vld [vmem:[#allocation2 + $0x50] sm:$0xff]
      %v307 = vld [vmem:[#allocation2 + $0x58] sm:$0xff]
      %v308 = vld [vmem:[#allocation2 + $0x60] sm:$0xff]
      %v309 = vld [vmem:[#allocation2 + $0x68] sm:$0xff]
      %v310 = vld [vmem:[#allocation2 + $0x70] sm:$0xff]
      %v311 = vld [vmem:[#allocation2 + $0x78] sm:$0xff]
      %v312 = vld [vmem:[#allocation2 + $0x80] sm:$0xff]
      %v313 = vld [vmem:[#allocation2 + $0x88] sm:$0xff]
      %v314 = vld [vmem:[#allocation2 + $0x90] sm:$0xff]
      %v315 = vld [vmem:[#allocation2 + $0x98] sm:$0xff]
      %v316 = vld [vmem:[#allocation2 + $0xa0] sm:$0xff]
      %v317 = vld [vmem:[#allocation2 + $0xa8] sm:$0xff]
      %v318 = vld [vmem:[#allocation2 + $0xb0] sm:$0xff]
      %v319 = vld [vmem:[#allocation2 + $0xb8] sm:$0xff]
      %v320 = vld [vmem:[#allocation2 + $0xc0] sm:$0xff]
      %v321 = vld [vmem:[#allocation2 + $0xc8] sm:$0xff]
      %v322 = vld [vmem:[#allocation2 + $0xd0] sm:$0xff]
      %v323 = vld [vmem:[#allocation2 + $0xd8] sm:$0xff]
      %v324 = vld [vmem:[#allocation2 + $0xe0] sm:$0xff]
      %v325 = vld [vmem:[#allocation2 + $0xe8] sm:$0xff]
      %v326 = vld [vmem:[#allocation2 + $0xf0] sm:$0xff]
      %v327 = vld [vmem:[#allocation2 + $0xf8] sm:$0xff]
      %v328 = vld [vmem:[%s236] sm:$0xf]
      %v329 = vld [vmem:[%s236 + $0x4] sm:$0xf]
      %v330 = vld [vmem:[%s236 + $0x8] sm:$0xf]
      %v331 = vld [vmem:[%s236 + $0xc] sm:$0xf]
      %v332 = vld [vmem:[%s236 + $0x10] sm:$0xf]
      %v333 = vld [vmem:[%s236 + $0x14] sm:$0xf]
      %v334 = vld [vmem:[%s236 + $0x18] sm:$0xf]
      %v335 = vld [vmem:[%s236 + $0x1c] sm:$0xf]
      %v336 = vld [vmem:[%s236 + $0x20] sm:$0xf]
      %v337 = vld [vmem:[%s236 + $0x24] sm:$0xf]
      %v338 = vld [vmem:[%s236 + $0x28] sm:$0xf]
      %v339 = vld [vmem:[%s236 + $0x2c] sm:$0xf]
      %v340 = vld [vmem:[%s236 + $0x30] sm:$0xf]
      %v341 = vld [vmem:[%s236 + $0x34] sm:$0xf]
      %v342 = vld [vmem:[%s236 + $0x38] sm:$0xf]
      %v343 = vld [vmem:[%s236 + $0x3c] sm:$0xf]
      %v344 = vld [vmem:[%s236 + $0x40] sm:$0xf]
      %v345 = vld [vmem:[%s236 + $0x44] sm:$0xf]
      %v346 = vld [vmem:[%s236 + $0x48] sm:$0xf]
      %v347 = vld [vmem:[%s236 + $0x4c] sm:$0xf]
      %v348 = vld [vmem:[%s236 + $0x50] sm:$0xf]
      %v349 = vld [vmem:[%s236 + $0x54] sm:$0xf]
      %v350 = vld [vmem:[%s236 + $0x58] sm:$0xf]
      %v351 = vld [vmem:[%s236 + $0x5c] sm:$0xf]
      %v352 = vld [vmem:[%s236 + $0x60] sm:$0xf]
      %v353 = vld [vmem:[%s236 + $0x64] sm:$0xf]
      %v354 = vld [vmem:[%s236 + $0x68] sm:$0xf]
      %v355 = vld [vmem:[%s236 + $0x6c] sm:$0xf]
      %v356 = vld [vmem:[%s236 + $0x70] sm:$0xf]
      %v357 = vld [vmem:[%s236 + $0x74] sm:$0xf]
      %v358 = vld [vmem:[%s236 + $0x78] sm:$0xf]
      %v359 = vld [vmem:[%s236 + $0x7c] sm:$0xf]
      %v360 = vld [vmem:[%s245] sm:$0xf]
      %v361 = vld [vmem:[%s245 + $0x4] sm:$0xf]
      %v362 = vld [vmem:[%s245 + $0x8] sm:$0xf]
      %v363 = vld [vmem:[%s245 + $0xc] sm:$0xf]
      %v364 = vld [vmem:[%s245 + $0x10] sm:$0xf]
      %v365 = vld [vmem:[%s245 + $0x14] sm:$0xf]
      %v366 = vld [vmem:[%s245 + $0x18] sm:$0xf]
      %v367 = vld [vmem:[%s245 + $0x1c] sm:$0xf]
      %v368 = vld [vmem:[%s245 + $0x20] sm:$0xf]
      %v369 = vld [vmem:[%s245 + $0x24] sm:$0xf]
      %v370 = vld [vmem:[%s245 + $0x28] sm:$0xf]
      %v371 = vld [vmem:[%s245 + $0x2c] sm:$0xf]
      %v372 = vld [vmem:[%s245 + $0x30] sm:$0xf]
      %v373 = vld [vmem:[%s245 + $0x34] sm:$0xf]
      %v374 = vld [vmem:[%s245 + $0x38] sm:$0xf]
      %v375 = vld [vmem:[%s245 + $0x3c] sm:$0xf]
      %v408 = vunpack.c.l.b16 %v328
      %v409 = vunpack.c.l.b16 %v329
      %v410 = vunpack.c.l.b16 %v330
      %v411 = vunpack.c.l.b16 %v331
      %v412 = vunpack.c.l.b16 %v332
      %v413 = vunpack.c.l.b16 %v333
      %v414 = vunpack.c.l.b16 %v334
      %v415 = vunpack.c.l.b16 %v335
      %v416 = vunpack.c.l.b16 %v336
      %v417 = vunpack.c.l.b16 %v337
      %v418 = vunpack.c.l.b16 %v338
      %v419 = vunpack.c.l.b16 %v339
      %v420 = vunpack.c.l.b16 %v340
      %v421 = vunpack.c.l.b16 %v341
      %v422 = vunpack.c.l.b16 %v342
      %v423 = vunpack.c.l.b16 %v343
      %v424 = vunpack.c.l.b16 %v344
      %v425 = vunpack.c.l.b16 %v345
      %v426 = vunpack.c.l.b16 %v346
      %v427 = vunpack.c.l.b16 %v347
      %v428 = vunpack.c.l.b16 %v348
      %v429 = vunpack.c.l.b16 %v349
      %v430 = vunpack.c.l.b16 %v350
      %v431 = vunpack.c.l.b16 %v351
      %v432 = vunpack.c.l.b16 %v352
      %v433 = vunpack.c.l.b16 %v353
      %v434 = vunpack.c.l.b16 %v354
      %v435 = vunpack.c.l.b16 %v355
      %v436 = vunpack.c.l.b16 %v356
      %v437 = vunpack.c.l.b16 %v357
      %v438 = vunpack.c.l.b16 %v358
      %v439 = vunpack.c.l.b16 %v359
      %v440 = vpack.c.b16 %v409, %v408
      %v441 = vpack.c.b16 %v411, %v410
      %v442 = vpack.c.b16 %v413, %v412
      %v443 = vpack.c.b16 %v415, %v414
      %v444 = vpack.c.b16 %v417, %v416
      %v445 = vpack.c.b16 %v419, %v418
      %v446 = vpack.c.b16 %v421, %v420
      %v447 = vpack.c.b16 %v423, %v422
      %v448 = vpack.c.b16 %v425, %v424
      %v449 = vpack.c.b16 %v427, %v426
      %v450 = vpack.c.b16 %v429, %v428
      %v451 = vpack.c.b16 %v431, %v430
      %v452 = vpack.c.b16 %v433, %v432
      %v453 = vpack.c.b16 %v435, %v434
      %v454 = vpack.c.b16 %v437, %v436
      %v455 = vpack.c.b16 %v439, %v438
      %v488 = vunpack.c.l.b16 %v360
      %v489 = vunpack.c.l.b16 %v361
      %v490 = vunpack.c.l.b16 %v362
      %v491 = vunpack.c.l.b16 %v363
      %v492 = vunpack.c.l.b16 %v364
      %v493 = vunpack.c.l.b16 %v365
      %v494 = vunpack.c.l.b16 %v366
      %v495 = vunpack.c.l.b16 %v367
      %v496 = vunpack.c.l.b16 %v368
      %v497 = vunpack.c.l.b16 %v369
      %v498 = vunpack.c.l.b16 %v370
      %v499 = vunpack.c.l.b16 %v371
      %v500 = vunpack.c.l.b16 %v372
      %v501 = vunpack.c.l.b16 %v373
      %v502 = vunpack.c.l.b16 %v374
      %v503 = vunpack.c.l.b16 %v375
      %v504 = vpack.c.b16 %v489, %v488
      %v505 = vpack.c.b16 %v491, %v490
      %v506 = vpack.c.b16 %v493, %v492
      %v507 = vpack.c.b16 %v495, %v494
      %v508 = vpack.c.b16 %v497, %v496
      %v509 = vpack.c.b16 %v499, %v498
      %v510 = vpack.c.b16 %v501, %v500
      %v511 = vpack.c.b16 %v503, %v502
      %520 = vmatprep.subr.bf16.mxu0 0
      %521 = vmatpush1.bf16.msra.mxu0 %v504
      %522 = vmatprep.subr.bf16.mxu0 0
      %523 = vmatpush1.bf16.msra.mxu0 %v505
      %524 = vmatprep.subr.bf16.mxu0 0
      %525 = vmatpush1.bf16.msra.mxu0 %v506
      %526 = vmatprep.subr.bf16.mxu0 0
      %527 = vmatpush1.bf16.msra.mxu0 %v507
      %528 = vmatprep.subr.bf16.mxu0 0
      %529 = vmatpush1.bf16.msra.mxu0 %v508
      %530 = vmatprep.subr.bf16.mxu0 0
      %531 = vmatpush1.bf16.msra.mxu0 %v509
      %532 = vmatprep.subr.bf16.mxu0 0
      %533 = vmatpush1.bf16.msra.mxu0 %v510
      %534 = vmatprep.subr.bf16.mxu0 0
      %535 = vmatpush1.bf16.msra.mxu0 %v511
      %536 = vmatprep.subr.bf16.mxu0 0
      %537 = vmatpush1.bf16.msra.mxu0 0
      %538 = vmatprep.subr.bf16.mxu0 0
      %539 = vmatpush1.bf16.msra.mxu0 0
      %540 = vmatprep.subr.bf16.mxu0 0
      %541 = vmatpush1.bf16.msra.mxu0 0
      %542 = vmatprep.subr.bf16.mxu0 0
      %543 = vmatpush1.bf16.msra.mxu0 0
      %544 = vmatprep.subr.bf16.mxu0 0
      %545 = vmatpush1.bf16.msra.mxu0 0
      %546 = vmatprep.subr.bf16.mxu0 0
      %547 = vmatpush1.bf16.msra.mxu0 0
      %548 = vmatprep.subr.bf16.mxu0 0
      %549 = vmatpush1.bf16.msra.mxu0 0
      %550 = vmatprep.subr.bf16.mxu0 0
      %551 = vmatpush1.bf16.msra.mxu0 0
      %552 = vmatprep.mubr.bf16.mxu0 0
      %553 = vmatmul.mubr.bf16.gmra.mrb[0].mxu0 %v440
      %v554 = vpop.f32.mrb[0].mxu0
      %v555 = vadd.f32 0.0, %v554
      %v556 = vpop.f32.mrb[0].mxu0
      %v557 = vpop.f32.mrb[0].mxu0
      %v558 = vadd.f32 0.0, %v557
      %v559 = vpop.f32.mrb[0].mxu0
      %560 = vmatprep.mubr.bf16.mxu0 0
      %561 = vmatmul.mubr.bf16.gmra.mrb[0].mxu0 %v441
      %v562 = vpop.f32.mrb[0].mxu0
      %v563 = vadd.f32 0.0, %v562
      %v564 = vpop.f32.mrb[0].mxu0
      %v565 = vpop.f32.mrb[0].mxu0
      %v566 = vadd.f32 0.0, %v565
      %v567 = vpop.f32.mrb[0].mxu0
      %568 = vmatprep.mubr.bf16.mxu0 0
      %569 = vmatmul.mubr.bf16.gmra.mrb[0].mxu0 %v442
      %v570 = vpop.f32.mrb[0].mxu0
      %v571 = vadd.f32 0.0, %v570
      %v572 = vpop.f32.mrb[0].mxu0
      %v573 = vpop.f32.mrb[0].mxu0
      %v574 = vadd.f32 0.0, %v573
      %v575 = vpop.f32.mrb[0].mxu0
      %576 = vmatprep.mubr.bf16.mxu0 0
      %577 = vmatmul.mubr.bf16.gmra.mrb[0].mxu0 %v443
      %v578 = vpop.f32.mrb[0].mxu0
      %v579 = vadd.f32 0.0, %v578
      %v580 = vpop.f32.mrb[0].mxu0
      %v581 = vpop.f32.mrb[0].mxu0
      %v582 = vadd.f32 0.0, %v581
      %v583 = vpop.f32.mrb[0].mxu0
      %584 = vmatprep.mubr.bf16.mxu0 0
      %585 = vmatmul.mubr.bf16.gmra.mrb[0].mxu0 %v444
      %v586 = vpop.f32.mrb[0].mxu0
      %v587 = vadd.f32 0.0, %v586
      %v588 = vpop.f32.mrb[0].mxu0
      %v589 = vpop.f32.mrb[0].mxu0
      %v590 = vadd.f32 0.0, %v589
      %v591 = vpop.f32.mrb[0].mxu0
      %592 = vmatprep.mubr.bf16.mxu0 0
      %593 = vmatmul.mubr.bf16.gmra.mrb[0].mxu0 %v445
      %v594 = vpop.f32.mrb[0].mxu0
      %v595 = vadd.f32 0.0, %v594
      %v596 = vpop.f32.mrb[0].mxu0
      %v597 = vpop.f32.mrb[0].mxu0
      %v598 = vadd.f32 0.0, %v597
      %v599 = vpop.f32.mrb[0].mxu0
      %600 = vmatprep.mubr.bf16.mxu0 0
      %601 = vmatmul.mubr.bf16.gmra.mrb[0].mxu0 %v446
      %v602 = vpop.f32.mrb[0].mxu0
      %v603 = vadd.f32 0.0, %v602
      %v604 = vpop.f32.mrb[0].mxu0
      %v605 = vpop.f32.mrb[0].mxu0
      %v606 = vadd.f32 0.0, %v605
      %v607 = vpop.f32.mrb[0].mxu0
      %608 = vmatprep.mubr.bf16.mxu0 0
      %609 = vmatmul.mubr.bf16.gmra.mrb[0].mxu0 %v447
      %v610 = vpop.f32.mrb[0].mxu0
      %v611 = vadd.f32 0.0, %v610
      %v612 = vpop.f32.mrb[0].mxu0
      %v613 = vpop.f32.mrb[0].mxu0
      %v614 = vadd.f32 0.0, %v613
      %v615 = vpop.f32.mrb[0].mxu0
      %616 = vmatprep.mubr.bf16.mxu0 0
      %617 = vmatmul.mubr.bf16.gmra.mrb[0].mxu0 %v448
      %v618 = vpop.f32.mrb[0].mxu0
      %v619 = vadd.f32 0.0, %v618
      %v620 = vpop.f32.mrb[0].mxu0
      %v621 = vpop.f32.mrb[0].mxu0
      %v622 = vadd.f32 0.0, %v621
      %v623 = vpop.f32.mrb[0].mxu0
      %624 = vmatprep.mubr.bf16.mxu0 0
      %625 = vmatmul.mubr.bf16.gmra.mrb[0].mxu0 %v449
      %v626 = vpop.f32.mrb[0].mxu0
      %v627 = vadd.f32 0.0, %v626
      %v628 = vpop.f32.mrb[0].mxu0
      %v629 = vpop.f32.mrb[0].mxu0
      %v630 = vadd.f32 0.0, %v629
      %v631 = vpop.f32.mrb[0].mxu0
      %632 = vmatprep.mubr.bf16.mxu0 0
      %633 = vmatmul.mubr.bf16.gmra.mrb[0].mxu0 %v450
      %v634 = vpop.f32.mrb[0].mxu0
      %v635 = vadd.f32 0.0, %v634
      %v636 = vpop.f32.mrb[0].mxu0
      %v637 = vpop.f32.mrb[0].mxu0
      %v638 = vadd.f32 0.0, %v637
      %v639 = vpop.f32.mrb[0].mxu0
      %640 = vmatprep.mubr.bf16.mxu0 0
      %641 = vmatmul.mubr.bf16.gmra.mrb[0].mxu0 %v451
      %v642 = vpop.f32.mrb[0].mxu0
      %v643 = vadd.f32 0.0, %v642
      %v644 = vpop.f32.mrb[0].mxu0
      %v645 = vpop.f32.mrb[0].mxu0
      %v646 = vadd.f32 0.0, %v645
      %v647 = vpop.f32.mrb[0].mxu0
      %648 = vmatprep.mubr.bf16.mxu0 0
      %649 = vmatmul.mubr.bf16.gmra.mrb[0].mxu0 %v452
      %v650 = vpop.f32.mrb[0].mxu0
      %v651 = vadd.f32 0.0, %v650
      %v652 = vpop.f32.mrb[0].mxu0
      %v653 = vpop.f32.mrb[0].mxu0
      %v654 = vadd.f32 0.0, %v653
      %v655 = vpop.f32.mrb[0].mxu0
      %656 = vmatprep.mubr.bf16.mxu0 0
      %657 = vmatmul.mubr.bf16.gmra.mrb[0].mxu0 %v453
      %v658 = vpop.f32.mrb[0].mxu0
      %v659 = vadd.f32 0.0, %v658
      %v660 = vpop.f32.mrb[0].mxu0
      %v661 = vpop.f32.mrb[0].mxu0
      %v662 = vadd.f32 0.0, %v661
      %v663 = vpop.f32.mrb[0].mxu0
      %664 = vmatprep.mubr.bf16.mxu0 0
      %665 = vmatmul.mubr.bf16.gmra.mrb[0].mxu0 %v454
      %v666 = vpop.f32.mrb[0].mxu0
      %v667 = vadd.f32 0.0, %v666
      %v668 = vpop.f32.mrb[0].mxu0
      %v669 = vpop.f32.mrb[0].mxu0
      %v670 = vadd.f32 0.0, %v669
      %v671 = vpop.f32.mrb[0].mxu0
      %672 = vmatprep.mubr.bf16.mxu0 0
      %673 = vmatmul.mubr.bf16.gmra.mrb[0].mxu0 %v455
      %v674 = vpop.f32.mrb[0].mxu0
      %v675 = vadd.f32 0.0, %v674
      %v676 = vpop.f32.mrb[0].mxu0
      %v677 = vpop.f32.mrb[0].mxu0
      %v678 = vadd.f32 0.0, %v677
      %v679 = vpop.f32.mrb[0].mxu0
      %680 = vdwg.mxu0
      %v681 = vadd.f32 %v296, %v555
      %v682 = vadd.f32 %v297, %v558
      %v683 = vadd.f32 %v298, %v563
      %v684 = vadd.f32 %v299, %v566
      %v685 = vadd.f32 %v300, %v571
      %v686 = vadd.f32 %v301, %v574
      %v687 = vadd.f32 %v302, %v579
      %v688 = vadd.f32 %v303, %v582
      %v689 = vadd.f32 %v304, %v587
      %v690 = vadd.f32 %v305, %v590
      %v691 = vadd.f32 %v306, %v595
      %v692 = vadd.f32 %v307, %v598
      %v693 = vadd.f32 %v308, %v603
      %v694 = vadd.f32 %v309, %v606
      %v695 = vadd.f32 %v310, %v611
      %v696 = vadd.f32 %v311, %v614
      %v697 = vadd.f32 %v312, %v619
      %v698 = vadd.f32 %v313, %v622
      %v699 = vadd.f32 %v314, %v627
      %v700 = vadd.f32 %v315, %v630
      %v701 = vadd.f32 %v316, %v635
      %v702 = vadd.f32 %v317, %v638
      %v703 = vadd.f32 %v318, %v643
      %v704 = vadd.f32 %v319, %v646
      %v705 = vadd.f32 %v320, %v651
      %v706 = vadd.f32 %v321, %v654
      %v707 = vadd.f32 %v322, %v659
      %v708 = vadd.f32 %v323, %v662
      %v709 = vadd.f32 %v324, %v667
      %v710 = vadd.f32 %v325, %v670
      %v711 = vadd.f32 %v326, %v675
      %v712 = vadd.f32 %v327, %v678
      %713 = vst [vmem:[#allocation2] sm:$0xff] %v681
      %714 = vst [vmem:[#allocation2 + $0x8] sm:$0xff] %v682
      %715 = vst [vmem:[#allocation2 + $0x10] sm:$0xff] %v683
      %716 = vst [vmem:[#allocation2 + $0x18] sm:$0xff] %v684
      %717 = vst [vmem:[#allocation2 + $0x20] sm:$0xff] %v685
      %718 = vst [vmem:[#allocation2 + $0x28] sm:$0xff] %v686
      %719 = vst [vmem:[#allocation2 + $0x30] sm:$0xff] %v687
      %720 = vst [vmem:[#allocation2 + $0x38] sm:$0xff] %v688
      %721 = vst [vmem:[#allocation2 + $0x40] sm:$0xff] %v689
      %722 = vst [vmem:[#allocation2 + $0x48] sm:$0xff] %v690
      %723 = vst [vmem:[#allocation2 + $0x50] sm:$0xff] %v691
      %724 = vst [vmem:[#allocation2 + $0x58] sm:$0xff] %v692
      %725 = vst [vmem:[#allocation2 + $0x60] sm:$0xff] %v693
      %726 = vst [vmem:[#allocation2 + $0x68] sm:$0xff] %v694
      %727 = vst [vmem:[#allocation2 + $0x70] sm:$0xff] %v695
      %728 = vst [vmem:[#allocation2 + $0x78] sm:$0xff] %v696
      %729 = vst [vmem:[#allocation2 + $0x80] sm:$0xff] %v697
      %730 = vst [vmem:[#allocation2 + $0x88] sm:$0xff] %v698
      %731 = vst [vmem:[#allocation2 + $0x90] sm:$0xff] %v699
      %732 = vst [vmem:[#allocation2 + $0x98] sm:$0xff] %v700
      %733 = vst [vmem:[#allocation2 + $0xa0] sm:$0xff] %v701
      %734 = vst [vmem:[#allocation2 + $0xa8] sm:$0xff] %v702
      %735 = vst [vmem:[#allocation2 + $0xb0] sm:$0xff] %v703
      %736 = vst [vmem:[#allocation2 + $0xb8] sm:$0xff] %v704
      %737 = vst [vmem:[#allocation2 + $0xc0] sm:$0xff] %v705
      %738 = vst [vmem:[#allocation2 + $0xc8] sm:$0xff] %v706
      %739 = vst [vmem:[#allocation2 + $0xd0] sm:$0xff] %v707
      %740 = vst [vmem:[#allocation2 + $0xd8] sm:$0xff] %v708
      %741 = vst [vmem:[#allocation2 + $0xe0] sm:$0xff] %v709
      %742 = vst [vmem:[#allocation2 + $0xe8] sm:$0xff] %v710
      %743 = vst [vmem:[#allocation2 + $0xf0] sm:$0xff] %v711
      %744 = vst [vmem:[#allocation2 + $0xf8] sm:$0xff] %v712
      // Predicated region
      $region37: #{yolo_block_forward.13} parent=31 // pred_check
        %p745 = pneg %p260
      $region38: #{yolo_block_forward.13} parent=31 // pred_check_branch
        %747 = sbr.rel (%p745) target = $region40
      $region39: #{yolo_block_forward.13} parent=31 // pred_region
        %v748 = vld [vmem:[#allocation2] sm:$0xff]
        %v749 = vld [vmem:[#allocation2 + $0x8] sm:$0xff]
        %v750 = vld [vmem:[#allocation2 + $0x10] sm:$0xff]
        %v751 = vld [vmem:[#allocation2 + $0x18] sm:$0xff]
        %v752 = vld [vmem:[#allocation2 + $0x20] sm:$0xff]
        %v753 = vld [vmem:[#allocation2 + $0x28] sm:$0xff]
        %v754 = vld [vmem:[#allocation2 + $0x30] sm:$0xff]
        %v755 = vld [vmem:[#allocation2 + $0x38] sm:$0xff]
        %v756 = vld [vmem:[#allocation2 + $0x40] sm:$0xff]
        %v757 = vld [vmem:[#allocation2 + $0x48] sm:$0xff]
        %v758 = vld [vmem:[#allocation2 + $0x50] sm:$0xff]
        %v759 = vld [vmem:[#allocation2 + $0x58] sm:$0xff]
        %v760 = vld [vmem:[#allocation2 + $0x60] sm:$0xff]
        %v761 = vld [vmem:[#allocation2 + $0x68] sm:$0xff]
        %v762 = vld [vmem:[#allocation2 + $0x70] sm:$0xff]
        %v763 = vld [vmem:[#allocation2 + $0x78] sm:$0xff]
        %v764 = vld [vmem:[#allocation2 + $0x80] sm:$0xff]
        %v765 = vld [vmem:[#allocation2 + $0x88] sm:$0xff]
        %v766 = vld [vmem:[#allocation2 + $0x90] sm:$0xff]
        %v767 = vld [vmem:[#allocation2 + $0x98] sm:$0xff]
        %v768 = vld [vmem:[#allocation2 + $0xa0] sm:$0xff]
        %v769 = vld [vmem:[#allocation2 + $0xa8] sm:$0xff]
        %v770 = vld [vmem:[#allocation2 + $0xb0] sm:$0xff]
        %v771 = vld [vmem:[#allocation2 + $0xb8] sm:$0xff]
        %v772 = vld [vmem:[#allocation2 + $0xc0] sm:$0xff]
        %v773 = vld [vmem:[#allocation2 + $0xc8] sm:$0xff]
        %v774 = vld [vmem:[#allocation2 + $0xd0] sm:$0xff]
        %v775 = vld [vmem:[#allocation2 + $0xd8] sm:$0xff]
        %v776 = vld [vmem:[#allocation2 + $0xe0] sm:$0xff]
        %v777 = vld [vmem:[#allocation2 + $0xe8] sm:$0xff]
        %v778 = vld [vmem:[#allocation2 + $0xf0] sm:$0xff]
        %v779 = vld [vmem:[#allocation2 + $0xf8] sm:$0xff]
        %v780 = vld [vmem:[%s249] sm:$0x1]
        %v782 = vlaneseq
        %v783 = vshrl.u32 %v782, 7
        %v784 = vsub.s32 0, %v783
        %v785 = vrot.slane %v780, %v784
        %v787 = vadd.f32 %v748, %v785
        %v788 = vadd.f32 %v749, %v785
        %v789 = vadd.f32 %v750, %v785
        %v790 = vadd.f32 %v751, %v785
        %v791 = vadd.f32 %v752, %v785
        %v792 = vadd.f32 %v753, %v785
        %v793 = vadd.f32 %v754, %v785
        %v794 = vadd.f32 %v755, %v785
        %v795 = vadd.f32 %v756, %v785
        %v796 = vadd.f32 %v757, %v785
        %v797 = vadd.f32 %v758, %v785
        %v798 = vadd.f32 %v759, %v785
        %v799 = vadd.f32 %v760, %v785
        %v800 = vadd.f32 %v761, %v785
        %v801 = vadd.f32 %v762, %v785
        %v802 = vadd.f32 %v763, %v785
        %v803 = vadd.f32 %v764, %v785
        %v804 = vadd.f32 %v765, %v785
        %v805 = vadd.f32 %v766, %v785
        %v806 = vadd.f32 %v767, %v785
        %v807 = vadd.f32 %v768, %v785
        %v808 = vadd.f32 %v769, %v785
        %v809 = vadd.f32 %v770, %v785
        %v810 = vadd.f32 %v771, %v785
        %v811 = vadd.f32 %v772, %v785
        %v812 = vadd.f32 %v773, %v785
        %v813 = vadd.f32 %v774, %v785
        %v814 = vadd.f32 %v775, %v785
        %v815 = vadd.f32 %v776, %v785
        %v816 = vadd.f32 %v777, %v785
        %v817 = vadd.f32 %v778, %v785
        %v818 = vadd.f32 %v779, %v785
        %vm819 = vcmp.ge.f32.partialorder %v787, 0.0
        %vm820 = vcmp.ge.f32.partialorder %v788, 0.0
        %vm821 = vcmp.ge.f32.partialorder %v789, 0.0
        %vm822 = vcmp.ge.f32.partialorder %v790, 0.0
        %vm823 = vcmp.ge.f32.partialorder %v791, 0.0
        %vm824 = vcmp.ge.f32.partialorder %v792, 0.0
        %vm825 = vcmp.ge.f32.partialorder %v793, 0.0
        %vm826 = vcmp.ge.f32.partialorder %v794, 0.0
        %vm827 = vcmp.ge.f32.partialorder %v795, 0.0
        %vm828 = vcmp.ge.f32.partialorder %v796, 0.0
        %vm829 = vcmp.ge.f32.partialorder %v797, 0.0
        %vm830 = vcmp.ge.f32.partialorder %v798, 0.0
        %vm831 = vcmp.ge.f32.partialorder %v799, 0.0
        %vm832 = vcmp.ge.f32.partialorder %v800, 0.0
        %vm833 = vcmp.ge.f32.partialorder %v801, 0.0
        %vm834 = vcmp.ge.f32.partialorder %v802, 0.0
        %vm835 = vcmp.ge.f32.partialorder %v803, 0.0
        %vm836 = vcmp.ge.f32.partialorder %v804, 0.0
        %vm837 = vcmp.ge.f32.partialorder %v805, 0.0
        %vm838 = vcmp.ge.f32.partialorder %v806, 0.0
        %vm839 = vcmp.ge.f32.partialorder %v807, 0.0
        %vm840 = vcmp.ge.f32.partialorder %v808, 0.0
        %vm841 = vcmp.ge.f32.partialorder %v809, 0.0
        %vm842 = vcmp.ge.f32.partialorder %v810, 0.0
        %vm843 = vcmp.ge.f32.partialorder %v811, 0.0
        %vm844 = vcmp.ge.f32.partialorder %v812, 0.0
        %vm845 = vcmp.ge.f32.partialorder %v813, 0.0
        %vm846 = vcmp.ge.f32.partialorder %v814, 0.0
        %vm847 = vcmp.ge.f32.partialorder %v815, 0.0
        %vm848 = vcmp.ge.f32.partialorder %v816, 0.0
        %vm849 = vcmp.ge.f32.partialorder %v817, 0.0
        %vm850 = vcmp.ge.f32.partialorder %v818, 0.0
        %v851 = vmul.f32 %v787, 0.1
        %v852 = vmul.f32 %v788, 0.1
        %v853 = vmul.f32 %v789, 0.1
        %v854 = vmul.f32 %v790, 0.1
        %v855 = vmul.f32 %v791, 0.1
        %v856 = vmul.f32 %v792, 0.1
        %v857 = vmul.f32 %v793, 0.1
        %v858 = vmul.f32 %v794, 0.1
        %v859 = vmul.f32 %v795, 0.1
        %v860 = vmul.f32 %v796, 0.1
        %v861 = vmul.f32 %v797, 0.1
        %v862 = vmul.f32 %v798, 0.1
        %v863 = vmul.f32 %v799, 0.1
        %v864 = vmul.f32 %v800, 0.1
        %v865 = vmul.f32 %v801, 0.1
        %v866 = vmul.f32 %v802, 0.1
        %v867 = vmul.f32 %v803, 0.1
        %v868 = vmul.f32 %v804, 0.1
        %v869 = vmul.f32 %v805, 0.1
        %v870 = vmul.f32 %v806, 0.1
        %v871 = vmul.f32 %v807, 0.1
        %v872 = vmul.f32 %v808, 0.1
        %v873 = vmul.f32 %v809, 0.1
        %v874 = vmul.f32 %v810, 0.1
        %v875 = vmul.f32 %v811, 0.1
        %v876 = vmul.f32 %v812, 0.1
        %v877 = vmul.f32 %v813, 0.1
        %v878 = vmul.f32 %v814, 0.1
        %v879 = vmul.f32 %v815, 0.1
        %v880 = vmul.f32 %v816, 0.1
        %v881 = vmul.f32 %v817, 0.1
        %v882 = vmul.f32 %v818, 0.1
        %v883 = vsel %vm819, %v787, %v851
        %v884 = vsel %vm820, %v788, %v852
        %v885 = vsel %vm821, %v789, %v853
        %v886 = vsel %vm822, %v790, %v854
        %v887 = vsel %vm823, %v791, %v855
        %v888 = vsel %vm824, %v792, %v856
        %v889 = vsel %vm825, %v793, %v857
        %v890 = vsel %vm826, %v794, %v858
        %v891 = vsel %vm827, %v795, %v859
        %v892 = vsel %vm828, %v796, %v860
        %v893 = vsel %vm829, %v797, %v861
        %v894 = vsel %vm830, %v798, %v862
        %v895 = vsel %vm831, %v799, %v863
        %v896 = vsel %vm832, %v800, %v864
        %v897 = vsel %vm833, %v801, %v865
        %v898 = vsel %vm834, %v802, %v866
        %v899 = vsel %vm835, %v803, %v867
        %v900 = vsel %vm836, %v804, %v868
        %v901 = vsel %vm837, %v805, %v869
        %v902 = vsel %vm838, %v806, %v870
        %v903 = vsel %vm839, %v807, %v871
        %v904 = vsel %vm840, %v808, %v872
        %v905 = vsel %vm841, %v809, %v873
        %v906 = vsel %vm842, %v810, %v874
        %v907 = vsel %vm843, %v811, %v875
        %v908 = vsel %vm844, %v812, %v876
        %v909 = vsel %vm845, %v813, %v877
        %v910 = vsel %vm846, %v814, %v878
        %v911 = vsel %vm847, %v815, %v879
        %v912 = vsel %vm848, %v816, %v880
        %v913 = vsel %vm849, %v817, %v881
        %v914 = vsel %vm850, %v818, %v882
        %915 = vst [vmem:[%s257] sm:$0xff] %v883
        %916 = vst [vmem:[%s257 + $0x8] sm:$0xff] %v884
        %917 = vst [vmem:[%s257 + $0x10] sm:$0xff] %v885
        %918 = vst [vmem:[%s257 + $0x18] sm:$0xff] %v886
        %919 = vst [vmem:[%s257 + $0x20] sm:$0xff] %v887
        %920 = vst [vmem:[%s257 + $0x28] sm:$0xff] %v888
        %921 = vst [vmem:[%s257 + $0x30] sm:$0xff] %v889
        %922 = vst [vmem:[%s257 + $0x38] sm:$0xff] %v890
        %923 = vst [vmem:[%s257 + $0x40] sm:$0xff] %v891
        %924 = vst [vmem:[%s257 + $0x48] sm:$0xff] %v892
        %925 = vst [vmem:[%s257 + $0x50] sm:$0xff] %v893
        %926 = vst [vmem:[%s257 + $0x58] sm:$0xff] %v894
        %927 = vst [vmem:[%s257 + $0x60] sm:$0xff] %v895
        %928 = vst [vmem:[%s257 + $0x68] sm:$0xff] %v896
        %929 = vst [vmem:[%s257 + $0x70] sm:$0xff] %v897
        %930 = vst [vmem:[%s257 + $0x78] sm:$0xff] %v898
        %931 = vst [vmem:[%s257 + $0x80] sm:$0xff] %v899
        %932 = vst [vmem:[%s257 + $0x88] sm:$0xff] %v900
        %933 = vst [vmem:[%s257 + $0x90] sm:$0xff] %v901
        %934 = vst [vmem:[%s257 + $0x98] sm:$0xff] %v902
        %935 = vst [vmem:[%s257 + $0xa0] sm:$0xff] %v903
        %936 = vst [vmem:[%s257 + $0xa8] sm:$0xff] %v904
        %937 = vst [vmem:[%s257 + $0xb0] sm:$0xff] %v905
        %938 = vst [vmem:[%s257 + $0xb8] sm:$0xff] %v906
        %939 = vst [vmem:[%s257 + $0xc0] sm:$0xff] %v907
        %940 = vst [vmem:[%s257 + $0xc8] sm:$0xff] %v908
        %941 = vst [vmem:[%s257 + $0xd0] sm:$0xff] %v909
        %942 = vst [vmem:[%s257 + $0xd8] sm:$0xff] %v910
        %943 = vst [vmem:[%s257 + $0xe0] sm:$0xff] %v911
        %944 = vst [vmem:[%s257 + $0xe8] sm:$0xff] %v912
        %945 = vst [vmem:[%s257 + $0xf0] sm:$0xff] %v913
        %946 = vst [vmem:[%s257 + $0xf8] sm:$0xff] %v914
      $region40: #{yolo_block_forward.13} parent=31 // pred_fallthru
        _
      %s947 = smul.u32 32, %s19
      %p948 = scmp.lt.s32.totalorder %s947, 63
      %s949 = scalar_select %p948, %s947, 63
      %p950 = scmp.lt.s32.totalorder %s20, 0
      %s951 = scalar_select %p950, %s20, 0
      %s952 = sadd.s32 %s951, %s949
      %s953 = smul.addr %s952, 8
      %s954 = scalar_lea.vmem %s3, %s953
      // Predicated region
      $region41: #{yolo_block_forward.13} parent=31 // pred_check
        %p955 = pneg %p135
      $region42: #{yolo_block_forward.13} parent=31 // pred_check_branch
        %957 = sbr.rel (%p955) target = $region44
      $region43: #{yolo_block_forward.13} parent=31 // pred_region
        %s958 = smul.u32 32, %s19
      $region44: #{yolo_block_forward.13} parent=31 // pred_fallthru
        _
    $region32: #{yolo_block_forward.13} parent=5 // pred_fallthru
      _
    %p959 = scmp.le.s32.totalorder 2, %s9
    // Predicated region
    $region45: #{yolo_block_forward.13} parent=5 // pred_check
      %p960 = pneg %p959
    $region46: #{yolo_block_forward.13} parent=5 // pred_check_branch
      %962 = sbr.rel (%p960) target = $region48
    $region47: #{yolo_block_forward.13} parent=5 // pred_region
      %s963 = ssub.s32 %s9, 2
      // Predicated region
      $region49: #{yolo_block_forward.13} parent=47 // pred_check
        %p964 = pneg %p141
      $region50: #{yolo_block_forward.13} parent=47 // pred_check_branch
        %966 = sbr.rel (%p964) target = $region52
      $region51: #{yolo_block_forward.13} parent=47 // pred_region
        %s967 = smul.u32 32, %s22
        %p968 = scmp.lt.s32.totalorder %s967, 63
        %s969 = scalar_select %p968, %s967, 63
        %p970 = scmp.lt.s32.totalorder %s23, 0
        %s971 = scalar_select %p970, %s23, 0
        %s972 = sadd.s32 %s971, %s969
        %s973 = smul.addr %s972, 8
        %s974 = scalar_lea.vmem %s3, %s973
      $region52: #{yolo_block_forward.13} parent=47 // pred_fallthru
        _
    $region48: #{yolo_block_forward.13} parent=5 // pred_fallthru
      _
  $region6: #{yolo_block_forward.13} parent=0 // loop_footer
    %s13 = sadd.s32 1, %s9
  $region7: #{yolo_block_forward.13} parent=0 // loop_footer_branch
    %8 = sbr.rel target = $region3
  $region8: #{yolo_block_forward.13} parent=0 // loop_exit
    _

// kernel: yolo_block_forward.8
$region0: #{yolo_block_forward.8}
  #allocation0 [shape = 'u32[]', space=smem, size = 0x4, offset = 0x4, fixed_abs, tag = 'smem constant byte address 0x4 - core index']
  #allocation1 [shape = 'u32[144,128]{1,0:T(1,128)}', space=vmem, size = 0x12000, scoped, tag = 'internal scratch']
  #allocation2 [shape = 'bf16[2,18,18,128]{3,2,1,0:T(8,128)(2,1)}', space=vmem, size = 0x36000, scoped, tag = 'scratch operand']
  #allocation3 [shape = 'f32[2,256,128]{2,1,0:T(8,128)}', space=vmem, size = 0x40000, scoped, tag = 'scratch operand']
  %s0 = inlined_call_operand.vmem [shape: bf16[2,16,16,128], index: 0, kind: input, shape index: {}]
  %s1 = inlined_call_operand.vmem [shape: bf16[9,128,128], index: 1, kind: input, shape index: {}]
  %s2 = inlined_call_operand.vmem [shape: f32[1,128], index: 2, kind: input, shape index: {}]
  %s3 = inlined_call_operand.vmem [shape: bf16[2,16,16,128], index: 3, kind: output, shape index: {}]
  %s4 = sld [smem:[#allocation0]]
  $region30: #{yolo_block_forward.8} parent=0
    _
  %s6 = ssub.s32 1, %s4
  %s7 = scalar_select 0, %s6, %s4
  // Predicated region
  $region2: #{yolo_block_forward.8} parent=0 // pred_check
    _
  $region3: #{yolo_block_forward.8} parent=0 // pred_check_branch
    %9 = sbr.rel (0) target = $region5
  $region4: #{yolo_block_forward.8} parent=0 // pred_region
    _
  $region5: #{yolo_block_forward.8} parent=0 // pred_fallthru
    _
  // Predicated region
  $region6: #{yolo_block_forward.8} parent=0 // pred_check
    _
  $region7: #{yolo_block_forward.8} parent=0 // pred_check_branch
    %11 = sbr.rel (0) target = $region9
  $region8: #{yolo_block_forward.8} parent=0 // pred_region
    _
  $region9: #{yolo_block_forward.8} parent=0 // pred_fallthru
    _
  // Predicated region
  $region10: #{yolo_block_forward.8} parent=0 // pred_check
    _
  $region11: #{yolo_block_forward.8} parent=0 // pred_check_branch
    %13 = sbr.rel (0) target = $region13
  $region12: #{yolo_block_forward.8} parent=0 // pred_region
    _
  $region13: #{yolo_block_forward.8} parent=0 // pred_fallthru
    _
  %p15 = scmp.eq.s32.totalorder 0, 0
  // Predicated region
  $region14: #{yolo_block_forward.8} parent=0 // pred_check
    %p16 = pneg %p15
  $region15: #{yolo_block_forward.8} parent=0 // pred_check_branch
    %18 = sbr.rel (%p16) target = $region17
  $region16: #{yolo_block_forward.8} parent=0 // pred_region
    %19 = vst [vmem:[#allocation2] sm:$0xf] 0
    %20 = vst [vmem:[#allocation2 + $0x4] sm:$0xf] 0
    %21 = vst [vmem:[#allocation2 + $0x8] sm:$0x1] 0
    %22 = vst [vmem:[#allocation2 + $0xc] sm:$0xf] 0
    %23 = vst [vmem:[#allocation2 + $0x10] sm:$0xf] 0
    %24 = vst [vmem:[#allocation2 + $0x14] sm:$0x1] 0
    %25 = vst [vmem:[#allocation2 + $0x18] sm:$0xf] 0
    %26 = vst [vmem:[#allocation2 + $0x1c] sm:$0xf] 0
    %27 = vst [vmem:[#allocation2 + $0x20] sm:$0x1] 0
    %28 = vst [vmem:[#allocation2 + $0x24] sm:$0xf] 0
    %29 = vst [vmem:[#allocation2 + $0x28] sm:$0xf] 0
    %30 = vst [vmem:[#allocation2 + $0x2c] sm:$0x1] 0
    %31 = vst [vmem:[#allocation2 + $0x30] sm:$0xf] 0
    %32 = vst [vmem:[#allocation2 + $0x34] sm:$0xf] 0
    %33 = vst [vmem:[#allocation2 + $0x38] sm:$0x1] 0
    %34 = vst [vmem:[#allocation2 + $0x3c] sm:$0xf] 0
    %35 = vst [vmem:[#allocation2 + $0x40] sm:$0xf] 0
    %36 = vst [vmem:[#allocation2 + $0x44] sm:$0x1] 0
    %37 = vst [vmem:[#allocation2 + $0x48] sm:$0xf] 0
    %38 = vst [vmem:[#allocation2 + $0x4c] sm:$0xf] 0
    %39 = vst [vmem:[#allocation2 + $0x50] sm:$0x1] 0
    %40 = vst [vmem:[#allocation2 + $0x54] sm:$0xf] 0
    %41 = vst [vmem:[#allocation2 + $0x58] sm:$0xf] 0
    %42 = vst [vmem:[#allocation2 + $0x5c] sm:$0x1] 0
    %43 = vst [vmem:[#allocation2 + $0x60] sm:$0xf] 0
    %44 = vst [vmem:[#allocation2 + $0x64] sm:$0xf] 0
    %45 = vst [vmem:[#allocation2 + $0x68] sm:$0x1] 0
    %46 = vst [vmem:[#allocation2 + $0x6c] sm:$0xf] 0
    %47 = vst [vmem:[#allocation2 + $0x70] sm:$0xf] 0
    %48 = vst [vmem:[#allocation2 + $0x74] sm:$0x1] 0
    %49 = vst [vmem:[#allocation2 + $0x78] sm:$0xf] 0
    %50 = vst [vmem:[#allocation2 + $0x7c] sm:$0xf] 0
    %51 = vst [vmem:[#allocation2 + $0x80] sm:$0x1] 0
    %52 = vst [vmem:[#allocation2 + $0x84] sm:$0xf] 0
    %53 = vst [vmem:[#allocation2 + $0x88] sm:$0xf] 0
    %54 = vst [vmem:[#allocation2 + $0x8c] sm:$0x1] 0
    %55 = vst [vmem:[#allocation2 + $0x90] sm:$0xf] 0
    %56 = vst [vmem:[#allocation2 + $0x94] sm:$0xf] 0
    %57 = vst [vmem:[#allocation2 + $0x98] sm:$0x1] 0
    %58 = vst [vmem:[#allocation2 + $0x9c] sm:$0xf] 0
    %59 = vst [vmem:[#allocation2 + $0xa0] sm:$0xf] 0
    %60 = vst [vmem:[#allocation2 + $0xa4] sm:$0x1] 0
    %61 = vst [vmem:[#allocation2 + $0xa8] sm:$0xf] 0
    %62 = vst [vmem:[#allocation2 + $0xac] sm:$0xf] 0
    %63 = vst [vmem:[#allocation2 + $0xb0] sm:$0x1] 0
    %64 = vst [vmem:[#allocation2 + $0xb4] sm:$0xf] 0
    %65 = vst [vmem:[#allocation2 + $0xb8] sm:$0xf] 0
    %66 = vst [vmem:[#allocation2 + $0xbc] sm:$0x1] 0
    %67 = vst [vmem:[#allocation2 + $0xc0] sm:$0xf] 0
    %68 = vst [vmem:[#allocation2 + $0xc4] sm:$0xf] 0
    %69 = vst [vmem:[#allocation2 + $0xc8] sm:$0x1] 0
    %70 = vst [vmem:[#allocation2 + $0xcc] sm:$0xf] 0
    %71 = vst [vmem:[#allocation2 + $0xd0] sm:$0xf] 0
    %72 = vst [vmem:[#allocation2 + $0xd4] sm:$0x1] 0
    %73 = vst [vmem:[#allocation2 + $0xd8] sm:$0xf] 0
    %74 = vst [vmem:[#allocation2 + $0xdc] sm:$0xf] 0
    %75 = vst [vmem:[#allocation2 + $0xe0] sm:$0x1] 0
    %76 = vst [vmem:[#allocation2 + $0xe4] sm:$0xf] 0
    %77 = vst [vmem:[#allocation2 + $0xe8] sm:$0xf] 0
    %78 = vst [vmem:[#allocation2 + $0xec] sm:$0x1] 0
    %79 = vst [vmem:[#allocation2 + $0xf0] sm:$0xf] 0
    %80 = vst [vmem:[#allocation2 + $0xf4] sm:$0xf] 0
    %81 = vst [vmem:[#allocation2 + $0xf8] sm:$0x1] 0
    %82 = vst [vmem:[#allocation2 + $0xfc] sm:$0xf] 0
    %83 = vst [vmem:[#allocation2 + $0x100] sm:$0xf] 0
    %84 = vst [vmem:[#allocation2 + $0x104] sm:$0x1] 0
    %85 = vst [vmem:[#allocation2 + $0x108] sm:$0xf] 0
    %86 = vst [vmem:[#allocation2 + $0x10c] sm:$0xf] 0
    %87 = vst [vmem:[#allocation2 + $0x110] sm:$0x1] 0
    %88 = vst [vmem:[#allocation2 + $0x114] sm:$0xf] 0
    %89 = vst [vmem:[#allocation2 + $0x118] sm:$0xf] 0
    %90 = vst [vmem:[#allocation2 + $0x11c] sm:$0x1] 0
    %91 = vst [vmem:[#allocation2 + $0x120] sm:$0xf] 0
    %92 = vst [vmem:[#allocation2 + $0x124] sm:$0xf] 0
    %93 = vst [vmem:[#allocation2 + $0x128] sm:$0x1] 0
    %94 = vst [vmem:[#allocation2 + $0x12c] sm:$0xf] 0
    %95 = vst [vmem:[#allocation2 + $0x130] sm:$0xf] 0
    %96 = vst [vmem:[#allocation2 + $0x134] sm:$0x1] 0
    %97 = vst [vmem:[#allocation2 + $0x138] sm:$0xf] 0
    %98 = vst [vmem:[#allocation2 + $0x13c] sm:$0xf] 0
    %99 = vst [vmem:[#allocation2 + $0x140] sm:$0x1] 0
    %100 = vst [vmem:[#allocation2 + $0x144] sm:$0xf] 0
    %101 = vst [vmem:[#allocation2 + $0x148] sm:$0xf] 0
    %102 = vst [vmem:[#allocation2 + $0x14c] sm:$0x1] 0
    %103 = vst [vmem:[#allocation2 + $0x150] sm:$0xf] 0
    %104 = vst [vmem:[#allocation2 + $0x154] sm:$0xf] 0
    %105 = vst [vmem:[#allocation2 + $0x158] sm:$0x1] 0
    %106 = vst [vmem:[#allocation2 + $0x15c] sm:$0xf] 0
    %107 = vst [vmem:[#allocation2 + $0x160] sm:$0xf] 0
    %108 = vst [vmem:[#allocation2 + $0x164] sm:$0x1] 0
    %109 = vst [vmem:[#allocation2 + $0x168] sm:$0xf] 0
    %110 = vst [vmem:[#allocation2 + $0x16c] sm:$0xf] 0
    %111 = vst [vmem:[#allocation2 + $0x170] sm:$0x1] 0
    %112 = vst [vmem:[#allocation2 + $0x174] sm:$0xf] 0
    %113 = vst [vmem:[#allocation2 + $0x178] sm:$0xf] 0
    %114 = vst [vmem:[#allocation2 + $0x17c] sm:$0x1] 0
    %115 = vst [vmem:[#allocation2 + $0x180] sm:$0xf] 0
    %116 = vst [vmem:[#allocation2 + $0x184] sm:$0xf] 0
    %117 = vst [vmem:[#allocation2 + $0x188] sm:$0x1] 0
    %118 = vst [vmem:[#allocation2 + $0x18c] sm:$0xf] 0
    %119 = vst [vmem:[#allocation2 + $0x190] sm:$0xf] 0
    %120 = vst [vmem:[#allocation2 + $0x194] sm:$0x1] 0
    %121 = vst [vmem:[#allocation2 + $0x198] sm:$0xf] 0
    %122 = vst [vmem:[#allocation2 + $0x19c] sm:$0xf] 0
    %123 = vst [vmem:[#allocation2 + $0x1a0] sm:$0x1] 0
    %124 = vst [vmem:[#allocation2 + $0x1a4] sm:$0xf] 0
    %125 = vst [vmem:[#allocation2 + $0x1a8] sm:$0xf] 0
    %126 = vst [vmem:[#allocation2 + $0x1ac] sm:$0x1] 0
    %127 = vst [vmem:[#allocation3] sm:$0xff] 0.0
    %128 = vst [vmem:[#allocation3 + $0x8] sm:$0xff] 0.0
    %129 = vst [vmem:[#allocation3 + $0x10] sm:$0xff] 0.0
    %130 = vst [vmem:[#allocation3 + $0x18] sm:$0xff] 0.0
    %131 = vst [vmem:[#allocation3 + $0x20] sm:$0xff] 0.0
    %132 = vst [vmem:[#allocation3 + $0x28] sm:$0xff] 0.0
    %133 = vst [vmem:[#allocation3 + $0x30] sm:$0xff] 0.0
    %134 = vst [vmem:[#allocation3 + $0x38] sm:$0xff] 0.0
    %135 = vst [vmem:[#allocation3 + $0x40] sm:$0xff] 0.0
    %136 = vst [vmem:[#allocation3 + $0x48] sm:$0xff] 0.0
    %137 = vst [vmem:[#allocation3 + $0x50] sm:$0xff] 0.0
    %138 = vst [vmem:[#allocation3 + $0x58] sm:$0xff] 0.0
    %139 = vst [vmem:[#allocation3 + $0x60] sm:$0xff] 0.0
    %140 = vst [vmem:[#allocation3 + $0x68] sm:$0xff] 0.0
    %141 = vst [vmem:[#allocation3 + $0x70] sm:$0xff] 0.0
    %142 = vst [vmem:[#allocation3 + $0x78] sm:$0xff] 0.0
    %143 = vst [vmem:[#allocation3 + $0x80] sm:$0xff] 0.0
    %144 = vst [vmem:[#allocation3 + $0x88] sm:$0xff] 0.0
    %145 = vst [vmem:[#allocation3 + $0x90] sm:$0xff] 0.0
    %146 = vst [vmem:[#allocation3 + $0x98] sm:$0xff] 0.0
    %147 = vst [vmem:[#allocation3 + $0xa0] sm:$0xff] 0.0
    %148 = vst [vmem:[#allocation3 + $0xa8] sm:$0xff] 0.0
    %149 = vst [vmem:[#allocation3 + $0xb0] sm:$0xff] 0.0
    %150 = vst [vmem:[#allocation3 + $0xb8] sm:$0xff] 0.0
    %151 = vst [vmem:[#allocation3 + $0xc0] sm:$0xff] 0.0
    %152 = vst [vmem:[#allocation3 + $0xc8] sm:$0xff] 0.0
    %153 = vst [vmem:[#allocation3 + $0xd0] sm:$0xff] 0.0
    %154 = vst [vmem:[#allocation3 + $0xd8] sm:$0xff] 0.0
    %155 = vst [vmem:[#allocation3 + $0xe0] sm:$0xff] 0.0
    %156 = vst [vmem:[#allocation3 + $0xe8] sm:$0xff] 0.0
    %157 = vst [vmem:[#allocation3 + $0xf0] sm:$0xff] 0.0
    %158 = vst [vmem:[#allocation3 + $0xf8] sm:$0xff] 0.0
    %159 = vst [vmem:[#allocation3 + $0x100] sm:$0xff] 0.0
    %160 = vst [vmem:[#allocation3 + $0x108] sm:$0xff] 0.0
    %161 = vst [vmem:[#allocation3 + $0x110] sm:$0xff] 0.0
    %162 = vst [vmem:[#allocation3 + $0x118] sm:$0xff] 0.0
    %163 = vst [vmem:[#allocation3 + $0x120] sm:$0xff] 0.0
    %164 = vst [vmem:[#allocation3 + $0x128] sm:$0xff] 0.0
    %165 = vst [vmem:[#allocation3 + $0x130] sm:$0xff] 0.0
    %166 = vst [vmem:[#allocation3 + $0x138] sm:$0xff] 0.0
    %167 = vst [vmem:[#allocation3 + $0x140] sm:$0xff] 0.0
    %168 = vst [vmem:[#allocation3 + $0x148] sm:$0xff] 0.0
    %169 = vst [vmem:[#allocation3 + $0x150] sm:$0xff] 0.0
    %170 = vst [vmem:[#allocation3 + $0x158] sm:$0xff] 0.0
    %171 = vst [vmem:[#allocation3 + $0x160] sm:$0xff] 0.0
    %172 = vst [vmem:[#allocation3 + $0x168] sm:$0xff] 0.0
    %173 = vst [vmem:[#allocation3 + $0x170] sm:$0xff] 0.0
    %174 = vst [vmem:[#allocation3 + $0x178] sm:$0xff] 0.0
    %175 = vst [vmem:[#allocation3 + $0x180] sm:$0xff] 0.0
    %176 = vst [vmem:[#allocation3 + $0x188] sm:$0xff] 0.0
    %177 = vst [vmem:[#allocation3 + $0x190] sm:$0xff] 0.0
    %178 = vst [vmem:[#allocation3 + $0x198] sm:$0xff] 0.0
    %179 = vst [vmem:[#allocation3 + $0x1a0] sm:$0xff] 0.0
    %180 = vst [vmem:[#allocation3 + $0x1a8] sm:$0xff] 0.0
    %181 = vst [vmem:[#allocation3 + $0x1b0] sm:$0xff] 0.0
    %182 = vst [vmem:[#allocation3 + $0x1b8] sm:$0xff] 0.0
    %183 = vst [vmem:[#allocation3 + $0x1c0] sm:$0xff] 0.0
    %184 = vst [vmem:[#allocation3 + $0x1c8] sm:$0xff] 0.0
    %185 = vst [vmem:[#allocation3 + $0x1d0] sm:$0xff] 0.0
    %186 = vst [vmem:[#allocation3 + $0x1d8] sm:$0xff] 0.0
    %187 = vst [vmem:[#allocation3 + $0x1e0] sm:$0xff] 0.0
    %188 = vst [vmem:[#allocation3 + $0x1e8] sm:$0xff] 0.0
    %189 = vst [vmem:[#allocation3 + $0x1f0] sm:$0xff] 0.0
    %190 = vst [vmem:[#allocation3 + $0x1f8] sm:$0xff] 0.0
  $region17: #{yolo_block_forward.8} parent=0 // pred_fallthru
    _
  %v191 = vld [vmem:[%s0] sm:$0xf]
  %v192 = vld [vmem:[%s0 + $0x4] sm:$0xf]
  %v193 = vld [vmem:[%s0 + $0x8] sm:$0xf]
  %v194 = vld [vmem:[%s0 + $0xc] sm:$0xf]
  %v195 = vld [vmem:[%s0 + $0x10] sm:$0xf]
  %v196 = vld [vmem:[%s0 + $0x14] sm:$0xf]
  %v197 = vld [vmem:[%s0 + $0x18] sm:$0xf]
  %v198 = vld [vmem:[%s0 + $0x1c] sm:$0xf]
  %v199 = vld [vmem:[%s0 + $0x20] sm:$0xf]
  %v200 = vld [vmem:[%s0 + $0x24] sm:$0xf]
  %v201 = vld [vmem:[%s0 + $0x28] sm:$0xf]
  %v202 = vld [vmem:[%s0 + $0x2c] sm:$0xf]
  %v203 = vld [vmem:[%s0 + $0x30] sm:$0xf]
  %v204 = vld [vmem:[%s0 + $0x34] sm:$0xf]
  %v205 = vld [vmem:[%s0 + $0x38] sm:$0xf]
  %v206 = vld [vmem:[%s0 + $0x3c] sm:$0xf]
  %v207 = vld [vmem:[%s0 + $0x40] sm:$0xf]
  %v208 = vld [vmem:[%s0 + $0x44] sm:$0xf]
  %v209 = vld [vmem:[%s0 + $0x48] sm:$0xf]
  %v210 = vld [vmem:[%s0 + $0x4c] sm:$0xf]
  %v211 = vld [vmem:[%s0 + $0x50] sm:$0xf]
  %v212 = vld [vmem:[%s0 + $0x54] sm:$0xf]
  %v213 = vld [vmem:[%s0 + $0x58] sm:$0xf]
  %v214 = vld [vmem:[%s0 + $0x5c] sm:$0xf]
  %v215 = vld [vmem:[%s0 + $0x60] sm:$0xf]
  %v216 = vld [vmem:[%s0 + $0x64] sm:$0xf]
  %v217 = vld [vmem:[%s0 + $0x68] sm:$0xf]
  %v218 = vld [vmem:[%s0 + $0x6c] sm:$0xf]
  %v219 = vld [vmem:[%s0 + $0x70] sm:$0xf]
  %v220 = vld [vmem:[%s0 + $0x74] sm:$0xf]
  %v221 = vld [vmem:[%s0 + $0x78] sm:$0xf]
  %v222 = vld [vmem:[%s0 + $0x7c] sm:$0xf]
  %v223 = vld [vmem:[%s0 + $0x80] sm:$0xf]
  %v224 = vld [vmem:[%s0 + $0x84] sm:$0xf]
  %v225 = vld [vmem:[%s0 + $0x88] sm:$0xf]
  %v226 = vld [vmem:[%s0 + $0x8c] sm:$0xf]
  %v227 = vld [vmem:[%s0 + $0x90] sm:$0xf]
  %v228 = vld [vmem:[%s0 + $0x94] sm:$0xf]
  %v229 = vld [vmem:[%s0 + $0x98] sm:$0xf]
  %v230 = vld [vmem:[%s0 + $0x9c] sm:$0xf]
  %v231 = vld [vmem:[%s0 + $0xa0] sm:$0xf]
  %v232 = vld [vmem:[%s0 + $0xa4] sm:$0xf]
  %v233 = vld [vmem:[%s0 + $0xa8] sm:$0xf]
  %v234 = vld [vmem:[%s0 + $0xac] sm:$0xf]
  %v235 = vld [vmem:[%s0 + $0xb0] sm:$0xf]
  %v236 = vld [vmem:[%s0 + $0xb4] sm:$0xf]
  %v237 = vld [vmem:[%s0 + $0xb8] sm:$0xf]
  %v238 = vld [vmem:[%s0 + $0xbc] sm:$0xf]
  %v239 = vld [vmem:[%s0 + $0xc0] sm:$0xf]
  %v240 = vld [vmem:[%s0 + $0xc4] sm:$0xf]
  %v241 = vld [vmem:[%s0 + $0xc8] sm:$0xf]
  %v242 = vld [vmem:[%s0 + $0xcc] sm:$0xf]
  %v243 = vld [vmem:[%s0 + $0xd0] sm:$0xf]
  %v244 = vld [vmem:[%s0 + $0xd4] sm:$0xf]
  %v245 = vld [vmem:[%s0 + $0xd8] sm:$0xf]
  %v246 = vld [vmem:[%s0 + $0xdc] sm:$0xf]
  %v247 = vld [vmem:[%s0 + $0xe0] sm:$0xf]
  %v248 = vld [vmem:[%s0 + $0xe4] sm:$0xf]
  %v249 = vld [vmem:[%s0 + $0xe8] sm:$0xf]
  %v250 = vld [vmem:[%s0 + $0xec] sm:$0xf]
  %v251 = vld [vmem:[%s0 + $0xf0] sm:$0xf]
  %v252 = vld [vmem:[%s0 + $0xf4] sm:$0xf]
  %v253 = vld [vmem:[%s0 + $0xf8] sm:$0xf]
  %v254 = vld [vmem:[%s0 + $0xfc] sm:$0xf]
  %vm255 = vsmask.f32 256
  %vm256 = vsmask.f32 4368
  %vm257 = vmor %vm255, %vm256
  %v259 = vshrl.u32 %v191, 16
  %v261 = vrot.slane %v259, 7
  %v262 = vshll.u32 %v191, 16
  %v264 = vor.u32 %v261, %v262
  %v265 = vrot.slane %v261, 4
  %v267 = vshrl.u32 %v192, 16
  %v269 = vrot.slane %v267, 7
  %v270 = vshll.u32 %v192, 16
  %v272 = vor.u32 %v269, %v270
  %v273 = vsel %vm257, %v265, %v272
  %v274 = vrot.slane %v269, 4
  %v276 = vshrl.u32 %v193, 16
  %v278 = vrot.slane %v276, 7
  %v279 = vshll.u32 %v193, 16
  %v281 = vor.u32 %v278, %v279
  %v282 = vrot.slane %v278, 4
  %v284 = vshrl.u32 %v194, 16
  %v286 = vrot.slane %v284, 7
  %v287 = vshll.u32 %v194, 16
  %v289 = vor.u32 %v286, %v287
  %v290 = vsel %vm257, %v282, %v289
  %v291 = vrot.slane %v286, 4
  %v293 = vshrl.u32 %v195, 16
  %v295 = vrot.slane %v293, 7
  %v296 = vshll.u32 %v195, 16
  %v298 = vor.u32 %v295, %v296
  %v299 = vrot.slane %v295, 4
  %v301 = vshrl.u32 %v196, 16
  %v303 = vrot.slane %v301, 7
  %v304 = vshll.u32 %v196, 16
  %v306 = vor.u32 %v303, %v304
  %v307 = vsel %vm257, %v299, %v306
  %v308 = vrot.slane %v303, 4
  %v310 = vshrl.u32 %v197, 16
  %v312 = vrot.slane %v310, 7
  %v313 = vshll.u32 %v197, 16
  %v315 = vor.u32 %v312, %v313
  %v316 = vrot.slane %v312, 4
  %v318 = vshrl.u32 %v198, 16
  %v320 = vrot.slane %v318, 7
  %v321 = vshll.u32 %v198, 16
  %v323 = vor.u32 %v320, %v321
  %v324 = vsel %vm257, %v316, %v323
  %v325 = vrot.slane %v320, 4
  %v327 = vshrl.u32 %v199, 16
  %v329 = vrot.slane %v327, 7
  %v330 = vshll.u32 %v199, 16
  %v332 = vor.u32 %v329, %v330
  %v333 = vrot.slane %v329, 4
  %v335 = vshrl.u32 %v200, 16
  %v337 = vrot.slane %v335, 7
  %v338 = vshll.u32 %v200, 16
  %v340 = vor.u32 %v337, %v338
  %v341 = vsel %vm257, %v333, %v340
  %v342 = vrot.slane %v337, 4
  %v344 = vshrl.u32 %v201, 16
  %v346 = vrot.slane %v344, 7
  %v347 = vshll.u32 %v201, 16
  %v349 = vor.u32 %v346, %v347
  %v350 = vrot.slane %v346, 4
  %v352 = vshrl.u32 %v202, 16
  %v354 = vrot.slane %v352, 7
  %v355 = vshll.u32 %v202, 16
  %v357 = vor.u32 %v354, %v355
  %v358 = vsel %vm257, %v350, %v357
  %v359 = vrot.slane %v354, 4
  %v361 = vshrl.u32 %v203, 16
  %v363 = vrot.slane %v361, 7
  %v364 = vshll.u32 %v203, 16
  %v366 = vor.u32 %v363, %v364
  %v367 = vrot.slane %v363, 4
  %v369 = vshrl.u32 %v204, 16
  %v371 = vrot.slane %v369, 7
  %v372 = vshll.u32 %v204, 16
  %v374 = vor.u32 %v371, %v372
  %v375 = vsel %vm257, %v367, %v374
  %v376 = vrot.slane %v371, 4
  %v378 = vshrl.u32 %v205, 16
  %v380 = vrot.slane %v378, 7
  %v381 = vshll.u32 %v205, 16
  %v383 = vor.u32 %v380, %v381
  %v384 = vrot.slane %v380, 4
  %v386 = vshrl.u32 %v206, 16
  %v388 = vrot.slane %v386, 7
  %v389 = vshll.u32 %v206, 16
  %v391 = vor.u32 %v388, %v389
  %v392 = vsel %vm257, %v384, %v391
  %v393 = vrot.slane %v388, 4
  %v395 = vshrl.u32 %v207, 16
  %v397 = vrot.slane %v395, 7
  %v398 = vshll.u32 %v207, 16
  %v400 = vor.u32 %v397, %v398
  %v401 = vrot.slane %v397, 4
  %v403 = vshrl.u32 %v208, 16
  %v405 = vrot.slane %v403, 7
  %v406 = vshll.u32 %v208, 16
  %v408 = vor.u32 %v405, %v406
  %v409 = vsel %vm257, %v401, %v408
  %v410 = vrot.slane %v405, 4
  %v412 = vshrl.u32 %v209, 16
  %v414 = vrot.slane %v412, 7
  %v415 = vshll.u32 %v209, 16
  %v417 = vor.u32 %v414, %v415
  %v418 = vrot.slane %v414, 4
  %v420 = vshrl.u32 %v210, 16
  %v422 = vrot.slane %v420, 7
  %v423 = vshll.u32 %v210, 16
  %v425 = vor.u32 %v422, %v423
  %v426 = vsel %vm257, %v418, %v425
  %v427 = vrot.slane %v422, 4
  %v429 = vshrl.u32 %v211, 16
  %v431 = vrot.slane %v429, 7
  %v432 = vshll.u32 %v211, 16
  %v434 = vor.u32 %v431, %v432
  %v435 = vrot.slane %v431, 4
  %v437 = vshrl.u32 %v212, 16
  %v439 = vrot.slane %v437, 7
  %v440 = vshll.u32 %v212, 16
  %v442 = vor.u32 %v439, %v440
  %v443 = vsel %vm257, %v435, %v442
  %v444 = vrot.slane %v439, 4
  %v446 = vshrl.u32 %v213, 16
  %v448 = vrot.slane %v446, 7
  %v449 = vshll.u32 %v213, 16
  %v451 = vor.u32 %v448, %v449
  %v452 = vrot.slane %v448, 4
  %v454 = vshrl.u32 %v214, 16
  %v456 = vrot.slane %v454, 7
  %v457 = vshll.u32 %v214, 16
  %v459 = vor.u32 %v456, %v457
  %v460 = vsel %vm257, %v452, %v459
  %v461 = vrot.slane %v456, 4
  %v463 = vshrl.u32 %v215, 16
  %v465 = vrot.slane %v463, 7
  %v466 = vshll.u32 %v215, 16
  %v468 = vor.u32 %v465, %v466
  %v469 = vrot.slane %v465, 4
  %v471 = vshrl.u32 %v216, 16
  %v473 = vrot.slane %v471, 7
  %v474 = vshll.u32 %v216, 16
  %v476 = vor.u32 %v473, %v474
  %v477 = vsel %vm257, %v469, %v476
  %v478 = vrot.slane %v473, 4
  %v480 = vshrl.u32 %v217, 16
  %v482 = vrot.slane %v480, 7
  %v483 = vshll.u32 %v217, 16
  %v485 = vor.u32 %v482, %v483
  %v486 = vrot.slane %v482, 4
  %v488 = vshrl.u32 %v218, 16
  %v490 = vrot.slane %v488, 7
  %v491 = vshll.u32 %v218, 16
  %v493 = vor.u32 %v490, %v491
  %v494 = vsel %vm257, %v486, %v493
  %v495 = vrot.slane %v490, 4
  %v497 = vshrl.u32 %v219, 16
  %v499 = vrot.slane %v497, 7
  %v500 = vshll.u32 %v219, 16
  %v502 = vor.u32 %v499, %v500
  %v503 = vrot.slane %v499, 4
  %v505 = vshrl.u32 %v220, 16
  %v507 = vrot.slane %v505, 7
  %v508 = vshll.u32 %v220, 16
  %v510 = vor.u32 %v507, %v508
  %v511 = vsel %vm257, %v503, %v510
  %v512 = vrot.slane %v507, 4
  %v514 = vshrl.u32 %v221, 16
  %v516 = vrot.slane %v514, 7
  %v517 = vshll.u32 %v221, 16
  %v519 = vor.u32 %v516, %v517
  %v520 = vrot.slane %v516, 4
  %v522 = vshrl.u32 %v222, 16
  %v524 = vrot.slane %v522, 7
  %v525 = vshll.u32 %v222, 16
  %v527 = vor.u32 %v524, %v525
  %v528 = vsel %vm257, %v520, %v527
  %v529 = vrot.slane %v524, 4
  %v531 = vshrl.u32 %v223, 16
  %v533 = vrot.slane %v531, 7
  %v534 = vshll.u32 %v223, 16
  %v536 = vor.u32 %v533, %v534
  %v537 = vrot.slane %v533, 4
  %v539 = vshrl.u32 %v224, 16
  %v541 = vrot.slane %v539, 7
  %v542 = vshll.u32 %v224, 16
  %v544 = vor.u32 %v541, %v542
  %v545 = vsel %vm257, %v537, %v544
  %v546 = vrot.slane %v541, 4
  %v548 = vshrl.u32 %v225, 16
  %v550 = vrot.slane %v548, 7
  %v551 = vshll.u32 %v225, 16
  %v553 = vor.u32 %v550, %v551
  %v554 = vrot.slane %v550, 4
  %v556 = vshrl.u32 %v226, 16
  %v558 = vrot.slane %v556, 7
  %v559 = vshll.u32 %v226, 16
  %v561 = vor.u32 %v558, %v559
  %v562 = vsel %vm257, %v554, %v561
  %v563 = vrot.slane %v558, 4
  %v565 = vshrl.u32 %v227, 16
  %v567 = vrot.slane %v565, 7
  %v568 = vshll.u32 %v227, 16
  %v570 = vor.u32 %v567, %v568
  %v571 = vrot.slane %v567, 4
  %v573 = vshrl.u32 %v228, 16
  %v575 = vrot.slane %v573, 7
  %v576 = vshll.u32 %v228, 16
  %v578 = vor.u32 %v575, %v576
  %v579 = vsel %vm257, %v571, %v578
  %v580 = vrot.slane %v575, 4
  %v582 = vshrl.u32 %v229, 16
  %v584 = vrot.slane %v582, 7
  %v585 = vshll.u32 %v229, 16
  %v587 = vor.u32 %v584, %v585
  %v588 = vrot.slane %v584, 4
  %v590 = vshrl.u32 %v230, 16
  %v592 = vrot.slane %v590, 7
  %v593 = vshll.u32 %v230, 16
  %v595 = vor.u32 %v592, %v593
  %v596 = vsel %vm257, %v588, %v595
  %v597 = vrot.slane %v592, 4
  %v599 = vshrl.u32 %v231, 16
  %v601 = vrot.slane %v599, 7
  %v602 = vshll.u32 %v231, 16
  %v604 = vor.u32 %v601, %v602
  %v605 = vrot.slane %v601, 4
  %v607 = vshrl.u32 %v232, 16
  %v609 = vrot.slane %v607, 7
  %v610 = vshll.u32 %v232, 16
  %v612 = vor.u32 %v609, %v610
  %v613 = vsel %vm257, %v605, %v612
  %v614 = vrot.slane %v609, 4
  %v616 = vshrl.u32 %v233, 16
  %v618 = vrot.slane %v616, 7
  %v619 = vshll.u32 %v233, 16
  %v621 = vor.u32 %v618, %v619
  %v622 = vrot.slane %v618, 4
  %v624 = vshrl.u32 %v234, 16
  %v626 = vrot.slane %v624, 7
  %v627 = vshll.u32 %v234, 16
  %v629 = vor.u32 %v626, %v627
  %v630 = vsel %vm257, %v622, %v629
  %v631 = vrot.slane %v626, 4
  %v633 = vshrl.u32 %v235, 16
  %v635 = vrot.slane %v633, 7
  %v636 = vshll.u32 %v235, 16
  %v638 = vor.u32 %v635, %v636
  %v639 = vrot.slane %v635, 4
  %v641 = vshrl.u32 %v236, 16
  %v643 = vrot.slane %v641, 7
  %v644 = vshll.u32 %v236, 16
  %v646 = vor.u32 %v643, %v644
  %v647 = vsel %vm257, %v639, %v646
  %v648 = vrot.slane %v643, 4
  %v650 = vshrl.u32 %v237, 16
  %v652 = vrot.slane %v650, 7
  %v653 = vshll.u32 %v237, 16
  %v655 = vor.u32 %v652, %v653
  %v656 = vrot.slane %v652, 4
  %v658 = vshrl.u32 %v238, 16
  %v660 = vrot.slane %v658, 7
  %v661 = vshll.u32 %v238, 16
  %v663 = vor.u32 %v660, %v661
  %v664 = vsel %vm257, %v656, %v663
  %v665 = vrot.slane %v660, 4
  %v667 = vshrl.u32 %v239, 16
  %v669 = vrot.slane %v667, 7
  %v670 = vshll.u32 %v239, 16
  %v672 = vor.u32 %v669, %v670
  %v673 = vrot.slane %v669, 4
  %v675 = vshrl.u32 %v240, 16
  %v677 = vrot.slane %v675, 7
  %v678 = vshll.u32 %v240, 16
  %v680 = vor.u32 %v677, %v678
  %v681 = vsel %vm257, %v673, %v680
  %v682 = vrot.slane %v677, 4
  %v684 = vshrl.u32 %v241, 16
  %v686 = vrot.slane %v684, 7
  %v687 = vshll.u32 %v241, 16
  %v689 = vor.u32 %v686, %v687
  %v690 = vrot.slane %v686, 4
  %v692 = vshrl.u32 %v242, 16
  %v694 = vrot.slane %v692, 7
  %v695 = vshll.u32 %v242, 16
  %v697 = vor.u32 %v694, %v695
  %v698 = vsel %vm257, %v690, %v697
  %v699 = vrot.slane %v694, 4
  %v701 = vshrl.u32 %v243, 16
  %v703 = vrot.slane %v701, 7
  %v704 = vshll.u32 %v243, 16
  %v706 = vor.u32 %v703, %v704
  %v707 = vrot.slane %v703, 4
  %v709 = vshrl.u32 %v244, 16
  %v711 = vrot.slane %v709, 7
  %v712 = vshll.u32 %v244, 16
  %v714 = vor.u32 %v711, %v712
  %v715 = vsel %vm257, %v707, %v714
  %v716 = vrot.slane %v711, 4
  %v718 = vshrl.u32 %v245, 16
  %v720 = vrot.slane %v718, 7
  %v721 = vshll.u32 %v245, 16
  %v723 = vor.u32 %v720, %v721
  %v724 = vrot.slane %v720, 4
  %v726 = vshrl.u32 %v246, 16
  %v728 = vrot.slane %v726, 7
  %v729 = vshll.u32 %v246, 16
  %v731 = vor.u32 %v728, %v729
  %v732 = vsel %vm257, %v724, %v731
  %v733 = vrot.slane %v728, 4
  %v735 = vshrl.u32 %v247, 16
  %v737 = vrot.slane %v735, 7
  %v738 = vshll.u32 %v247, 16
  %v740 = vor.u32 %v737, %v738
  %v741 = vrot.slane %v737, 4
  %v743 = vshrl.u32 %v248, 16
  %v745 = vrot.slane %v743, 7
  %v746 = vshll.u32 %v248, 16
  %v748 = vor.u32 %v745, %v746
  %v749 = vsel %vm257, %v741, %v748
  %v750 = vrot.slane %v745, 4
  %v752 = vshrl.u32 %v249, 16
  %v754 = vrot.slane %v752, 7
  %v755 = vshll.u32 %v249, 16
  %v757 = vor.u32 %v754, %v755
  %v758 = vrot.slane %v754, 4
  %v760 = vshrl.u32 %v250, 16
  %v762 = vrot.slane %v760, 7
  %v763 = vshll.u32 %v250, 16
  %v765 = vor.u32 %v762, %v763
  %v766 = vsel %vm257, %v758, %v765
  %v767 = vrot.slane %v762, 4
  %v769 = vshrl.u32 %v251, 16
  %v771 = vrot.slane %v769, 7
  %v772 = vshll.u32 %v251, 16
  %v774 = vor.u32 %v771, %v772
  %v775 = vrot.slane %v771, 4
  %v777 = vshrl.u32 %v252, 16
  %v779 = vrot.slane %v777, 7
  %v780 = vshll.u32 %v252, 16
  %v782 = vor.u32 %v779, %v780
  %v783 = vsel %vm257, %v775, %v782
  %v784 = vrot.slane %v779, 4
  %v786 = vshrl.u32 %v253, 16
  %v788 = vrot.slane %v786, 7
  %v789 = vshll.u32 %v253, 16
  %v791 = vor.u32 %v788, %v789
  %v792 = vrot.slane %v788, 4
  %v794 = vshrl.u32 %v254, 16
  %v796 = vrot.slane %v794, 7
  %v797 = vshll.u32 %v254, 16
  %v799 = vor.u32 %v796, %v797
  %v800 = vsel %vm257, %v792, %v799
  %v801 = vrot.slane %v796, 4
  %s898 = scalar_lea.vmem [#allocation2], 12
  %vm899 = vcmask 1043456
  %vm900 = vsmask.f32 7938
  %vm901 = vmand %vm899, %vm900
  %v902 = vld [vmem:[%s898] sm:$0xf]
  %v903 = vsel %vm901, %v264, %v902
  %904 = vst [vmem:[%s898] sm:$0xf] %v903
  %905 = vst [vmem:[%s898 + $0x4] sm:$0xf] %v273
  %vm906 = vcmask 1040384
  %vm907 = vmand %vm906, %vm255
  %v908 = vld [vmem:[%s898 + $0x8] sm:$0x1]
  %v909 = vsel %vm907, %v274, %v908
  %910 = vst [vmem:[%s898 + $0x8] sm:$0x1] %v909
  %v911 = vld [vmem:[%s898 + $0xc] sm:$0xf]
  %v912 = vsel %vm901, %v281, %v911
  %913 = vst [vmem:[%s898 + $0xc] sm:$0xf] %v912
  %914 = vst [vmem:[%s898 + $0x10] sm:$0xf] %v290
  %v915 = vld [vmem:[%s898 + $0x14] sm:$0x1]
  %v916 = vsel %vm907, %v291, %v915
  %917 = vst [vmem:[%s898 + $0x14] sm:$0x1] %v916
  %v918 = vld [vmem:[%s898 + $0x18] sm:$0xf]
  %v919 = vsel %vm901, %v298, %v918
  %920 = vst [vmem:[%s898 + $0x18] sm:$0xf] %v919
  %921 = vst [vmem:[%s898 + $0x1c] sm:$0xf] %v307
  %v922 = vld [vmem:[%s898 + $0x20] sm:$0x1]
  %v923 = vsel %vm907, %v308, %v922
  %924 = vst [vmem:[%s898 + $0x20] sm:$0x1] %v923
  %v925 = vld [vmem:[%s898 + $0x24] sm:$0xf]
  %v926 = vsel %vm901, %v315, %v925
  %927 = vst [vmem:[%s898 + $0x24] sm:$0xf] %v926
  %928 = vst [vmem:[%s898 + $0x28] sm:$0xf] %v324
  %v929 = vld [vmem:[%s898 + $0x2c] sm:$0x1]
  %v930 = vsel %vm907, %v325, %v929
  %931 = vst [vmem:[%s898 + $0x2c] sm:$0x1] %v930
  %v932 = vld [vmem:[%s898 + $0x30] sm:$0xf]
  %v933 = vsel %vm901, %v332, %v932
  %934 = vst [vmem:[%s898 + $0x30] sm:$0xf] %v933
  %935 = vst [vmem:[%s898 + $0x34] sm:$0xf] %v341
  %v936 = vld [vmem:[%s898 + $0x38] sm:$0x1]
  %v937 = vsel %vm907, %v342, %v936
  %938 = vst [vmem:[%s898 + $0x38] sm:$0x1] %v937
  %v939 = vld [vmem:[%s898 + $0x3c] sm:$0xf]
  %v940 = vsel %vm901, %v349, %v939
  %941 = vst [vmem:[%s898 + $0x3c] sm:$0xf] %v940
  %942 = vst [vmem:[%s898 + $0x40] sm:$0xf] %v358
  %v943 = vld [vmem:[%s898 + $0x44] sm:$0x1]
  %v944 = vsel %vm907, %v359, %v943
  %945 = vst [vmem:[%s898 + $0x44] sm:$0x1] %v944
  %v946 = vld [vmem:[%s898 + $0x48] sm:$0xf]
  %v947 = vsel %vm901, %v366, %v946
  %948 = vst [vmem:[%s898 + $0x48] sm:$0xf] %v947
  %949 = vst [vmem:[%s898 + $0x4c] sm:$0xf] %v375
  %v950 = vld [vmem:[%s898 + $0x50] sm:$0x1]
  %v951 = vsel %vm907, %v376, %v950
  %952 = vst [vmem:[%s898 + $0x50] sm:$0x1] %v951
  %v953 = vld [vmem:[%s898 + $0x54] sm:$0xf]
  %v954 = vsel %vm901, %v383, %v953
  %955 = vst [vmem:[%s898 + $0x54] sm:$0xf] %v954
  %956 = vst [vmem:[%s898 + $0x58] sm:$0xf] %v392
  %v957 = vld [vmem:[%s898 + $0x5c] sm:$0x1]
  %v958 = vsel %vm907, %v393, %v957
  %959 = vst [vmem:[%s898 + $0x5c] sm:$0x1] %v958
  %v960 = vld [vmem:[%s898 + $0x60] sm:$0xf]
  %v961 = vsel %vm901, %v400, %v960
  %962 = vst [vmem:[%s898 + $0x60] sm:$0xf] %v961
  %963 = vst [vmem:[%s898 + $0x64] sm:$0xf] %v409
  %v964 = vld [vmem:[%s898 + $0x68] sm:$0x1]
  %v965 = vsel %vm907, %v410, %v964
  %966 = vst [vmem:[%s898 + $0x68] sm:$0x1] %v965
  %v967 = vld [vmem:[%s898 + $0x6c] sm:$0xf]
  %v968 = vsel %vm901, %v417, %v967
  %969 = vst [vmem:[%s898 + $0x6c] sm:$0xf] %v968
  %970 = vst [vmem:[%s898 + $0x70] sm:$0xf] %v426
  %v971 = vld [vmem:[%s898 + $0x74] sm:$0x1]
  %v972 = vsel %vm907, %v427, %v971
  %973 = vst [vmem:[%s898 + $0x74] sm:$0x1] %v972
  %v974 = vld [vmem:[%s898 + $0x78] sm:$0xf]
  %v975 = vsel %vm901, %v434, %v974
  %976 = vst [vmem:[%s898 + $0x78] sm:$0xf] %v975
  %977 = vst [vmem:[%s898 + $0x7c] sm:$0xf] %v443
  %v978 = vld [vmem:[%s898 + $0x80] sm:$0x1]
  %v979 = vsel %vm907, %v444, %v978
  %980 = vst [vmem:[%s898 + $0x80] sm:$0x1] %v979
  %v981 = vld [vmem:[%s898 + $0x84] sm:$0xf]
  %v982 = vsel %vm901, %v451, %v981
  %983 = vst [vmem:[%s898 + $0x84] sm:$0xf] %v982
  %984 = vst [vmem:[%s898 + $0x88] sm:$0xf] %v460
  %v985 = vld [vmem:[%s898 + $0x8c] sm:$0x1]
  %v986 = vsel %vm907, %v461, %v985
  %987 = vst [vmem:[%s898 + $0x8c] sm:$0x1] %v986
  %v988 = vld [vmem:[%s898 + $0x90] sm:$0xf]
  %v989 = vsel %vm901, %v468, %v988
  %990 = vst [vmem:[%s898 + $0x90] sm:$0xf] %v989
  %991 = vst [vmem:[%s898 + $0x94] sm:$0xf] %v477
  %v992 = vld [vmem:[%s898 + $0x98] sm:$0x1]
  %v993 = vsel %vm907, %v478, %v992
  %994 = vst [vmem:[%s898 + $0x98] sm:$0x1] %v993
  %v995 = vld [vmem:[%s898 + $0x9c] sm:$0xf]
  %v996 = vsel %vm901, %v485, %v995
  %997 = vst [vmem:[%s898 + $0x9c] sm:$0xf] %v996
  %998 = vst [vmem:[%s898 + $0xa0] sm:$0xf] %v494
  %v999 = vld [vmem:[%s898 + $0xa4] sm:$0x1]
  %v1000 = vsel %vm907, %v495, %v999
  %1001 = vst [vmem:[%s898 + $0xa4] sm:$0x1] %v1000
  %v1002 = vld [vmem:[%s898 + $0xa8] sm:$0xf]
  %v1003 = vsel %vm901, %v502, %v1002
  %1004 = vst [vmem:[%s898 + $0xa8] sm:$0xf] %v1003
  %1005 = vst [vmem:[%s898 + $0xac] sm:$0xf] %v511
  %v1006 = vld [vmem:[%s898 + $0xb0] sm:$0x1]
  %v1007 = vsel %vm907, %v512, %v1006
  %1008 = vst [vmem:[%s898 + $0xb0] sm:$0x1] %v1007
  %v1009 = vld [vmem:[%s898 + $0xb4] sm:$0xf]
  %v1010 = vsel %vm901, %v519, %v1009
  %1011 = vst [vmem:[%s898 + $0xb4] sm:$0xf] %v1010
  %1012 = vst [vmem:[%s898 + $0xb8] sm:$0xf] %v528
  %v1013 = vld [vmem:[%s898 + $0xbc] sm:$0x1]
  %v1014 = vsel %vm907, %v529, %v1013
  %1015 = vst [vmem:[%s898 + $0xbc] sm:$0x1] %v1014
  %v1016 = vld [vmem:[%s898 + $0xd8] sm:$0xf]
  %v1017 = vsel %vm901, %v536, %v1016
  %1018 = vst [vmem:[%s898 + $0xd8] sm:$0xf] %v1017
  %1019 = vst [vmem:[%s898 + $0xdc] sm:$0xf] %v545
  %v1020 = vld [vmem:[%s898 + $0xe0] sm:$0x1]
  %v1021 = vsel %vm907, %v546, %v1020
  %1022 = vst [vmem:[%s898 + $0xe0] sm:$0x1] %v1021
  %v1023 = vld [vmem:[%s898 + $0xe4] sm:$0xf]
  %v1024 = vsel %vm901, %v553, %v1023
  %1025 = vst [vmem:[%s898 + $0xe4] sm:$0xf] %v1024
  %1026 = vst [vmem:[%s898 + $0xe8] sm:$0xf] %v562
  %v1027 = vld [vmem:[%s898 + $0xec] sm:$0x1]
  %v1028 = vsel %vm907, %v563, %v1027
  %1029 = vst [vmem:[%s898 + $0xec] sm:$0x1] %v1028
  %v1030 = vld [vmem:[%s898 + $0xf0] sm:$0xf]
  %v1031 = vsel %vm901, %v570, %v1030
  %1032 = vst [vmem:[%s898 + $0xf0] sm:$0xf] %v1031
  %1033 = vst [vmem:[%s898 + $0xf4] sm:$0xf] %v579
  %v1034 = vld [vmem:[%s898 + $0xf8] sm:$0x1]
  %v1035 = vsel %vm907, %v580, %v1034
  %1036 = vst [vmem:[%s898 + $0xf8] sm:$0x1] %v1035
  %v1037 = vld [vmem:[%s898 + $0xfc] sm:$0xf]
  %v1038 = vsel %vm901, %v587, %v1037
  %1039 = vst [vmem:[%s898 + $0xfc] sm:$0xf] %v1038
  %1040 = vst [vmem:[%s898 + $0x100] sm:$0xf] %v596
  %v1041 = vld [vmem:[%s898 + $0x104] sm:$0x1]
  %v1042 = vsel %vm907, %v597, %v1041
  %1043 = vst [vmem:[%s898 + $0x104] sm:$0x1] %v1042
  %v1044 = vld [vmem:[%s898 + $0x108] sm:$0xf]
  %v1045 = vsel %vm901, %v604, %v1044
  %1046 = vst [vmem:[%s898 + $0x108] sm:$0xf] %v1045
  %1047 = vst [vmem:[%s898 + $0x10c] sm:$0xf] %v613
  %v1048 = vld [vmem:[%s898 + $0x110] sm:$0x1]
  %v1049 = vsel %vm907, %v614, %v1048
  %1050 = vst [vmem:[%s898 + $0x110] sm:$0x1] %v1049
  %v1051 = vld [vmem:[%s898 + $0x114] sm:$0xf]
  %v1052 = vsel %vm901, %v621, %v1051
  %1053 = vst [vmem:[%s898 + $0x114] sm:$0xf] %v1052
  %1054 = vst [vmem:[%s898 + $0x118] sm:$0xf] %v630
  %v1055 = vld [vmem:[%s898 + $0x11c] sm:$0x1]
  %v1056 = vsel %vm907, %v631, %v1055
  %1057 = vst [vmem:[%s898 + $0x11c] sm:$0x1] %v1056
  %v1058 = vld [vmem:[%s898 + $0x120] sm:$0xf]
  %v1059 = vsel %vm901, %v638, %v1058
  %1060 = vst [vmem:[%s898 + $0x120] sm:$0xf] %v1059
  %1061 = vst [vmem:[%s898 + $0x124] sm:$0xf] %v647
  %v1062 = vld [vmem:[%s898 + $0x128] sm:$0x1]
  %v1063 = vsel %vm907, %v648, %v1062
  %1064 = vst [vmem:[%s898 + $0x128] sm:$0x1] %v1063
  %v1065 = vld [vmem:[%s898 + $0x12c] sm:$0xf]
  %v1066 = vsel %vm901, %v655, %v1065
  %1067 = vst [vmem:[%s898 + $0x12c] sm:$0xf] %v1066
  %1068 = vst [vmem:[%s898 + $0x130] sm:$0xf] %v664
  %v1069 = vld [vmem:[%s898 + $0x134] sm:$0x1]
  %v1070 = vsel %vm907, %v665, %v1069
  %1071 = vst [vmem:[%s898 + $0x134] sm:$0x1] %v1070
  %v1072 = vld [vmem:[%s898 + $0x138] sm:$0xf]
  %v1073 = vsel %vm901, %v672, %v1072
  %1074 = vst [vmem:[%s898 + $0x138] sm:$0xf] %v1073
  %1075 = vst [vmem:[%s898 + $0x13c] sm:$0xf] %v681
  %v1076 = vld [vmem:[%s898 + $0x140] sm:$0x1]
  %v1077 = vsel %vm907, %v682, %v1076
  %1078 = vst [vmem:[%s898 + $0x140] sm:$0x1] %v1077
  %v1079 = vld [vmem:[%s898 + $0x144] sm:$0xf]
  %v1080 = vsel %vm901, %v689, %v1079
  %1081 = vst [vmem:[%s898 + $0x144] sm:$0xf] %v1080
  %1082 = vst [vmem:[%s898 + $0x148] sm:$0xf] %v698
  %v1083 = vld [vmem:[%s898 + $0x14c] sm:$0x1]
  %v1084 = vsel %vm907, %v699, %v1083
  %1085 = vst [vmem:[%s898 + $0x14c] sm:$0x1] %v1084
  %v1086 = vld [vmem:[%s898 + $0x150] sm:$0xf]
  %v1087 = vsel %vm901, %v706, %v1086
  %1088 = vst [vmem:[%s898 + $0x150] sm:$0xf] %v1087
  %1089 = vst [vmem:[%s898 + $0x154] sm:$0xf] %v715
  %v1090 = vld [vmem:[%s898 + $0x158] sm:$0x1]
  %v1091 = vsel %vm907, %v716, %v1090
  %1092 = vst [vmem:[%s898 + $0x158] sm:$0x1] %v1091
  %v1093 = vld [vmem:[%s898 + $0x15c] sm:$0xf]
  %v1094 = vsel %vm901, %v723, %v1093
  %1095 = vst [vmem:[%s898 + $0x15c] sm:$0xf] %v1094
  %1096 = vst [vmem:[%s898 + $0x160] sm:$0xf] %v732
  %v1097 = vld [vmem:[%s898 + $0x164] sm:$0x1]
  %v1098 = vsel %vm907, %v733, %v1097
  %1099 = vst [vmem:[%s898 + $0x164] sm:$0x1] %v1098
  %v1100 = vld [vmem:[%s898 + $0x168] sm:$0xf]
  %v1101 = vsel %vm901, %v740, %v1100
  %1102 = vst [vmem:[%s898 + $0x168] sm:$0xf] %v1101
  %1103 = vst [vmem:[%s898 + $0x16c] sm:$0xf] %v749
  %v1104 = vld [vmem:[%s898 + $0x170] sm:$0x1]
  %v1105 = vsel %vm907, %v750, %v1104
  %1106 = vst [vmem:[%s898 + $0x170] sm:$0x1] %v1105
  %v1107 = vld [vmem:[%s898 + $0x174] sm:$0xf]
  %v1108 = vsel %vm901, %v757, %v1107
  %1109 = vst [vmem:[%s898 + $0x174] sm:$0xf] %v1108
  %1110 = vst [vmem:[%s898 + $0x178] sm:$0xf] %v766
  %v1111 = vld [vmem:[%s898 + $0x17c] sm:$0x1]
  %v1112 = vsel %vm907, %v767, %v1111
  %1113 = vst [vmem:[%s898 + $0x17c] sm:$0x1] %v1112
  %v1114 = vld [vmem:[%s898 + $0x180] sm:$0xf]
  %v1115 = vsel %vm901, %v774, %v1114
  %1116 = vst [vmem:[%s898 + $0x180] sm:$0xf] %v1115
  %1117 = vst [vmem:[%s898 + $0x184] sm:$0xf] %v783
  %v1118 = vld [vmem:[%s898 + $0x188] sm:$0x1]
  %v1119 = vsel %vm907, %v784, %v1118
  %1120 = vst [vmem:[%s898 + $0x188] sm:$0x1] %v1119
  %v1121 = vld [vmem:[%s898 + $0x18c] sm:$0xf]
  %v1122 = vsel %vm901, %v791, %v1121
  %1123 = vst [vmem:[%s898 + $0x18c] sm:$0xf] %v1122
  %1124 = vst [vmem:[%s898 + $0x190] sm:$0xf] %v800
  %v1125 = vld [vmem:[%s898 + $0x194] sm:$0x1]
  %v1126 = vsel %vm907, %v801, %v1125
  %1127 = vst [vmem:[%s898 + $0x194] sm:$0x1] %v1126
  %v1128 = vld [vmem:[#allocation2] sm:$0xf]
  %v1129 = vld [vmem:[#allocation2 + $0x4] sm:$0xf]
  %v1130 = vld [vmem:[#allocation2 + $0xc] sm:$0xf]
  %v1131 = vld [vmem:[#allocation2 + $0x10] sm:$0xf]
  %v1132 = vld [vmem:[#allocation2 + $0x18] sm:$0xf]
  %v1133 = vld [vmem:[#allocation2 + $0x1c] sm:$0xf]
  %v1134 = vld [vmem:[#allocation2 + $0x24] sm:$0xf]
  %v1135 = vld [vmem:[#allocation2 + $0x28] sm:$0xf]
  %v1136 = vld [vmem:[#allocation2 + $0x30] sm:$0xf]
  %v1137 = vld [vmem:[#allocation2 + $0x34] sm:$0xf]
  %v1138 = vld [vmem:[#allocation2 + $0x3c] sm:$0xf]
  %v1139 = vld [vmem:[#allocation2 + $0x40] sm:$0xf]
  %v1140 = vld [vmem:[#allocation2 + $0x48] sm:$0xf]
  %v1141 = vld [vmem:[#allocation2 + $0x4c] sm:$0xf]
  %v1142 = vld [vmem:[#allocation2 + $0x54] sm:$0xf]
  %v1143 = vld [vmem:[#allocation2 + $0x58] sm:$0xf]
  %v1144 = vld [vmem:[#allocation2 + $0x60] sm:$0xf]
  %v1145 = vld [vmem:[#allocation2 + $0x64] sm:$0xf]
  %v1146 = vld [vmem:[#allocation2 + $0x6c] sm:$0xf]
  %v1147 = vld [vmem:[#allocation2 + $0x70] sm:$0xf]
  %v1148 = vld [vmem:[#allocation2 + $0x78] sm:$0xf]
  %v1149 = vld [vmem:[#allocation2 + $0x7c] sm:$0xf]
  %v1150 = vld [vmem:[#allocation2 + $0x84] sm:$0xf]
  %v1151 = vld [vmem:[#allocation2 + $0x88] sm:$0xf]
  %v1152 = vld [vmem:[#allocation2 + $0x90] sm:$0xf]
  %v1153 = vld [vmem:[#allocation2 + $0x94] sm:$0xf]
  %v1154 = vld [vmem:[#allocation2 + $0x9c] sm:$0xf]
  %v1155 = vld [vmem:[#allocation2 + $0xa0] sm:$0xf]
  %v1156 = vld [vmem:[#allocation2 + $0xa8] sm:$0xf]
  %v1157 = vld [vmem:[#allocation2 + $0xac] sm:$0xf]
  %v1158 = vld [vmem:[#allocation2 + $0xb4] sm:$0xf]
  %v1159 = vld [vmem:[#allocation2 + $0xb8] sm:$0xf]
  %v1160 = vld [vmem:[#allocation2 + $0xc0] sm:$0xf]
  %v1161 = vld [vmem:[#allocation2 + $0xc4] sm:$0xf]
  %v1162 = vld [vmem:[#allocation2 + $0xcc] sm:$0xf]
  %v1163 = vld [vmem:[#allocation2 + $0xd0] sm:$0xf]
  %v1164 = vld [vmem:[#allocation3] sm:$0xff]
  %v1165 = vld [vmem:[#allocation3 + $0x8] sm:$0xff]
  %v1166 = vld [vmem:[#allocation3 + $0x10] sm:$0xff]
  %v1167 = vld [vmem:[#allocation3 + $0x18] sm:$0xff]
  %v1168 = vld [vmem:[#allocation3 + $0x20] sm:$0xff]
  %v1169 = vld [vmem:[#allocation3 + $0x28] sm:$0xff]
  %v1170 = vld [vmem:[#allocation3 + $0x30] sm:$0xff]
  %v1171 = vld [vmem:[#allocation3 + $0x38] sm:$0xff]
  %v1172 = vld [vmem:[#allocation3 + $0x40] sm:$0xff]
  %v1173 = vld [vmem:[#allocation3 + $0x48] sm:$0xff]
  %v1174 = vld [vmem:[#allocation3 + $0x50] sm:$0xff]
  %v1175 = vld [vmem:[#allocation3 + $0x58] sm:$0xff]
  %v1176 = vld [vmem:[#allocation3 + $0x60] sm:$0xff]
  %v1177 = vld [vmem:[#allocation3 + $0x68] sm:$0xff]
  %v1178 = vld [vmem:[#allocation3 + $0x70] sm:$0xff]
  %v1179 = vld [vmem:[#allocation3 + $0x78] sm:$0xff]
  %v1180 = vld [vmem:[#allocation3 + $0x80] sm:$0xff]
  %v1181 = vld [vmem:[#allocation3 + $0x88] sm:$0xff]
  %v1182 = vld [vmem:[#allocation3 + $0x90] sm:$0xff]
  %v1183 = vld [vmem:[#allocation3 + $0x98] sm:$0xff]
  %v1184 = vld [vmem:[#allocation3 + $0xa0] sm:$0xff]
  %v1185 = vld [vmem:[#allocation3 + $0xa8] sm:$0xff]
  %v1186 = vld [vmem:[#allocation3 + $0xb0] sm:$0xff]
  %v1187 = vld [vmem:[#allocation3 + $0xb8] sm:$0xff]
  %v1188 = vld [vmem:[#allocation3 + $0xc0] sm:$0xff]
  %v1189 = vld [vmem:[#allocation3 + $0xc8] sm:$0xff]
  %v1190 = vld [vmem:[#allocation3 + $0xd0] sm:$0xff]
  %v1191 = vld [vmem:[#allocation3 + $0xd8] sm:$0xff]
  %v1192 = vld [vmem:[#allocation3 + $0xe0] sm:$0xff]
  %v1193 = vld [vmem:[#allocation3 + $0xe8] sm:$0xff]
  %v1194 = vld [vmem:[#allocation3 + $0xf0] sm:$0xff]
  %v1195 = vld [vmem:[#allocation3 + $0xf8] sm:$0xff]
  %v1196 = vld [vmem:[%s1] sm:$0xf]
  %v1197 = vld [vmem:[%s1 + $0x4] sm:$0xf]
  %v1198 = vld [vmem:[%s1 + $0x8] sm:$0xf]
  %v1199 = vld [vmem:[%s1 + $0xc] sm:$0xf]
  %v1200 = vld [vmem:[%s1 + $0x10] sm:$0xf]
  %v1201 = vld [vmem:[%s1 + $0x14] sm:$0xf]
  %v1202 = vld [vmem:[%s1 + $0x18] sm:$0xf]
  %v1203 = vld [vmem:[%s1 + $0x1c] sm:$0xf]
  %v1204 = vld [vmem:[%s1 + $0x20] sm:$0xf]
  %v1205 = vld [vmem:[%s1 + $0x24] sm:$0xf]
  %v1206 = vld [vmem:[%s1 + $0x28] sm:$0xf]
  %v1207 = vld [vmem:[%s1 + $0x2c] sm:$0xf]
  %v1208 = vld [vmem:[%s1 + $0x30] sm:$0xf]
  %v1209 = vld [vmem:[%s1 + $0x34] sm:$0xf]
  %v1210 = vld [vmem:[%s1 + $0x38] sm:$0xf]
  %v1211 = vld [vmem:[%s1 + $0x3c] sm:$0xf]
  %v1244 = vunpack.c.l.b16 %v1128
  %v1245 = vunpack.c.l.b16 %v1129
  %v1246 = vunpack.c.l.b16 %v1130
  %v1247 = vunpack.c.l.b16 %v1131
  %v1248 = vunpack.c.l.b16 %v1132
  %v1249 = vunpack.c.l.b16 %v1133
  %v1250 = vunpack.c.l.b16 %v1134
  %v1251 = vunpack.c.l.b16 %v1135
  %v1252 = vunpack.c.l.b16 %v1136
  %v1253 = vunpack.c.l.b16 %v1137
  %v1254 = vunpack.c.l.b16 %v1138
  %v1255 = vunpack.c.l.b16 %v1139
  %v1256 = vunpack.c.l.b16 %v1140
  %v1257 = vunpack.c.l.b16 %v1141
  %v1258 = vunpack.c.l.b16 %v1142
  %v1259 = vunpack.c.l.b16 %v1143
  %v1260 = vunpack.c.l.b16 %v1144
  %v1261 = vunpack.c.l.b16 %v1145
  %v1262 = vunpack.c.l.b16 %v1146
  %v1263 = vunpack.c.l.b16 %v1147
  %v1264 = vunpack.c.l.b16 %v1148
  %v1265 = vunpack.c.l.b16 %v1149
  %v1266 = vunpack.c.l.b16 %v1150
  %v1267 = vunpack.c.l.b16 %v1151
  %v1268 = vunpack.c.l.b16 %v1152
  %v1269 = vunpack.c.l.b16 %v1153
  %v1270 = vunpack.c.l.b16 %v1154
  %v1271 = vunpack.c.l.b16 %v1155
  %v1272 = vunpack.c.l.b16 %v1156
  %v1273 = vunpack.c.l.b16 %v1157
  %v1274 = vunpack.c.l.b16 %v1158
  %v1275 = vunpack.c.l.b16 %v1159
  %v1276 = vpack.c.b16 %v1245, %v1244
  %v1277 = vpack.c.b16 %v1247, %v1246
  %v1278 = vpack.c.b16 %v1249, %v1248
  %v1279 = vpack.c.b16 %v1251, %v1250
  %v1280 = vpack.c.b16 %v1253, %v1252
  %v1281 = vpack.c.b16 %v1255, %v1254
  %v1282 = vpack.c.b16 %v1257, %v1256
  %v1283 = vpack.c.b16 %v1259, %v1258
  %v1284 = vpack.c.b16 %v1261, %v1260
  %v1285 = vpack.c.b16 %v1263, %v1262
  %v1286 = vpack.c.b16 %v1265, %v1264
  %v1287 = vpack.c.b16 %v1267, %v1266
  %v1288 = vpack.c.b16 %v1269, %v1268
  %v1289 = vpack.c.b16 %v1271, %v1270
  %v1290 = vpack.c.b16 %v1273, %v1272
  %v1291 = vpack.c.b16 %v1275, %v1274
  %v1324 = vunpack.c.l.b16 %v1196
  %v1325 = vunpack.c.l.b16 %v1197
  %v1326 = vunpack.c.l.b16 %v1198
  %v1327 = vunpack.c.l.b16 %v1199
  %v1328 = vunpack.c.l.b16 %v1200
  %v1329 = vunpack.c.l.b16 %v1201
  %v1330 = vunpack.c.l.b16 %v1202
  %v1331 = vunpack.c.l.b16 %v1203
  %v1332 = vunpack.c.l.b16 %v1204
  %v1333 = vunpack.c.l.b16 %v1205
  %v1334 = vunpack.c.l.b16 %v1206
  %v1335 = vunpack.c.l.b16 %v1207
  %v1336 = vunpack.c.l.b16 %v1208
  %v1337 = vunpack.c.l.b16 %v1209
  %v1338 = vunpack.c.l.b16 %v1210
  %v1339 = vunpack.c.l.b16 %v1211
  %v1340 = vpack.c.b16 %v1325, %v1324
  %v1341 = vpack.c.b16 %v1327, %v1326
  %v1342 = vpack.c.b16 %v1329, %v1328
  %v1343 = vpack.c.b16 %v1331, %v1330
  %v1344 = vpack.c.b16 %v1333, %v1332
  %v1345 = vpack.c.b16 %v1335, %v1334
  %v1346 = vpack.c.b16 %v1337, %v1336
  %v1347 = vpack.c.b16 %v1339, %v1338
  %1356 = vmatprep.subr.bf16.mxu0 0
  %1357 = vmatpush1.bf16.msra.mxu0 %v1340
  %1358 = vmatprep.subr.bf16.mxu0 0
  %1359 = vmatpush1.bf16.msra.mxu0 %v1341
  %1360 = vmatprep.subr.bf16.mxu0 0
  %1361 = vmatpush1.bf16.msra.mxu0 %v1342
  %1362 = vmatprep.subr.bf16.mxu0 0
  %1363 = vmatpush1.bf16.msra.mxu0 %v1343
  %1364 = vmatprep.subr.bf16.mxu0 0
  %1365 = vmatpush1.bf16.msra.mxu0 %v1344
  %1366 = vmatprep.subr.bf16.mxu0 0
  %1367 = vmatpush1.bf16.msra.mxu0 %v1345
  %1368 = vmatprep.subr.bf16.mxu0 0
  %1369 = vmatpush1.bf16.msra.mxu0 %v1346
  %1370 = vmatprep.subr.bf16.mxu0 0
  %1371 = vmatpush1.bf16.msra.mxu0 %v1347
  %1372 = vmatprep.subr.bf16.mxu0 0
  %1373 = vmatpush1.bf16.msra.mxu0 0
  %1374 = vmatprep.subr.bf16.mxu0 0
  %1375 = vmatpush1.bf16.msra.mxu0 0
  %1376 = vmatprep.subr.bf16.mxu0 0
  %1377 = vmatpush1.bf16.msra.mxu0 0
  %1378 = vmatprep.subr.bf16.mxu0 0
  %1379 = vmatpush1.bf16.msra.mxu0 0
  %1380 = vmatprep.subr.bf16.mxu0 0
  %1381 = vmatpush1.bf16.msra.mxu0 0
  %1382 = vmatprep.subr.bf16.mxu0 0
  %1383 = vmatpush1.bf16.msra.mxu0 0
  %1384 = vmatprep.subr.bf16.mxu0 0
  %1385 = vmatpush1.bf16.msra.mxu0 0
  %1386 = vmatprep.subr.bf16.mxu0 0
  %1387 = vmatpush1.bf16.msra.mxu0 0
  %1388 = vmatprep.mubr.bf16.mxu0 0
  %1389 = vmatmul.mubr.bf16.gmra.mrb[0].mxu0 %v1276
  %v1390 = vpop.f32.mrb[0].mxu0
  %v1391 = vadd.f32 0.0, %v1390
  %v1392 = vpop.f32.mrb[0].mxu0
  %v1393 = vpop.f32.mrb[0].mxu0
  %v1394 = vadd.f32 0.0, %v1393
  %v1395 = vpop.f32.mrb[0].mxu0
  %1396 = vmatprep.mubr.bf16.mxu0 0
  %1397 = vmatmul.mubr.bf16.gmra.mrb[0].mxu0 %v1277
  %v1398 = vpop.f32.mrb[0].mxu0
  %v1399 = vadd.f32 0.0, %v1398
  %v1400 = vpop.f32.mrb[0].mxu0
  %v1401 = vpop.f32.mrb[0].mxu0
  %v1402 = vadd.f32 0.0, %v1401
  %v1403 = vpop.f32.mrb[0].mxu0
  %1404 = vmatprep.mubr.bf16.mxu0 0
  %1405 = vmatmul.mubr.bf16.gmra.mrb[0].mxu0 %v1278
  %v1406 = vpop.f32.mrb[0].mxu0
  %v1407 = vadd.f32 0.0, %v1406
  %v1408 = vpop.f32.mrb[0].mxu0
  %v1409 = vpop.f32.mrb[0].mxu0
  %v1410 = vadd.f32 0.0, %v1409
  %v1411 = vpop.f32.mrb[0].mxu0
  %1412 = vmatprep.mubr.bf16.mxu0 0
  %1413 = vmatmul.mubr.bf16.gmra.mrb[0].mxu0 %v1279
  %v1414 = vpop.f32.mrb[0].mxu0
  %v1415 = vadd.f32 0.0, %v1414
  %v1416 = vpop.f32.mrb[0].mxu0
  %v1417 = vpop.f32.mrb[0].mxu0
  %v1418 = vadd.f32 0.0, %v1417
  %v1419 = vpop.f32.mrb[0].mxu0
  %1420 = vmatprep.mubr.bf16.mxu0 0
  %1421 = vmatmul.mubr.bf16.gmra.mrb[0].mxu0 %v1280
  %v1422 = vpop.f32.mrb[0].mxu0
  %v1423 = vadd.f32 0.0, %v1422
  %v1424 = vpop.f32.mrb[0].mxu0
  %v1425 = vpop.f32.mrb[0].mxu0
  %v1426 = vadd.f32 0.0, %v1425
  %v1427 = vpop.f32.mrb[0].mxu0
  %1428 = vmatprep.mubr.bf16.mxu0 0
  %1429 = vmatmul.mubr.bf16.gmra.mrb[0].mxu0 %v1281
  %v1430 = vpop.f32.mrb[0].mxu0
  %v1431 = vadd.f32 0.0, %v1430
  %v1432 = vpop.f32.mrb[0].mxu0
  %v1433 = vpop.f32.mrb[0].mxu0
  %v1434 = vadd.f32 0.0, %v1433
  %v1435 = vpop.f32.mrb[0].mxu0
  %1436 = vmatprep.mubr.bf16.mxu0 0
  %1437 = vmatmul.mubr.bf16.gmra.mrb[0].mxu0 %v1282
  %v1438 = vpop.f32.mrb[0].mxu0
  %v1439 = vadd.f32 0.0, %v1438
  %v1440 = vpop.f32.mrb[0].mxu0
  %v1441 = vpop.f32.mrb[0].mxu0
  %v1442 = vadd.f32 0.0, %v1441
  %v1443 = vpop.f32.mrb[0].mxu0
  %1444 = vmatprep.mubr.bf16.mxu0 0
  %1445 = vmatmul.mubr.bf16.gmra.mrb[0].mxu0 %v1283
  %v1446 = vpop.f32.mrb[0].mxu0
  %v1447 = vadd.f32 0.0, %v1446
  %v1448 = vpop.f32.mrb[0].mxu0
  %v1449 = vpop.f32.mrb[0].mxu0
  %v1450 = vadd.f32 0.0, %v1449
  %v1451 = vpop.f32.mrb[0].mxu0
  %1452 = vmatprep.mubr.bf16.mxu0 0
  %1453 = vmatmul.mubr.bf16.gmra.mrb[0].mxu0 %v1284
  %v1454 = vpop.f32.mrb[0].mxu0
  %v1455 = vadd.f32 0.0, %v1454
  %v1456 = vpop.f32.mrb[0].mxu0
  %v1457 = vpop.f32.mrb[0].mxu0
  %v1458 = vadd.f32 0.0, %v1457
  %v1459 = vpop.f32.mrb[0].mxu0
  %1460 = vmatprep.mubr.bf16.mxu0 0
  %1461 = vmatmul.mubr.bf16.gmra.mrb[0].mxu0 %v1285
  %v1462 = vpop.f32.mrb[0].mxu0
  %v1463 = vadd.f32 0.0, %v1462
  %v1464 = vpop.f32.mrb[0].mxu0
  %v1465 = vpop.f32.mrb[0].mxu0
  %v1466 = vadd.f32 0.0, %v1465
  %v1467 = vpop.f32.mrb[0].mxu0
  %1468 = vmatprep.mubr.bf16.mxu0 0
  %1469 = vmatmul.mubr.bf16.gmra.mrb[0].mxu0 %v1286
  %v1470 = vpop.f32.mrb[0].mxu0
  %v1471 = vadd.f32 0.0, %v1470
  %v1472 = vpop.f32.mrb[0].mxu0
  %v1473 = vpop.f32.mrb[0].mxu0
  %v1474 = vadd.f32 0.0, %v1473
  %v1475 = vpop.f32.mrb[0].mxu0
  %1476 = vmatprep.mubr.bf16.mxu0 0
  %1477 = vmatmul.mubr.bf16.gmra.mrb[0].mxu0 %v1287
  %v1478 = vpop.f32.mrb[0].mxu0
  %v1479 = vadd.f32 0.0, %v1478
  %v1480 = vpop.f32.mrb[0].mxu0
  %v1481 = vpop.f32.mrb[0].mxu0
  %v1482 = vadd.f32 0.0, %v1481
  %v1483 = vpop.f32.mrb[0].mxu0
  %1484 = vmatprep.mubr.bf16.mxu0 0
  %1485 = vmatmul.mubr.bf16.gmra.mrb[0].mxu0 %v1288
  %v1486 = vpop.f32.mrb[0].mxu0
  %v1487 = vadd.f32 0.0, %v1486
  %v1488 = vpop.f32.mrb[0].mxu0
  %v1489 = vpop.f32.mrb[0].mxu0
  %v1490 = vadd.f32 0.0, %v1489
  %v1491 = vpop.f32.mrb[0].mxu0
  %1492 = vmatprep.mubr.bf16.mxu0 0
  %1493 = vmatmul.mubr.bf16.gmra.mrb[0].mxu0 %v1289
  %v1494 = vpop.f32.mrb[0].mxu0
  %v1495 = vadd.f32 0.0, %v1494
  %v1496 = vpop.f32.mrb[0].mxu0
  %v1497 = vpop.f32.mrb[0].mxu0
  %v1498 = vadd.f32 0.0, %v1497
  %v1499 = vpop.f32.mrb[0].mxu0
  %1500 = vmatprep.mubr.bf16.mxu0 0
  %1501 = vmatmul.mubr.bf16.gmra.mrb[0].mxu0 %v1290
  %v1502 = vpop.f32.mrb[0].mxu0
  %v1503 = vadd.f32 0.0, %v1502
  %v1504 = vpop.f32.mrb[0].mxu0
  %v1505 = vpop.f32.mrb[0].mxu0
  %v1506 = vadd.f32 0.0, %v1505
  %v1507 = vpop.f32.mrb[0].mxu0
  %1508 = vmatprep.mubr.bf16.mxu0 0
  %1509 = vmatmul.mubr.bf16.gmra.mrb[0].mxu0 %v1291
  %v1510 = vpop.f32.mrb[0].mxu0
  %v1511 = vadd.f32 0.0, %v1510
  %v1512 = vpop.f32.mrb[0].mxu0
  %v1513 = vpop.f32.mrb[0].mxu0
  %v1514 = vadd.f32 0.0, %v1513
  %v1515 = vpop.f32.mrb[0].mxu0
  %1516 = vdwg.mxu0
  %v1517 = vadd.f32 %v1164, %v1391
  %v1518 = vadd.f32 %v1165, %v1394
  %v1519 = vadd.f32 %v1166, %v1399
  %v1520 = vadd.f32 %v1167, %v1402
  %v1521 = vadd.f32 %v1168, %v1407
  %v1522 = vadd.f32 %v1169, %v1410
  %v1523 = vadd.f32 %v1170, %v1415
  %v1524 = vadd.f32 %v1171, %v1418
  %v1525 = vadd.f32 %v1172, %v1423
  %v1526 = vadd.f32 %v1173, %v1426
  %v1527 = vadd.f32 %v1174, %v1431
  %v1528 = vadd.f32 %v1175, %v1434
  %v1529 = vadd.f32 %v1176, %v1439
  %v1530 = vadd.f32 %v1177, %v1442
  %v1531 = vadd.f32 %v1178, %v1447
  %v1532 = vadd.f32 %v1179, %v1450
  %v1533 = vadd.f32 %v1180, %v1455
  %v1534 = vadd.f32 %v1181, %v1458
  %v1535 = vadd.f32 %v1182, %v1463
  %v1536 = vadd.f32 %v1183, %v1466
  %v1537 = vadd.f32 %v1184, %v1471
  %v1538 = vadd.f32 %v1185, %v1474
  %v1539 = vadd.f32 %v1186, %v1479
  %v1540 = vadd.f32 %v1187, %v1482
  %v1541 = vadd.f32 %v1188, %v1487
  %v1542 = vadd.f32 %v1189, %v1490
  %v1543 = vadd.f32 %v1190, %v1495
  %v1544 = vadd.f32 %v1191, %v1498
  %v1545 = vadd.f32 %v1192, %v1503
  %v1546 = vadd.f32 %v1193, %v1506
  %v1547 = vadd.f32 %v1194, %v1511
  %v1548 = vadd.f32 %v1195, %v1514
  %1549 = vst [vmem:[#allocation3] sm:$0xff] %v1517
  %1550 = vst [vmem:[#allocation3 + $0x8] sm:$0xff] %v1518
  %1551 = vst [vmem:[#allocation3 + $0x10] sm:$0xff] %v1519
  %1552 = vst [vmem:[#allocation3 + $0x18] sm:$0xff] %v1520
  %1553 = vst [vmem:[#allocation3 + $0x20] sm:$0xff] %v1521
  %1554 = vst [vmem:[#allocation3 + $0x28] sm:$0xff] %v1522
  %1555 = vst [vmem:[#allocation3 + $0x30] sm:$0xff] %v1523
  %1556 = vst [vmem:[#allocation3 + $0x38] sm:$0xff] %v1524
  %1557 = vst [vmem:[#allocation3 + $0x40] sm:$0xff] %v1525
  %1558 = vst [vmem:[#allocation3 + $0x48] sm:$0xff] %v1526
  %1559 = vst [vmem:[#allocation3 + $0x50] sm:$0xff] %v1527
  %1560 = vst [vmem:[#allocation3 + $0x58] sm:$0xff] %v1528
  %1561 = vst [vmem:[#allocation3 + $0x60] sm:$0xff] %v1529
  %1562 = vst [vmem:[#allocation3 + $0x68] sm:$0xff] %v1530
  %1563 = vst [vmem:[#allocation3 + $0x70] sm:$0xff] %v1531
  %1564 = vst [vmem:[#allocation3 + $0x78] sm:$0xff] %v1532
  %1565 = vst [vmem:[#allocation3 + $0x80] sm:$0xff] %v1533
  %1566 = vst [vmem:[#allocation3 + $0x88] sm:$0xff] %v1534
  %1567 = vst [vmem:[#allocation3 + $0x90] sm:$0xff] %v1535
  %1568 = vst [vmem:[#allocation3 + $0x98] sm:$0xff] %v1536
  %1569 = vst [vmem:[#allocation3 + $0xa0] sm:$0xff] %v1537
  %1570 = vst [vmem:[#allocation3 + $0xa8] sm:$0xff] %v1538
  %1571 = vst [vmem:[#allocation3 + $0xb0] sm:$0xff] %v1539
  %1572 = vst [vmem:[#allocation3 + $0xb8] sm:$0xff] %v1540
  %1573 = vst [vmem:[#allocation3 + $0xc0] sm:$0xff] %v1541
  %1574 = vst [vmem:[#allocation3 + $0xc8] sm:$0xff] %v1542
  %1575 = vst [vmem:[#allocation3 + $0xd0] sm:$0xff] %v1543
  %1576 = vst [vmem:[#allocation3 + $0xd8] sm:$0xff] %v1544
  %1577 = vst [vmem:[#allocation3 + $0xe0] sm:$0xff] %v1545
  %1578 = vst [vmem:[#allocation3 + $0xe8] sm:$0xff] %v1546
  %1579 = vst [vmem:[#allocation3 + $0xf0] sm:$0xff] %v1547
  %1580 = vst [vmem:[#allocation3 + $0xf8] sm:$0xff] %v1548
  %v1581 = vld [vmem:[#allocation3] sm:$0xff]
  %v1582 = vld [vmem:[#allocation3 + $0x8] sm:$0xff]
  %v1583 = vld [vmem:[#allocation3 + $0x10] sm:$0xff]
  %v1584 = vld [vmem:[#allocation3 + $0x18] sm:$0xff]
  %v1585 = vld [vmem:[#allocation3 + $0x20] sm:$0xff]
  %v1586 = vld [vmem:[#allocation3 + $0x28] sm:$0xff]
  %v1587 = vld [vmem:[#allocation3 + $0x30] sm:$0xff]
  %v1588 = vld [vmem:[#allocation3 + $0x38] sm:$0xff]
  %v1589 = vld [vmem:[#allocation3 + $0x40] sm:$0xff]
  %v1590 = vld [vmem:[#allocation3 + $0x48] sm:$0xff]
  %v1591 = vld [vmem:[#allocation3 + $0x50] sm:$0xff]
  %v1592 = vld [vmem:[#allocation3 + $0x58] sm:$0xff]
  %v1593 = vld [vmem:[#allocation3 + $0x60] sm:$0xff]
  %v1594 = vld [vmem:[#allocation3 + $0x68] sm:$0xff]
  %v1595 = vld [vmem:[#allocation3 + $0x70] sm:$0xff]
  %v1596 = vld [vmem:[#allocation3 + $0x78] sm:$0xff]
  %v1597 = vld [vmem:[#allocation3 + $0x80] sm:$0xff]
  %v1598 = vld [vmem:[#allocation3 + $0x88] sm:$0xff]
  %v1599 = vld [vmem:[#allocation3 + $0x90] sm:$0xff]
  %v1600 = vld [vmem:[#allocation3 + $0x98] sm:$0xff]
  %v1601 = vld [vmem:[#allocation3 + $0xa0] sm:$0xff]
  %v1602 = vld [vmem:[#allocation3 + $0xa8] sm:$0xff]
  %v1603 = vld [vmem:[#allocation3 + $0xb0] sm:$0xff]
  %v1604 = vld [vmem:[#allocation3 + $0xb8] sm:$0xff]
  %v1605 = vld [vmem:[#allocation3 + $0xc0] sm:$0xff]
  %v1606 = vld [vmem:[#allocation3 + $0xc8] sm:$0xff]
  %v1607 = vld [vmem:[#allocation3 + $0xd0] sm:$0xff]
  %v1608 = vld [vmem:[#allocation3 + $0xd8] sm:$0xff]
  %v1609 = vld [vmem:[#allocation3 + $0xe0] sm:$0xff]
  %v1610 = vld [vmem:[#allocation3 + $0xe8] sm:$0xff]
  %v1611 = vld [vmem:[#allocation3 + $0xf0] sm:$0xff]
  %v1612 = vld [vmem:[#allocation3 + $0xf8] sm:$0xff]
  %s1613 = scalar_lea.vmem %s1, 192
  %v1614 = vld [vmem:[%s1613] sm:$0xf]
  %v1615 = vld [vmem:[%s1613 + $0x4] sm:$0xf]
  %v1616 = vld [vmem:[%s1613 + $0x8] sm:$0xf]
  %v1617 = vld [vmem:[%s1613 + $0xc] sm:$0xf]
  %v1618 = vld [vmem:[%s1613 + $0x10] sm:$0xf]
  %v1619 = vld [vmem:[%s1613 + $0x14] sm:$0xf]
  %v1620 = vld [vmem:[%s1613 + $0x18] sm:$0xf]
  %v1621 = vld [vmem:[%s1613 + $0x1c] sm:$0xf]
  %v1622 = vld [vmem:[%s1613 + $0x20] sm:$0xf]
  %v1623 = vld [vmem:[%s1613 + $0x24] sm:$0xf]
  %v1624 = vld [vmem:[%s1613 + $0x28] sm:$0xf]
  %v1625 = vld [vmem:[%s1613 + $0x2c] sm:$0xf]
  %v1626 = vld [vmem:[%s1613 + $0x30] sm:$0xf]
  %v1627 = vld [vmem:[%s1613 + $0x34] sm:$0xf]
  %v1628 = vld [vmem:[%s1613 + $0x38] sm:$0xf]
  %v1629 = vld [vmem:[%s1613 + $0x3c] sm:$0xf]
  %v1632 = vunpack.c.l.b16 %v1160
  %v1633 = vunpack.c.l.b16 %v1161
  %v1634 = vpack.c.b16 %v1633, %v1632
  %v1652 = vunpack.c.l.b16 %v1614
  %v1653 = vunpack.c.l.b16 %v1615
  %v1654 = vunpack.c.l.b16 %v1616
  %v1655 = vunpack.c.l.b16 %v1617
  %v1656 = vunpack.c.l.b16 %v1618
  %v1657 = vunpack.c.l.b16 %v1619
  %v1658 = vunpack.c.l.b16 %v1620
  %v1659 = vunpack.c.l.b16 %v1621
  %v1660 = vunpack.c.l.b16 %v1622
  %v1661 = vunpack.c.l.b16 %v1623
  %v1662 = vunpack.c.l.b16 %v1624
  %v1663 = vunpack.c.l.b16 %v1625
  %v1664 = vunpack.c.l.b16 %v1626
  %v1665 = vunpack.c.l.b16 %v1627
  %v1666 = vunpack.c.l.b16 %v1628
  %v1667 = vunpack.c.l.b16 %v1629
  %v1668 = vpack.c.b16 %v1653, %v1652
  %v1669 = vpack.c.b16 %v1655, %v1654
  %v1670 = vpack.c.b16 %v1657, %v1656
  %v1671 = vpack.c.b16 %v1659, %v1658
  %v1672 = vpack.c.b16 %v1661, %v1660
  %v1673 = vpack.c.b16 %v1663, %v1662
  %v1674 = vpack.c.b16 %v1665, %v1664
  %v1675 = vpack.c.b16 %v1667, %v1666
  %1684 = vmatprep.subr.bf16.mxu0 0
  %1685 = vmatpush1.bf16.msra.mxu0 %v1668
  %1686 = vmatprep.subr.bf16.mxu0 0
  %1687 = vmatpush1.bf16.msra.mxu0 %v1669
  %1688 = vmatprep.subr.bf16.mxu0 0
  %1689 = vmatpush1.bf16.msra.mxu0 %v1670
  %1690 = vmatprep.subr.bf16.mxu0 0
  %1691 = vmatpush1.bf16.msra.mxu0 %v1671
  %1692 = vmatprep.subr.bf16.mxu0 0
  %1693 = vmatpush1.bf16.msra.mxu0 %v1672
  %1694 = vmatprep.subr.bf16.mxu0 0
  %1695 = vmatpush1.bf16.msra.mxu0 %v1673
  %1696 = vmatprep.subr.bf16.mxu0 0
  %1697 = vmatpush1.bf16.msra.mxu0 %v1674
  %1698 = vmatprep.subr.bf16.mxu0 0
  %1699 = vmatpush1.bf16.msra.mxu0 %v1675
  %1700 = vmatprep.subr.bf16.mxu0 0
  %1701 = vmatpush1.bf16.msra.mxu0 0
  %1702 = vmatprep.subr.bf16.mxu0 0
  %1703 = vmatpush1.bf16.msra.mxu0 0
  %1704 = vmatprep.subr.bf16.mxu0 0
  %1705 = vmatpush1.bf16.msra.mxu0 0
  %1706 = vmatprep.subr.bf16.mxu0 0
  %1707 = vmatpush1.bf16.msra.mxu0 0
  %1708 = vmatprep.subr.bf16.mxu0 0
  %1709 = vmatpush1.bf16.msra.mxu0 0
  %1710 = vmatprep.subr.bf16.mxu0 0
  %1711 = vmatpush1.bf16.msra.mxu0 0
  %1712 = vmatprep.subr.bf16.mxu0 0
  %1713 = vmatpush1.bf16.msra.mxu0 0
  %1714 = vmatprep.subr.bf16.mxu0 0
  %1715 = vmatpush1.bf16.msra.mxu0 0
  %1716 = vmatprep.mubr.bf16.mxu0 0
  %1717 = vmatmul.mubr.bf16.gmra.mrb[0].mxu0 %v1277
  %v1718 = vpop.f32.mrb[0].mxu0
  %v1719 = vadd.f32 0.0, %v1718
  %v1720 = vpop.f32.mrb[0].mxu0
  %v1721 = vpop.f32.mrb[0].mxu0
  %v1722 = vadd.f32 0.0, %v1721
  %v1723 = vpop.f32.mrb[0].mxu0
  %1724 = vmatprep.mubr.bf16.mxu0 0
  %1725 = vmatmul.mubr.bf16.gmra.mrb[0].mxu0 %v1278
  %v1726 = vpop.f32.mrb[0].mxu0
  %v1727 = vadd.f32 0.0, %v1726
  %v1728 = vpop.f32.mrb[0].mxu0
  %v1729 = vpop.f32.mrb[0].mxu0
  %v1730 = vadd.f32 0.0, %v1729
  %v1731 = vpop.f32.mrb[0].mxu0
  %1732 = vmatprep.mubr.bf16.mxu0 0
  %1733 = vmatmul.mubr.bf16.gmra.mrb[0].mxu0 %v1279
  %v1734 = vpop.f32.mrb[0].mxu0
  %v1735 = vadd.f32 0.0, %v1734
  %v1736 = vpop.f32.mrb[0].mxu0
  %v1737 = vpop.f32.mrb[0].mxu0
  %v1738 = vadd.f32 0.0, %v1737
  %v1739 = vpop.f32.mrb[0].mxu0
  %1740 = vmatprep.mubr.bf16.mxu0 0
  %1741 = vmatmul.mubr.bf16.gmra.mrb[0].mxu0 %v1280
  %v1742 = vpop.f32.mrb[0].mxu0
  %v1743 = vadd.f32 0.0, %v1742
  %v1744 = vpop.f32.mrb[0].mxu0
  %v1745 = vpop.f32.mrb[0].mxu0
  %v1746 = vadd.f32 0.0, %v1745
  %v1747 = vpop.f32.mrb[0].mxu0
  %1748 = vmatprep.mubr.bf16.mxu0 0
  %1749 = vmatmul.mubr.bf16.gmra.mrb[0].mxu0 %v1281
  %v1750 = vpop.f32.mrb[0].mxu0
  %v1751 = vadd.f32 0.0, %v1750
  %v1752 = vpop.f32.mrb[0].mxu0
  %v1753 = vpop.f32.mrb[0].mxu0
  %v1754 = vadd.f32 0.0, %v1753
  %v1755 = vpop.f32.mrb[0].mxu0
  %1756 = vmatprep.mubr.bf16.mxu0 0
  %1757 = vmatmul.mubr.bf16.gmra.mrb[0].mxu0 %v1282
  %v1758 = vpop.f32.mrb[0].mxu0
  %v1759 = vadd.f32 0.0, %v1758
  %v1760 = vpop.f32.mrb[0].mxu0
  %v1761 = vpop.f32.mrb[0].mxu0
  %v1762 = vadd.f32 0.0, %v1761
  %v1763 = vpop.f32.mrb[0].mxu0
  %1764 = vmatprep.mubr.bf16.mxu0 0
  %1765 = vmatmul.mubr.bf16.gmra.mrb[0].mxu0 %v1283
  %v1766 = vpop.f32.mrb[0].mxu0
  %v1767 = vadd.f32 0.0, %v1766
  %v1768 = vpop.f32.mrb[0].mxu0
  %v1769 = vpop.f32.mrb[0].mxu0
  %v1770 = vadd.f32 0.0, %v1769
  %v1771 = vpop.f32.mrb[0].mxu0
  %1772 = vmatprep.mubr.bf16.mxu0 0
  %1773 = vmatmul.mubr.bf16.gmra.mrb[0].mxu0 %v1284
  %v1774 = vpop.f32.mrb[0].mxu0
  %v1775 = vadd.f32 0.0, %v1774
  %v1776 = vpop.f32.mrb[0].mxu0
  %v1777 = vpop.f32.mrb[0].mxu0
  %v1778 = vadd.f32 0.0, %v1777
  %v1779 = vpop.f32.mrb[0].mxu0
  %1780 = vmatprep.mubr.bf16.mxu0 0
  %1781 = vmatmul.mubr.bf16.gmra.mrb[0].mxu0 %v1285
  %v1782 = vpop.f32.mrb[0].mxu0
  %v1783 = vadd.f32 0.0, %v1782
  %v1784 = vpop.f32.mrb[0].mxu0
  %v1785 = vpop.f32.mrb[0].mxu0
  %v1786 = vadd.f32 0.0, %v1785
  %v1787 = vpop.f32.mrb[0].mxu0
  %1788 = vmatprep.mubr.bf16.mxu0 0
  %1789 = vmatmul.mubr.bf16.gmra.mrb[0].mxu0 %v1286
  %v1790 = vpop.f32.mrb[0].mxu0
  %v1791 = vadd.f32 0.0, %v1790
  %v1792 = vpop.f32.mrb[0].mxu0
  %v1793 = vpop.f32.mrb[0].mxu0
  %v1794 = vadd.f32 0.0, %v1793
  %v1795 = vpop.f32.mrb[0].mxu0
  %1796 = vmatprep.mubr.bf16.mxu0 0
  %1797 = vmatmul.mubr.bf16.gmra.mrb[0].mxu0 %v1287
  %v1798 = vpop.f32.mrb[0].mxu0
  %v1799 = vadd.f32 0.0, %v1798
  %v1800 = vpop.f32.mrb[0].mxu0
  %v1801 = vpop.f32.mrb[0].mxu0
  %v1802 = vadd.f32 0.0, %v1801
  %v1803 = vpop.f32.mrb[0].mxu0
  %1804 = vmatprep.mubr.bf16.mxu0 0
  %1805 = vmatmul.mubr.bf16.gmra.mrb[0].mxu0 %v1288
  %v1806 = vpop.f32.mrb[0].mxu0
  %v1807 = vadd.f32 0.0, %v1806
  %v1808 = vpop.f32.mrb[0].mxu0
  %v1809 = vpop.f32.mrb[0].mxu0
  %v1810 = vadd.f32 0.0, %v1809
  %v1811 = vpop.f32.mrb[0].mxu0
  %1812 = vmatprep.mubr.bf16.mxu0 0
  %1813 = vmatmul.mubr.bf16.gmra.mrb[0].mxu0 %v1289
  %v1814 = vpop.f32.mrb[0].mxu0
  %v1815 = vadd.f32 0.0, %v1814
  %v1816 = vpop.f32.mrb[0].mxu0
  %v1817 = vpop.f32.mrb[0].mxu0
  %v1818 = vadd.f32 0.0, %v1817
  %v1819 = vpop.f32.mrb[0].mxu0
  %1820 = vmatprep.mubr.bf16.mxu0 0
  %1821 = vmatmul.mubr.bf16.gmra.mrb[0].mxu0 %v1290
  %v1822 = vpop.f32.mrb[0].mxu0
  %v1823 = vadd.f32 0.0, %v1822
  %v1824 = vpop.f32.mrb[0].mxu0
  %v1825 = vpop.f32.mrb[0].mxu0
  %v1826 = vadd.f32 0.0, %v1825
  %v1827 = vpop.f32.mrb[0].mxu0
  %1828 = vmatprep.mubr.bf16.mxu0 0
  %1829 = vmatmul.mubr.bf16.gmra.mrb[0].mxu0 %v1291
  %v1830 = vpop.f32.mrb[0].mxu0
  %v1831 = vadd.f32 0.0, %v1830
  %v1832 = vpop.f32.mrb[0].mxu0
  %v1833 = vpop.f32.mrb[0].mxu0
  %v1834 = vadd.f32 0.0, %v1833
  %v1835 = vpop.f32.mrb[0].mxu0
  %1836 = vmatprep.mubr.bf16.mxu0 0
  %1837 = vmatmul.mubr.bf16.gmra.mrb[0].mxu0 %v1634
  %v1838 = vpop.f32.mrb[0].mxu0
  %v1839 = vadd.f32 0.0, %v1838
  %v1840 = vpop.f32.mrb[0].mxu0
  %v1841 = vpop.f32.mrb[0].mxu0
  %v1842 = vadd.f32 0.0, %v1841
  %v1843 = vpop.f32.mrb[0].mxu0
  %1844 = vdwg.mxu0
  %v1845 = vadd.f32 %v1581, %v1719
  %v1846 = vadd.f32 %v1582, %v1722
  %v1847 = vadd.f32 %v1583, %v1727
  %v1848 = vadd.f32 %v1584, %v1730
  %v1849 = vadd.f32 %v1585, %v1735
  %v1850 = vadd.f32 %v1586, %v1738
  %v1851 = vadd.f32 %v1587, %v1743
  %v1852 = vadd.f32 %v1588, %v1746
  %v1853 = vadd.f32 %v1589, %v1751
  %v1854 = vadd.f32 %v1590, %v1754
  %v1855 = vadd.f32 %v1591, %v1759
  %v1856 = vadd.f32 %v1592, %v1762
  %v1857 = vadd.f32 %v1593, %v1767
  %v1858 = vadd.f32 %v1594, %v1770
  %v1859 = vadd.f32 %v1595, %v1775
  %v1860 = vadd.f32 %v1596, %v1778
  %v1861 = vadd.f32 %v1597, %v1783
  %v1862 = vadd.f32 %v1598, %v1786
  %v1863 = vadd.f32 %v1599, %v1791
  %v1864 = vadd.f32 %v1600, %v1794
  %v1865 = vadd.f32 %v1601, %v1799
  %v1866 = vadd.f32 %v1602, %v1802
  %v1867 = vadd.f32 %v1603, %v1807
  %v1868 = vadd.f32 %v1604, %v1810
  %v1869 = vadd.f32 %v1605, %v1815
  %v1870 = vadd.f32 %v1606, %v1818
  %v1871 = vadd.f32 %v1607, %v1823
  %v1872 = vadd.f32 %v1608, %v1826
  %v1873 = vadd.f32 %v1609, %v1831
  %v1874 = vadd.f32 %v1610, %v1834
  %v1875 = vadd.f32 %v1611, %v1839
  %v1876 = vadd.f32 %v1612, %v1842
  %1877 = vst [vmem:[#allocation3] sm:$0xff] %v1845
  %1878 = vst [vmem:[#allocation3 + $0x8] sm:$0xff] %v1846
  %1879 = vst [vmem:[#allocation3 + $0x10] sm:$0xff] %v1847
  %1880 = vst [vmem:[#allocation3 + $0x18] sm:$0xff] %v1848
  %1881 = vst [vmem:[#allocation3 + $0x20] sm:$0xff] %v1849
  %1882 = vst [vmem:[#allocation3 + $0x28] sm:$0xff] %v1850
  %1883 = vst [vmem:[#allocation3 + $0x30] sm:$0xff] %v1851
  %1884 = vst [vmem:[#allocation3 + $0x38] sm:$0xff] %v1852
  %1885 = vst [vmem:[#allocation3 + $0x40] sm:$0xff] %v1853
  %1886 = vst [vmem:[#allocation3 + $0x48] sm:$0xff] %v1854
  %1887 = vst [vmem:[#allocation3 + $0x50] sm:$0xff] %v1855
  %1888 = vst [vmem:[#allocation3 + $0x58] sm:$0xff] %v1856
  %1889 = vst [vmem:[#allocation3 + $0x60] sm:$0xff] %v1857
  %1890 = vst [vmem:[#allocation3 + $0x68] sm:$0xff] %v1858
  %1891 = vst [vmem:[#allocation3 + $0x70] sm:$0xff] %v1859
  %1892 = vst [vmem:[#allocation3 + $0x78] sm:$0xff] %v1860
  %1893 = vst [vmem:[#allocation3 + $0x80] sm:$0xff] %v1861
  %1894 = vst [vmem:[#allocation3 + $0x88] sm:$0xff] %v1862
  %1895 = vst [vmem:[#allocation3 + $0x90] sm:$0xff] %v1863
  %1896 = vst [vmem:[#allocation3 + $0x98] sm:$0xff] %v1864
  %1897 = vst [vmem:[#allocation3 + $0xa0] sm:$0xff] %v1865
  %1898 = vst [vmem:[#allocation3 + $0xa8] sm:$0xff] %v1866
  %1899 = vst [vmem:[#allocation3 + $0xb0] sm:$0xff] %v1867
  %1900 = vst [vmem:[#allocation3 + $0xb8] sm:$0xff] %v1868
  %1901 = vst [vmem:[#allocation3 + $0xc0] sm:$0xff] %v1869
  %1902 = vst [vmem:[#allocation3 + $0xc8] sm:$0xff] %v1870
  %1903 = vst [vmem:[#allocation3 + $0xd0] sm:$0xff] %v1871
  %1904 = vst [vmem:[#allocation3 + $0xd8] sm:$0xff] %v1872
  %1905 = vst [vmem:[#allocation3 + $0xe0] sm:$0xff] %v1873
  %1906 = vst [vmem:[#allocation3 + $0xe8] sm:$0xff] %v1874
  %1907 = vst [vmem:[#allocation3 + $0xf0] sm:$0xff] %v1875
  %1908 = vst [vmem:[#allocation3 + $0xf8] sm:$0xff] %v1876
  %v1909 = vld [vmem:[#allocation3] sm:$0xff]
  %v1910 = vld [vmem:[#allocation3 + $0x8] sm:$0xff]
  %v1911 = vld [vmem:[#allocation3 + $0x10] sm:$0xff]
  %v1912 = vld [vmem:[#allocation3 + $0x18] sm:$0xff]
  %v1913 = vld [vmem:[#allocation3 + $0x20] sm:$0xff]
  %v1914 = vld [vmem:[#allocation3 + $0x28] sm:$0xff]
  %v1915 = vld [vmem:[#allocation3 + $0x30] sm:$0xff]
  %v1916 = vld [vmem:[#allocation3 + $0x38] sm:$0xff]
  %v1917 = vld [vmem:[#allocation3 + $0x40] sm:$0xff]
  %v1918 = vld [vmem:[#allocation3 + $0x48] sm:$0xff]
  %v1919 = vld [vmem:[#allocation3 + $0x50] sm:$0xff]
  %v1920 = vld [vmem:[#allocation3 + $0x58] sm:$0xff]
  %v1921 = vld [vmem:[#allocation3 + $0x60] sm:$0xff]
  %v1922 = vld [vmem:[#allocation3 + $0x68] sm:$0xff]
  %v1923 = vld [vmem:[#allocation3 + $0x70] sm:$0xff]
  %v1924 = vld [vmem:[#allocation3 + $0x78] sm:$0xff]
  %v1925 = vld [vmem:[#allocation3 + $0x80] sm:$0xff]
  %v1926 = vld [vmem:[#allocation3 + $0x88] sm:$0xff]
  %v1927 = vld [vmem:[#allocation3 + $0x90] sm:$0xff]
  %v1928 = vld [vmem:[#allocation3 + $0x98] sm:$0xff]
  %v1929 = vld [vmem:[#allocation3 + $0xa0] sm:$0xff]
  %v1930 = vld [vmem:[#allocation3 + $0xa8] sm:$0xff]
  %v1931 = vld [vmem:[#allocation3 + $0xb0] sm:$0xff]
  %v1932 = vld [vmem:[#allocation3 + $0xb8] sm:$0xff]
  %v1933 = vld [vmem:[#allocation3 + $0xc0] sm:$0xff]
  %v1934 = vld [vmem:[#allocation3 + $0xc8] sm:$0xff]
  %v1935 = vld [vmem:[#allocation3 + $0xd0] sm:$0xff]
  %v1936 = vld [vmem:[#allocation3 + $0xd8] sm:$0xff]
  %v1937 = vld [vmem:[#allocation3 + $0xe0] sm:$0xff]
  %v1938 = vld [vmem:[#allocation3 + $0xe8] sm:$0xff]
  %v1939 = vld [vmem:[#allocation3 + $0xf0] sm:$0xff]
  %v1940 = vld [vmem:[#allocation3 + $0xf8] sm:$0xff]
  %s1941 = scalar_lea.vmem %s1, 384
  %v1942 = vld [vmem:[%s1941] sm:$0xf]
  %v1943 = vld [vmem:[%s1941 + $0x4] sm:$0xf]
  %v1944 = vld [vmem:[%s1941 + $0x8] sm:$0xf]
  %v1945 = vld [vmem:[%s1941 + $0xc] sm:$0xf]
  %v1946 = vld [vmem:[%s1941 + $0x10] sm:$0xf]
  %v1947 = vld [vmem:[%s1941 + $0x14] sm:$0xf]
  %v1948 = vld [vmem:[%s1941 + $0x18] sm:$0xf]
  %v1949 = vld [vmem:[%s1941 + $0x1c] sm:$0xf]
  %v1950 = vld [vmem:[%s1941 + $0x20] sm:$0xf]
  %v1951 = vld [vmem:[%s1941 + $0x24] sm:$0xf]
  %v1952 = vld [vmem:[%s1941 + $0x28] sm:$0xf]
  %v1953 = vld [vmem:[%s1941 + $0x2c] sm:$0xf]
  %v1954 = vld [vmem:[%s1941 + $0x30] sm:$0xf]
  %v1955 = vld [vmem:[%s1941 + $0x34] sm:$0xf]
  %v1956 = vld [vmem:[%s1941 + $0x38] sm:$0xf]
  %v1957 = vld [vmem:[%s1941 + $0x3c] sm:$0xf]
  %v1960 = vunpack.c.l.b16 %v1162
  %v1961 = vunpack.c.l.b16 %v1163
  %v1962 = vpack.c.b16 %v1961, %v1960
  %v1980 = vunpack.c.l.b16 %v1942
  %v1981 = vunpack.c.l.b16 %v1943
  %v1982 = vunpack.c.l.b16 %v1944
  %v1983 = vunpack.c.l.b16 %v1945
  %v1984 = vunpack.c.l.b16 %v1946
  %v1985 = vunpack.c.l.b16 %v1947
  %v1986 = vunpack.c.l.b16 %v1948
  %v1987 = vunpack.c.l.b16 %v1949
  %v1988 = vunpack.c.l.b16 %v1950
  %v1989 = vunpack.c.l.b16 %v1951
  %v1990 = vunpack.c.l.b16 %v1952
  %v1991 = vunpack.c.l.b16 %v1953
  %v1992 = vunpack.c.l.b16 %v1954
  %v1993 = vunpack.c.l.b16 %v1955
  %v1994 = vunpack.c.l.b16 %v1956
  %v1995 = vunpack.c.l.b16 %v1957
  %v1996 = vpack.c.b16 %v1981, %v1980
  %v1997 = vpack.c.b16 %v1983, %v1982
  %v1998 = vpack.c.b16 %v1985, %v1984
  %v1999 = vpack.c.b16 %v1987, %v1986
  %v2000 = vpack.c.b16 %v1989, %v1988
  %v2001 = vpack.c.b16 %v1991, %v1990
  %v2002 = vpack.c.b16 %v1993, %v1992
  %v2003 = vpack.c.b16 %v1995, %v1994
  %2012 = vmatprep.subr.bf16.mxu0 0
  %2013 = vmatpush1.bf16.msra.mxu0 %v1996
  %2014 = vmatprep.subr.bf16.mxu0 0
  %2015 = vmatpush1.bf16.msra.mxu0 %v1997
  %2016 = vmatprep.subr.bf16.mxu0 0
  %2017 = vmatpush1.bf16.msra.mxu0 %v1998
  %2018 = vmatprep.subr.bf16.mxu0 0
  %2019 = vmatpush1.bf16.msra.mxu0 %v1999
  %2020 = vmatprep.subr.bf16.mxu0 0
  %2021 = vmatpush1.bf16.msra.mxu0 %v2000
  %2022 = vmatprep.subr.bf16.mxu0 0
  %2023 = vmatpush1.bf16.msra.mxu0 %v2001
  %2024 = vmatprep.subr.bf16.mxu0 0
  %2025 = vmatpush1.bf16.msra.mxu0 %v2002
  %2026 = vmatprep.subr.bf16.mxu0 0
  %2027 = vmatpush1.bf16.msra.mxu0 %v2003
  %2028 = vmatprep.subr.bf16.mxu0 0
  %2029 = vmatpush1.bf16.msra.mxu0 0
  %2030 = vmatprep.subr.bf16.mxu0 0
  %2031 = vmatpush1.bf16.msra.mxu0 0
  %2032 = vmatprep.subr.bf16.mxu0 0
  %2033 = vmatpush1.bf16.msra.mxu0 0
  %2034 = vmatprep.subr.bf16.mxu0 0
  %2035 = vmatpush1.bf16.msra.mxu0 0
  %2036 = vmatprep.subr.bf16.mxu0 0
  %2037 = vmatpush1.bf16.msra.mxu0 0
  %2038 = vmatprep.subr.bf16.mxu0 0
  %2039 = vmatpush1.bf16.msra.mxu0 0
  %2040 = vmatprep.subr.bf16.mxu0 0
  %2041 = vmatpush1.bf16.msra.mxu0 0
  %2042 = vmatprep.subr.bf16.mxu0 0
  %2043 = vmatpush1.bf16.msra.mxu0 0
  %2044 = vmatprep.mubr.bf16.mxu0 0
  %2045 = vmatmul.mubr.bf16.gmra.mrb[0].mxu0 %v1278
  %v2046 = vpop.f32.mrb[0].mxu0
  %v2047 = vadd.f32 0.0, %v2046
  %v2048 = vpop.f32.mrb[0].mxu0
  %v2049 = vpop.f32.mrb[0].mxu0
  %v2050 = vadd.f32 0.0, %v2049
  %v2051 = vpop.f32.mrb[0].mxu0
  %2052 = vmatprep.mubr.bf16.mxu0 0
  %2053 = vmatmul.mubr.bf16.gmra.mrb[0].mxu0 %v1279
  %v2054 = vpop.f32.mrb[0].mxu0
  %v2055 = vadd.f32 0.0, %v2054
  %v2056 = vpop.f32.mrb[0].mxu0
  %v2057 = vpop.f32.mrb[0].mxu0
  %v2058 = vadd.f32 0.0, %v2057
  %v2059 = vpop.f32.mrb[0].mxu0
  %2060 = vmatprep.mubr.bf16.mxu0 0
  %2061 = vmatmul.mubr.bf16.gmra.mrb[0].mxu0 %v1280
  %v2062 = vpop.f32.mrb[0].mxu0
  %v2063 = vadd.f32 0.0, %v2062
  %v2064 = vpop.f32.mrb[0].mxu0
  %v2065 = vpop.f32.mrb[0].mxu0
  %v2066 = vadd.f32 0.0, %v2065
  %v2067 = vpop.f32.mrb[0].mxu0
  %2068 = vmatprep.mubr.bf16.mxu0 0
  %2069 = vmatmul.mubr.bf16.gmra.mrb[0].mxu0 %v1281
  %v2070 = vpop.f32.mrb[0].mxu0
  %v2071 = vadd.f32 0.0, %v2070
  %v2072 = vpop.f32.mrb[0].mxu0
  %v2073 = vpop.f32.mrb[0].mxu0
  %v2074 = vadd.f32 0.0, %v2073
  %v2075 = vpop.f32.mrb[0].mxu0
  %2076 = vmatprep.mubr.bf16.mxu0 0
  %2077 = vmatmul.mubr.bf16.gmra.mrb[0].mxu0 %v1282
  %v2078 = vpop.f32.mrb[0].mxu0
  %v2079 = vadd.f32 0.0, %v2078
  %v2080 = vpop.f32.mrb[0].mxu0
  %v2081 = vpop.f32.mrb[0].mxu0
  %v2082 = vadd.f32 0.0, %v2081
  %v2083 = vpop.f32.mrb[0].mxu0
  %2084 = vmatprep.mubr.bf16.mxu0 0
  %2085 = vmatmul.mubr.bf16.gmra.mrb[0].mxu0 %v1283
  %v2086 = vpop.f32.mrb[0].mxu0
  %v2087 = vadd.f32 0.0, %v2086
  %v2088 = vpop.f32.mrb[0].mxu0
  %v2089 = vpop.f32.mrb[0].mxu0
  %v2090 = vadd.f32 0.0, %v2089
  %v2091 = vpop.f32.mrb[0].mxu0
  %2092 = vmatprep.mubr.bf16.mxu0 0
  %2093 = vmatmul.mubr.bf16.gmra.mrb[0].mxu0 %v1284
  %v2094 = vpop.f32.mrb[0].mxu0
  %v2095 = vadd.f32 0.0, %v2094
  %v2096 = vpop.f32.mrb[0].mxu0
  %v2097 = vpop.f32.mrb[0].mxu0
  %v2098 = vadd.f32 0.0, %v2097
  %v2099 = vpop.f32.mrb[0].mxu0
  %2100 = vmatprep.mubr.bf16.mxu0 0
  %2101 = vmatmul.mubr.bf16.gmra.mrb[0].mxu0 %v1285
  %v2102 = vpop.f32.mrb[0].mxu0
  %v2103 = vadd.f32 0.0, %v2102
  %v2104 = vpop.f32.mrb[0].mxu0
  %v2105 = vpop.f32.mrb[0].mxu0
  %v2106 = vadd.f32 0.0, %v2105
  %v2107 = vpop.f32.mrb[0].mxu0
  %2108 = vmatprep.mubr.bf16.mxu0 0
  %2109 = vmatmul.mubr.bf16.gmra.mrb[0].mxu0 %v1286
  %v2110 = vpop.f32.mrb[0].mxu0
  %v2111 = vadd.f32 0.0, %v2110
  %v2112 = vpop.f32.mrb[0].mxu0
  %v2113 = vpop.f32.mrb[0].mxu0
  %v2114 = vadd.f32 0.0, %v2113
  %v2115 = vpop.f32.mrb[0].mxu0
  %2116 = vmatprep.mubr.bf16.mxu0 0
  %2117 = vmatmul.mubr.bf16.gmra.mrb[0].mxu0 %v1287
  %v2118 = vpop.f32.mrb[0].mxu0
  %v2119 = vadd.f32 0.0, %v2118
  %v2120 = vpop.f32.mrb[0].mxu0
  %v2121 = vpop.f32.mrb[0].mxu0
  %v2122 = vadd.f32 0.0, %v2121
  %v2123 = vpop.f32.mrb[0].mxu0
  %2124 = vmatprep.mubr.bf16.mxu0 0
  %2125 = vmatmul.mubr.bf16.gmra.mrb[0].mxu0 %v1288
  %v2126 = vpop.f32.mrb[0].mxu0
  %v2127 = vadd.f32 0.0, %v2126
  %v2128 = vpop.f32.mrb[0].mxu0
  %v2129 = vpop.f32.mrb[0].mxu0
  %v2130 = vadd.f32 0.0, %v2129
  %v2131 = vpop.f32.mrb[0].mxu0
  %2132 = vmatprep.mubr.bf16.mxu0 0
  %2133 = vmatmul.mubr.bf16.gmra.mrb[0].mxu0 %v1289
  %v2134 = vpop.f32.mrb[0].mxu0
  %v2135 = vadd.f32 0.0, %v2134
  %v2136 = vpop.f32.mrb[0].mxu0
  %v2137 = vpop.f32.mrb[0].mxu0
  %v2138 = vadd.f32 0.0, %v2137
  %v2139 = vpop.f32.mrb[0].mxu0
  %2140 = vmatprep.mubr.bf16.mxu0 0
  %2141 = vmatmul.mubr.bf16.gmra.mrb[0].mxu0 %v1290
  %v2142 = vpop.f32.mrb[0].mxu0
  %v2143 = vadd.f32 0.0, %v2142
  %v2144 = vpop.f32.mrb[0].mxu0
  %v2145 = vpop.f32.mrb[0].mxu0
  %v2146 = vadd.f32 0.0, %v2145
  %v2147 = vpop.f32.mrb[0].mxu0
  %2148 = vmatprep.mubr.bf16.mxu0 0
  %2149 = vmatmul.mubr.bf16.gmra.mrb[0].mxu0 %v1291
  %v2150 = vpop.f32.mrb[0].mxu0
  %v2151 = vadd.f32 0.0, %v2150
  %v2152 = vpop.f32.mrb[0].mxu0
  %v2153 = vpop.f32.mrb[0].mxu0
  %v2154 = vadd.f32 0.0, %v2153
  %v2155 = vpop.f32.mrb[0].mxu0
  %2156 = vmatprep.mubr.bf16.mxu0 0
  %2157 = vmatmul.mubr.bf16.gmra.mrb[0].mxu0 %v1634
  %v2158 = vpop.f32.mrb[0].mxu0
  %v2159 = vadd.f32 0.0, %v2158
  %v2160 = vpop.f32.mrb[0].mxu0
  %v2161 = vpop.f32.mrb[0].mxu0
  %v2162 = vadd.f32 0.0, %v2161
  %v2163 = vpop.f32.mrb[0].mxu0
  %2164 = vmatprep.mubr.bf16.mxu0 0
  %2165 = vmatmul.mubr.bf16.gmra.mrb[0].mxu0 %v1962
  %v2166 = vpop.f32.mrb[0].mxu0
  %v2167 = vadd.f32 0.0, %v2166
  %v2168 = vpop.f32.mrb[0].mxu0
  %v2169 = vpop.f32.mrb[0].mxu0
  %v2170 = vadd.f32 0.0, %v2169
  %v2171 = vpop.f32.mrb[0].mxu0
  %2172 = vdwg.mxu0
  %v2173 = vadd.f32 %v1909, %v2047
  %v2174 = vadd.f32 %v1910, %v2050
  %v2175 = vadd.f32 %v1911, %v2055
  %v2176 = vadd.f32 %v1912, %v2058
  %v2177 = vadd.f32 %v1913, %v2063
  %v2178 = vadd.f32 %v1914, %v2066
  %v2179 = vadd.f32 %v1915, %v2071
  %v2180 = vadd.f32 %v1916, %v2074
  %v2181 = vadd.f32 %v1917, %v2079
  %v2182 = vadd.f32 %v1918, %v2082
  %v2183 = vadd.f32 %v1919, %v2087
  %v2184 = vadd.f32 %v1920, %v2090
  %v2185 = vadd.f32 %v1921, %v2095
  %v2186 = vadd.f32 %v1922, %v2098
  %v2187 = vadd.f32 %v1923, %v2103
  %v2188 = vadd.f32 %v1924, %v2106
  %v2189 = vadd.f32 %v1925, %v2111
  %v2190 = vadd.f32 %v1926, %v2114
  %v2191 = vadd.f32 %v1927, %v2119
  %v2192 = vadd.f32 %v1928, %v2122
  %v2193 = vadd.f32 %v1929, %v2127
  %v2194 = vadd.f32 %v1930, %v2130
  %v2195 = vadd.f32 %v1931, %v2135
  %v2196 = vadd.f32 %v1932, %v2138
  %v2197 = vadd.f32 %v1933, %v2143
  %v2198 = vadd.f32 %v1934, %v2146
  %v2199 = vadd.f32 %v1935, %v2151
  %v2200 = vadd.f32 %v1936, %v2154
  %v2201 = vadd.f32 %v1937, %v2159
  %v2202 = vadd.f32 %v1938, %v2162
  %v2203 = vadd.f32 %v1939, %v2167
  %v2204 = vadd.f32 %v1940, %v2170
  %2205 = vst [vmem:[#allocation3] sm:$0xff] %v2173
  %2206 = vst [vmem:[#allocation3 + $0x8] sm:$0xff] %v2174
  %2207 = vst [vmem:[#allocation3 + $0x10] sm:$0xff] %v2175
  %2208 = vst [vmem:[#allocation3 + $0x18] sm:$0xff] %v2176
  %2209 = vst [vmem:[#allocation3 + $0x20] sm:$0xff] %v2177
  %2210 = vst [vmem:[#allocation3 + $0x28] sm:$0xff] %v2178
  %2211 = vst [vmem:[#allocation3 + $0x30] sm:$0xff] %v2179
  %2212 = vst [vmem:[#allocation3 + $0x38] sm:$0xff] %v2180
  %2213 = vst [vmem:[#allocation3 + $0x40] sm:$0xff] %v2181
  %2214 = vst [vmem:[#allocation3 + $0x48] sm:$0xff] %v2182
  %2215 = vst [vmem:[#allocation3 + $0x50] sm:$0xff] %v2183
  %2216 = vst [vmem:[#allocation3 + $0x58] sm:$0xff] %v2184
  %2217 = vst [vmem:[#allocation3 + $0x60] sm:$0xff] %v2185
  %2218 = vst [vmem:[#allocation3 + $0x68] sm:$0xff] %v2186
  %2219 = vst [vmem:[#allocation3 + $0x70] sm:$0xff] %v2187
  %2220 = vst [vmem:[#allocation3 + $0x78] sm:$0xff] %v2188
  %2221 = vst [vmem:[#allocation3 + $0x80] sm:$0xff] %v2189
  %2222 = vst [vmem:[#allocation3 + $0x88] sm:$0xff] %v2190
  %2223 = vst [vmem:[#allocation3 + $0x90] sm:$0xff] %v2191
  %2224 = vst [vmem:[#allocation3 + $0x98] sm:$0xff] %v2192
  %2225 = vst [vmem:[#allocation3 + $0xa0] sm:$0xff] %v2193
  %2226 = vst [vmem:[#allocation3 + $0xa8] sm:$0xff] %v2194
  %2227 = vst [vmem:[#allocation3 + $0xb0] sm:$0xff] %v2195
  %2228 = vst [vmem:[#allocation3 + $0xb8] sm:$0xff] %v2196
  %2229 = vst [vmem:[#allocation3 + $0xc0] sm:$0xff] %v2197
  %2230 = vst [vmem:[#allocation3 + $0xc8] sm:$0xff] %v2198
  %2231 = vst [vmem:[#allocation3 + $0xd0] sm:$0xff] %v2199
  %2232 = vst [vmem:[#allocation3 + $0xd8] sm:$0xff] %v2200
  %2233 = vst [vmem:[#allocation3 + $0xe0] sm:$0xff] %v2201
  %2234 = vst [vmem:[#allocation3 + $0xe8] sm:$0xff] %v2202
  %2235 = vst [vmem:[#allocation3 + $0xf0] sm:$0xff] %v2203
  %2236 = vst [vmem:[#allocation3 + $0xf8] sm:$0xff] %v2204
  %v2237 = vld [vmem:[#allocation2] sm:$0xf]
  %v2238 = vld [vmem:[#allocation2 + $0x4] sm:$0xf]
  %v2239 = vld [vmem:[#allocation2 + $0x8] sm:$0x1]
  %v2240 = vld [vmem:[#allocation2 + $0xc] sm:$0xf]
  %v2241 = vld [vmem:[#allocation2 + $0x10] sm:$0xf]
  %v2242 = vld [vmem:[#allocation2 + $0x14] sm:$0x1]
  %v2243 = vld [vmem:[#allocation2 + $0x18] sm:$0xf]
  %v2244 = vld [vmem:[#allocation2 + $0x1c] sm:$0xf]
  %v2245 = vld [vmem:[#allocation2 + $0x20] sm:$0x1]
  %v2246 = vld [vmem:[#allocation2 + $0x24] sm:$0xf]
  %v2247 = vld [vmem:[#allocation2 + $0x28] sm:$0xf]
  %v2248 = vld [vmem:[#allocation2 + $0x2c] sm:$0x1]
  %v2249 = vld [vmem:[#allocation2 + $0x30] sm:$0xf]
  %v2250 = vld [vmem:[#allocation2 + $0x34] sm:$0xf]
  %v2251 = vld [vmem:[#allocation2 + $0x38] sm:$0x1]
  %v2252 = vld [vmem:[#allocation2 + $0x3c] sm:$0xf]
  %v2253 = vld [vmem:[#allocation2 + $0x40] sm:$0xf]
  %v2254 = vld [vmem:[#allocation2 + $0x44] sm:$0x1]
  %v2255 = vld [vmem:[#allocation2 + $0x48] sm:$0xf]
  %v2256 = vld [vmem:[#allocation2 + $0x4c] sm:$0xf]
  %v2257 = vld [vmem:[#allocation2 + $0x50] sm:$0x1]
  %v2258 = vld [vmem:[#allocation2 + $0x54] sm:$0xf]
  %v2259 = vld [vmem:[#allocation2 + $0x58] sm:$0xf]
  %v2260 = vld [vmem:[#allocation2 + $0x5c] sm:$0x1]
  %v2261 = vld [vmem:[#allocation2 + $0x60] sm:$0xf]
  %v2262 = vld [vmem:[#allocation2 + $0x64] sm:$0xf]
  %v2263 = vld [vmem:[#allocation2 + $0x68] sm:$0x1]
  %v2264 = vld [vmem:[#allocation2 + $0x6c] sm:$0xf]
  %v2265 = vld [vmem:[#allocation2 + $0x70] sm:$0xf]
  %v2266 = vld [vmem:[#allocation2 + $0x74] sm:$0x1]
  %v2267 = vld [vmem:[#allocation2 + $0x78] sm:$0xf]
  %v2268 = vld [vmem:[#allocation2 + $0x7c] sm:$0xf]
  %v2269 = vld [vmem:[#allocation2 + $0x80] sm:$0x1]
  %v2270 = vld [vmem:[#allocation2 + $0x84] sm:$0xf]
  %v2271 = vld [vmem:[#allocation2 + $0x88] sm:$0xf]
  %v2272 = vld [vmem:[#allocation2 + $0x8c] sm:$0x1]
  %v2273 = vld [vmem:[#allocation2 + $0x90] sm:$0xf]
  %v2274 = vld [vmem:[#allocation2 + $0x94] sm:$0xf]
  %v2275 = vld [vmem:[#allocation2 + $0x98] sm:$0x1]
  %v2276 = vld [vmem:[#allocation2 + $0x9c] sm:$0xf]
  %v2277 = vld [vmem:[#allocation2 + $0xa0] sm:$0xf]
  %v2278 = vld [vmem:[#allocation2 + $0xa4] sm:$0x1]
  %v2279 = vld [vmem:[#allocation2 + $0xa8] sm:$0xf]
  %v2280 = vld [vmem:[#allocation2 + $0xac] sm:$0xf]
  %v2281 = vld [vmem:[#allocation2 + $0xb0] sm:$0x1]
  %v2282 = vld [vmem:[#allocation2 + $0xb4] sm:$0xf]
  %v2283 = vld [vmem:[#allocation2 + $0xb8] sm:$0xf]
  %v2284 = vld [vmem:[#allocation2 + $0xbc] sm:$0x1]
  %v2285 = vld [vmem:[#allocation2 + $0xc0] sm:$0xf]
  %v2286 = vld [vmem:[#allocation2 + $0xc4] sm:$0xf]
  %v2287 = vld [vmem:[#allocation2 + $0xc8] sm:$0x1]
  %v2288 = vld [vmem:[#allocation2 + $0xcc] sm:$0xf]
  %v2289 = vld [vmem:[#allocation2 + $0xd0] sm:$0xf]
  %v2290 = vld [vmem:[#allocation2 + $0xd4] sm:$0x1]
  %vm2291 = vsmask.f32 3328
  %vm2292 = vsmask.f32 7440
  %vm2293 = vmor %vm2291, %vm2292
  %v2295 = vshrl.u32 %v2237, 16
  %v2297 = vrot.slane %v2295, 4
  %v2298 = vshll.u32 %v2237, 16
  %v2300 = vrot.slane %v2298, 5
  %v2301 = vor.u32 %v2297, %v2300
  %v2302 = vrot.slane %v2301, 4
  %v2304 = vshll.u32 %v2238, 16
  %v2306 = vrot.slane %v2304, 5
  %v2307 = vsel %vm2293, %v2302, %v2306
  %v2308 = vshrl.u32 %v2238, 16
  %v2310 = vrot.slane %v2308, 4
  %v2311 = vor.u32 %v2310, %v2306
  %v2312 = vrot.slane %v2311, 4
  %v2314 = vshll.u32 %v2239, 16
  %v2316 = vrot.slane %v2314, 5
  %v2317 = vsel %vm2293, %v2312, %v2316
  %v2319 = vshrl.u32 %v2240, 16
  %v2321 = vrot.slane %v2319, 4
  %v2322 = vshll.u32 %v2240, 16
  %v2324 = vrot.slane %v2322, 5
  %v2325 = vor.u32 %v2321, %v2324
  %v2326 = vrot.slane %v2325, 4
  %v2328 = vshll.u32 %v2241, 16
  %v2330 = vrot.slane %v2328, 5
  %v2331 = vsel %vm2293, %v2326, %v2330
  %v2332 = vshrl.u32 %v2241, 16
  %v2334 = vrot.slane %v2332, 4
  %v2335 = vor.u32 %v2334, %v2330
  %v2336 = vrot.slane %v2335, 4
  %v2338 = vshll.u32 %v2242, 16
  %v2340 = vrot.slane %v2338, 5
  %v2341 = vsel %vm2293, %v2336, %v2340
  %v2343 = vshrl.u32 %v2243, 16
  %v2345 = vrot.slane %v2343, 4
  %v2346 = vshll.u32 %v2243, 16
  %v2348 = vrot.slane %v2346, 5
  %v2349 = vor.u32 %v2345, %v2348
  %v2350 = vrot.slane %v2349, 4
  %v2352 = vshll.u32 %v2244, 16
  %v2354 = vrot.slane %v2352, 5
  %v2355 = vsel %vm2293, %v2350, %v2354
  %v2356 = vshrl.u32 %v2244, 16
  %v2358 = vrot.slane %v2356, 4
  %v2359 = vor.u32 %v2358, %v2354
  %v2360 = vrot.slane %v2359, 4
  %v2362 = vshll.u32 %v2245, 16
  %v2364 = vrot.slane %v2362, 5
  %v2365 = vsel %vm2293, %v2360, %v2364
  %v2367 = vshrl.u32 %v2246, 16
  %v2369 = vrot.slane %v2367, 4
  %v2370 = vshll.u32 %v2246, 16
  %v2372 = vrot.slane %v2370, 5
  %v2373 = vor.u32 %v2369, %v2372
  %v2374 = vrot.slane %v2373, 4
  %v2376 = vshll.u32 %v2247, 16
  %v2378 = vrot.slane %v2376, 5
  %v2379 = vsel %vm2293, %v2374, %v2378
  %v2380 = vshrl.u32 %v2247, 16
  %v2382 = vrot.slane %v2380, 4
  %v2383 = vor.u32 %v2382, %v2378
  %v2384 = vrot.slane %v2383, 4
  %v2386 = vshll.u32 %v2248, 16
  %v2388 = vrot.slane %v2386, 5
  %v2389 = vsel %vm2293, %v2384, %v2388
  %v2391 = vshrl.u32 %v2249, 16
  %v2393 = vrot.slane %v2391, 4
  %v2394 = vshll.u32 %v2249, 16
  %v2396 = vrot.slane %v2394, 5
  %v2397 = vor.u32 %v2393, %v2396
  %v2398 = vrot.slane %v2397, 4
  %v2400 = vshll.u32 %v2250, 16
  %v2402 = vrot.slane %v2400, 5
  %v2403 = vsel %vm2293, %v2398, %v2402
  %v2404 = vshrl.u32 %v2250, 16
  %v2406 = vrot.slane %v2404, 4
  %v2407 = vor.u32 %v2406, %v2402
  %v2408 = vrot.slane %v2407, 4
  %v2410 = vshll.u32 %v2251, 16
  %v2412 = vrot.slane %v2410, 5
  %v2413 = vsel %vm2293, %v2408, %v2412
  %v2415 = vshrl.u32 %v2252, 16
  %v2417 = vrot.slane %v2415, 4
  %v2418 = vshll.u32 %v2252, 16
  %v2420 = vrot.slane %v2418, 5
  %v2421 = vor.u32 %v2417, %v2420
  %v2422 = vrot.slane %v2421, 4
  %v2424 = vshll.u32 %v2253, 16
  %v2426 = vrot.slane %v2424, 5
  %v2427 = vsel %vm2293, %v2422, %v2426
  %v2428 = vshrl.u32 %v2253, 16
  %v2430 = vrot.slane %v2428, 4
  %v2431 = vor.u32 %v2430, %v2426
  %v2432 = vrot.slane %v2431, 4
  %v2434 = vshll.u32 %v2254, 16
  %v2436 = vrot.slane %v2434, 5
  %v2437 = vsel %vm2293, %v2432, %v2436
  %v2439 = vshrl.u32 %v2255, 16
  %v2441 = vrot.slane %v2439, 4
  %v2442 = vshll.u32 %v2255, 16
  %v2444 = vrot.slane %v2442, 5
  %v2445 = vor.u32 %v2441, %v2444
  %v2446 = vrot.slane %v2445, 4
  %v2448 = vshll.u32 %v2256, 16
  %v2450 = vrot.slane %v2448, 5
  %v2451 = vsel %vm2293, %v2446, %v2450
  %v2452 = vshrl.u32 %v2256, 16
  %v2454 = vrot.slane %v2452, 4
  %v2455 = vor.u32 %v2454, %v2450
  %v2456 = vrot.slane %v2455, 4
  %v2458 = vshll.u32 %v2257, 16
  %v2460 = vrot.slane %v2458, 5
  %v2461 = vsel %vm2293, %v2456, %v2460
  %v2463 = vshrl.u32 %v2258, 16
  %v2465 = vrot.slane %v2463, 4
  %v2466 = vshll.u32 %v2258, 16
  %v2468 = vrot.slane %v2466, 5
  %v2469 = vor.u32 %v2465, %v2468
  %v2470 = vrot.slane %v2469, 4
  %v2472 = vshll.u32 %v2259, 16
  %v2474 = vrot.slane %v2472, 5
  %v2475 = vsel %vm2293, %v2470, %v2474
  %v2476 = vshrl.u32 %v2259, 16
  %v2478 = vrot.slane %v2476, 4
  %v2479 = vor.u32 %v2478, %v2474
  %v2480 = vrot.slane %v2479, 4
  %v2482 = vshll.u32 %v2260, 16
  %v2484 = vrot.slane %v2482, 5
  %v2485 = vsel %vm2293, %v2480, %v2484
  %v2487 = vshrl.u32 %v2261, 16
  %v2489 = vrot.slane %v2487, 4
  %v2490 = vshll.u32 %v2261, 16
  %v2492 = vrot.slane %v2490, 5
  %v2493 = vor.u32 %v2489, %v2492
  %v2494 = vrot.slane %v2493, 4
  %v2496 = vshll.u32 %v2262, 16
  %v2498 = vrot.slane %v2496, 5
  %v2499 = vsel %vm2293, %v2494, %v2498
  %v2500 = vshrl.u32 %v2262, 16
  %v2502 = vrot.slane %v2500, 4
  %v2503 = vor.u32 %v2502, %v2498
  %v2504 = vrot.slane %v2503, 4
  %v2506 = vshll.u32 %v2263, 16
  %v2508 = vrot.slane %v2506, 5
  %v2509 = vsel %vm2293, %v2504, %v2508
  %v2511 = vshrl.u32 %v2264, 16
  %v2513 = vrot.slane %v2511, 4
  %v2514 = vshll.u32 %v2264, 16
  %v2516 = vrot.slane %v2514, 5
  %v2517 = vor.u32 %v2513, %v2516
  %v2518 = vrot.slane %v2517, 4
  %v2520 = vshll.u32 %v2265, 16
  %v2522 = vrot.slane %v2520, 5
  %v2523 = vsel %vm2293, %v2518, %v2522
  %v2524 = vshrl.u32 %v2265, 16
  %v2526 = vrot.slane %v2524, 4
  %v2527 = vor.u32 %v2526, %v2522
  %v2528 = vrot.slane %v2527, 4
  %v2530 = vshll.u32 %v2266, 16
  %v2532 = vrot.slane %v2530, 5
  %v2533 = vsel %vm2293, %v2528, %v2532
  %v2535 = vshrl.u32 %v2267, 16
  %v2537 = vrot.slane %v2535, 4
  %v2538 = vshll.u32 %v2267, 16
  %v2540 = vrot.slane %v2538, 5
  %v2541 = vor.u32 %v2537, %v2540
  %v2542 = vrot.slane %v2541, 4
  %v2544 = vshll.u32 %v2268, 16
  %v2546 = vrot.slane %v2544, 5
  %v2547 = vsel %vm2293, %v2542, %v2546
  %v2548 = vshrl.u32 %v2268, 16
  %v2550 = vrot.slane %v2548, 4
  %v2551 = vor.u32 %v2550, %v2546
  %v2552 = vrot.slane %v2551, 4
  %v2554 = vshll.u32 %v2269, 16
  %v2556 = vrot.slane %v2554, 5
  %v2557 = vsel %vm2293, %v2552, %v2556
  %v2559 = vshrl.u32 %v2270, 16
  %v2561 = vrot.slane %v2559, 4
  %v2562 = vshll.u32 %v2270, 16
  %v2564 = vrot.slane %v2562, 5
  %v2565 = vor.u32 %v2561, %v2564
  %v2566 = vrot.slane %v2565, 4
  %v2568 = vshll.u32 %v2271, 16
  %v2570 = vrot.slane %v2568, 5
  %v2571 = vsel %vm2293, %v2566, %v2570
  %v2572 = vshrl.u32 %v2271, 16
  %v2574 = vrot.slane %v2572, 4
  %v2575 = vor.u32 %v2574, %v2570
  %v2576 = vrot.slane %v2575, 4
  %v2578 = vshll.u32 %v2272, 16
  %v2580 = vrot.slane %v2578, 5
  %v2581 = vsel %vm2293, %v2576, %v2580
  %v2583 = vshrl.u32 %v2273, 16
  %v2585 = vrot.slane %v2583, 4
  %v2586 = vshll.u32 %v2273, 16
  %v2588 = vrot.slane %v2586, 5
  %v2589 = vor.u32 %v2585, %v2588
  %v2590 = vrot.slane %v2589, 4
  %v2592 = vshll.u32 %v2274, 16
  %v2594 = vrot.slane %v2592, 5
  %v2595 = vsel %vm2293, %v2590, %v2594
  %v2596 = vshrl.u32 %v2274, 16
  %v2598 = vrot.slane %v2596, 4
  %v2599 = vor.u32 %v2598, %v2594
  %v2600 = vrot.slane %v2599, 4
  %v2602 = vshll.u32 %v2275, 16
  %v2604 = vrot.slane %v2602, 5
  %v2605 = vsel %vm2293, %v2600, %v2604
  %v2607 = vshrl.u32 %v2276, 16
  %v2609 = vrot.slane %v2607, 4
  %v2610 = vshll.u32 %v2276, 16
  %v2612 = vrot.slane %v2610, 5
  %v2613 = vor.u32 %v2609, %v2612
  %v2614 = vrot.slane %v2613, 4
  %v2616 = vshll.u32 %v2277, 16
  %v2618 = vrot.slane %v2616, 5
  %v2619 = vsel %vm2293, %v2614, %v2618
  %v2620 = vshrl.u32 %v2277, 16
  %v2622 = vrot.slane %v2620, 4
  %v2623 = vor.u32 %v2622, %v2618
  %v2624 = vrot.slane %v2623, 4
  %v2626 = vshll.u32 %v2278, 16
  %v2628 = vrot.slane %v2626, 5
  %v2629 = vsel %vm2293, %v2624, %v2628
  %v2631 = vshrl.u32 %v2279, 16
  %v2633 = vrot.slane %v2631, 4
  %v2634 = vshll.u32 %v2279, 16
  %v2636 = vrot.slane %v2634, 5
  %v2637 = vor.u32 %v2633, %v2636
  %v2638 = vrot.slane %v2637, 4
  %v2640 = vshll.u32 %v2280, 16
  %v2642 = vrot.slane %v2640, 5
  %v2643 = vsel %vm2293, %v2638, %v2642
  %v2644 = vshrl.u32 %v2280, 16
  %v2646 = vrot.slane %v2644, 4
  %v2647 = vor.u32 %v2646, %v2642
  %v2648 = vrot.slane %v2647, 4
  %v2650 = vshll.u32 %v2281, 16
  %v2652 = vrot.slane %v2650, 5
  %v2653 = vsel %vm2293, %v2648, %v2652
  %v2655 = vshrl.u32 %v2282, 16
  %v2657 = vrot.slane %v2655, 4
  %v2658 = vshll.u32 %v2282, 16
  %v2660 = vrot.slane %v2658, 5
  %v2661 = vor.u32 %v2657, %v2660
  %v2662 = vrot.slane %v2661, 4
  %v2664 = vshll.u32 %v2283, 16
  %v2666 = vrot.slane %v2664, 5
  %v2667 = vsel %vm2293, %v2662, %v2666
  %v2668 = vshrl.u32 %v2283, 16
  %v2670 = vrot.slane %v2668, 4
  %v2671 = vor.u32 %v2670, %v2666
  %v2672 = vrot.slane %v2671, 4
  %v2674 = vshll.u32 %v2284, 16
  %v2676 = vrot.slane %v2674, 5
  %v2677 = vsel %vm2293, %v2672, %v2676
  %v2679 = vshrl.u32 %v2285, 16
  %v2681 = vrot.slane %v2679, 4
  %v2682 = vshll.u32 %v2285, 16
  %v2684 = vrot.slane %v2682, 5
  %v2685 = vor.u32 %v2681, %v2684
  %v2686 = vrot.slane %v2685, 4
  %v2688 = vshll.u32 %v2286, 16
  %v2690 = vrot.slane %v2688, 5
  %v2691 = vsel %vm2293, %v2686, %v2690
  %v2692 = vshrl.u32 %v2286, 16
  %v2694 = vrot.slane %v2692, 4
  %v2695 = vor.u32 %v2694, %v2690
  %v2696 = vrot.slane %v2695, 4
  %v2698 = vshll.u32 %v2287, 16
  %v2700 = vrot.slane %v2698, 5
  %v2701 = vsel %vm2293, %v2696, %v2700
  %v2703 = vshrl.u32 %v2288, 16
  %v2705 = vrot.slane %v2703, 4
  %v2706 = vshll.u32 %v2288, 16
  %v2708 = vrot.slane %v2706, 5
  %v2709 = vor.u32 %v2705, %v2708
  %v2710 = vrot.slane %v2709, 4
  %v2712 = vshll.u32 %v2289, 16
  %v2714 = vrot.slane %v2712, 5
  %v2715 = vsel %vm2293, %v2710, %v2714
  %v2716 = vshrl.u32 %v2289, 16
  %v2718 = vrot.slane %v2716, 4
  %v2719 = vor.u32 %v2718, %v2714
  %v2720 = vrot.slane %v2719, 4
  %v2722 = vshll.u32 %v2290, 16
  %v2724 = vrot.slane %v2722, 5
  %v2725 = vsel %vm2293, %v2720, %v2724
  %v2726 = vld [vmem:[#allocation3] sm:$0xff]
  %v2727 = vld [vmem:[#allocation3 + $0x8] sm:$0xff]
  %v2728 = vld [vmem:[#allocation3 + $0x10] sm:$0xff]
  %v2729 = vld [vmem:[#allocation3 + $0x18] sm:$0xff]
  %v2730 = vld [vmem:[#allocation3 + $0x20] sm:$0xff]
  %v2731 = vld [vmem:[#allocation3 + $0x28] sm:$0xff]
  %v2732 = vld [vmem:[#allocation3 + $0x30] sm:$0xff]
  %v2733 = vld [vmem:[#allocation3 + $0x38] sm:$0xff]
  %v2734 = vld [vmem:[#allocation3 + $0x40] sm:$0xff]
  %v2735 = vld [vmem:[#allocation3 + $0x48] sm:$0xff]
  %v2736 = vld [vmem:[#allocation3 + $0x50] sm:$0xff]
  %v2737 = vld [vmem:[#allocation3 + $0x58] sm:$0xff]
  %v2738 = vld [vmem:[#allocation3 + $0x60] sm:$0xff]
  %v2739 = vld [vmem:[#allocation3 + $0x68] sm:$0xff]
  %v2740 = vld [vmem:[#allocation3 + $0x70] sm:$0xff]
  %v2741 = vld [vmem:[#allocation3 + $0x78] sm:$0xff]
  %v2742 = vld [vmem:[#allocation3 + $0x80] sm:$0xff]
  %v2743 = vld [vmem:[#allocation3 + $0x88] sm:$0xff]
  %v2744 = vld [vmem:[#allocation3 + $0x90] sm:$0xff]
  %v2745 = vld [vmem:[#allocation3 + $0x98] sm:$0xff]
  %v2746 = vld [vmem:[#allocation3 + $0xa0] sm:$0xff]
  %v2747 = vld [vmem:[#allocation3 + $0xa8] sm:$0xff]
  %v2748 = vld [vmem:[#allocation3 + $0xb0] sm:$0xff]
  %v2749 = vld [vmem:[#allocation3 + $0xb8] sm:$0xff]
  %v2750 = vld [vmem:[#allocation3 + $0xc0] sm:$0xff]
  %v2751 = vld [vmem:[#allocation3 + $0xc8] sm:$0xff]
  %v2752 = vld [vmem:[#allocation3 + $0xd0] sm:$0xff]
  %v2753 = vld [vmem:[#allocation3 + $0xd8] sm:$0xff]
  %v2754 = vld [vmem:[#allocation3 + $0xe0] sm:$0xff]
  %v2755 = vld [vmem:[#allocation3 + $0xe8] sm:$0xff]
  %v2756 = vld [vmem:[#allocation3 + $0xf0] sm:$0xff]
  %v2757 = vld [vmem:[#allocation3 + $0xf8] sm:$0xff]
  %s2758 = scalar_lea.vmem %s1, 64
  %v2759 = vld [vmem:[%s2758] sm:$0xf]
  %v2760 = vld [vmem:[%s2758 + $0x4] sm:$0xf]
  %v2761 = vld [vmem:[%s2758 + $0x8] sm:$0xf]
  %v2762 = vld [vmem:[%s2758 + $0xc] sm:$0xf]
  %v2763 = vld [vmem:[%s2758 + $0x10] sm:$0xf]
  %v2764 = vld [vmem:[%s2758 + $0x14] sm:$0xf]
  %v2765 = vld [vmem:[%s2758 + $0x18] sm:$0xf]
  %v2766 = vld [vmem:[%s2758 + $0x1c] sm:$0xf]
  %v2767 = vld [vmem:[%s2758 + $0x20] sm:$0xf]
  %v2768 = vld [vmem:[%s2758 + $0x24] sm:$0xf]
  %v2769 = vld [vmem:[%s2758 + $0x28] sm:$0xf]
  %v2770 = vld [vmem:[%s2758 + $0x2c] sm:$0xf]
  %v2771 = vld [vmem:[%s2758 + $0x30] sm:$0xf]
  %v2772 = vld [vmem:[%s2758 + $0x34] sm:$0xf]
  %v2773 = vld [vmem:[%s2758 + $0x38] sm:$0xf]
  %v2774 = vld [vmem:[%s2758 + $0x3c] sm:$0xf]
  %v2775 = vunpack.c.l.b16 %v2307
  %v2776 = vunpack.c.l.b16 %v2317
  %v2777 = vunpack.c.l.b16 %v2331
  %v2778 = vunpack.c.l.b16 %v2341
  %v2779 = vunpack.c.l.b16 %v2355
  %v2780 = vunpack.c.l.b16 %v2365
  %v2781 = vunpack.c.l.b16 %v2379
  %v2782 = vunpack.c.l.b16 %v2389
  %v2783 = vunpack.c.l.b16 %v2403
  %v2784 = vunpack.c.l.b16 %v2413
  %v2785 = vunpack.c.l.b16 %v2427
  %v2786 = vunpack.c.l.b16 %v2437
  %v2787 = vunpack.c.l.b16 %v2451
  %v2788 = vunpack.c.l.b16 %v2461
  %v2789 = vunpack.c.l.b16 %v2475
  %v2790 = vunpack.c.l.b16 %v2485
  %v2791 = vunpack.c.l.b16 %v2499
  %v2792 = vunpack.c.l.b16 %v2509
  %v2793 = vunpack.c.l.b16 %v2523
  %v2794 = vunpack.c.l.b16 %v2533
  %v2795 = vunpack.c.l.b16 %v2547
  %v2796 = vunpack.c.l.b16 %v2557
  %v2797 = vunpack.c.l.b16 %v2571
  %v2798 = vunpack.c.l.b16 %v2581
  %v2799 = vunpack.c.l.b16 %v2595
  %v2800 = vunpack.c.l.b16 %v2605
  %v2801 = vunpack.c.l.b16 %v2619
  %v2802 = vunpack.c.l.b16 %v2629
  %v2803 = vunpack.c.l.b16 %v2643
  %v2804 = vunpack.c.l.b16 %v2653
  %v2805 = vunpack.c.l.b16 %v2667
  %v2806 = vunpack.c.l.b16 %v2677
  %v2807 = vpack.c.b16 %v2776, %v2775
  %v2808 = vpack.c.b16 %v2778, %v2777
  %v2809 = vpack.c.b16 %v2780, %v2779
  %v2810 = vpack.c.b16 %v2782, %v2781
  %v2811 = vpack.c.b16 %v2784, %v2783
  %v2812 = vpack.c.b16 %v2786, %v2785
  %v2813 = vpack.c.b16 %v2788, %v2787
  %v2814 = vpack.c.b16 %v2790, %v2789
  %v2815 = vpack.c.b16 %v2792, %v2791
  %v2816 = vpack.c.b16 %v2794, %v2793
  %v2817 = vpack.c.b16 %v2796, %v2795
  %v2818 = vpack.c.b16 %v2798, %v2797
  %v2819 = vpack.c.b16 %v2800, %v2799
  %v2820 = vpack.c.b16 %v2802, %v2801
  %v2821 = vpack.c.b16 %v2804, %v2803
  %v2822 = vpack.c.b16 %v2806, %v2805
  %v2855 = vunpack.c.l.b16 %v2759
  %v2856 = vunpack.c.l.b16 %v2760
  %v2857 = vunpack.c.l.b16 %v2761
  %v2858 = vunpack.c.l.b16 %v2762
  %v2859 = vunpack.c.l.b16 %v2763
  %v2860 = vunpack.c.l.b16 %v2764
  %v2861 = vunpack.c.l.b16 %v2765
  %v2862 = vunpack.c.l.b16 %v2766
  %v2863 = vunpack.c.l.b16 %v2767
  %v2864 = vunpack.c.l.b16 %v2768
  %v2865 = vunpack.c.l.b16 %v2769
  %v2866 = vunpack.c.l.b16 %v2770
  %v2867 = vunpack.c.l.b16 %v2771
  %v2868 = vunpack.c.l.b16 %v2772
  %v2869 = vunpack.c.l.b16 %v2773
  %v2870 = vunpack.c.l.b16 %v2774
  %v2871 = vpack.c.b16 %v2856, %v2855
  %v2872 = vpack.c.b16 %v2858, %v2857
  %v2873 = vpack.c.b16 %v2860, %v2859
  %v2874 = vpack.c.b16 %v2862, %v2861
  %v2875 = vpack.c.b16 %v2864, %v2863
  %v2876 = vpack.c.b16 %v2866, %v2865
  %v2877 = vpack.c.b16 %v2868, %v2867
  %v2878 = vpack.c.b16 %v2870, %v2869
  %2887 = vmatprep.subr.bf16.mxu0 0
  %2888 = vmatpush1.bf16.msra.mxu0 %v2871
  %2889 = vmatprep.subr.bf16.mxu0 0
  %2890 = vmatpush1.bf16.msra.mxu0 %v2872
  %2891 = vmatprep.subr.bf16.mxu0 0
  %2892 = vmatpush1.bf16.msra.mxu0 %v2873
  %2893 = vmatprep.subr.bf16.mxu0 0
  %2894 = vmatpush1.bf16.msra.mxu0 %v2874
  %2895 = vmatprep.subr.bf16.mxu0 0
  %2896 = vmatpush1.bf16.msra.mxu0 %v2875
  %2897 = vmatprep.subr.bf16.mxu0 0
  %2898 = vmatpush1.bf16.msra.mxu0 %v2876
  %2899 = vmatprep.subr.bf16.mxu0 0
  %2900 = vmatpush1.bf16.msra.mxu0 %v2877
  %2901 = vmatprep.subr.bf16.mxu0 0
  %2902 = vmatpush1.bf16.msra.mxu0 %v2878
  %2903 = vmatprep.subr.bf16.mxu0 0
  %2904 = vmatpush1.bf16.msra.mxu0 0
  %2905 = vmatprep.subr.bf16.mxu0 0
  %2906 = vmatpush1.bf16.msra.mxu0 0
  %2907 = vmatprep.subr.bf16.mxu0 0
  %2908 = vmatpush1.bf16.msra.mxu0 0
  %2909 = vmatprep.subr.bf16.mxu0 0
  %2910 = vmatpush1.bf16.msra.mxu0 0
  %2911 = vmatprep.subr.bf16.mxu0 0
  %2912 = vmatpush1.bf16.msra.mxu0 0
  %2913 = vmatprep.subr.bf16.mxu0 0
  %2914 = vmatpush1.bf16.msra.mxu0 0
  %2915 = vmatprep.subr.bf16.mxu0 0
  %2916 = vmatpush1.bf16.msra.mxu0 0
  %2917 = vmatprep.subr.bf16.mxu0 0
  %2918 = vmatpush1.bf16.msra.mxu0 0
  %2919 = vmatprep.mubr.bf16.mxu0 0
  %2920 = vmatmul.mubr.bf16.gmra.mrb[0].mxu0 %v2807
  %v2921 = vpop.f32.mrb[0].mxu0
  %v2922 = vadd.f32 0.0, %v2921
  %v2923 = vpop.f32.mrb[0].mxu0
  %v2924 = vpop.f32.mrb[0].mxu0
  %v2925 = vadd.f32 0.0, %v2924
  %v2926 = vpop.f32.mrb[0].mxu0
  %2927 = vmatprep.mubr.bf16.mxu0 0
  %2928 = vmatmul.mubr.bf16.gmra.mrb[0].mxu0 %v2808
  %v2929 = vpop.f32.mrb[0].mxu0
  %v2930 = vadd.f32 0.0, %v2929
  %v2931 = vpop.f32.mrb[0].mxu0
  %v2932 = vpop.f32.mrb[0].mxu0
  %v2933 = vadd.f32 0.0, %v2932
  %v2934 = vpop.f32.mrb[0].mxu0
  %2935 = vmatprep.mubr.bf16.mxu0 0
  %2936 = vmatmul.mubr.bf16.gmra.mrb[0].mxu0 %v2809
  %v2937 = vpop.f32.mrb[0].mxu0
  %v2938 = vadd.f32 0.0, %v2937
  %v2939 = vpop.f32.mrb[0].mxu0
  %v2940 = vpop.f32.mrb[0].mxu0
  %v2941 = vadd.f32 0.0, %v2940
  %v2942 = vpop.f32.mrb[0].mxu0
  %2943 = vmatprep.mubr.bf16.mxu0 0
  %2944 = vmatmul.mubr.bf16.gmra.mrb[0].mxu0 %v2810
  %v2945 = vpop.f32.mrb[0].mxu0
  %v2946 = vadd.f32 0.0, %v2945
  %v2947 = vpop.f32.mrb[0].mxu0
  %v2948 = vpop.f32.mrb[0].mxu0
  %v2949 = vadd.f32 0.0, %v2948
  %v2950 = vpop.f32.mrb[0].mxu0
  %2951 = vmatprep.mubr.bf16.mxu0 0
  %2952 = vmatmul.mubr.bf16.gmra.mrb[0].mxu0 %v2811
  %v2953 = vpop.f32.mrb[0].mxu0
  %v2954 = vadd.f32 0.0, %v2953
  %v2955 = vpop.f32.mrb[0].mxu0
  %v2956 = vpop.f32.mrb[0].mxu0
  %v2957 = vadd.f32 0.0, %v2956
  %v2958 = vpop.f32.mrb[0].mxu0
  %2959 = vmatprep.mubr.bf16.mxu0 0
  %2960 = vmatmul.mubr.bf16.gmra.mrb[0].mxu0 %v2812
  %v2961 = vpop.f32.mrb[0].mxu0
  %v2962 = vadd.f32 0.0, %v2961
  %v2963 = vpop.f32.mrb[0].mxu0
  %v2964 = vpop.f32.mrb[0].mxu0
  %v2965 = vadd.f32 0.0, %v2964
  %v2966 = vpop.f32.mrb[0].mxu0
  %2967 = vmatprep.mubr.bf16.mxu0 0
  %2968 = vmatmul.mubr.bf16.gmra.mrb[0].mxu0 %v2813
  %v2969 = vpop.f32.mrb[0].mxu0
  %v2970 = vadd.f32 0.0, %v2969
  %v2971 = vpop.f32.mrb[0].mxu0
  %v2972 = vpop.f32.mrb[0].mxu0
  %v2973 = vadd.f32 0.0, %v2972
  %v2974 = vpop.f32.mrb[0].mxu0
  %2975 = vmatprep.mubr.bf16.mxu0 0
  %2976 = vmatmul.mubr.bf16.gmra.mrb[0].mxu0 %v2814
  %v2977 = vpop.f32.mrb[0].mxu0
  %v2978 = vadd.f32 0.0, %v2977
  %v2979 = vpop.f32.mrb[0].mxu0
  %v2980 = vpop.f32.mrb[0].mxu0
  %v2981 = vadd.f32 0.0, %v2980
  %v2982 = vpop.f32.mrb[0].mxu0
  %2983 = vmatprep.mubr.bf16.mxu0 0
  %2984 = vmatmul.mubr.bf16.gmra.mrb[0].mxu0 %v2815
  %v2985 = vpop.f32.mrb[0].mxu0
  %v2986 = vadd.f32 0.0, %v2985
  %v2987 = vpop.f32.mrb[0].mxu0
  %v2988 = vpop.f32.mrb[0].mxu0
  %v2989 = vadd.f32 0.0, %v2988
  %v2990 = vpop.f32.mrb[0].mxu0
  %2991 = vmatprep.mubr.bf16.mxu0 0
  %2992 = vmatmul.mubr.bf16.gmra.mrb[0].mxu0 %v2816
  %v2993 = vpop.f32.mrb[0].mxu0
  %v2994 = vadd.f32 0.0, %v2993
  %v2995 = vpop.f32.mrb[0].mxu0
  %v2996 = vpop.f32.mrb[0].mxu0
  %v2997 = vadd.f32 0.0, %v2996
  %v2998 = vpop.f32.mrb[0].mxu0
  %2999 = vmatprep.mubr.bf16.mxu0 0
  %3000 = vmatmul.mubr.bf16.gmra.mrb[0].mxu0 %v2817
  %v3001 = vpop.f32.mrb[0].mxu0
  %v3002 = vadd.f32 0.0, %v3001
  %v3003 = vpop.f32.mrb[0].mxu0
  %v3004 = vpop.f32.mrb[0].mxu0
  %v3005 = vadd.f32 0.0, %v3004
  %v3006 = vpop.f32.mrb[0].mxu0
  %3007 = vmatprep.mubr.bf16.mxu0 0
  %3008 = vmatmul.mubr.bf16.gmra.mrb[0].mxu0 %v2818
  %v3009 = vpop.f32.mrb[0].mxu0
  %v3010 = vadd.f32 0.0, %v3009
  %v3011 = vpop.f32.mrb[0].mxu0
  %v3012 = vpop.f32.mrb[0].mxu0
  %v3013 = vadd.f32 0.0, %v3012
  %v3014 = vpop.f32.mrb[0].mxu0
  %3015 = vmatprep.mubr.bf16.mxu0 0
  %3016 = vmatmul.mubr.bf16.gmra.mrb[0].mxu0 %v2819
  %v3017 = vpop.f32.mrb[0].mxu0
  %v3018 = vadd.f32 0.0, %v3017
  %v3019 = vpop.f32.mrb[0].mxu0
  %v3020 = vpop.f32.mrb[0].mxu0
  %v3021 = vadd.f32 0.0, %v3020
  %v3022 = vpop.f32.mrb[0].mxu0
  %3023 = vmatprep.mubr.bf16.mxu0 0
  %3024 = vmatmul.mubr.bf16.gmra.mrb[0].mxu0 %v2820
  %v3025 = vpop.f32.mrb[0].mxu0
  %v3026 = vadd.f32 0.0, %v3025
  %v3027 = vpop.f32.mrb[0].mxu0
  %v3028 = vpop.f32.mrb[0].mxu0
  %v3029 = vadd.f32 0.0, %v3028
  %v3030 = vpop.f32.mrb[0].mxu0
  %3031 = vmatprep.mubr.bf16.mxu0 0
  %3032 = vmatmul.mubr.bf16.gmra.mrb[0].mxu0 %v2821
  %v3033 = vpop.f32.mrb[0].mxu0
  %v3034 = vadd.f32 0.0, %v3033
  %v3035 = vpop.f32.mrb[0].mxu0
  %v3036 = vpop.f32.mrb[0].mxu0
  %v3037 = vadd.f32 0.0, %v3036
  %v3038 = vpop.f32.mrb[0].mxu0
  %3039 = vmatprep.mubr.bf16.mxu0 0
  %3040 = vmatmul.mubr.bf16.gmra.mrb[0].mxu0 %v2822
  %v3041 = vpop.f32.mrb[0].mxu0
  %v3042 = vadd.f32 0.0, %v3041
  %v3043 = vpop.f32.mrb[0].mxu0
  %v3044 = vpop.f32.mrb[0].mxu0
  %v3045 = vadd.f32 0.0, %v3044
  %v3046 = vpop.f32.mrb[0].mxu0
  %3047 = vdwg.mxu0
  %v3048 = vadd.f32 %v2726, %v2922
  %v3049 = vadd.f32 %v2727, %v2925
  %v3050 = vadd.f32 %v2728, %v2930
  %v3051 = vadd.f32 %v2729, %v2933
  %v3052 = vadd.f32 %v2730, %v2938
  %v3053 = vadd.f32 %v2731, %v2941
  %v3054 = vadd.f32 %v2732, %v2946
  %v3055 = vadd.f32 %v2733, %v2949
  %v3056 = vadd.f32 %v2734, %v2954
  %v3057 = vadd.f32 %v2735, %v2957
  %v3058 = vadd.f32 %v2736, %v2962
  %v3059 = vadd.f32 %v2737, %v2965
  %v3060 = vadd.f32 %v2738, %v2970
  %v3061 = vadd.f32 %v2739, %v2973
  %v3062 = vadd.f32 %v2740, %v2978
  %v3063 = vadd.f32 %v2741, %v2981
  %v3064 = vadd.f32 %v2742, %v2986
  %v3065 = vadd.f32 %v2743, %v2989
  %v3066 = vadd.f32 %v2744, %v2994
  %v3067 = vadd.f32 %v2745, %v2997
  %v3068 = vadd.f32 %v2746, %v3002
  %v3069 = vadd.f32 %v2747, %v3005
  %v3070 = vadd.f32 %v2748, %v3010
  %v3071 = vadd.f32 %v2749, %v3013
  %v3072 = vadd.f32 %v2750, %v3018
  %v3073 = vadd.f32 %v2751, %v3021
  %v3074 = vadd.f32 %v2752, %v3026
  %v3075 = vadd.f32 %v2753, %v3029
  %v3076 = vadd.f32 %v2754, %v3034
  %v3077 = vadd.f32 %v2755, %v3037
  %v3078 = vadd.f32 %v2756, %v3042
  %v3079 = vadd.f32 %v2757, %v3045
  %3080 = vst [vmem:[#allocation3] sm:$0xff] %v3048
  %3081 = vst [vmem:[#allocation3 + $0x8] sm:$0xff] %v3049
  %3082 = vst [vmem:[#allocation3 + $0x10] sm:$0xff] %v3050
  %3083 = vst [vmem:[#allocation3 + $0x18] sm:$0xff] %v3051
  %3084 = vst [vmem:[#allocation3 + $0x20] sm:$0xff] %v3052
  %3085 = vst [vmem:[#allocation3 + $0x28] sm:$0xff] %v3053
  %3086 = vst [vmem:[#allocation3 + $0x30] sm:$0xff] %v3054
  %3087 = vst [vmem:[#allocation3 + $0x38] sm:$0xff] %v3055
  %3088 = vst [vmem:[#allocation3 + $0x40] sm:$0xff] %v3056
  %3089 = vst [vmem:[#allocation3 + $0x48] sm:$0xff] %v3057
  %3090 = vst [vmem:[#allocation3 + $0x50] sm:$0xff] %v3058
  %3091 = vst [vmem:[#allocation3 + $0x58] sm:$0xff] %v3059
  %3092 = vst [vmem:[#allocation3 + $0x60] sm:$0xff] %v3060
  %3093 = vst [vmem:[#allocation3 + $0x68] sm:$0xff] %v3061
  %3094 = vst [vmem:[#allocation3 + $0x70] sm:$0xff] %v3062
  %3095 = vst [vmem:[#allocation3 + $0x78] sm:$0xff] %v3063
  %3096 = vst [vmem:[#allocation3 + $0x80] sm:$0xff] %v3064
  %3097 = vst [vmem:[#allocation3 + $0x88] sm:$0xff] %v3065
  %3098 = vst [vmem:[#allocation3 + $0x90] sm:$0xff] %v3066
  %3099 = vst [vmem:[#allocation3 + $0x98] sm:$0xff] %v3067
  %3100 = vst [vmem:[#allocation3 + $0xa0] sm:$0xff] %v3068
  %3101 = vst [vmem:[#allocation3 + $0xa8] sm:$0xff] %v3069
  %3102 = vst [vmem:[#allocation3 + $0xb0] sm:$0xff] %v3070
  %3103 = vst [vmem:[#allocation3 + $0xb8] sm:$0xff] %v3071
  %3104 = vst [vmem:[#allocation3 + $0xc0] sm:$0xff] %v3072
  %3105 = vst [vmem:[#allocation3 + $0xc8] sm:$0xff] %v3073
  %3106 = vst [vmem:[#allocation3 + $0xd0] sm:$0xff] %v3074
  %3107 = vst [vmem:[#allocation3 + $0xd8] sm:$0xff] %v3075
  %3108 = vst [vmem:[#allocation3 + $0xe0] sm:$0xff] %v3076
  %3109 = vst [vmem:[#allocation3 + $0xe8] sm:$0xff] %v3077
  %3110 = vst [vmem:[#allocation3 + $0xf0] sm:$0xff] %v3078
  %3111 = vst [vmem:[#allocation3 + $0xf8] sm:$0xff] %v3079
  %v3112 = vld [vmem:[#allocation3] sm:$0xff]
  %v3113 = vld [vmem:[#allocation3 + $0x8] sm:$0xff]
  %v3114 = vld [vmem:[#allocation3 + $0x10] sm:$0xff]
  %v3115 = vld [vmem:[#allocation3 + $0x18] sm:$0xff]
  %v3116 = vld [vmem:[#allocation3 + $0x20] sm:$0xff]
  %v3117 = vld [vmem:[#allocation3 + $0x28] sm:$0xff]
  %v3118 = vld [vmem:[#allocation3 + $0x30] sm:$0xff]
  %v3119 = vld [vmem:[#allocation3 + $0x38] sm:$0xff]
  %v3120 = vld [vmem:[#allocation3 + $0x40] sm:$0xff]
  %v3121 = vld [vmem:[#allocation3 + $0x48] sm:$0xff]
  %v3122 = vld [vmem:[#allocation3 + $0x50] sm:$0xff]
  %v3123 = vld [vmem:[#allocation3 + $0x58] sm:$0xff]
  %v3124 = vld [vmem:[#allocation3 + $0x60] sm:$0xff]
  %v3125 = vld [vmem:[#allocation3 + $0x68] sm:$0xff]
  %v3126 = vld [vmem:[#allocation3 + $0x70] sm:$0xff]
  %v3127 = vld [vmem:[#allocation3 + $0x78] sm:$0xff]
  %v3128 = vld [vmem:[#allocation3 + $0x80] sm:$0xff]
  %v3129 = vld [vmem:[#allocation3 + $0x88] sm:$0xff]
  %v3130 = vld [vmem:[#allocation3 + $0x90] sm:$0xff]
  %v3131 = vld [vmem:[#allocation3 + $0x98] sm:$0xff]
  %v3132 = vld [vmem:[#allocation3 + $0xa0] sm:$0xff]
  %v3133 = vld [vmem:[#allocation3 + $0xa8] sm:$0xff]
  %v3134 = vld [vmem:[#allocation3 + $0xb0] sm:$0xff]
  %v3135 = vld [vmem:[#allocation3 + $0xb8] sm:$0xff]
  %v3136 = vld [vmem:[#allocation3 + $0xc0] sm:$0xff]
  %v3137 = vld [vmem:[#allocation3 + $0xc8] sm:$0xff]
  %v3138 = vld [vmem:[#allocation3 + $0xd0] sm:$0xff]
  %v3139 = vld [vmem:[#allocation3 + $0xd8] sm:$0xff]
  %v3140 = vld [vmem:[#allocation3 + $0xe0] sm:$0xff]
  %v3141 = vld [vmem:[#allocation3 + $0xe8] sm:$0xff]
  %v3142 = vld [vmem:[#allocation3 + $0xf0] sm:$0xff]
  %v3143 = vld [vmem:[#allocation3 + $0xf8] sm:$0xff]
  %s3144 = scalar_lea.vmem %s1, 256
  %v3145 = vld [vmem:[%s3144] sm:$0xf]
  %v3146 = vld [vmem:[%s3144 + $0x4] sm:$0xf]
  %v3147 = vld [vmem:[%s3144 + $0x8] sm:$0xf]
  %v3148 = vld [vmem:[%s3144 + $0xc] sm:$0xf]
  %v3149 = vld [vmem:[%s3144 + $0x10] sm:$0xf]
  %v3150 = vld [vmem:[%s3144 + $0x14] sm:$0xf]
  %v3151 = vld [vmem:[%s3144 + $0x18] sm:$0xf]
  %v3152 = vld [vmem:[%s3144 + $0x1c] sm:$0xf]
  %v3153 = vld [vmem:[%s3144 + $0x20] sm:$0xf]
  %v3154 = vld [vmem:[%s3144 + $0x24] sm:$0xf]
  %v3155 = vld [vmem:[%s3144 + $0x28] sm:$0xf]
  %v3156 = vld [vmem:[%s3144 + $0x2c] sm:$0xf]
  %v3157 = vld [vmem:[%s3144 + $0x30] sm:$0xf]
  %v3158 = vld [vmem:[%s3144 + $0x34] sm:$0xf]
  %v3159 = vld [vmem:[%s3144 + $0x38] sm:$0xf]
  %v3160 = vld [vmem:[%s3144 + $0x3c] sm:$0xf]
  %v3161 = vunpack.c.l.b16 %v2691
  %v3162 = vunpack.c.l.b16 %v2701
  %v3163 = vpack.c.b16 %v3162, %v3161
  %v3181 = vunpack.c.l.b16 %v3145
  %v3182 = vunpack.c.l.b16 %v3146
  %v3183 = vunpack.c.l.b16 %v3147
  %v3184 = vunpack.c.l.b16 %v3148
  %v3185 = vunpack.c.l.b16 %v3149
  %v3186 = vunpack.c.l.b16 %v3150
  %v3187 = vunpack.c.l.b16 %v3151
  %v3188 = vunpack.c.l.b16 %v3152
  %v3189 = vunpack.c.l.b16 %v3153
  %v3190 = vunpack.c.l.b16 %v3154
  %v3191 = vunpack.c.l.b16 %v3155
  %v3192 = vunpack.c.l.b16 %v3156
  %v3193 = vunpack.c.l.b16 %v3157
  %v3194 = vunpack.c.l.b16 %v3158
  %v3195 = vunpack.c.l.b16 %v3159
  %v3196 = vunpack.c.l.b16 %v3160
  %v3197 = vpack.c.b16 %v3182, %v3181
  %v3198 = vpack.c.b16 %v3184, %v3183
  %v3199 = vpack.c.b16 %v3186, %v3185
  %v3200 = vpack.c.b16 %v3188, %v3187
  %v3201 = vpack.c.b16 %v3190, %v3189
  %v3202 = vpack.c.b16 %v3192, %v3191
  %v3203 = vpack.c.b16 %v3194, %v3193
  %v3204 = vpack.c.b16 %v3196, %v3195
  %3213 = vmatprep.subr.bf16.mxu0 0
  %3214 = vmatpush1.bf16.msra.mxu0 %v3197
  %3215 = vmatprep.subr.bf16.mxu0 0
  %3216 = vmatpush1.bf16.msra.mxu0 %v3198
  %3217 = vmatprep.subr.bf16.mxu0 0
  %3218 = vmatpush1.bf16.msra.mxu0 %v3199
  %3219 = vmatprep.subr.bf16.mxu0 0
  %3220 = vmatpush1.bf16.msra.mxu0 %v3200
  %3221 = vmatprep.subr.bf16.mxu0 0
  %3222 = vmatpush1.bf16.msra.mxu0 %v3201
  %3223 = vmatprep.subr.bf16.mxu0 0
  %3224 = vmatpush1.bf16.msra.mxu0 %v3202
  %3225 = vmatprep.subr.bf16.mxu0 0
  %3226 = vmatpush1.bf16.msra.mxu0 %v3203
  %3227 = vmatprep.subr.bf16.mxu0 0
  %3228 = vmatpush1.bf16.msra.mxu0 %v3204
  %3229 = vmatprep.subr.bf16.mxu0 0
  %3230 = vmatpush1.bf16.msra.mxu0 0
  %3231 = vmatprep.subr.bf16.mxu0 0
  %3232 = vmatpush1.bf16.msra.mxu0 0
  %3233 = vmatprep.subr.bf16.mxu0 0
  %3234 = vmatpush1.bf16.msra.mxu0 0
  %3235 = vmatprep.subr.bf16.mxu0 0
  %3236 = vmatpush1.bf16.msra.mxu0 0
  %3237 = vmatprep.subr.bf16.mxu0 0
  %3238 = vmatpush1.bf16.msra.mxu0 0
  %3239 = vmatprep.subr.bf16.mxu0 0
  %3240 = vmatpush1.bf16.msra.mxu0 0
  %3241 = vmatprep.subr.bf16.mxu0 0
  %3242 = vmatpush1.bf16.msra.mxu0 0
  %3243 = vmatprep.subr.bf16.mxu0 0
  %3244 = vmatpush1.bf16.msra.mxu0 0
  %3245 = vmatprep.mubr.bf16.mxu0 0
  %3246 = vmatmul.mubr.bf16.gmra.mrb[0].mxu0 %v2808
  %v3247 = vpop.f32.mrb[0].mxu0
  %v3248 = vadd.f32 0.0, %v3247
  %v3249 = vpop.f32.mrb[0].mxu0
  %v3250 = vpop.f32.mrb[0].mxu0
  %v3251 = vadd.f32 0.0, %v3250
  %v3252 = vpop.f32.mrb[0].mxu0
  %3253 = vmatprep.mubr.bf16.mxu0 0
  %3254 = vmatmul.mubr.bf16.gmra.mrb[0].mxu0 %v2809
  %v3255 = vpop.f32.mrb[0].mxu0
  %v3256 = vadd.f32 0.0, %v3255
  %v3257 = vpop.f32.mrb[0].mxu0
  %v3258 = vpop.f32.mrb[0].mxu0
  %v3259 = vadd.f32 0.0, %v3258
  %v3260 = vpop.f32.mrb[0].mxu0
  %3261 = vmatprep.mubr.bf16.mxu0 0
  %3262 = vmatmul.mubr.bf16.gmra.mrb[0].mxu0 %v2810
  %v3263 = vpop.f32.mrb[0].mxu0
  %v3264 = vadd.f32 0.0, %v3263
  %v3265 = vpop.f32.mrb[0].mxu0
  %v3266 = vpop.f32.mrb[0].mxu0
  %v3267 = vadd.f32 0.0, %v3266
  %v3268 = vpop.f32.mrb[0].mxu0
  %3269 = vmatprep.mubr.bf16.mxu0 0
  %3270 = vmatmul.mubr.bf16.gmra.mrb[0].mxu0 %v2811
  %v3271 = vpop.f32.mrb[0].mxu0
  %v3272 = vadd.f32 0.0, %v3271
  %v3273 = vpop.f32.mrb[0].mxu0
  %v3274 = vpop.f32.mrb[0].mxu0
  %v3275 = vadd.f32 0.0, %v3274
  %v3276 = vpop.f32.mrb[0].mxu0
  %3277 = vmatprep.mubr.bf16.mxu0 0
  %3278 = vmatmul.mubr.bf16.gmra.mrb[0].mxu0 %v2812
  %v3279 = vpop.f32.mrb[0].mxu0
  %v3280 = vadd.f32 0.0, %v3279
  %v3281 = vpop.f32.mrb[0].mxu0
  %v3282 = vpop.f32.mrb[0].mxu0
  %v3283 = vadd.f32 0.0, %v3282
  %v3284 = vpop.f32.mrb[0].mxu0
  %3285 = vmatprep.mubr.bf16.mxu0 0
  %3286 = vmatmul.mubr.bf16.gmra.mrb[0].mxu0 %v2813
  %v3287 = vpop.f32.mrb[0].mxu0
  %v3288 = vadd.f32 0.0, %v3287
  %v3289 = vpop.f32.mrb[0].mxu0
  %v3290 = vpop.f32.mrb[0].mxu0
  %v3291 = vadd.f32 0.0, %v3290
  %v3292 = vpop.f32.mrb[0].mxu0
  %3293 = vmatprep.mubr.bf16.mxu0 0
  %3294 = vmatmul.mubr.bf16.gmra.mrb[0].mxu0 %v2814
  %v3295 = vpop.f32.mrb[0].mxu0
  %v3296 = vadd.f32 0.0, %v3295
  %v3297 = vpop.f32.mrb[0].mxu0
  %v3298 = vpop.f32.mrb[0].mxu0
  %v3299 = vadd.f32 0.0, %v3298
  %v3300 = vpop.f32.mrb[0].mxu0
  %3301 = vmatprep.mubr.bf16.mxu0 0
  %3302 = vmatmul.mubr.bf16.gmra.mrb[0].mxu0 %v2815
  %v3303 = vpop.f32.mrb[0].mxu0
  %v3304 = vadd.f32 0.0, %v3303
  %v3305 = vpop.f32.mrb[0].mxu0
  %v3306 = vpop.f32.mrb[0].mxu0
  %v3307 = vadd.f32 0.0, %v3306
  %v3308 = vpop.f32.mrb[0].mxu0
  %3309 = vmatprep.mubr.bf16.mxu0 0
  %3310 = vmatmul.mubr.bf16.gmra.mrb[0].mxu0 %v2816
  %v3311 = vpop.f32.mrb[0].mxu0
  %v3312 = vadd.f32 0.0, %v3311
  %v3313 = vpop.f32.mrb[0].mxu0
  %v3314 = vpop.f32.mrb[0].mxu0
  %v3315 = vadd.f32 0.0, %v3314
  %v3316 = vpop.f32.mrb[0].mxu0
  %3317 = vmatprep.mubr.bf16.mxu0 0
  %3318 = vmatmul.mubr.bf16.gmra.mrb[0].mxu0 %v2817
  %v3319 = vpop.f32.mrb[0].mxu0
  %v3320 = vadd.f32 0.0, %v3319
  %v3321 = vpop.f32.mrb[0].mxu0
  %v3322 = vpop.f32.mrb[0].mxu0
  %v3323 = vadd.f32 0.0, %v3322
  %v3324 = vpop.f32.mrb[0].mxu0
  %3325 = vmatprep.mubr.bf16.mxu0 0
  %3326 = vmatmul.mubr.bf16.gmra.mrb[0].mxu0 %v2818
  %v3327 = vpop.f32.mrb[0].mxu0
  %v3328 = vadd.f32 0.0, %v3327
  %v3329 = vpop.f32.mrb[0].mxu0
  %v3330 = vpop.f32.mrb[0].mxu0
  %v3331 = vadd.f32 0.0, %v3330
  %v3332 = vpop.f32.mrb[0].mxu0
  %3333 = vmatprep.mubr.bf16.mxu0 0
  %3334 = vmatmul.mubr.bf16.gmra.mrb[0].mxu0 %v2819
  %v3335 = vpop.f32.mrb[0].mxu0
  %v3336 = vadd.f32 0.0, %v3335
  %v3337 = vpop.f32.mrb[0].mxu0
  %v3338 = vpop.f32.mrb[0].mxu0
  %v3339 = vadd.f32 0.0, %v3338
  %v3340 = vpop.f32.mrb[0].mxu0
  %3341 = vmatprep.mubr.bf16.mxu0 0
  %3342 = vmatmul.mubr.bf16.gmra.mrb[0].mxu0 %v2820
  %v3343 = vpop.f32.mrb[0].mxu0
  %v3344 = vadd.f32 0.0, %v3343
  %v3345 = vpop.f32.mrb[0].mxu0
  %v3346 = vpop.f32.mrb[0].mxu0
  %v3347 = vadd.f32 0.0, %v3346
  %v3348 = vpop.f32.mrb[0].mxu0
  %3349 = vmatprep.mubr.bf16.mxu0 0
  %3350 = vmatmul.mubr.bf16.gmra.mrb[0].mxu0 %v2821
  %v3351 = vpop.f32.mrb[0].mxu0
  %v3352 = vadd.f32 0.0, %v3351
  %v3353 = vpop.f32.mrb[0].mxu0
  %v3354 = vpop.f32.mrb[0].mxu0
  %v3355 = vadd.f32 0.0, %v3354
  %v3356 = vpop.f32.mrb[0].mxu0
  %3357 = vmatprep.mubr.bf16.mxu0 0
  %3358 = vmatmul.mubr.bf16.gmra.mrb[0].mxu0 %v2822
  %v3359 = vpop.f32.mrb[0].mxu0
  %v3360 = vadd.f32 0.0, %v3359
  %v3361 = vpop.f32.mrb[0].mxu0
  %v3362 = vpop.f32.mrb[0].mxu0
  %v3363 = vadd.f32 0.0, %v3362
  %v3364 = vpop.f32.mrb[0].mxu0
  %3365 = vmatprep.mubr.bf16.mxu0 0
  %3366 = vmatmul.mubr.bf16.gmra.mrb[0].mxu0 %v3163
  %v3367 = vpop.f32.mrb[0].mxu0
  %v3368 = vadd.f32 0.0, %v3367
  %v3369 = vpop.f32.mrb[0].mxu0
  %v3370 = vpop.f32.mrb[0].mxu0
  %v3371 = vadd.f32 0.0, %v3370
  %v3372 = vpop.f32.mrb[0].mxu0
  %3373 = vdwg.mxu0
  %v3374 = vadd.f32 %v3112, %v3248
  %v3375 = vadd.f32 %v3113, %v3251
  %v3376 = vadd.f32 %v3114, %v3256
  %v3377 = vadd.f32 %v3115, %v3259
  %v3378 = vadd.f32 %v3116, %v3264
  %v3379 = vadd.f32 %v3117, %v3267
  %v3380 = vadd.f32 %v3118, %v3272
  %v3381 = vadd.f32 %v3119, %v3275
  %v3382 = vadd.f32 %v3120, %v3280
  %v3383 = vadd.f32 %v3121, %v3283
  %v3384 = vadd.f32 %v3122, %v3288
  %v3385 = vadd.f32 %v3123, %v3291
  %v3386 = vadd.f32 %v3124, %v3296
  %v3387 = vadd.f32 %v3125, %v3299
  %v3388 = vadd.f32 %v3126, %v3304
  %v3389 = vadd.f32 %v3127, %v3307
  %v3390 = vadd.f32 %v3128, %v3312
  %v3391 = vadd.f32 %v3129, %v3315
  %v3392 = vadd.f32 %v3130, %v3320
  %v3393 = vadd.f32 %v3131, %v3323
  %v3394 = vadd.f32 %v3132, %v3328
  %v3395 = vadd.f32 %v3133, %v3331
  %v3396 = vadd.f32 %v3134, %v3336
  %v3397 = vadd.f32 %v3135, %v3339
  %v3398 = vadd.f32 %v3136, %v3344
  %v3399 = vadd.f32 %v3137, %v3347
  %v3400 = vadd.f32 %v3138, %v3352
  %v3401 = vadd.f32 %v3139, %v3355
  %v3402 = vadd.f32 %v3140, %v3360
  %v3403 = vadd.f32 %v3141, %v3363
  %v3404 = vadd.f32 %v3142, %v3368
  %v3405 = vadd.f32 %v3143, %v3371
  %3406 = vst [vmem:[#allocation3] sm:$0xff] %v3374
  %3407 = vst [vmem:[#allocation3 + $0x8] sm:$0xff] %v3375
  %3408 = vst [vmem:[#allocation3 + $0x10] sm:$0xff] %v3376
  %3409 = vst [vmem:[#allocation3 + $0x18] sm:$0xff] %v3377
  %3410 = vst [vmem:[#allocation3 + $0x20] sm:$0xff] %v3378
  %3411 = vst [vmem:[#allocation3 + $0x28] sm:$0xff] %v3379
  %3412 = vst [vmem:[#allocation3 + $0x30] sm:$0xff] %v3380
  %3413 = vst [vmem:[#allocation3 + $0x38] sm:$0xff] %v3381
  %3414 = vst [vmem:[#allocation3 + $0x40] sm:$0xff] %v3382
  %3415 = vst [vmem:[#allocation3 + $0x48] sm:$0xff] %v3383
  %3416 = vst [vmem:[#allocation3 + $0x50] sm:$0xff] %v3384
  %3417 = vst [vmem:[#allocation3 + $0x58] sm:$0xff] %v3385
  %3418 = vst [vmem:[#allocation3 + $0x60] sm:$0xff] %v3386
  %3419 = vst [vmem:[#allocation3 + $0x68] sm:$0xff] %v3387
  %3420 = vst [vmem:[#allocation3 + $0x70] sm:$0xff] %v3388
  %3421 = vst [vmem:[#allocation3 + $0x78] sm:$0xff] %v3389
  %3422 = vst [vmem:[#allocation3 + $0x80] sm:$0xff] %v3390
  %3423 = vst [vmem:[#allocation3 + $0x88] sm:$0xff] %v3391
  %3424 = vst [vmem:[#allocation3 + $0x90] sm:$0xff] %v3392
  %3425 = vst [vmem:[#allocation3 + $0x98] sm:$0xff] %v3393
  %3426 = vst [vmem:[#allocation3 + $0xa0] sm:$0xff] %v3394
  %3427 = vst [vmem:[#allocation3 + $0xa8] sm:$0xff] %v3395
  %3428 = vst [vmem:[#allocation3 + $0xb0] sm:$0xff] %v3396
  %3429 = vst [vmem:[#allocation3 + $0xb8] sm:$0xff] %v3397
  %3430 = vst [vmem:[#allocation3 + $0xc0] sm:$0xff] %v3398
  %3431 = vst [vmem:[#allocation3 + $0xc8] sm:$0xff] %v3399
  %3432 = vst [vmem:[#allocation3 + $0xd0] sm:$0xff] %v3400
  %3433 = vst [vmem:[#allocation3 + $0xd8] sm:$0xff] %v3401
  %3434 = vst [vmem:[#allocation3 + $0xe0] sm:$0xff] %v3402
  %3435 = vst [vmem:[#allocation3 + $0xe8] sm:$0xff] %v3403
  %3436 = vst [vmem:[#allocation3 + $0xf0] sm:$0xff] %v3404
  %3437 = vst [vmem:[#allocation3 + $0xf8] sm:$0xff] %v3405
  %v3438 = vld [vmem:[#allocation3] sm:$0xff]
  %v3439 = vld [vmem:[#allocation3 + $0x8] sm:$0xff]
  %v3440 = vld [vmem:[#allocation3 + $0x10] sm:$0xff]
  %v3441 = vld [vmem:[#allocation3 + $0x18] sm:$0xff]
  %v3442 = vld [vmem:[#allocation3 + $0x20] sm:$0xff]
  %v3443 = vld [vmem:[#allocation3 + $0x28] sm:$0xff]
  %v3444 = vld [vmem:[#allocation3 + $0x30] sm:$0xff]
  %v3445 = vld [vmem:[#allocation3 + $0x38] sm:$0xff]
  %v3446 = vld [vmem:[#allocation3 + $0x40] sm:$0xff]
  %v3447 = vld [vmem:[#allocation3 + $0x48] sm:$0xff]
  %v3448 = vld [vmem:[#allocation3 + $0x50] sm:$0xff]
  %v3449 = vld [vmem:[#allocation3 + $0x58] sm:$0xff]
  %v3450 = vld [vmem:[#allocation3 + $0x60] sm:$0xff]
  %v3451 = vld [vmem:[#allocation3 + $0x68] sm:$0xff]
  %v3452 = vld [vmem:[#allocation3 + $0x70] sm:$0xff]
  %v3453 = vld [vmem:[#allocation3 + $0x78] sm:$0xff]
  %v3454 = vld [vmem:[#allocation3 + $0x80] sm:$0xff]
  %v3455 = vld [vmem:[#allocation3 + $0x88] sm:$0xff]
  %v3456 = vld [vmem:[#allocation3 + $0x90] sm:$0xff]
  %v3457 = vld [vmem:[#allocation3 + $0x98] sm:$0xff]
  %v3458 = vld [vmem:[#allocation3 + $0xa0] sm:$0xff]
  %v3459 = vld [vmem:[#allocation3 + $0xa8] sm:$0xff]
  %v3460 = vld [vmem:[#allocation3 + $0xb0] sm:$0xff]
  %v3461 = vld [vmem:[#allocation3 + $0xb8] sm:$0xff]
  %v3462 = vld [vmem:[#allocation3 + $0xc0] sm:$0xff]
  %v3463 = vld [vmem:[#allocation3 + $0xc8] sm:$0xff]
  %v3464 = vld [vmem:[#allocation3 + $0xd0] sm:$0xff]
  %v3465 = vld [vmem:[#allocation3 + $0xd8] sm:$0xff]
  %v3466 = vld [vmem:[#allocation3 + $0xe0] sm:$0xff]
  %v3467 = vld [vmem:[#allocation3 + $0xe8] sm:$0xff]
  %v3468 = vld [vmem:[#allocation3 + $0xf0] sm:$0xff]
  %v3469 = vld [vmem:[#allocation3 + $0xf8] sm:$0xff]
  %s3470 = scalar_lea.vmem %s1, 448
  %v3471 = vld [vmem:[%s3470] sm:$0xf]
  %v3472 = vld [vmem:[%s3470 + $0x4] sm:$0xf]
  %v3473 = vld [vmem:[%s3470 + $0x8] sm:$0xf]
  %v3474 = vld [vmem:[%s3470 + $0xc] sm:$0xf]
  %v3475 = vld [vmem:[%s3470 + $0x10] sm:$0xf]
  %v3476 = vld [vmem:[%s3470 + $0x14] sm:$0xf]
  %v3477 = vld [vmem:[%s3470 + $0x18] sm:$0xf]
  %v3478 = vld [vmem:[%s3470 + $0x1c] sm:$0xf]
  %v3479 = vld [vmem:[%s3470 + $0x20] sm:$0xf]
  %v3480 = vld [vmem:[%s3470 + $0x24] sm:$0xf]
  %v3481 = vld [vmem:[%s3470 + $0x28] sm:$0xf]
  %v3482 = vld [vmem:[%s3470 + $0x2c] sm:$0xf]
  %v3483 = vld [vmem:[%s3470 + $0x30] sm:$0xf]
  %v3484 = vld [vmem:[%s3470 + $0x34] sm:$0xf]
  %v3485 = vld [vmem:[%s3470 + $0x38] sm:$0xf]
  %v3486 = vld [vmem:[%s3470 + $0x3c] sm:$0xf]
  %v3487 = vunpack.c.l.b16 %v2715
  %v3488 = vunpack.c.l.b16 %v2725
  %v3489 = vpack.c.b16 %v3488, %v3487
  %v3507 = vunpack.c.l.b16 %v3471
  %v3508 = vunpack.c.l.b16 %v3472
  %v3509 = vunpack.c.l.b16 %v3473
  %v3510 = vunpack.c.l.b16 %v3474
  %v3511 = vunpack.c.l.b16 %v3475
  %v3512 = vunpack.c.l.b16 %v3476
  %v3513 = vunpack.c.l.b16 %v3477
  %v3514 = vunpack.c.l.b16 %v3478
  %v3515 = vunpack.c.l.b16 %v3479
  %v3516 = vunpack.c.l.b16 %v3480
  %v3517 = vunpack.c.l.b16 %v3481
  %v3518 = vunpack.c.l.b16 %v3482
  %v3519 = vunpack.c.l.b16 %v3483
  %v3520 = vunpack.c.l.b16 %v3484
  %v3521 = vunpack.c.l.b16 %v3485
  %v3522 = vunpack.c.l.b16 %v3486
  %v3523 = vpack.c.b16 %v3508, %v3507
  %v3524 = vpack.c.b16 %v3510, %v3509
  %v3525 = vpack.c.b16 %v3512, %v3511
  %v3526 = vpack.c.b16 %v3514, %v3513
  %v3527 = vpack.c.b16 %v3516, %v3515
  %v3528 = vpack.c.b16 %v3518, %v3517
  %v3529 = vpack.c.b16 %v3520, %v3519
  %v3530 = vpack.c.b16 %v3522, %v3521
  %3539 = vmatprep.subr.bf16.mxu0 0
  %3540 = vmatpush1.bf16.msra.mxu0 %v3523
  %3541 = vmatprep.subr.bf16.mxu0 0
  %3542 = vmatpush1.bf16.msra.mxu0 %v3524
  %3543 = vmatprep.subr.bf16.mxu0 0
  %3544 = vmatpush1.bf16.msra.mxu0 %v3525
  %3545 = vmatprep.subr.bf16.mxu0 0
  %3546 = vmatpush1.bf16.msra.mxu0 %v3526
  %3547 = vmatprep.subr.bf16.mxu0 0
  %3548 = vmatpush1.bf16.msra.mxu0 %v3527
  %3549 = vmatprep.subr.bf16.mxu0 0
  %3550 = vmatpush1.bf16.msra.mxu0 %v3528
  %3551 = vmatprep.subr.bf16.mxu0 0
  %3552 = vmatpush1.bf16.msra.mxu0 %v3529
  %3553 = vmatprep.subr.bf16.mxu0 0
  %3554 = vmatpush1.bf16.msra.mxu0 %v3530
  %3555 = vmatprep.subr.bf16.mxu0 0
  %3556 = vmatpush1.bf16.msra.mxu0 0
  %3557 = vmatprep.subr.bf16.mxu0 0
  %3558 = vmatpush1.bf16.msra.mxu0 0
  %3559 = vmatprep.subr.bf16.mxu0 0
  %3560 = vmatpush1.bf16.msra.mxu0 0
  %3561 = vmatprep.subr.bf16.mxu0 0
  %3562 = vmatpush1.bf16.msra.mxu0 0
  %3563 = vmatprep.subr.bf16.mxu0 0
  %3564 = vmatpush1.bf16.msra.mxu0 0
  %3565 = vmatprep.subr.bf16.mxu0 0
  %3566 = vmatpush1.bf16.msra.mxu0 0
  %3567 = vmatprep.subr.bf16.mxu0 0
  %3568 = vmatpush1.bf16.msra.mxu0 0
  %3569 = vmatprep.subr.bf16.mxu0 0
  %3570 = vmatpush1.bf16.msra.mxu0 0
  %3571 = vmatprep.mubr.bf16.mxu0 0
  %3572 = vmatmul.mubr.bf16.gmra.mrb[0].mxu0 %v2809
  %v3573 = vpop.f32.mrb[0].mxu0
  %v3574 = vadd.f32 0.0, %v3573
  %v3575 = vpop.f32.mrb[0].mxu0
  %v3576 = vpop.f32.mrb[0].mxu0
  %v3577 = vadd.f32 0.0, %v3576
  %v3578 = vpop.f32.mrb[0].mxu0
  %3579 = vmatprep.mubr.bf16.mxu0 0
  %3580 = vmatmul.mubr.bf16.gmra.mrb[0].mxu0 %v2810
  %v3581 = vpop.f32.mrb[0].mxu0
  %v3582 = vadd.f32 0.0, %v3581
  %v3583 = vpop.f32.mrb[0].mxu0
  %v3584 = vpop.f32.mrb[0].mxu0
  %v3585 = vadd.f32 0.0, %v3584
  %v3586 = vpop.f32.mrb[0].mxu0
  %3587 = vmatprep.mubr.bf16.mxu0 0
  %3588 = vmatmul.mubr.bf16.gmra.mrb[0].mxu0 %v2811
  %v3589 = vpop.f32.mrb[0].mxu0
  %v3590 = vadd.f32 0.0, %v3589
  %v3591 = vpop.f32.mrb[0].mxu0
  %v3592 = vpop.f32.mrb[0].mxu0
  %v3593 = vadd.f32 0.0, %v3592
  %v3594 = vpop.f32.mrb[0].mxu0
  %3595 = vmatprep.mubr.bf16.mxu0 0
  %3596 = vmatmul.mubr.bf16.gmra.mrb[0].mxu0 %v2812
  %v3597 = vpop.f32.mrb[0].mxu0
  %v3598 = vadd.f32 0.0, %v3597
  %v3599 = vpop.f32.mrb[0].mxu0
  %v3600 = vpop.f32.mrb[0].mxu0
  %v3601 = vadd.f32 0.0, %v3600
  %v3602 = vpop.f32.mrb[0].mxu0
  %3603 = vmatprep.mubr.bf16.mxu0 0
  %3604 = vmatmul.mubr.bf16.gmra.mrb[0].mxu0 %v2813
  %v3605 = vpop.f32.mrb[0].mxu0
  %v3606 = vadd.f32 0.0, %v3605
  %v3607 = vpop.f32.mrb[0].mxu0
  %v3608 = vpop.f32.mrb[0].mxu0
  %v3609 = vadd.f32 0.0, %v3608
  %v3610 = vpop.f32.mrb[0].mxu0
  %3611 = vmatprep.mubr.bf16.mxu0 0
  %3612 = vmatmul.mubr.bf16.gmra.mrb[0].mxu0 %v2814
  %v3613 = vpop.f32.mrb[0].mxu0
  %v3614 = vadd.f32 0.0, %v3613
  %v3615 = vpop.f32.mrb[0].mxu0
  %v3616 = vpop.f32.mrb[0].mxu0
  %v3617 = vadd.f32 0.0, %v3616
  %v3618 = vpop.f32.mrb[0].mxu0
  %3619 = vmatprep.mubr.bf16.mxu0 0
  %3620 = vmatmul.mubr.bf16.gmra.mrb[0].mxu0 %v2815
  %v3621 = vpop.f32.mrb[0].mxu0
  %v3622 = vadd.f32 0.0, %v3621
  %v3623 = vpop.f32.mrb[0].mxu0
  %v3624 = vpop.f32.mrb[0].mxu0
  %v3625 = vadd.f32 0.0, %v3624
  %v3626 = vpop.f32.mrb[0].mxu0
  %3627 = vmatprep.mubr.bf16.mxu0 0
  %3628 = vmatmul.mubr.bf16.gmra.mrb[0].mxu0 %v2816
  %v3629 = vpop.f32.mrb[0].mxu0
  %v3630 = vadd.f32 0.0, %v3629
  %v3631 = vpop.f32.mrb[0].mxu0
  %v3632 = vpop.f32.mrb[0].mxu0
  %v3633 = vadd.f32 0.0, %v3632
  %v3634 = vpop.f32.mrb[0].mxu0
  %3635 = vmatprep.mubr.bf16.mxu0 0
  %3636 = vmatmul.mubr.bf16.gmra.mrb[0].mxu0 %v2817
  %v3637 = vpop.f32.mrb[0].mxu0
  %v3638 = vadd.f32 0.0, %v3637
  %v3639 = vpop.f32.mrb[0].mxu0
  %v3640 = vpop.f32.mrb[0].mxu0
  %v3641 = vadd.f32 0.0, %v3640
  %v3642 = vpop.f32.mrb[0].mxu0
  %3643 = vmatprep.mubr.bf16.mxu0 0
  %3644 = vmatmul.mubr.bf16.gmra.mrb[0].mxu0 %v2818
  %v3645 = vpop.f32.mrb[0].mxu0
  %v3646 = vadd.f32 0.0, %v3645
  %v3647 = vpop.f32.mrb[0].mxu0
  %v3648 = vpop.f32.mrb[0].mxu0
  %v3649 = vadd.f32 0.0, %v3648
  %v3650 = vpop.f32.mrb[0].mxu0
  %3651 = vmatprep.mubr.bf16.mxu0 0
  %3652 = vmatmul.mubr.bf16.gmra.mrb[0].mxu0 %v2819
  %v3653 = vpop.f32.mrb[0].mxu0
  %v3654 = vadd.f32 0.0, %v3653
  %v3655 = vpop.f32.mrb[0].mxu0
  %v3656 = vpop.f32.mrb[0].mxu0
  %v3657 = vadd.f32 0.0, %v3656
  %v3658 = vpop.f32.mrb[0].mxu0
  %3659 = vmatprep.mubr.bf16.mxu0 0
  %3660 = vmatmul.mubr.bf16.gmra.mrb[0].mxu0 %v2820
  %v3661 = vpop.f32.mrb[0].mxu0
  %v3662 = vadd.f32 0.0, %v3661
  %v3663 = vpop.f32.mrb[0].mxu0
  %v3664 = vpop.f32.mrb[0].mxu0
  %v3665 = vadd.f32 0.0, %v3664
  %v3666 = vpop.f32.mrb[0].mxu0
  %3667 = vmatprep.mubr.bf16.mxu0 0
  %3668 = vmatmul.mubr.bf16.gmra.mrb[0].mxu0 %v2821
  %v3669 = vpop.f32.mrb[0].mxu0
  %v3670 = vadd.f32 0.0, %v3669
  %v3671 = vpop.f32.mrb[0].mxu0
  %v3672 = vpop.f32.mrb[0].mxu0
  %v3673 = vadd.f32 0.0, %v3672
  %v3674 = vpop.f32.mrb[0].mxu0
  %3675 = vmatprep.mubr.bf16.mxu0 0
  %3676 = vmatmul.mubr.bf16.gmra.mrb[0].mxu0 %v2822
  %v3677 = vpop.f32.mrb[0].mxu0
  %v3678 = vadd.f32 0.0, %v3677
  %v3679 = vpop.f32.mrb[0].mxu0
  %v3680 = vpop.f32.mrb[0].mxu0
  %v3681 = vadd.f32 0.0, %v3680
  %v3682 = vpop.f32.mrb[0].mxu0
  %3683 = vmatprep.mubr.bf16.mxu0 0
  %3684 = vmatmul.mubr.bf16.gmra.mrb[0].mxu0 %v3163
  %v3685 = vpop.f32.mrb[0].mxu0
  %v3686 = vadd.f32 0.0, %v3685
  %v3687 = vpop.f32.mrb[0].mxu0
  %v3688 = vpop.f32.mrb[0].mxu0
  %v3689 = vadd.f32 0.0, %v3688
  %v3690 = vpop.f32.mrb[0].mxu0
  %3691 = vmatprep.mubr.bf16.mxu0 0
  %3692 = vmatmul.mubr.bf16.gmra.mrb[0].mxu0 %v3489
  %v3693 = vpop.f32.mrb[0].mxu0
  %v3694 = vadd.f32 0.0, %v3693
  %v3695 = vpop.f32.mrb[0].mxu0
  %v3696 = vpop.f32.mrb[0].mxu0
  %v3697 = vadd.f32 0.0, %v3696
  %v3698 = vpop.f32.mrb[0].mxu0
  %3699 = vdwg.mxu0
  %v3700 = vadd.f32 %v3438, %v3574
  %v3701 = vadd.f32 %v3439, %v3577
  %v3702 = vadd.f32 %v3440, %v3582
  %v3703 = vadd.f32 %v3441, %v3585
  %v3704 = vadd.f32 %v3442, %v3590
  %v3705 = vadd.f32 %v3443, %v3593
  %v3706 = vadd.f32 %v3444, %v3598
  %v3707 = vadd.f32 %v3445, %v3601
  %v3708 = vadd.f32 %v3446, %v3606
  %v3709 = vadd.f32 %v3447, %v3609
  %v3710 = vadd.f32 %v3448, %v3614
  %v3711 = vadd.f32 %v3449, %v3617
  %v3712 = vadd.f32 %v3450, %v3622
  %v3713 = vadd.f32 %v3451, %v3625
  %v3714 = vadd.f32 %v3452, %v3630
  %v3715 = vadd.f32 %v3453, %v3633
  %v3716 = vadd.f32 %v3454, %v3638
  %v3717 = vadd.f32 %v3455, %v3641
  %v3718 = vadd.f32 %v3456, %v3646
  %v3719 = vadd.f32 %v3457, %v3649
  %v3720 = vadd.f32 %v3458, %v3654
  %v3721 = vadd.f32 %v3459, %v3657
  %v3722 = vadd.f32 %v3460, %v3662
  %v3723 = vadd.f32 %v3461, %v3665
  %v3724 = vadd.f32 %v3462, %v3670
  %v3725 = vadd.f32 %v3463, %v3673
  %v3726 = vadd.f32 %v3464, %v3678
  %v3727 = vadd.f32 %v3465, %v3681
  %v3728 = vadd.f32 %v3466, %v3686
  %v3729 = vadd.f32 %v3467, %v3689
  %v3730 = vadd.f32 %v3468, %v3694
  %v3731 = vadd.f32 %v3469, %v3697
  %3732 = vst [vmem:[#allocation3] sm:$0xff] %v3700
  %3733 = vst [vmem:[#allocation3 + $0x8] sm:$0xff] %v3701
  %3734 = vst [vmem:[#allocation3 + $0x10] sm:$0xff] %v3702
  %3735 = vst [vmem:[#allocation3 + $0x18] sm:$0xff] %v3703
  %3736 = vst [vmem:[#allocation3 + $0x20] sm:$0xff] %v3704
  %3737 = vst [vmem:[#allocation3 + $0x28] sm:$0xff] %v3705
  %3738 = vst [vmem:[#allocation3 + $0x30] sm:$0xff] %v3706
  %3739 = vst [vmem:[#allocation3 + $0x38] sm:$0xff] %v3707
  %3740 = vst [vmem:[#allocation3 + $0x40] sm:$0xff] %v3708
  %3741 = vst [vmem:[#allocation3 + $0x48] sm:$0xff] %v3709
  %3742 = vst [vmem:[#allocation3 + $0x50] sm:$0xff] %v3710
  %3743 = vst [vmem:[#allocation3 + $0x58] sm:$0xff] %v3711
  %3744 = vst [vmem:[#allocation3 + $0x60] sm:$0xff] %v3712
  %3745 = vst [vmem:[#allocation3 + $0x68] sm:$0xff] %v3713
  %3746 = vst [vmem:[#allocation3 + $0x70] sm:$0xff] %v3714
  %3747 = vst [vmem:[#allocation3 + $0x78] sm:$0xff] %v3715
  %3748 = vst [vmem:[#allocation3 + $0x80] sm:$0xff] %v3716
  %3749 = vst [vmem:[#allocation3 + $0x88] sm:$0xff] %v3717
  %3750 = vst [vmem:[#allocation3 + $0x90] sm:$0xff] %v3718
  %3751 = vst [vmem:[#allocation3 + $0x98] sm:$0xff] %v3719
  %3752 = vst [vmem:[#allocation3 + $0xa0] sm:$0xff] %v3720
  %3753 = vst [vmem:[#allocation3 + $0xa8] sm:$0xff] %v3721
  %3754 = vst [vmem:[#allocation3 + $0xb0] sm:$0xff] %v3722
  %3755 = vst [vmem:[#allocation3 + $0xb8] sm:$0xff] %v3723
  %3756 = vst [vmem:[#allocation3 + $0xc0] sm:$0xff] %v3724
  %3757 = vst [vmem:[#allocation3 + $0xc8] sm:$0xff] %v3725
  %3758 = vst [vmem:[#allocation3 + $0xd0] sm:$0xff] %v3726
  %3759 = vst [vmem:[#allocation3 + $0xd8] sm:$0xff] %v3727
  %3760 = vst [vmem:[#allocation3 + $0xe0] sm:$0xff] %v3728
  %3761 = vst [vmem:[#allocation3 + $0xe8] sm:$0xff] %v3729
  %3762 = vst [vmem:[#allocation3 + $0xf0] sm:$0xff] %v3730
  %3763 = vst [vmem:[#allocation3 + $0xf8] sm:$0xff] %v3731
  %v3764 = vld [vmem:[#allocation2] sm:$0xe]
  %v3765 = vld [vmem:[#allocation2 + $0x4] sm:$0xf]
  %v3766 = vld [vmem:[#allocation2 + $0x8] sm:$0x1]
  %v3767 = vld [vmem:[#allocation2 + $0xc] sm:$0xe]
  %v3768 = vld [vmem:[#allocation2 + $0x10] sm:$0xf]
  %v3769 = vld [vmem:[#allocation2 + $0x14] sm:$0x1]
  %v3770 = vld [vmem:[#allocation2 + $0x18] sm:$0xe]
  %v3771 = vld [vmem:[#allocation2 + $0x1c] sm:$0xf]
  %v3772 = vld [vmem:[#allocation2 + $0x20] sm:$0x1]
  %v3773 = vld [vmem:[#allocation2 + $0x24] sm:$0xe]
  %v3774 = vld [vmem:[#allocation2 + $0x28] sm:$0xf]
  %v3775 = vld [vmem:[#allocation2 + $0x2c] sm:$0x1]
  %v3776 = vld [vmem:[#allocation2 + $0x30] sm:$0xe]
  %v3777 = vld [vmem:[#allocation2 + $0x34] sm:$0xf]
  %v3778 = vld [vmem:[#allocation2 + $0x38] sm:$0x1]
  %v3779 = vld [vmem:[#allocation2 + $0x3c] sm:$0xe]
  %v3780 = vld [vmem:[#allocation2 + $0x40] sm:$0xf]
  %v3781 = vld [vmem:[#allocation2 + $0x44] sm:$0x1]
  %v3782 = vld [vmem:[#allocation2 + $0x48] sm:$0xe]
  %v3783 = vld [vmem:[#allocation2 + $0x4c] sm:$0xf]
  %v3784 = vld [vmem:[#allocation2 + $0x50] sm:$0x1]
  %v3785 = vld [vmem:[#allocation2 + $0x54] sm:$0xe]
  %v3786 = vld [vmem:[#allocation2 + $0x58] sm:$0xf]
  %v3787 = vld [vmem:[#allocation2 + $0x5c] sm:$0x1]
  %v3788 = vld [vmem:[#allocation2 + $0x60] sm:$0xe]
  %v3789 = vld [vmem:[#allocation2 + $0x64] sm:$0xf]
  %v3790 = vld [vmem:[#allocation2 + $0x68] sm:$0x1]
  %v3791 = vld [vmem:[#allocation2 + $0x6c] sm:$0xe]
  %v3792 = vld [vmem:[#allocation2 + $0x70] sm:$0xf]
  %v3793 = vld [vmem:[#allocation2 + $0x74] sm:$0x1]
  %v3794 = vld [vmem:[#allocation2 + $0x78] sm:$0xe]
  %v3795 = vld [vmem:[#allocation2 + $0x7c] sm:$0xf]
  %v3796 = vld [vmem:[#allocation2 + $0x80] sm:$0x1]
  %v3797 = vld [vmem:[#allocation2 + $0x84] sm:$0xe]
  %v3798 = vld [vmem:[#allocation2 + $0x88] sm:$0xf]
  %v3799 = vld [vmem:[#allocation2 + $0x8c] sm:$0x1]
  %v3800 = vld [vmem:[#allocation2 + $0x90] sm:$0xe]
  %v3801 = vld [vmem:[#allocation2 + $0x94] sm:$0xf]
  %v3802 = vld [vmem:[#allocation2 + $0x98] sm:$0x1]
  %v3803 = vld [vmem:[#allocation2 + $0x9c] sm:$0xe]
  %v3804 = vld [vmem:[#allocation2 + $0xa0] sm:$0xf]
  %v3805 = vld [vmem:[#allocation2 + $0xa4] sm:$0x1]
  %v3806 = vld [vmem:[#allocation2 + $0xa8] sm:$0xe]
  %v3807 = vld [vmem:[#allocation2 + $0xac] sm:$0xf]
  %v3808 = vld [vmem:[#allocation2 + $0xb0] sm:$0x1]
  %v3809 = vld [vmem:[#allocation2 + $0xb4] sm:$0xe]
  %v3810 = vld [vmem:[#allocation2 + $0xb8] sm:$0xf]
  %v3811 = vld [vmem:[#allocation2 + $0xbc] sm:$0x1]
  %v3812 = vld [vmem:[#allocation2 + $0xc0] sm:$0xe]
  %v3813 = vld [vmem:[#allocation2 + $0xc4] sm:$0xf]
  %v3814 = vld [vmem:[#allocation2 + $0xc8] sm:$0x1]
  %v3815 = vld [vmem:[#allocation2 + $0xcc] sm:$0xe]
  %v3816 = vld [vmem:[#allocation2 + $0xd0] sm:$0xf]
  %v3817 = vld [vmem:[#allocation2 + $0xd4] sm:$0x1]
  %vm3872 = vcmask 1042432
  %vm3873 = vcmask 1046532
  %vm3874 = vmor %vm3872, %vm3873
  %v3875 = vrot.slane %v3764, 5
  %v3876 = vrot.slane %v3875, 4
  %v3877 = vrot.slane %v3765, 5
  %v3878 = vsel %vm3874, %v3876, %v3877
  %v3879 = vrot.slane %v3877, 4
  %v3880 = vrot.slane %v3766, 5
  %v3881 = vsel %vm3874, %v3879, %v3880
  %v3882 = vrot.slane %v3767, 5
  %v3883 = vrot.slane %v3882, 4
  %v3884 = vrot.slane %v3768, 5
  %v3885 = vsel %vm3874, %v3883, %v3884
  %v3886 = vrot.slane %v3884, 4
  %v3887 = vrot.slane %v3769, 5
  %v3888 = vsel %vm3874, %v3886, %v3887
  %v3889 = vrot.slane %v3770, 5
  %v3890 = vrot.slane %v3889, 4
  %v3891 = vrot.slane %v3771, 5
  %v3892 = vsel %vm3874, %v3890, %v3891
  %v3893 = vrot.slane %v3891, 4
  %v3894 = vrot.slane %v3772, 5
  %v3895 = vsel %vm3874, %v3893, %v3894
  %v3896 = vrot.slane %v3773, 5
  %v3897 = vrot.slane %v3896, 4
  %v3898 = vrot.slane %v3774, 5
  %v3899 = vsel %vm3874, %v3897, %v3898
  %v3900 = vrot.slane %v3898, 4
  %v3901 = vrot.slane %v3775, 5
  %v3902 = vsel %vm3874, %v3900, %v3901
  %v3903 = vrot.slane %v3776, 5
  %v3904 = vrot.slane %v3903, 4
  %v3905 = vrot.slane %v3777, 5
  %v3906 = vsel %vm3874, %v3904, %v3905
  %v3907 = vrot.slane %v3905, 4
  %v3908 = vrot.slane %v3778, 5
  %v3909 = vsel %vm3874, %v3907, %v3908
  %v3910 = vrot.slane %v3779, 5
  %v3911 = vrot.slane %v3910, 4
  %v3912 = vrot.slane %v3780, 5
  %v3913 = vsel %vm3874, %v3911, %v3912
  %v3914 = vrot.slane %v3912, 4
  %v3915 = vrot.slane %v3781, 5
  %v3916 = vsel %vm3874, %v3914, %v3915
  %v3917 = vrot.slane %v3782, 5
  %v3918 = vrot.slane %v3917, 4
  %v3919 = vrot.slane %v3783, 5
  %v3920 = vsel %vm3874, %v3918, %v3919
  %v3921 = vrot.slane %v3919, 4
  %v3922 = vrot.slane %v3784, 5
  %v3923 = vsel %vm3874, %v3921, %v3922
  %v3924 = vrot.slane %v3785, 5
  %v3925 = vrot.slane %v3924, 4
  %v3926 = vrot.slane %v3786, 5
  %v3927 = vsel %vm3874, %v3925, %v3926
  %v3928 = vrot.slane %v3926, 4
  %v3929 = vrot.slane %v3787, 5
  %v3930 = vsel %vm3874, %v3928, %v3929
  %v3931 = vrot.slane %v3788, 5
  %v3932 = vrot.slane %v3931, 4
  %v3933 = vrot.slane %v3789, 5
  %v3934 = vsel %vm3874, %v3932, %v3933
  %v3935 = vrot.slane %v3933, 4
  %v3936 = vrot.slane %v3790, 5
  %v3937 = vsel %vm3874, %v3935, %v3936
  %v3938 = vrot.slane %v3791, 5
  %v3939 = vrot.slane %v3938, 4
  %v3940 = vrot.slane %v3792, 5
  %v3941 = vsel %vm3874, %v3939, %v3940
  %v3942 = vrot.slane %v3940, 4
  %v3943 = vrot.slane %v3793, 5
  %v3944 = vsel %vm3874, %v3942, %v3943
  %v3945 = vrot.slane %v3794, 5
  %v3946 = vrot.slane %v3945, 4
  %v3947 = vrot.slane %v3795, 5
  %v3948 = vsel %vm3874, %v3946, %v3947
  %v3949 = vrot.slane %v3947, 4
  %v3950 = vrot.slane %v3796, 5
  %v3951 = vsel %vm3874, %v3949, %v3950
  %v3952 = vrot.slane %v3797, 5
  %v3953 = vrot.slane %v3952, 4
  %v3954 = vrot.slane %v3798, 5
  %v3955 = vsel %vm3874, %v3953, %v3954
  %v3956 = vrot.slane %v3954, 4
  %v3957 = vrot.slane %v3799, 5
  %v3958 = vsel %vm3874, %v3956, %v3957
  %v3959 = vrot.slane %v3800, 5
  %v3960 = vrot.slane %v3959, 4
  %v3961 = vrot.slane %v3801, 5
  %v3962 = vsel %vm3874, %v3960, %v3961
  %v3963 = vrot.slane %v3961, 4
  %v3964 = vrot.slane %v3802, 5
  %v3965 = vsel %vm3874, %v3963, %v3964
  %v3966 = vrot.slane %v3803, 5
  %v3967 = vrot.slane %v3966, 4
  %v3968 = vrot.slane %v3804, 5
  %v3969 = vsel %vm3874, %v3967, %v3968
  %v3970 = vrot.slane %v3968, 4
  %v3971 = vrot.slane %v3805, 5
  %v3972 = vsel %vm3874, %v3970, %v3971
  %v3973 = vrot.slane %v3806, 5
  %v3974 = vrot.slane %v3973, 4
  %v3975 = vrot.slane %v3807, 5
  %v3976 = vsel %vm3874, %v3974, %v3975
  %v3977 = vrot.slane %v3975, 4
  %v3978 = vrot.slane %v3808, 5
  %v3979 = vsel %vm3874, %v3977, %v3978
  %v3980 = vrot.slane %v3809, 5
  %v3981 = vrot.slane %v3980, 4
  %v3982 = vrot.slane %v3810, 5
  %v3983 = vsel %vm3874, %v3981, %v3982
  %v3984 = vrot.slane %v3982, 4
  %v3985 = vrot.slane %v3811, 5
  %v3986 = vsel %vm3874, %v3984, %v3985
  %v3987 = vrot.slane %v3812, 5
  %v3988 = vrot.slane %v3987, 4
  %v3989 = vrot.slane %v3813, 5
  %v3990 = vsel %vm3874, %v3988, %v3989
  %v3991 = vrot.slane %v3989, 4
  %v3992 = vrot.slane %v3814, 5
  %v3993 = vsel %vm3874, %v3991, %v3992
  %v3994 = vrot.slane %v3815, 5
  %v3995 = vrot.slane %v3994, 4
  %v3996 = vrot.slane %v3816, 5
  %v3997 = vsel %vm3874, %v3995, %v3996
  %v3998 = vrot.slane %v3996, 4
  %v3999 = vrot.slane %v3817, 5
  %v4000 = vsel %vm3874, %v3998, %v3999
  %v4001 = vld [vmem:[#allocation3] sm:$0xff]
  %v4002 = vld [vmem:[#allocation3 + $0x8] sm:$0xff]
  %v4003 = vld [vmem:[#allocation3 + $0x10] sm:$0xff]
  %v4004 = vld [vmem:[#allocation3 + $0x18] sm:$0xff]
  %v4005 = vld [vmem:[#allocation3 + $0x20] sm:$0xff]
  %v4006 = vld [vmem:[#allocation3 + $0x28] sm:$0xff]
  %v4007 = vld [vmem:[#allocation3 + $0x30] sm:$0xff]
  %v4008 = vld [vmem:[#allocation3 + $0x38] sm:$0xff]
  %v4009 = vld [vmem:[#allocation3 + $0x40] sm:$0xff]
  %v4010 = vld [vmem:[#allocation3 + $0x48] sm:$0xff]
  %v4011 = vld [vmem:[#allocation3 + $0x50] sm:$0xff]
  %v4012 = vld [vmem:[#allocation3 + $0x58] sm:$0xff]
  %v4013 = vld [vmem:[#allocation3 + $0x60] sm:$0xff]
  %v4014 = vld [vmem:[#allocation3 + $0x68] sm:$0xff]
  %v4015 = vld [vmem:[#allocation3 + $0x70] sm:$0xff]
  %v4016 = vld [vmem:[#allocation3 + $0x78] sm:$0xff]
  %v4017 = vld [vmem:[#allocation3 + $0x80] sm:$0xff]
  %v4018 = vld [vmem:[#allocation3 + $0x88] sm:$0xff]
  %v4019 = vld [vmem:[#allocation3 + $0x90] sm:$0xff]
  %v4020 = vld [vmem:[#allocation3 + $0x98] sm:$0xff]
  %v4021 = vld [vmem:[#allocation3 + $0xa0] sm:$0xff]
  %v4022 = vld [vmem:[#allocation3 + $0xa8] sm:$0xff]
  %v4023 = vld [vmem:[#allocation3 + $0xb0] sm:$0xff]
  %v4024 = vld [vmem:[#allocation3 + $0xb8] sm:$0xff]
  %v4025 = vld [vmem:[#allocation3 + $0xc0] sm:$0xff]
  %v4026 = vld [vmem:[#allocation3 + $0xc8] sm:$0xff]
  %v4027 = vld [vmem:[#allocation3 + $0xd0] sm:$0xff]
  %v4028 = vld [vmem:[#allocation3 + $0xd8] sm:$0xff]
  %v4029 = vld [vmem:[#allocation3 + $0xe0] sm:$0xff]
  %v4030 = vld [vmem:[#allocation3 + $0xe8] sm:$0xff]
  %v4031 = vld [vmem:[#allocation3 + $0xf0] sm:$0xff]
  %v4032 = vld [vmem:[#allocation3 + $0xf8] sm:$0xff]
  %s4033 = scalar_lea.vmem %s1, 128
  %v4034 = vld [vmem:[%s4033] sm:$0xf]
  %v4035 = vld [vmem:[%s4033 + $0x4] sm:$0xf]
  %v4036 = vld [vmem:[%s4033 + $0x8] sm:$0xf]
  %v4037 = vld [vmem:[%s4033 + $0xc] sm:$0xf]
  %v4038 = vld [vmem:[%s4033 + $0x10] sm:$0xf]
  %v4039 = vld [vmem:[%s4033 + $0x14] sm:$0xf]
  %v4040 = vld [vmem:[%s4033 + $0x18] sm:$0xf]
  %v4041 = vld [vmem:[%s4033 + $0x1c] sm:$0xf]
  %v4042 = vld [vmem:[%s4033 + $0x20] sm:$0xf]
  %v4043 = vld [vmem:[%s4033 + $0x24] sm:$0xf]
  %v4044 = vld [vmem:[%s4033 + $0x28] sm:$0xf]
  %v4045 = vld [vmem:[%s4033 + $0x2c] sm:$0xf]
  %v4046 = vld [vmem:[%s4033 + $0x30] sm:$0xf]
  %v4047 = vld [vmem:[%s4033 + $0x34] sm:$0xf]
  %v4048 = vld [vmem:[%s4033 + $0x38] sm:$0xf]
  %v4049 = vld [vmem:[%s4033 + $0x3c] sm:$0xf]
  %v4050 = vunpack.c.l.b16 %v3878
  %v4051 = vunpack.c.l.b16 %v3881
  %v4052 = vunpack.c.l.b16 %v3885
  %v4053 = vunpack.c.l.b16 %v3888
  %v4054 = vunpack.c.l.b16 %v3892
  %v4055 = vunpack.c.l.b16 %v3895
  %v4056 = vunpack.c.l.b16 %v3899
  %v4057 = vunpack.c.l.b16 %v3902
  %v4058 = vunpack.c.l.b16 %v3906
  %v4059 = vunpack.c.l.b16 %v3909
  %v4060 = vunpack.c.l.b16 %v3913
  %v4061 = vunpack.c.l.b16 %v3916
  %v4062 = vunpack.c.l.b16 %v3920
  %v4063 = vunpack.c.l.b16 %v3923
  %v4064 = vunpack.c.l.b16 %v3927
  %v4065 = vunpack.c.l.b16 %v3930
  %v4066 = vunpack.c.l.b16 %v3934
  %v4067 = vunpack.c.l.b16 %v3937
  %v4068 = vunpack.c.l.b16 %v3941
  %v4069 = vunpack.c.l.b16 %v3944
  %v4070 = vunpack.c.l.b16 %v3948
  %v4071 = vunpack.c.l.b16 %v3951
  %v4072 = vunpack.c.l.b16 %v3955
  %v4073 = vunpack.c.l.b16 %v3958
  %v4074 = vunpack.c.l.b16 %v3962
  %v4075 = vunpack.c.l.b16 %v3965
  %v4076 = vunpack.c.l.b16 %v3969
  %v4077 = vunpack.c.l.b16 %v3972
  %v4078 = vunpack.c.l.b16 %v3976
  %v4079 = vunpack.c.l.b16 %v3979
  %v4080 = vunpack.c.l.b16 %v3983
  %v4081 = vunpack.c.l.b16 %v3986
  %v4082 = vpack.c.b16 %v4051, %v4050
  %v4083 = vpack.c.b16 %v4053, %v4052
  %v4084 = vpack.c.b16 %v4055, %v4054
  %v4085 = vpack.c.b16 %v4057, %v4056
  %v4086 = vpack.c.b16 %v4059, %v4058
  %v4087 = vpack.c.b16 %v4061, %v4060
  %v4088 = vpack.c.b16 %v4063, %v4062
  %v4089 = vpack.c.b16 %v4065, %v4064
  %v4090 = vpack.c.b16 %v4067, %v4066
  %v4091 = vpack.c.b16 %v4069, %v4068
  %v4092 = vpack.c.b16 %v4071, %v4070
  %v4093 = vpack.c.b16 %v4073, %v4072
  %v4094 = vpack.c.b16 %v4075, %v4074
  %v4095 = vpack.c.b16 %v4077, %v4076
  %v4096 = vpack.c.b16 %v4079, %v4078
  %v4097 = vpack.c.b16 %v4081, %v4080
  %v4130 = vunpack.c.l.b16 %v4034
  %v4131 = vunpack.c.l.b16 %v4035
  %v4132 = vunpack.c.l.b16 %v4036
  %v4133 = vunpack.c.l.b16 %v4037
  %v4134 = vunpack.c.l.b16 %v4038
  %v4135 = vunpack.c.l.b16 %v4039
  %v4136 = vunpack.c.l.b16 %v4040
  %v4137 = vunpack.c.l.b16 %v4041
  %v4138 = vunpack.c.l.b16 %v4042
  %v4139 = vunpack.c.l.b16 %v4043
  %v4140 = vunpack.c.l.b16 %v4044
  %v4141 = vunpack.c.l.b16 %v4045
  %v4142 = vunpack.c.l.b16 %v4046
  %v4143 = vunpack.c.l.b16 %v4047
  %v4144 = vunpack.c.l.b16 %v4048
  %v4145 = vunpack.c.l.b16 %v4049
  %v4146 = vpack.c.b16 %v4131, %v4130
  %v4147 = vpack.c.b16 %v4133, %v4132
  %v4148 = vpack.c.b16 %v4135, %v4134
  %v4149 = vpack.c.b16 %v4137, %v4136
  %v4150 = vpack.c.b16 %v4139, %v4138
  %v4151 = vpack.c.b16 %v4141, %v4140
  %v4152 = vpack.c.b16 %v4143, %v4142
  %v4153 = vpack.c.b16 %v4145, %v4144
  %4162 = vmatprep.subr.bf16.mxu0 0
  %4163 = vmatpush1.bf16.msra.mxu0 %v4146
  %4164 = vmatprep.subr.bf16.mxu0 0
  %4165 = vmatpush1.bf16.msra.mxu0 %v4147
  %4166 = vmatprep.subr.bf16.mxu0 0
  %4167 = vmatpush1.bf16.msra.mxu0 %v4148
  %4168 = vmatprep.subr.bf16.mxu0 0
  %4169 = vmatpush1.bf16.msra.mxu0 %v4149
  %4170 = vmatprep.subr.bf16.mxu0 0
  %4171 = vmatpush1.bf16.msra.mxu0 %v4150
  %4172 = vmatprep.subr.bf16.mxu0 0
  %4173 = vmatpush1.bf16.msra.mxu0 %v4151
  %4174 = vmatprep.subr.bf16.mxu0 0
  %4175 = vmatpush1.bf16.msra.mxu0 %v4152
  %4176 = vmatprep.subr.bf16.mxu0 0
  %4177 = vmatpush1.bf16.msra.mxu0 %v4153
  %4178 = vmatprep.subr.bf16.mxu0 0
  %4179 = vmatpush1.bf16.msra.mxu0 0
  %4180 = vmatprep.subr.bf16.mxu0 0
  %4181 = vmatpush1.bf16.msra.mxu0 0
  %4182 = vmatprep.subr.bf16.mxu0 0
  %4183 = vmatpush1.bf16.msra.mxu0 0
  %4184 = vmatprep.subr.bf16.mxu0 0
  %4185 = vmatpush1.bf16.msra.mxu0 0
  %4186 = vmatprep.subr.bf16.mxu0 0
  %4187 = vmatpush1.bf16.msra.mxu0 0
  %4188 = vmatprep.subr.bf16.mxu0 0
  %4189 = vmatpush1.bf16.msra.mxu0 0
  %4190 = vmatprep.subr.bf16.mxu0 0
  %4191 = vmatpush1.bf16.msra.mxu0 0
  %4192 = vmatprep.subr.bf16.mxu0 0
  %4193 = vmatpush1.bf16.msra.mxu0 0
  %4194 = vmatprep.mubr.bf16.mxu0 0
  %4195 = vmatmul.mubr.bf16.gmra.mrb[0].mxu0 %v4082
  %v4196 = vpop.f32.mrb[0].mxu0
  %v4197 = vadd.f32 0.0, %v4196
  %v4198 = vpop.f32.mrb[0].mxu0
  %v4199 = vpop.f32.mrb[0].mxu0
  %v4200 = vadd.f32 0.0, %v4199
  %v4201 = vpop.f32.mrb[0].mxu0
  %4202 = vmatprep.mubr.bf16.mxu0 0
  %4203 = vmatmul.mubr.bf16.gmra.mrb[0].mxu0 %v4083
  %v4204 = vpop.f32.mrb[0].mxu0
  %v4205 = vadd.f32 0.0, %v4204
  %v4206 = vpop.f32.mrb[0].mxu0
  %v4207 = vpop.f32.mrb[0].mxu0
  %v4208 = vadd.f32 0.0, %v4207
  %v4209 = vpop.f32.mrb[0].mxu0
  %4210 = vmatprep.mubr.bf16.mxu0 0
  %4211 = vmatmul.mubr.bf16.gmra.mrb[0].mxu0 %v4084
  %v4212 = vpop.f32.mrb[0].mxu0
  %v4213 = vadd.f32 0.0, %v4212
  %v4214 = vpop.f32.mrb[0].mxu0
  %v4215 = vpop.f32.mrb[0].mxu0
  %v4216 = vadd.f32 0.0, %v4215
  %v4217 = vpop.f32.mrb[0].mxu0
  %4218 = vmatprep.mubr.bf16.mxu0 0
  %4219 = vmatmul.mubr.bf16.gmra.mrb[0].mxu0 %v4085
  %v4220 = vpop.f32.mrb[0].mxu0
  %v4221 = vadd.f32 0.0, %v4220
  %v4222 = vpop.f32.mrb[0].mxu0
  %v4223 = vpop.f32.mrb[0].mxu0
  %v4224 = vadd.f32 0.0, %v4223
  %v4225 = vpop.f32.mrb[0].mxu0
  %4226 = vmatprep.mubr.bf16.mxu0 0
  %4227 = vmatmul.mubr.bf16.gmra.mrb[0].mxu0 %v4086
  %v4228 = vpop.f32.mrb[0].mxu0
  %v4229 = vadd.f32 0.0, %v4228
  %v4230 = vpop.f32.mrb[0].mxu0
  %v4231 = vpop.f32.mrb[0].mxu0
  %v4232 = vadd.f32 0.0, %v4231
  %v4233 = vpop.f32.mrb[0].mxu0
  %4234 = vmatprep.mubr.bf16.mxu0 0
  %4235 = vmatmul.mubr.bf16.gmra.mrb[0].mxu0 %v4087
  %v4236 = vpop.f32.mrb[0].mxu0
  %v4237 = vadd.f32 0.0, %v4236
  %v4238 = vpop.f32.mrb[0].mxu0
  %v4239 = vpop.f32.mrb[0].mxu0
  %v4240 = vadd.f32 0.0, %v4239
  %v4241 = vpop.f32.mrb[0].mxu0
  %4242 = vmatprep.mubr.bf16.mxu0 0
  %4243 = vmatmul.mubr.bf16.gmra.mrb[0].mxu0 %v4088
  %v4244 = vpop.f32.mrb[0].mxu0
  %v4245 = vadd.f32 0.0, %v4244
  %v4246 = vpop.f32.mrb[0].mxu0
  %v4247 = vpop.f32.mrb[0].mxu0
  %v4248 = vadd.f32 0.0, %v4247
  %v4249 = vpop.f32.mrb[0].mxu0
  %4250 = vmatprep.mubr.bf16.mxu0 0
  %4251 = vmatmul.mubr.bf16.gmra.mrb[0].mxu0 %v4089
  %v4252 = vpop.f32.mrb[0].mxu0
  %v4253 = vadd.f32 0.0, %v4252
  %v4254 = vpop.f32.mrb[0].mxu0
  %v4255 = vpop.f32.mrb[0].mxu0
  %v4256 = vadd.f32 0.0, %v4255
  %v4257 = vpop.f32.mrb[0].mxu0
  %4258 = vmatprep.mubr.bf16.mxu0 0
  %4259 = vmatmul.mubr.bf16.gmra.mrb[0].mxu0 %v4090
  %v4260 = vpop.f32.mrb[0].mxu0
  %v4261 = vadd.f32 0.0, %v4260
  %v4262 = vpop.f32.mrb[0].mxu0
  %v4263 = vpop.f32.mrb[0].mxu0
  %v4264 = vadd.f32 0.0, %v4263
  %v4265 = vpop.f32.mrb[0].mxu0
  %4266 = vmatprep.mubr.bf16.mxu0 0
  %4267 = vmatmul.mubr.bf16.gmra.mrb[0].mxu0 %v4091
  %v4268 = vpop.f32.mrb[0].mxu0
  %v4269 = vadd.f32 0.0, %v4268
  %v4270 = vpop.f32.mrb[0].mxu0
  %v4271 = vpop.f32.mrb[0].mxu0
  %v4272 = vadd.f32 0.0, %v4271
  %v4273 = vpop.f32.mrb[0].mxu0
  %4274 = vmatprep.mubr.bf16.mxu0 0
  %4275 = vmatmul.mubr.bf16.gmra.mrb[0].mxu0 %v4092
  %v4276 = vpop.f32.mrb[0].mxu0
  %v4277 = vadd.f32 0.0, %v4276
  %v4278 = vpop.f32.mrb[0].mxu0
  %v4279 = vpop.f32.mrb[0].mxu0
  %v4280 = vadd.f32 0.0, %v4279
  %v4281 = vpop.f32.mrb[0].mxu0
  %4282 = vmatprep.mubr.bf16.mxu0 0
  %4283 = vmatmul.mubr.bf16.gmra.mrb[0].mxu0 %v4093
  %v4284 = vpop.f32.mrb[0].mxu0
  %v4285 = vadd.f32 0.0, %v4284
  %v4286 = vpop.f32.mrb[0].mxu0
  %v4287 = vpop.f32.mrb[0].mxu0
  %v4288 = vadd.f32 0.0, %v4287
  %v4289 = vpop.f32.mrb[0].mxu0
  %4290 = vmatprep.mubr.bf16.mxu0 0
  %4291 = vmatmul.mubr.bf16.gmra.mrb[0].mxu0 %v4094
  %v4292 = vpop.f32.mrb[0].mxu0
  %v4293 = vadd.f32 0.0, %v4292
  %v4294 = vpop.f32.mrb[0].mxu0
  %v4295 = vpop.f32.mrb[0].mxu0
  %v4296 = vadd.f32 0.0, %v4295
  %v4297 = vpop.f32.mrb[0].mxu0
  %4298 = vmatprep.mubr.bf16.mxu0 0
  %4299 = vmatmul.mubr.bf16.gmra.mrb[0].mxu0 %v4095
  %v4300 = vpop.f32.mrb[0].mxu0
  %v4301 = vadd.f32 0.0, %v4300
  %v4302 = vpop.f32.mrb[0].mxu0
  %v4303 = vpop.f32.mrb[0].mxu0
  %v4304 = vadd.f32 0.0, %v4303
  %v4305 = vpop.f32.mrb[0].mxu0
  %4306 = vmatprep.mubr.bf16.mxu0 0
  %4307 = vmatmul.mubr.bf16.gmra.mrb[0].mxu0 %v4096
  %v4308 = vpop.f32.mrb[0].mxu0
  %v4309 = vadd.f32 0.0, %v4308
  %v4310 = vpop.f32.mrb[0].mxu0
  %v4311 = vpop.f32.mrb[0].mxu0
  %v4312 = vadd.f32 0.0, %v4311
  %v4313 = vpop.f32.mrb[0].mxu0
  %4314 = vmatprep.mubr.bf16.mxu0 0
  %4315 = vmatmul.mubr.bf16.gmra.mrb[0].mxu0 %v4097
  %v4316 = vpop.f32.mrb[0].mxu0
  %v4317 = vadd.f32 0.0, %v4316
  %v4318 = vpop.f32.mrb[0].mxu0
  %v4319 = vpop.f32.mrb[0].mxu0
  %v4320 = vadd.f32 0.0, %v4319
  %v4321 = vpop.f32.mrb[0].mxu0
  %4322 = vdwg.mxu0
  %v4323 = vadd.f32 %v4001, %v4197
  %v4324 = vadd.f32 %v4002, %v4200
  %v4325 = vadd.f32 %v4003, %v4205
  %v4326 = vadd.f32 %v4004, %v4208
  %v4327 = vadd.f32 %v4005, %v4213
  %v4328 = vadd.f32 %v4006, %v4216
  %v4329 = vadd.f32 %v4007, %v4221
  %v4330 = vadd.f32 %v4008, %v4224
  %v4331 = vadd.f32 %v4009, %v4229
  %v4332 = vadd.f32 %v4010, %v4232
  %v4333 = vadd.f32 %v4011, %v4237
  %v4334 = vadd.f32 %v4012, %v4240
  %v4335 = vadd.f32 %v4013, %v4245
  %v4336 = vadd.f32 %v4014, %v4248
  %v4337 = vadd.f32 %v4015, %v4253
  %v4338 = vadd.f32 %v4016, %v4256
  %v4339 = vadd.f32 %v4017, %v4261
  %v4340 = vadd.f32 %v4018, %v4264
  %v4341 = vadd.f32 %v4019, %v4269
  %v4342 = vadd.f32 %v4020, %v4272
  %v4343 = vadd.f32 %v4021, %v4277
  %v4344 = vadd.f32 %v4022, %v4280
  %v4345 = vadd.f32 %v4023, %v4285
  %v4346 = vadd.f32 %v4024, %v4288
  %v4347 = vadd.f32 %v4025, %v4293
  %v4348 = vadd.f32 %v4026, %v4296
  %v4349 = vadd.f32 %v4027, %v4301
  %v4350 = vadd.f32 %v4028, %v4304
  %v4351 = vadd.f32 %v4029, %v4309
  %v4352 = vadd.f32 %v4030, %v4312
  %v4353 = vadd.f32 %v4031, %v4317
  %v4354 = vadd.f32 %v4032, %v4320
  %4355 = vst [vmem:[#allocation3] sm:$0xff] %v4323
  %4356 = vst [vmem:[#allocation3 + $0x8] sm:$0xff] %v4324
  %4357 = vst [vmem:[#allocation3 + $0x10] sm:$0xff] %v4325
  %4358 = vst [vmem:[#allocation3 + $0x18] sm:$0xff] %v4326
  %4359 = vst [vmem:[#allocation3 + $0x20] sm:$0xff] %v4327
  %4360 = vst [vmem:[#allocation3 + $0x28] sm:$0xff] %v4328
  %4361 = vst [vmem:[#allocation3 + $0x30] sm:$0xff] %v4329
  %4362 = vst [vmem:[#allocation3 + $0x38] sm:$0xff] %v4330
  %4363 = vst [vmem:[#allocation3 + $0x40] sm:$0xff] %v4331
  %4364 = vst [vmem:[#allocation3 + $0x48] sm:$0xff] %v4332
  %4365 = vst [vmem:[#allocation3 + $0x50] sm:$0xff] %v4333
  %4366 = vst [vmem:[#allocation3 + $0x58] sm:$0xff] %v4334
  %4367 = vst [vmem:[#allocation3 + $0x60] sm:$0xff] %v4335
  %4368 = vst [vmem:[#allocation3 + $0x68] sm:$0xff] %v4336
  %4369 = vst [vmem:[#allocation3 + $0x70] sm:$0xff] %v4337
  %4370 = vst [vmem:[#allocation3 + $0x78] sm:$0xff] %v4338
  %4371 = vst [vmem:[#allocation3 + $0x80] sm:$0xff] %v4339
  %4372 = vst [vmem:[#allocation3 + $0x88] sm:$0xff] %v4340
  %4373 = vst [vmem:[#allocation3 + $0x90] sm:$0xff] %v4341
  %4374 = vst [vmem:[#allocation3 + $0x98] sm:$0xff] %v4342
  %4375 = vst [vmem:[#allocation3 + $0xa0] sm:$0xff] %v4343
  %4376 = vst [vmem:[#allocation3 + $0xa8] sm:$0xff] %v4344
  %4377 = vst [vmem:[#allocation3 + $0xb0] sm:$0xff] %v4345
  %4378 = vst [vmem:[#allocation3 + $0xb8] sm:$0xff] %v4346
  %4379 = vst [vmem:[#allocation3 + $0xc0] sm:$0xff] %v4347
  %4380 = vst [vmem:[#allocation3 + $0xc8] sm:$0xff] %v4348
  %4381 = vst [vmem:[#allocation3 + $0xd0] sm:$0xff] %v4349
  %4382 = vst [vmem:[#allocation3 + $0xd8] sm:$0xff] %v4350
  %4383 = vst [vmem:[#allocation3 + $0xe0] sm:$0xff] %v4351
  %4384 = vst [vmem:[#allocation3 + $0xe8] sm:$0xff] %v4352
  %4385 = vst [vmem:[#allocation3 + $0xf0] sm:$0xff] %v4353
  %4386 = vst [vmem:[#allocation3 + $0xf8] sm:$0xff] %v4354
  %v4387 = vld [vmem:[#allocation3] sm:$0xff]
  %v4388 = vld [vmem:[#allocation3 + $0x8] sm:$0xff]
  %v4389 = vld [vmem:[#allocation3 + $0x10] sm:$0xff]
  %v4390 = vld [vmem:[#allocation3 + $0x18] sm:$0xff]
  %v4391 = vld [vmem:[#allocation3 + $0x20] sm:$0xff]
  %v4392 = vld [vmem:[#allocation3 + $0x28] sm:$0xff]
  %v4393 = vld [vmem:[#allocation3 + $0x30] sm:$0xff]
  %v4394 = vld [vmem:[#allocation3 + $0x38] sm:$0xff]
  %v4395 = vld [vmem:[#allocation3 + $0x40] sm:$0xff]
  %v4396 = vld [vmem:[#allocation3 + $0x48] sm:$0xff]
  %v4397 = vld [vmem:[#allocation3 + $0x50] sm:$0xff]
  %v4398 = vld [vmem:[#allocation3 + $0x58] sm:$0xff]
  %v4399 = vld [vmem:[#allocation3 + $0x60] sm:$0xff]
  %v4400 = vld [vmem:[#allocation3 + $0x68] sm:$0xff]
  %v4401 = vld [vmem:[#allocation3 + $0x70] sm:$0xff]
  %v4402 = vld [vmem:[#allocation3 + $0x78] sm:$0xff]
  %v4403 = vld [vmem:[#allocation3 + $0x80] sm:$0xff]
  %v4404 = vld [vmem:[#allocation3 + $0x88] sm:$0xff]
  %v4405 = vld [vmem:[#allocation3 + $0x90] sm:$0xff]
  %v4406 = vld [vmem:[#allocation3 + $0x98] sm:$0xff]
  %v4407 = vld [vmem:[#allocation3 + $0xa0] sm:$0xff]
  %v4408 = vld [vmem:[#allocation3 + $0xa8] sm:$0xff]
  %v4409 = vld [vmem:[#allocation3 + $0xb0] sm:$0xff]
  %v4410 = vld [vmem:[#allocation3 + $0xb8] sm:$0xff]
  %v4411 = vld [vmem:[#allocation3 + $0xc0] sm:$0xff]
  %v4412 = vld [vmem:[#allocation3 + $0xc8] sm:$0xff]
  %v4413 = vld [vmem:[#allocation3 + $0xd0] sm:$0xff]
  %v4414 = vld [vmem:[#allocation3 + $0xd8] sm:$0xff]
  %v4415 = vld [vmem:[#allocation3 + $0xe0] sm:$0xff]
  %v4416 = vld [vmem:[#allocation3 + $0xe8] sm:$0xff]
  %v4417 = vld [vmem:[#allocation3 + $0xf0] sm:$0xff]
  %v4418 = vld [vmem:[#allocation3 + $0xf8] sm:$0xff]
  %s4419 = scalar_lea.vmem %s1, 320
  %v4420 = vld [vmem:[%s4419] sm:$0xf]
  %v4421 = vld [vmem:[%s4419 + $0x4] sm:$0xf]
  %v4422 = vld [vmem:[%s4419 + $0x8] sm:$0xf]
  %v4423 = vld [vmem:[%s4419 + $0xc] sm:$0xf]
  %v4424 = vld [vmem:[%s4419 + $0x10] sm:$0xf]
  %v4425 = vld [vmem:[%s4419 + $0x14] sm:$0xf]
  %v4426 = vld [vmem:[%s4419 + $0x18] sm:$0xf]
  %v4427 = vld [vmem:[%s4419 + $0x1c] sm:$0xf]
  %v4428 = vld [vmem:[%s4419 + $0x20] sm:$0xf]
  %v4429 = vld [vmem:[%s4419 + $0x24] sm:$0xf]
  %v4430 = vld [vmem:[%s4419 + $0x28] sm:$0xf]
  %v4431 = vld [vmem:[%s4419 + $0x2c] sm:$0xf]
  %v4432 = vld [vmem:[%s4419 + $0x30] sm:$0xf]
  %v4433 = vld [vmem:[%s4419 + $0x34] sm:$0xf]
  %v4434 = vld [vmem:[%s4419 + $0x38] sm:$0xf]
  %v4435 = vld [vmem:[%s4419 + $0x3c] sm:$0xf]
  %v4436 = vunpack.c.l.b16 %v3990
  %v4437 = vunpack.c.l.b16 %v3993
  %v4438 = vpack.c.b16 %v4437, %v4436
  %v4456 = vunpack.c.l.b16 %v4420
  %v4457 = vunpack.c.l.b16 %v4421
  %v4458 = vunpack.c.l.b16 %v4422
  %v4459 = vunpack.c.l.b16 %v4423
  %v4460 = vunpack.c.l.b16 %v4424
  %v4461 = vunpack.c.l.b16 %v4425
  %v4462 = vunpack.c.l.b16 %v4426
  %v4463 = vunpack.c.l.b16 %v4427
  %v4464 = vunpack.c.l.b16 %v4428
  %v4465 = vunpack.c.l.b16 %v4429
  %v4466 = vunpack.c.l.b16 %v4430
  %v4467 = vunpack.c.l.b16 %v4431
  %v4468 = vunpack.c.l.b16 %v4432
  %v4469 = vunpack.c.l.b16 %v4433
  %v4470 = vunpack.c.l.b16 %v4434
  %v4471 = vunpack.c.l.b16 %v4435
  %v4472 = vpack.c.b16 %v4457, %v4456
  %v4473 = vpack.c.b16 %v4459, %v4458
  %v4474 = vpack.c.b16 %v4461, %v4460
  %v4475 = vpack.c.b16 %v4463, %v4462
  %v4476 = vpack.c.b16 %v4465, %v4464
  %v4477 = vpack.c.b16 %v4467, %v4466
  %v4478 = vpack.c.b16 %v4469, %v4468
  %v4479 = vpack.c.b16 %v4471, %v4470
  %4488 = vmatprep.subr.bf16.mxu0 0
  %4489 = vmatpush1.bf16.msra.mxu0 %v4472
  %4490 = vmatprep.subr.bf16.mxu0 0
  %4491 = vmatpush1.bf16.msra.mxu0 %v4473
  %4492 = vmatprep.subr.bf16.mxu0 0
  %4493 = vmatpush1.bf16.msra.mxu0 %v4474
  %4494 = vmatprep.subr.bf16.mxu0 0
  %4495 = vmatpush1.bf16.msra.mxu0 %v4475
  %4496 = vmatprep.subr.bf16.mxu0 0
  %4497 = vmatpush1.bf16.msra.mxu0 %v4476
  %4498 = vmatprep.subr.bf16.mxu0 0
  %4499 = vmatpush1.bf16.msra.mxu0 %v4477
  %4500 = vmatprep.subr.bf16.mxu0 0
  %4501 = vmatpush1.bf16.msra.mxu0 %v4478
  %4502 = vmatprep.subr.bf16.mxu0 0
  %4503 = vmatpush1.bf16.msra.mxu0 %v4479
  %4504 = vmatprep.subr.bf16.mxu0 0
  %4505 = vmatpush1.bf16.msra.mxu0 0
  %4506 = vmatprep.subr.bf16.mxu0 0
  %4507 = vmatpush1.bf16.msra.mxu0 0
  %4508 = vmatprep.subr.bf16.mxu0 0
  %4509 = vmatpush1.bf16.msra.mxu0 0
  %4510 = vmatprep.subr.bf16.mxu0 0
  %4511 = vmatpush1.bf16.msra.mxu0 0
  %4512 = vmatprep.subr.bf16.mxu0 0
  %4513 = vmatpush1.bf16.msra.mxu0 0
  %4514 = vmatprep.subr.bf16.mxu0 0
  %4515 = vmatpush1.bf16.msra.mxu0 0
  %4516 = vmatprep.subr.bf16.mxu0 0
  %4517 = vmatpush1.bf16.msra.mxu0 0
  %4518 = vmatprep.subr.bf16.mxu0 0
  %4519 = vmatpush1.bf16.msra.mxu0 0
  %4520 = vmatprep.mubr.bf16.mxu0 0
  %4521 = vmatmul.mubr.bf16.gmra.mrb[0].mxu0 %v4083
  %v4522 = vpop.f32.mrb[0].mxu0
  %v4523 = vadd.f32 0.0, %v4522
  %v4524 = vpop.f32.mrb[0].mxu0
  %v4525 = vpop.f32.mrb[0].mxu0
  %v4526 = vadd.f32 0.0, %v4525
  %v4527 = vpop.f32.mrb[0].mxu0
  %4528 = vmatprep.mubr.bf16.mxu0 0
  %4529 = vmatmul.mubr.bf16.gmra.mrb[0].mxu0 %v4084
  %v4530 = vpop.f32.mrb[0].mxu0
  %v4531 = vadd.f32 0.0, %v4530
  %v4532 = vpop.f32.mrb[0].mxu0
  %v4533 = vpop.f32.mrb[0].mxu0
  %v4534 = vadd.f32 0.0, %v4533
  %v4535 = vpop.f32.mrb[0].mxu0
  %4536 = vmatprep.mubr.bf16.mxu0 0
  %4537 = vmatmul.mubr.bf16.gmra.mrb[0].mxu0 %v4085
  %v4538 = vpop.f32.mrb[0].mxu0
  %v4539 = vadd.f32 0.0, %v4538
  %v4540 = vpop.f32.mrb[0].mxu0
  %v4541 = vpop.f32.mrb[0].mxu0
  %v4542 = vadd.f32 0.0, %v4541
  %v4543 = vpop.f32.mrb[0].mxu0
  %4544 = vmatprep.mubr.bf16.mxu0 0
  %4545 = vmatmul.mubr.bf16.gmra.mrb[0].mxu0 %v4086
  %v4546 = vpop.f32.mrb[0].mxu0
  %v4547 = vadd.f32 0.0, %v4546
  %v4548 = vpop.f32.mrb[0].mxu0
  %v4549 = vpop.f32.mrb[0].mxu0
  %v4550 = vadd.f32 0.0, %v4549
  %v4551 = vpop.f32.mrb[0].mxu0
  %4552 = vmatprep.mubr.bf16.mxu0 0
  %4553 = vmatmul.mubr.bf16.gmra.mrb[0].mxu0 %v4087
  %v4554 = vpop.f32.mrb[0].mxu0
  %v4555 = vadd.f32 0.0, %v4554
  %v4556 = vpop.f32.mrb[0].mxu0
  %v4557 = vpop.f32.mrb[0].mxu0
  %v4558 = vadd.f32 0.0, %v4557
  %v4559 = vpop.f32.mrb[0].mxu0
  %4560 = vmatprep.mubr.bf16.mxu0 0
  %4561 = vmatmul.mubr.bf16.gmra.mrb[0].mxu0 %v4088
  %v4562 = vpop.f32.mrb[0].mxu0
  %v4563 = vadd.f32 0.0, %v4562
  %v4564 = vpop.f32.mrb[0].mxu0
  %v4565 = vpop.f32.mrb[0].mxu0
  %v4566 = vadd.f32 0.0, %v4565
  %v4567 = vpop.f32.mrb[0].mxu0
  %4568 = vmatprep.mubr.bf16.mxu0 0
  %4569 = vmatmul.mubr.bf16.gmra.mrb[0].mxu0 %v4089
  %v4570 = vpop.f32.mrb[0].mxu0
  %v4571 = vadd.f32 0.0, %v4570
  %v4572 = vpop.f32.mrb[0].mxu0
  %v4573 = vpop.f32.mrb[0].mxu0
  %v4574 = vadd.f32 0.0, %v4573
  %v4575 = vpop.f32.mrb[0].mxu0
  %4576 = vmatprep.mubr.bf16.mxu0 0
  %4577 = vmatmul.mubr.bf16.gmra.mrb[0].mxu0 %v4090
  %v4578 = vpop.f32.mrb[0].mxu0
  %v4579 = vadd.f32 0.0, %v4578
  %v4580 = vpop.f32.mrb[0].mxu0
  %v4581 = vpop.f32.mrb[0].mxu0
  %v4582 = vadd.f32 0.0, %v4581
  %v4583 = vpop.f32.mrb[0].mxu0
  %4584 = vmatprep.mubr.bf16.mxu0 0
  %4585 = vmatmul.mubr.bf16.gmra.mrb[0].mxu0 %v4091
  %v4586 = vpop.f32.mrb[0].mxu0
  %v4587 = vadd.f32 0.0, %v4586
  %v4588 = vpop.f32.mrb[0].mxu0
  %v4589 = vpop.f32.mrb[0].mxu0
  %v4590 = vadd.f32 0.0, %v4589
  %v4591 = vpop.f32.mrb[0].mxu0
  %4592 = vmatprep.mubr.bf16.mxu0 0
  %4593 = vmatmul.mubr.bf16.gmra.mrb[0].mxu0 %v4092
  %v4594 = vpop.f32.mrb[0].mxu0
  %v4595 = vadd.f32 0.0, %v4594
  %v4596 = vpop.f32.mrb[0].mxu0
  %v4597 = vpop.f32.mrb[0].mxu0
  %v4598 = vadd.f32 0.0, %v4597
  %v4599 = vpop.f32.mrb[0].mxu0
  %4600 = vmatprep.mubr.bf16.mxu0 0
  %4601 = vmatmul.mubr.bf16.gmra.mrb[0].mxu0 %v4093
  %v4602 = vpop.f32.mrb[0].mxu0
  %v4603 = vadd.f32 0.0, %v4602
  %v4604 = vpop.f32.mrb[0].mxu0
  %v4605 = vpop.f32.mrb[0].mxu0
  %v4606 = vadd.f32 0.0, %v4605
  %v4607 = vpop.f32.mrb[0].mxu0
  %4608 = vmatprep.mubr.bf16.mxu0 0
  %4609 = vmatmul.mubr.bf16.gmra.mrb[0].mxu0 %v4094
  %v4610 = vpop.f32.mrb[0].mxu0
  %v4611 = vadd.f32 0.0, %v4610
  %v4612 = vpop.f32.mrb[0].mxu0
  %v4613 = vpop.f32.mrb[0].mxu0
  %v4614 = vadd.f32 0.0, %v4613
  %v4615 = vpop.f32.mrb[0].mxu0
  %4616 = vmatprep.mubr.bf16.mxu0 0
  %4617 = vmatmul.mubr.bf16.gmra.mrb[0].mxu0 %v4095
  %v4618 = vpop.f32.mrb[0].mxu0
  %v4619 = vadd.f32 0.0, %v4618
  %v4620 = vpop.f32.mrb[0].mxu0
  %v4621 = vpop.f32.mrb[0].mxu0
  %v4622 = vadd.f32 0.0, %v4621
  %v4623 = vpop.f32.mrb[0].mxu0
  %4624 = vmatprep.mubr.bf16.mxu0 0
  %4625 = vmatmul.mubr.bf16.gmra.mrb[0].mxu0 %v4096
  %v4626 = vpop.f32.mrb[0].mxu0
  %v4627 = vadd.f32 0.0, %v4626
  %v4628 = vpop.f32.mrb[0].mxu0
  %v4629 = vpop.f32.mrb[0].mxu0
  %v4630 = vadd.f32 0.0, %v4629
  %v4631 = vpop.f32.mrb[0].mxu0
  %4632 = vmatprep.mubr.bf16.mxu0 0
  %4633 = vmatmul.mubr.bf16.gmra.mrb[0].mxu0 %v4097
  %v4634 = vpop.f32.mrb[0].mxu0
  %v4635 = vadd.f32 0.0, %v4634
  %v4636 = vpop.f32.mrb[0].mxu0
  %v4637 = vpop.f32.mrb[0].mxu0
  %v4638 = vadd.f32 0.0, %v4637
  %v4639 = vpop.f32.mrb[0].mxu0
  %4640 = vmatprep.mubr.bf16.mxu0 0
  %4641 = vmatmul.mubr.bf16.gmra.mrb[0].mxu0 %v4438
  %v4642 = vpop.f32.mrb[0].mxu0
  %v4643 = vadd.f32 0.0, %v4642
  %v4644 = vpop.f32.mrb[0].mxu0
  %v4645 = vpop.f32.mrb[0].mxu0
  %v4646 = vadd.f32 0.0, %v4645
  %v4647 = vpop.f32.mrb[0].mxu0
  %4648 = vdwg.mxu0
  %v4649 = vadd.f32 %v4387, %v4523
  %v4650 = vadd.f32 %v4388, %v4526
  %v4651 = vadd.f32 %v4389, %v4531
  %v4652 = vadd.f32 %v4390, %v4534
  %v4653 = vadd.f32 %v4391, %v4539
  %v4654 = vadd.f32 %v4392, %v4542
  %v4655 = vadd.f32 %v4393, %v4547
  %v4656 = vadd.f32 %v4394, %v4550
  %v4657 = vadd.f32 %v4395, %v4555
  %v4658 = vadd.f32 %v4396, %v4558
  %v4659 = vadd.f32 %v4397, %v4563
  %v4660 = vadd.f32 %v4398, %v4566
  %v4661 = vadd.f32 %v4399, %v4571
  %v4662 = vadd.f32 %v4400, %v4574
  %v4663 = vadd.f32 %v4401, %v4579
  %v4664 = vadd.f32 %v4402, %v4582
  %v4665 = vadd.f32 %v4403, %v4587
  %v4666 = vadd.f32 %v4404, %v4590
  %v4667 = vadd.f32 %v4405, %v4595
  %v4668 = vadd.f32 %v4406, %v4598
  %v4669 = vadd.f32 %v4407, %v4603
  %v4670 = vadd.f32 %v4408, %v4606
  %v4671 = vadd.f32 %v4409, %v4611
  %v4672 = vadd.f32 %v4410, %v4614
  %v4673 = vadd.f32 %v4411, %v4619
  %v4674 = vadd.f32 %v4412, %v4622
  %v4675 = vadd.f32 %v4413, %v4627
  %v4676 = vadd.f32 %v4414, %v4630
  %v4677 = vadd.f32 %v4415, %v4635
  %v4678 = vadd.f32 %v4416, %v4638
  %v4679 = vadd.f32 %v4417, %v4643
  %v4680 = vadd.f32 %v4418, %v4646
  %4681 = vst [vmem:[#allocation3] sm:$0xff] %v4649
  %4682 = vst [vmem:[#allocation3 + $0x8] sm:$0xff] %v4650
  %4683 = vst [vmem:[#allocation3 + $0x10] sm:$0xff] %v4651
  %4684 = vst [vmem:[#allocation3 + $0x18] sm:$0xff] %v4652
  %4685 = vst [vmem:[#allocation3 + $0x20] sm:$0xff] %v4653
  %4686 = vst [vmem:[#allocation3 + $0x28] sm:$0xff] %v4654
  %4687 = vst [vmem:[#allocation3 + $0x30] sm:$0xff] %v4655
  %4688 = vst [vmem:[#allocation3 + $0x38] sm:$0xff] %v4656
  %4689 = vst [vmem:[#allocation3 + $0x40] sm:$0xff] %v4657
  %4690 = vst [vmem:[#allocation3 + $0x48] sm:$0xff] %v4658
  %4691 = vst [vmem:[#allocation3 + $0x50] sm:$0xff] %v4659
  %4692 = vst [vmem:[#allocation3 + $0x58] sm:$0xff] %v4660
  %4693 = vst [vmem:[#allocation3 + $0x60] sm:$0xff] %v4661
  %4694 = vst [vmem:[#allocation3 + $0x68] sm:$0xff] %v4662
  %4695 = vst [vmem:[#allocation3 + $0x70] sm:$0xff] %v4663
  %4696 = vst [vmem:[#allocation3 + $0x78] sm:$0xff] %v4664
  %4697 = vst [vmem:[#allocation3 + $0x80] sm:$0xff] %v4665
  %4698 = vst [vmem:[#allocation3 + $0x88] sm:$0xff] %v4666
  %4699 = vst [vmem:[#allocation3 + $0x90] sm:$0xff] %v4667
  %4700 = vst [vmem:[#allocation3 + $0x98] sm:$0xff] %v4668
  %4701 = vst [vmem:[#allocation3 + $0xa0] sm:$0xff] %v4669
  %4702 = vst [vmem:[#allocation3 + $0xa8] sm:$0xff] %v4670
  %4703 = vst [vmem:[#allocation3 + $0xb0] sm:$0xff] %v4671
  %4704 = vst [vmem:[#allocation3 + $0xb8] sm:$0xff] %v4672
  %4705 = vst [vmem:[#allocation3 + $0xc0] sm:$0xff] %v4673
  %4706 = vst [vmem:[#allocation3 + $0xc8] sm:$0xff] %v4674
  %4707 = vst [vmem:[#allocation3 + $0xd0] sm:$0xff] %v4675
  %4708 = vst [vmem:[#allocation3 + $0xd8] sm:$0xff] %v4676
  %4709 = vst [vmem:[#allocation3 + $0xe0] sm:$0xff] %v4677
  %4710 = vst [vmem:[#allocation3 + $0xe8] sm:$0xff] %v4678
  %4711 = vst [vmem:[#allocation3 + $0xf0] sm:$0xff] %v4679
  %4712 = vst [vmem:[#allocation3 + $0xf8] sm:$0xff] %v4680
  %v4713 = vld [vmem:[#allocation3] sm:$0xff]
  %v4714 = vld [vmem:[#allocation3 + $0x8] sm:$0xff]
  %v4715 = vld [vmem:[#allocation3 + $0x10] sm:$0xff]
  %v4716 = vld [vmem:[#allocation3 + $0x18] sm:$0xff]
  %v4717 = vld [vmem:[#allocation3 + $0x20] sm:$0xff]
  %v4718 = vld [vmem:[#allocation3 + $0x28] sm:$0xff]
  %v4719 = vld [vmem:[#allocation3 + $0x30] sm:$0xff]
  %v4720 = vld [vmem:[#allocation3 + $0x38] sm:$0xff]
  %v4721 = vld [vmem:[#allocation3 + $0x40] sm:$0xff]
  %v4722 = vld [vmem:[#allocation3 + $0x48] sm:$0xff]
  %v4723 = vld [vmem:[#allocation3 + $0x50] sm:$0xff]
  %v4724 = vld [vmem:[#allocation3 + $0x58] sm:$0xff]
  %v4725 = vld [vmem:[#allocation3 + $0x60] sm:$0xff]
  %v4726 = vld [vmem:[#allocation3 + $0x68] sm:$0xff]
  %v4727 = vld [vmem:[#allocation3 + $0x70] sm:$0xff]
  %v4728 = vld [vmem:[#allocation3 + $0x78] sm:$0xff]
  %v4729 = vld [vmem:[#allocation3 + $0x80] sm:$0xff]
  %v4730 = vld [vmem:[#allocation3 + $0x88] sm:$0xff]
  %v4731 = vld [vmem:[#allocation3 + $0x90] sm:$0xff]
  %v4732 = vld [vmem:[#allocation3 + $0x98] sm:$0xff]
  %v4733 = vld [vmem:[#allocation3 + $0xa0] sm:$0xff]
  %v4734 = vld [vmem:[#allocation3 + $0xa8] sm:$0xff]
  %v4735 = vld [vmem:[#allocation3 + $0xb0] sm:$0xff]
  %v4736 = vld [vmem:[#allocation3 + $0xb8] sm:$0xff]
  %v4737 = vld [vmem:[#allocation3 + $0xc0] sm:$0xff]
  %v4738 = vld [vmem:[#allocation3 + $0xc8] sm:$0xff]
  %v4739 = vld [vmem:[#allocation3 + $0xd0] sm:$0xff]
  %v4740 = vld [vmem:[#allocation3 + $0xd8] sm:$0xff]
  %v4741 = vld [vmem:[#allocation3 + $0xe0] sm:$0xff]
  %v4742 = vld [vmem:[#allocation3 + $0xe8] sm:$0xff]
  %v4743 = vld [vmem:[#allocation3 + $0xf0] sm:$0xff]
  %v4744 = vld [vmem:[#allocation3 + $0xf8] sm:$0xff]
  %s4745 = scalar_lea.vmem %s1, 512
  %v4746 = vld [vmem:[%s4745] sm:$0xf]
  %v4747 = vld [vmem:[%s4745 + $0x4] sm:$0xf]
  %v4748 = vld [vmem:[%s4745 + $0x8] sm:$0xf]
  %v4749 = vld [vmem:[%s4745 + $0xc] sm:$0xf]
  %v4750 = vld [vmem:[%s4745 + $0x10] sm:$0xf]
  %v4751 = vld [vmem:[%s4745 + $0x14] sm:$0xf]
  %v4752 = vld [vmem:[%s4745 + $0x18] sm:$0xf]
  %v4753 = vld [vmem:[%s4745 + $0x1c] sm:$0xf]
  %v4754 = vld [vmem:[%s4745 + $0x20] sm:$0xf]
  %v4755 = vld [vmem:[%s4745 + $0x24] sm:$0xf]
  %v4756 = vld [vmem:[%s4745 + $0x28] sm:$0xf]
  %v4757 = vld [vmem:[%s4745 + $0x2c] sm:$0xf]
  %v4758 = vld [vmem:[%s4745 + $0x30] sm:$0xf]
  %v4759 = vld [vmem:[%s4745 + $0x34] sm:$0xf]
  %v4760 = vld [vmem:[%s4745 + $0x38] sm:$0xf]
  %v4761 = vld [vmem:[%s4745 + $0x3c] sm:$0xf]
  %v4762 = vunpack.c.l.b16 %v3997
  %v4763 = vunpack.c.l.b16 %v4000
  %v4764 = vpack.c.b16 %v4763, %v4762
  %v4782 = vunpack.c.l.b16 %v4746
  %v4783 = vunpack.c.l.b16 %v4747
  %v4784 = vunpack.c.l.b16 %v4748
  %v4785 = vunpack.c.l.b16 %v4749
  %v4786 = vunpack.c.l.b16 %v4750
  %v4787 = vunpack.c.l.b16 %v4751
  %v4788 = vunpack.c.l.b16 %v4752
  %v4789 = vunpack.c.l.b16 %v4753
  %v4790 = vunpack.c.l.b16 %v4754
  %v4791 = vunpack.c.l.b16 %v4755
  %v4792 = vunpack.c.l.b16 %v4756
  %v4793 = vunpack.c.l.b16 %v4757
  %v4794 = vunpack.c.l.b16 %v4758
  %v4795 = vunpack.c.l.b16 %v4759
  %v4796 = vunpack.c.l.b16 %v4760
  %v4797 = vunpack.c.l.b16 %v4761
  %v4798 = vpack.c.b16 %v4783, %v4782
  %v4799 = vpack.c.b16 %v4785, %v4784
  %v4800 = vpack.c.b16 %v4787, %v4786
  %v4801 = vpack.c.b16 %v4789, %v4788
  %v4802 = vpack.c.b16 %v4791, %v4790
  %v4803 = vpack.c.b16 %v4793, %v4792
  %v4804 = vpack.c.b16 %v4795, %v4794
  %v4805 = vpack.c.b16 %v4797, %v4796
  %4814 = vmatprep.subr.bf16.mxu0 0
  %4815 = vmatpush1.bf16.msra.mxu0 %v4798
  %4816 = vmatprep.subr.bf16.mxu0 0
  %4817 = vmatpush1.bf16.msra.mxu0 %v4799
  %4818 = vmatprep.subr.bf16.mxu0 0
  %4819 = vmatpush1.bf16.msra.mxu0 %v4800
  %4820 = vmatprep.subr.bf16.mxu0 0
  %4821 = vmatpush1.bf16.msra.mxu0 %v4801
  %4822 = vmatprep.subr.bf16.mxu0 0
  %4823 = vmatpush1.bf16.msra.mxu0 %v4802
  %4824 = vmatprep.subr.bf16.mxu0 0
  %4825 = vmatpush1.bf16.msra.mxu0 %v4803
  %4826 = vmatprep.subr.bf16.mxu0 0
  %4827 = vmatpush1.bf16.msra.mxu0 %v4804
  %4828 = vmatprep.subr.bf16.mxu0 0
  %4829 = vmatpush1.bf16.msra.mxu0 %v4805
  %4830 = vmatprep.subr.bf16.mxu0 0
  %4831 = vmatpush1.bf16.msra.mxu0 0
  %4832 = vmatprep.subr.bf16.mxu0 0
  %4833 = vmatpush1.bf16.msra.mxu0 0
  %4834 = vmatprep.subr.bf16.mxu0 0
  %4835 = vmatpush1.bf16.msra.mxu0 0
  %4836 = vmatprep.subr.bf16.mxu0 0
  %4837 = vmatpush1.bf16.msra.mxu0 0
  %4838 = vmatprep.subr.bf16.mxu0 0
  %4839 = vmatpush1.bf16.msra.mxu0 0
  %4840 = vmatprep.subr.bf16.mxu0 0
  %4841 = vmatpush1.bf16.msra.mxu0 0
  %4842 = vmatprep.subr.bf16.mxu0 0
  %4843 = vmatpush1.bf16.msra.mxu0 0
  %4844 = vmatprep.subr.bf16.mxu0 0
  %4845 = vmatpush1.bf16.msra.mxu0 0
  %4846 = vmatprep.mubr.bf16.mxu0 0
  %4847 = vmatmul.mubr.bf16.gmra.mrb[0].mxu0 %v4084
  %v4848 = vpop.f32.mrb[0].mxu0
  %v4849 = vadd.f32 0.0, %v4848
  %v4850 = vpop.f32.mrb[0].mxu0
  %v4851 = vpop.f32.mrb[0].mxu0
  %v4852 = vadd.f32 0.0, %v4851
  %v4853 = vpop.f32.mrb[0].mxu0
  %4854 = vmatprep.mubr.bf16.mxu0 0
  %4855 = vmatmul.mubr.bf16.gmra.mrb[0].mxu0 %v4085
  %v4856 = vpop.f32.mrb[0].mxu0
  %v4857 = vadd.f32 0.0, %v4856
  %v4858 = vpop.f32.mrb[0].mxu0
  %v4859 = vpop.f32.mrb[0].mxu0
  %v4860 = vadd.f32 0.0, %v4859
  %v4861 = vpop.f32.mrb[0].mxu0
  %4862 = vmatprep.mubr.bf16.mxu0 0
  %4863 = vmatmul.mubr.bf16.gmra.mrb[0].mxu0 %v4086
  %v4864 = vpop.f32.mrb[0].mxu0
  %v4865 = vadd.f32 0.0, %v4864
  %v4866 = vpop.f32.mrb[0].mxu0
  %v4867 = vpop.f32.mrb[0].mxu0
  %v4868 = vadd.f32 0.0, %v4867
  %v4869 = vpop.f32.mrb[0].mxu0
  %4870 = vmatprep.mubr.bf16.mxu0 0
  %4871 = vmatmul.mubr.bf16.gmra.mrb[0].mxu0 %v4087
  %v4872 = vpop.f32.mrb[0].mxu0
  %v4873 = vadd.f32 0.0, %v4872
  %v4874 = vpop.f32.mrb[0].mxu0
  %v4875 = vpop.f32.mrb[0].mxu0
  %v4876 = vadd.f32 0.0, %v4875
  %v4877 = vpop.f32.mrb[0].mxu0
  %4878 = vmatprep.mubr.bf16.mxu0 0
  %4879 = vmatmul.mubr.bf16.gmra.mrb[0].mxu0 %v4088
  %v4880 = vpop.f32.mrb[0].mxu0
  %v4881 = vadd.f32 0.0, %v4880
  %v4882 = vpop.f32.mrb[0].mxu0
  %v4883 = vpop.f32.mrb[0].mxu0
  %v4884 = vadd.f32 0.0, %v4883
  %v4885 = vpop.f32.mrb[0].mxu0
  %4886 = vmatprep.mubr.bf16.mxu0 0
  %4887 = vmatmul.mubr.bf16.gmra.mrb[0].mxu0 %v4089
  %v4888 = vpop.f32.mrb[0].mxu0
  %v4889 = vadd.f32 0.0, %v4888
  %v4890 = vpop.f32.mrb[0].mxu0
  %v4891 = vpop.f32.mrb[0].mxu0
  %v4892 = vadd.f32 0.0, %v4891
  %v4893 = vpop.f32.mrb[0].mxu0
  %4894 = vmatprep.mubr.bf16.mxu0 0
  %4895 = vmatmul.mubr.bf16.gmra.mrb[0].mxu0 %v4090
  %v4896 = vpop.f32.mrb[0].mxu0
  %v4897 = vadd.f32 0.0, %v4896
  %v4898 = vpop.f32.mrb[0].mxu0
  %v4899 = vpop.f32.mrb[0].mxu0
  %v4900 = vadd.f32 0.0, %v4899
  %v4901 = vpop.f32.mrb[0].mxu0
  %4902 = vmatprep.mubr.bf16.mxu0 0
  %4903 = vmatmul.mubr.bf16.gmra.mrb[0].mxu0 %v4091
  %v4904 = vpop.f32.mrb[0].mxu0
  %v4905 = vadd.f32 0.0, %v4904
  %v4906 = vpop.f32.mrb[0].mxu0
  %v4907 = vpop.f32.mrb[0].mxu0
  %v4908 = vadd.f32 0.0, %v4907
  %v4909 = vpop.f32.mrb[0].mxu0
  %4910 = vmatprep.mubr.bf16.mxu0 0
  %4911 = vmatmul.mubr.bf16.gmra.mrb[0].mxu0 %v4092
  %v4912 = vpop.f32.mrb[0].mxu0
  %v4913 = vadd.f32 0.0, %v4912
  %v4914 = vpop.f32.mrb[0].mxu0
  %v4915 = vpop.f32.mrb[0].mxu0
  %v4916 = vadd.f32 0.0, %v4915
  %v4917 = vpop.f32.mrb[0].mxu0
  %4918 = vmatprep.mubr.bf16.mxu0 0
  %4919 = vmatmul.mubr.bf16.gmra.mrb[0].mxu0 %v4093
  %v4920 = vpop.f32.mrb[0].mxu0
  %v4921 = vadd.f32 0.0, %v4920
  %v4922 = vpop.f32.mrb[0].mxu0
  %v4923 = vpop.f32.mrb[0].mxu0
  %v4924 = vadd.f32 0.0, %v4923
  %v4925 = vpop.f32.mrb[0].mxu0
  %4926 = vmatprep.mubr.bf16.mxu0 0
  %4927 = vmatmul.mubr.bf16.gmra.mrb[0].mxu0 %v4094
  %v4928 = vpop.f32.mrb[0].mxu0
  %v4929 = vadd.f32 0.0, %v4928
  %v4930 = vpop.f32.mrb[0].mxu0
  %v4931 = vpop.f32.mrb[0].mxu0
  %v4932 = vadd.f32 0.0, %v4931
  %v4933 = vpop.f32.mrb[0].mxu0
  %4934 = vmatprep.mubr.bf16.mxu0 0
  %4935 = vmatmul.mubr.bf16.gmra.mrb[0].mxu0 %v4095
  %v4936 = vpop.f32.mrb[0].mxu0
  %v4937 = vadd.f32 0.0, %v4936
  %v4938 = vpop.f32.mrb[0].mxu0
  %v4939 = vpop.f32.mrb[0].mxu0
  %v4940 = vadd.f32 0.0, %v4939
  %v4941 = vpop.f32.mrb[0].mxu0
  %4942 = vmatprep.mubr.bf16.mxu0 0
  %4943 = vmatmul.mubr.bf16.gmra.mrb[0].mxu0 %v4096
  %v4944 = vpop.f32.mrb[0].mxu0
  %v4945 = vadd.f32 0.0, %v4944
  %v4946 = vpop.f32.mrb[0].mxu0
  %v4947 = vpop.f32.mrb[0].mxu0
  %v4948 = vadd.f32 0.0, %v4947
  %v4949 = vpop.f32.mrb[0].mxu0
  %4950 = vmatprep.mubr.bf16.mxu0 0
  %4951 = vmatmul.mubr.bf16.gmra.mrb[0].mxu0 %v4097
  %v4952 = vpop.f32.mrb[0].mxu0
  %v4953 = vadd.f32 0.0, %v4952
  %v4954 = vpop.f32.mrb[0].mxu0
  %v4955 = vpop.f32.mrb[0].mxu0
  %v4956 = vadd.f32 0.0, %v4955
  %v4957 = vpop.f32.mrb[0].mxu0
  %4958 = vmatprep.mubr.bf16.mxu0 0
  %4959 = vmatmul.mubr.bf16.gmra.mrb[0].mxu0 %v4438
  %v4960 = vpop.f32.mrb[0].mxu0
  %v4961 = vadd.f32 0.0, %v4960
  %v4962 = vpop.f32.mrb[0].mxu0
  %v4963 = vpop.f32.mrb[0].mxu0
  %v4964 = vadd.f32 0.0, %v4963
  %v4965 = vpop.f32.mrb[0].mxu0
  %4966 = vmatprep.mubr.bf16.mxu0 0
  %4967 = vmatmul.mubr.bf16.gmra.mrb[0].mxu0 %v4764
  %v4968 = vpop.f32.mrb[0].mxu0
  %v4969 = vadd.f32 0.0, %v4968
  %v4970 = vpop.f32.mrb[0].mxu0
  %v4971 = vpop.f32.mrb[0].mxu0
  %v4972 = vadd.f32 0.0, %v4971
  %v4973 = vpop.f32.mrb[0].mxu0
  %4974 = vdwg.mxu0
  %v4975 = vadd.f32 %v4713, %v4849
  %v4976 = vadd.f32 %v4714, %v4852
  %v4977 = vadd.f32 %v4715, %v4857
  %v4978 = vadd.f32 %v4716, %v4860
  %v4979 = vadd.f32 %v4717, %v4865
  %v4980 = vadd.f32 %v4718, %v4868
  %v4981 = vadd.f32 %v4719, %v4873
  %v4982 = vadd.f32 %v4720, %v4876
  %v4983 = vadd.f32 %v4721, %v4881
  %v4984 = vadd.f32 %v4722, %v4884
  %v4985 = vadd.f32 %v4723, %v4889
  %v4986 = vadd.f32 %v4724, %v4892
  %v4987 = vadd.f32 %v4725, %v4897
  %v4988 = vadd.f32 %v4726, %v4900
  %v4989 = vadd.f32 %v4727, %v4905
  %v4990 = vadd.f32 %v4728, %v4908
  %v4991 = vadd.f32 %v4729, %v4913
  %v4992 = vadd.f32 %v4730, %v4916
  %v4993 = vadd.f32 %v4731, %v4921
  %v4994 = vadd.f32 %v4732, %v4924
  %v4995 = vadd.f32 %v4733, %v4929
  %v4996 = vadd.f32 %v4734, %v4932
  %v4997 = vadd.f32 %v4735, %v4937
  %v4998 = vadd.f32 %v4736, %v4940
  %v4999 = vadd.f32 %v4737, %v4945
  %v5000 = vadd.f32 %v4738, %v4948
  %v5001 = vadd.f32 %v4739, %v4953
  %v5002 = vadd.f32 %v4740, %v4956
  %v5003 = vadd.f32 %v4741, %v4961
  %v5004 = vadd.f32 %v4742, %v4964
  %v5005 = vadd.f32 %v4743, %v4969
  %v5006 = vadd.f32 %v4744, %v4972
  %5007 = vst [vmem:[#allocation3] sm:$0xff] %v4975
  %5008 = vst [vmem:[#allocation3 + $0x8] sm:$0xff] %v4976
  %5009 = vst [vmem:[#allocation3 + $0x10] sm:$0xff] %v4977
  %5010 = vst [vmem:[#allocation3 + $0x18] sm:$0xff] %v4978
  %5011 = vst [vmem:[#allocation3 + $0x20] sm:$0xff] %v4979
  %5012 = vst [vmem:[#allocation3 + $0x28] sm:$0xff] %v4980
  %5013 = vst [vmem:[#allocation3 + $0x30] sm:$0xff] %v4981
  %5014 = vst [vmem:[#allocation3 + $0x38] sm:$0xff] %v4982
  %5015 = vst [vmem:[#allocation3 + $0x40] sm:$0xff] %v4983
  %5016 = vst [vmem:[#allocation3 + $0x48] sm:$0xff] %v4984
  %5017 = vst [vmem:[#allocation3 + $0x50] sm:$0xff] %v4985
  %5018 = vst [vmem:[#allocation3 + $0x58] sm:$0xff] %v4986
  %5019 = vst [vmem:[#allocation3 + $0x60] sm:$0xff] %v4987
  %5020 = vst [vmem:[#allocation3 + $0x68] sm:$0xff] %v4988
  %5021 = vst [vmem:[#allocation3 + $0x70] sm:$0xff] %v4989
  %5022 = vst [vmem:[#allocation3 + $0x78] sm:$0xff] %v4990
  %5023 = vst [vmem:[#allocation3 + $0x80] sm:$0xff] %v4991
  %5024 = vst [vmem:[#allocation3 + $0x88] sm:$0xff] %v4992
  %5025 = vst [vmem:[#allocation3 + $0x90] sm:$0xff] %v4993
  %5026 = vst [vmem:[#allocation3 + $0x98] sm:$0xff] %v4994
  %5027 = vst [vmem:[#allocation3 + $0xa0] sm:$0xff] %v4995
  %5028 = vst [vmem:[#allocation3 + $0xa8] sm:$0xff] %v4996
  %5029 = vst [vmem:[#allocation3 + $0xb0] sm:$0xff] %v4997
  %5030 = vst [vmem:[#allocation3 + $0xb8] sm:$0xff] %v4998
  %5031 = vst [vmem:[#allocation3 + $0xc0] sm:$0xff] %v4999
  %5032 = vst [vmem:[#allocation3 + $0xc8] sm:$0xff] %v5000
  %5033 = vst [vmem:[#allocation3 + $0xd0] sm:$0xff] %v5001
  %5034 = vst [vmem:[#allocation3 + $0xd8] sm:$0xff] %v5002
  %5035 = vst [vmem:[#allocation3 + $0xe0] sm:$0xff] %v5003
  %5036 = vst [vmem:[#allocation3 + $0xe8] sm:$0xff] %v5004
  %5037 = vst [vmem:[#allocation3 + $0xf0] sm:$0xff] %v5005
  %5038 = vst [vmem:[#allocation3 + $0xf8] sm:$0xff] %v5006
  %s5039 = scalar_lea.vmem [#allocation2], 216
  %v5040 = vld [vmem:[%s5039] sm:$0xf]
  %v5041 = vld [vmem:[%s5039 + $0x4] sm:$0xf]
  %v5042 = vld [vmem:[%s5039 + $0xc] sm:$0xf]
  %v5043 = vld [vmem:[%s5039 + $0x10] sm:$0xf]
  %v5044 = vld [vmem:[%s5039 + $0x18] sm:$0xf]
  %v5045 = vld [vmem:[%s5039 + $0x1c] sm:$0xf]
  %v5046 = vld [vmem:[%s5039 + $0x24] sm:$0xf]
  %v5047 = vld [vmem:[%s5039 + $0x28] sm:$0xf]
  %v5048 = vld [vmem:[%s5039 + $0x30] sm:$0xf]
  %v5049 = vld [vmem:[%s5039 + $0x34] sm:$0xf]
  %v5050 = vld [vmem:[%s5039 + $0x3c] sm:$0xf]
  %v5051 = vld [vmem:[%s5039 + $0x40] sm:$0xf]
  %v5052 = vld [vmem:[%s5039 + $0x48] sm:$0xf]
  %v5053 = vld [vmem:[%s5039 + $0x4c] sm:$0xf]
  %v5054 = vld [vmem:[%s5039 + $0x54] sm:$0xf]
  %v5055 = vld [vmem:[%s5039 + $0x58] sm:$0xf]
  %v5056 = vld [vmem:[%s5039 + $0x60] sm:$0xf]
  %v5057 = vld [vmem:[%s5039 + $0x64] sm:$0xf]
  %v5058 = vld [vmem:[%s5039 + $0x6c] sm:$0xf]
  %v5059 = vld [vmem:[%s5039 + $0x70] sm:$0xf]
  %v5060 = vld [vmem:[%s5039 + $0x78] sm:$0xf]
  %v5061 = vld [vmem:[%s5039 + $0x7c] sm:$0xf]
  %v5062 = vld [vmem:[%s5039 + $0x84] sm:$0xf]
  %v5063 = vld [vmem:[%s5039 + $0x88] sm:$0xf]
  %v5064 = vld [vmem:[%s5039 + $0x90] sm:$0xf]
  %v5065 = vld [vmem:[%s5039 + $0x94] sm:$0xf]
  %v5066 = vld [vmem:[%s5039 + $0x9c] sm:$0xf]
  %v5067 = vld [vmem:[%s5039 + $0xa0] sm:$0xf]
  %v5068 = vld [vmem:[%s5039 + $0xa8] sm:$0xf]
  %v5069 = vld [vmem:[%s5039 + $0xac] sm:$0xf]
  %v5070 = vld [vmem:[%s5039 + $0xb4] sm:$0xf]
  %v5071 = vld [vmem:[%s5039 + $0xb8] sm:$0xf]
  %v5072 = vld [vmem:[%s5039 + $0xc0] sm:$0xf]
  %v5073 = vld [vmem:[%s5039 + $0xc4] sm:$0xf]
  %v5074 = vld [vmem:[%s5039 + $0xcc] sm:$0xf]
  %v5075 = vld [vmem:[%s5039 + $0xd0] sm:$0xf]
  %s5076 = scalar_lea.vmem [#allocation3], 256
  %v5077 = vld [vmem:[%s5076] sm:$0xff]
  %v5078 = vld [vmem:[%s5076 + $0x8] sm:$0xff]
  %v5079 = vld [vmem:[%s5076 + $0x10] sm:$0xff]
  %v5080 = vld [vmem:[%s5076 + $0x18] sm:$0xff]
  %v5081 = vld [vmem:[%s5076 + $0x20] sm:$0xff]
  %v5082 = vld [vmem:[%s5076 + $0x28] sm:$0xff]
  %v5083 = vld [vmem:[%s5076 + $0x30] sm:$0xff]
  %v5084 = vld [vmem:[%s5076 + $0x38] sm:$0xff]
  %v5085 = vld [vmem:[%s5076 + $0x40] sm:$0xff]
  %v5086 = vld [vmem:[%s5076 + $0x48] sm:$0xff]
  %v5087 = vld [vmem:[%s5076 + $0x50] sm:$0xff]
  %v5088 = vld [vmem:[%s5076 + $0x58] sm:$0xff]
  %v5089 = vld [vmem:[%s5076 + $0x60] sm:$0xff]
  %v5090 = vld [vmem:[%s5076 + $0x68] sm:$0xff]
  %v5091 = vld [vmem:[%s5076 + $0x70] sm:$0xff]
  %v5092 = vld [vmem:[%s5076 + $0x78] sm:$0xff]
  %v5093 = vld [vmem:[%s5076 + $0x80] sm:$0xff]
  %v5094 = vld [vmem:[%s5076 + $0x88] sm:$0xff]
  %v5095 = vld [vmem:[%s5076 + $0x90] sm:$0xff]
  %v5096 = vld [vmem:[%s5076 + $0x98] sm:$0xff]
  %v5097 = vld [vmem:[%s5076 + $0xa0] sm:$0xff]
  %v5098 = vld [vmem:[%s5076 + $0xa8] sm:$0xff]
  %v5099 = vld [vmem:[%s5076 + $0xb0] sm:$0xff]
  %v5100 = vld [vmem:[%s5076 + $0xb8] sm:$0xff]
  %v5101 = vld [vmem:[%s5076 + $0xc0] sm:$0xff]
  %v5102 = vld [vmem:[%s5076 + $0xc8] sm:$0xff]
  %v5103 = vld [vmem:[%s5076 + $0xd0] sm:$0xff]
  %v5104 = vld [vmem:[%s5076 + $0xd8] sm:$0xff]
  %v5105 = vld [vmem:[%s5076 + $0xe0] sm:$0xff]
  %v5106 = vld [vmem:[%s5076 + $0xe8] sm:$0xff]
  %v5107 = vld [vmem:[%s5076 + $0xf0] sm:$0xff]
  %v5108 = vld [vmem:[%s5076 + $0xf8] sm:$0xff]
  %v5109 = vld [vmem:[%s1] sm:$0xf]
  %v5110 = vld [vmem:[%s1 + $0x4] sm:$0xf]
  %v5111 = vld [vmem:[%s1 + $0x8] sm:$0xf]
  %v5112 = vld [vmem:[%s1 + $0xc] sm:$0xf]
  %v5113 = vld [vmem:[%s1 + $0x10] sm:$0xf]
  %v5114 = vld [vmem:[%s1 + $0x14] sm:$0xf]
  %v5115 = vld [vmem:[%s1 + $0x18] sm:$0xf]
  %v5116 = vld [vmem:[%s1 + $0x1c] sm:$0xf]
  %v5117 = vld [vmem:[%s1 + $0x20] sm:$0xf]
  %v5118 = vld [vmem:[%s1 + $0x24] sm:$0xf]
  %v5119 = vld [vmem:[%s1 + $0x28] sm:$0xf]
  %v5120 = vld [vmem:[%s1 + $0x2c] sm:$0xf]
  %v5121 = vld [vmem:[%s1 + $0x30] sm:$0xf]
  %v5122 = vld [vmem:[%s1 + $0x34] sm:$0xf]
  %v5123 = vld [vmem:[%s1 + $0x38] sm:$0xf]
  %v5124 = vld [vmem:[%s1 + $0x3c] sm:$0xf]
  %v5157 = vunpack.c.l.b16 %v5040
  %v5158 = vunpack.c.l.b16 %v5041
  %v5159 = vunpack.c.l.b16 %v5042
  %v5160 = vunpack.c.l.b16 %v5043
  %v5161 = vunpack.c.l.b16 %v5044
  %v5162 = vunpack.c.l.b16 %v5045
  %v5163 = vunpack.c.l.b16 %v5046
  %v5164 = vunpack.c.l.b16 %v5047
  %v5165 = vunpack.c.l.b16 %v5048
  %v5166 = vunpack.c.l.b16 %v5049
  %v5167 = vunpack.c.l.b16 %v5050
  %v5168 = vunpack.c.l.b16 %v5051
  %v5169 = vunpack.c.l.b16 %v5052
  %v5170 = vunpack.c.l.b16 %v5053
  %v5171 = vunpack.c.l.b16 %v5054
  %v5172 = vunpack.c.l.b16 %v5055
  %v5173 = vunpack.c.l.b16 %v5056
  %v5174 = vunpack.c.l.b16 %v5057
  %v5175 = vunpack.c.l.b16 %v5058
  %v5176 = vunpack.c.l.b16 %v5059
  %v5177 = vunpack.c.l.b16 %v5060
  %v5178 = vunpack.c.l.b16 %v5061
  %v5179 = vunpack.c.l.b16 %v5062
  %v5180 = vunpack.c.l.b16 %v5063
  %v5181 = vunpack.c.l.b16 %v5064
  %v5182 = vunpack.c.l.b16 %v5065
  %v5183 = vunpack.c.l.b16 %v5066
  %v5184 = vunpack.c.l.b16 %v5067
  %v5185 = vunpack.c.l.b16 %v5068
  %v5186 = vunpack.c.l.b16 %v5069
  %v5187 = vunpack.c.l.b16 %v5070
  %v5188 = vunpack.c.l.b16 %v5071
  %v5189 = vpack.c.b16 %v5158, %v5157
  %v5190 = vpack.c.b16 %v5160, %v5159
  %v5191 = vpack.c.b16 %v5162, %v5161
  %v5192 = vpack.c.b16 %v5164, %v5163
  %v5193 = vpack.c.b16 %v5166, %v5165
  %v5194 = vpack.c.b16 %v5168, %v5167
  %v5195 = vpack.c.b16 %v5170, %v5169
  %v5196 = vpack.c.b16 %v5172, %v5171
  %v5197 = vpack.c.b16 %v5174, %v5173
  %v5198 = vpack.c.b16 %v5176, %v5175
  %v5199 = vpack.c.b16 %v5178, %v5177
  %v5200 = vpack.c.b16 %v5180, %v5179
  %v5201 = vpack.c.b16 %v5182, %v5181
  %v5202 = vpack.c.b16 %v5184, %v5183
  %v5203 = vpack.c.b16 %v5186, %v5185
  %v5204 = vpack.c.b16 %v5188, %v5187
  %v5237 = vunpack.c.l.b16 %v5109
  %v5238 = vunpack.c.l.b16 %v5110
  %v5239 = vunpack.c.l.b16 %v5111
  %v5240 = vunpack.c.l.b16 %v5112
  %v5241 = vunpack.c.l.b16 %v5113
  %v5242 = vunpack.c.l.b16 %v5114
  %v5243 = vunpack.c.l.b16 %v5115
  %v5244 = vunpack.c.l.b16 %v5116
  %v5245 = vunpack.c.l.b16 %v5117
  %v5246 = vunpack.c.l.b16 %v5118
  %v5247 = vunpack.c.l.b16 %v5119
  %v5248 = vunpack.c.l.b16 %v5120
  %v5249 = vunpack.c.l.b16 %v5121
  %v5250 = vunpack.c.l.b16 %v5122
  %v5251 = vunpack.c.l.b16 %v5123
  %v5252 = vunpack.c.l.b16 %v5124
  %v5253 = vpack.c.b16 %v5238, %v5237
  %v5254 = vpack.c.b16 %v5240, %v5239
  %v5255 = vpack.c.b16 %v5242, %v5241
  %v5256 = vpack.c.b16 %v5244, %v5243
  %v5257 = vpack.c.b16 %v5246, %v5245
  %v5258 = vpack.c.b16 %v5248, %v5247
  %v5259 = vpack.c.b16 %v5250, %v5249
  %v5260 = vpack.c.b16 %v5252, %v5251
  %5269 = vmatprep.subr.bf16.mxu0 0
  %5270 = vmatpush1.bf16.msra.mxu0 %v5253
  %5271 = vmatprep.subr.bf16.mxu0 0
  %5272 = vmatpush1.bf16.msra.mxu0 %v5254
  %5273 = vmatprep.subr.bf16.mxu0 0
  %5274 = vmatpush1.bf16.msra.mxu0 %v5255
  %5275 = vmatprep.subr.bf16.mxu0 0
  %5276 = vmatpush1.bf16.msra.mxu0 %v5256
  %5277 = vmatprep.subr.bf16.mxu0 0
  %5278 = vmatpush1.bf16.msra.mxu0 %v5257
  %5279 = vmatprep.subr.bf16.mxu0 0
  %5280 = vmatpush1.bf16.msra.mxu0 %v5258
  %5281 = vmatprep.subr.bf16.mxu0 0
  %5282 = vmatpush1.bf16.msra.mxu0 %v5259
  %5283 = vmatprep.subr.bf16.mxu0 0
  %5284 = vmatpush1.bf16.msra.mxu0 %v5260
  %5285 = vmatprep.subr.bf16.mxu0 0
  %5286 = vmatpush1.bf16.msra.mxu0 0
  %5287 = vmatprep.subr.bf16.mxu0 0
  %5288 = vmatpush1.bf16.msra.mxu0 0
  %5289 = vmatprep.subr.bf16.mxu0 0
  %5290 = vmatpush1.bf16.msra.mxu0 0
  %5291 = vmatprep.subr.bf16.mxu0 0
  %5292 = vmatpush1.bf16.msra.mxu0 0
  %5293 = vmatprep.subr.bf16.mxu0 0
  %5294 = vmatpush1.bf16.msra.mxu0 0
  %5295 = vmatprep.subr.bf16.mxu0 0
  %5296 = vmatpush1.bf16.msra.mxu0 0
  %5297 = vmatprep.subr.bf16.mxu0 0
  %5298 = vmatpush1.bf16.msra.mxu0 0
  %5299 = vmatprep.subr.bf16.mxu0 0
  %5300 = vmatpush1.bf16.msra.mxu0 0
  %5301 = vmatprep.mubr.bf16.mxu0 0
  %5302 = vmatmul.mubr.bf16.gmra.mrb[0].mxu0 %v5189
  %v5303 = vpop.f32.mrb[0].mxu0
  %v5304 = vadd.f32 0.0, %v5303
  %v5305 = vpop.f32.mrb[0].mxu0
  %v5306 = vpop.f32.mrb[0].mxu0
  %v5307 = vadd.f32 0.0, %v5306
  %v5308 = vpop.f32.mrb[0].mxu0
  %5309 = vmatprep.mubr.bf16.mxu0 0
  %5310 = vmatmul.mubr.bf16.gmra.mrb[0].mxu0 %v5190
  %v5311 = vpop.f32.mrb[0].mxu0
  %v5312 = vadd.f32 0.0, %v5311
  %v5313 = vpop.f32.mrb[0].mxu0
  %v5314 = vpop.f32.mrb[0].mxu0
  %v5315 = vadd.f32 0.0, %v5314
  %v5316 = vpop.f32.mrb[0].mxu0
  %5317 = vmatprep.mubr.bf16.mxu0 0
  %5318 = vmatmul.mubr.bf16.gmra.mrb[0].mxu0 %v5191
  %v5319 = vpop.f32.mrb[0].mxu0
  %v5320 = vadd.f32 0.0, %v5319
  %v5321 = vpop.f32.mrb[0].mxu0
  %v5322 = vpop.f32.mrb[0].mxu0
  %v5323 = vadd.f32 0.0, %v5322
  %v5324 = vpop.f32.mrb[0].mxu0
  %5325 = vmatprep.mubr.bf16.mxu0 0
  %5326 = vmatmul.mubr.bf16.gmra.mrb[0].mxu0 %v5192
  %v5327 = vpop.f32.mrb[0].mxu0
  %v5328 = vadd.f32 0.0, %v5327
  %v5329 = vpop.f32.mrb[0].mxu0
  %v5330 = vpop.f32.mrb[0].mxu0
  %v5331 = vadd.f32 0.0, %v5330
  %v5332 = vpop.f32.mrb[0].mxu0
  %5333 = vmatprep.mubr.bf16.mxu0 0
  %5334 = vmatmul.mubr.bf16.gmra.mrb[0].mxu0 %v5193
  %v5335 = vpop.f32.mrb[0].mxu0
  %v5336 = vadd.f32 0.0, %v5335
  %v5337 = vpop.f32.mrb[0].mxu0
  %v5338 = vpop.f32.mrb[0].mxu0
  %v5339 = vadd.f32 0.0, %v5338
  %v5340 = vpop.f32.mrb[0].mxu0
  %5341 = vmatprep.mubr.bf16.mxu0 0
  %5342 = vmatmul.mubr.bf16.gmra.mrb[0].mxu0 %v5194
  %v5343 = vpop.f32.mrb[0].mxu0
  %v5344 = vadd.f32 0.0, %v5343
  %v5345 = vpop.f32.mrb[0].mxu0
  %v5346 = vpop.f32.mrb[0].mxu0
  %v5347 = vadd.f32 0.0, %v5346
  %v5348 = vpop.f32.mrb[0].mxu0
  %5349 = vmatprep.mubr.bf16.mxu0 0
  %5350 = vmatmul.mubr.bf16.gmra.mrb[0].mxu0 %v5195
  %v5351 = vpop.f32.mrb[0].mxu0
  %v5352 = vadd.f32 0.0, %v5351
  %v5353 = vpop.f32.mrb[0].mxu0
  %v5354 = vpop.f32.mrb[0].mxu0
  %v5355 = vadd.f32 0.0, %v5354
  %v5356 = vpop.f32.mrb[0].mxu0
  %5357 = vmatprep.mubr.bf16.mxu0 0
  %5358 = vmatmul.mubr.bf16.gmra.mrb[0].mxu0 %v5196
  %v5359 = vpop.f32.mrb[0].mxu0
  %v5360 = vadd.f32 0.0, %v5359
  %v5361 = vpop.f32.mrb[0].mxu0
  %v5362 = vpop.f32.mrb[0].mxu0
  %v5363 = vadd.f32 0.0, %v5362
  %v5364 = vpop.f32.mrb[0].mxu0
  %5365 = vmatprep.mubr.bf16.mxu0 0
  %5366 = vmatmul.mubr.bf16.gmra.mrb[0].mxu0 %v5197
  %v5367 = vpop.f32.mrb[0].mxu0
  %v5368 = vadd.f32 0.0, %v5367
  %v5369 = vpop.f32.mrb[0].mxu0
  %v5370 = vpop.f32.mrb[0].mxu0
  %v5371 = vadd.f32 0.0, %v5370
  %v5372 = vpop.f32.mrb[0].mxu0
  %5373 = vmatprep.mubr.bf16.mxu0 0
  %5374 = vmatmul.mubr.bf16.gmra.mrb[0].mxu0 %v5198
  %v5375 = vpop.f32.mrb[0].mxu0
  %v5376 = vadd.f32 0.0, %v5375
  %v5377 = vpop.f32.mrb[0].mxu0
  %v5378 = vpop.f32.mrb[0].mxu0
  %v5379 = vadd.f32 0.0, %v5378
  %v5380 = vpop.f32.mrb[0].mxu0
  %5381 = vmatprep.mubr.bf16.mxu0 0
  %5382 = vmatmul.mubr.bf16.gmra.mrb[0].mxu0 %v5199
  %v5383 = vpop.f32.mrb[0].mxu0
  %v5384 = vadd.f32 0.0, %v5383
  %v5385 = vpop.f32.mrb[0].mxu0
  %v5386 = vpop.f32.mrb[0].mxu0
  %v5387 = vadd.f32 0.0, %v5386
  %v5388 = vpop.f32.mrb[0].mxu0
  %5389 = vmatprep.mubr.bf16.mxu0 0
  %5390 = vmatmul.mubr.bf16.gmra.mrb[0].mxu0 %v5200
  %v5391 = vpop.f32.mrb[0].mxu0
  %v5392 = vadd.f32 0.0, %v5391
  %v5393 = vpop.f32.mrb[0].mxu0
  %v5394 = vpop.f32.mrb[0].mxu0
  %v5395 = vadd.f32 0.0, %v5394
  %v5396 = vpop.f32.mrb[0].mxu0
  %5397 = vmatprep.mubr.bf16.mxu0 0
  %5398 = vmatmul.mubr.bf16.gmra.mrb[0].mxu0 %v5201
  %v5399 = vpop.f32.mrb[0].mxu0
  %v5400 = vadd.f32 0.0, %v5399
  %v5401 = vpop.f32.mrb[0].mxu0
  %v5402 = vpop.f32.mrb[0].mxu0
  %v5403 = vadd.f32 0.0, %v5402
  %v5404 = vpop.f32.mrb[0].mxu0
  %5405 = vmatprep.mubr.bf16.mxu0 0
  %5406 = vmatmul.mubr.bf16.gmra.mrb[0].mxu0 %v5202
  %v5407 = vpop.f32.mrb[0].mxu0
  %v5408 = vadd.f32 0.0, %v5407
  %v5409 = vpop.f32.mrb[0].mxu0
  %v5410 = vpop.f32.mrb[0].mxu0
  %v5411 = vadd.f32 0.0, %v5410
  %v5412 = vpop.f32.mrb[0].mxu0
  %5413 = vmatprep.mubr.bf16.mxu0 0
  %5414 = vmatmul.mubr.bf16.gmra.mrb[0].mxu0 %v5203
  %v5415 = vpop.f32.mrb[0].mxu0
  %v5416 = vadd.f32 0.0, %v5415
  %v5417 = vpop.f32.mrb[0].mxu0
  %v5418 = vpop.f32.mrb[0].mxu0
  %v5419 = vadd.f32 0.0, %v5418
  %v5420 = vpop.f32.mrb[0].mxu0
  %5421 = vmatprep.mubr.bf16.mxu0 0
  %5422 = vmatmul.mubr.bf16.gmra.mrb[0].mxu0 %v5204
  %v5423 = vpop.f32.mrb[0].mxu0
  %v5424 = vadd.f32 0.0, %v5423
  %v5425 = vpop.f32.mrb[0].mxu0
  %v5426 = vpop.f32.mrb[0].mxu0
  %v5427 = vadd.f32 0.0, %v5426
  %v5428 = vpop.f32.mrb[0].mxu0
  %5429 = vdwg.mxu0
  %v5430 = vadd.f32 %v5077, %v5304
  %v5431 = vadd.f32 %v5078, %v5307
  %v5432 = vadd.f32 %v5079, %v5312
  %v5433 = vadd.f32 %v5080, %v5315
  %v5434 = vadd.f32 %v5081, %v5320
  %v5435 = vadd.f32 %v5082, %v5323
  %v5436 = vadd.f32 %v5083, %v5328
  %v5437 = vadd.f32 %v5084, %v5331
  %v5438 = vadd.f32 %v5085, %v5336
  %v5439 = vadd.f32 %v5086, %v5339
  %v5440 = vadd.f32 %v5087, %v5344
  %v5441 = vadd.f32 %v5088, %v5347
  %v5442 = vadd.f32 %v5089, %v5352
  %v5443 = vadd.f32 %v5090, %v5355
  %v5444 = vadd.f32 %v5091, %v5360
  %v5445 = vadd.f32 %v5092, %v5363
  %v5446 = vadd.f32 %v5093, %v5368
  %v5447 = vadd.f32 %v5094, %v5371
  %v5448 = vadd.f32 %v5095, %v5376
  %v5449 = vadd.f32 %v5096, %v5379
  %v5450 = vadd.f32 %v5097, %v5384
  %v5451 = vadd.f32 %v5098, %v5387
  %v5452 = vadd.f32 %v5099, %v5392
  %v5453 = vadd.f32 %v5100, %v5395
  %v5454 = vadd.f32 %v5101, %v5400
  %v5455 = vadd.f32 %v5102, %v5403
  %v5456 = vadd.f32 %v5103, %v5408
  %v5457 = vadd.f32 %v5104, %v5411
  %v5458 = vadd.f32 %v5105, %v5416
  %v5459 = vadd.f32 %v5106, %v5419
  %v5460 = vadd.f32 %v5107, %v5424
  %v5461 = vadd.f32 %v5108, %v5427
  %5462 = vst [vmem:[%s5076] sm:$0xff] %v5430
  %5463 = vst [vmem:[%s5076 + $0x8] sm:$0xff] %v5431
  %5464 = vst [vmem:[%s5076 + $0x10] sm:$0xff] %v5432
  %5465 = vst [vmem:[%s5076 + $0x18] sm:$0xff] %v5433
  %5466 = vst [vmem:[%s5076 + $0x20] sm:$0xff] %v5434
  %5467 = vst [vmem:[%s5076 + $0x28] sm:$0xff] %v5435
  %5468 = vst [vmem:[%s5076 + $0x30] sm:$0xff] %v5436
  %5469 = vst [vmem:[%s5076 + $0x38] sm:$0xff] %v5437
  %5470 = vst [vmem:[%s5076 + $0x40] sm:$0xff] %v5438
  %5471 = vst [vmem:[%s5076 + $0x48] sm:$0xff] %v5439
  %5472 = vst [vmem:[%s5076 + $0x50] sm:$0xff] %v5440
  %5473 = vst [vmem:[%s5076 + $0x58] sm:$0xff] %v5441
  %5474 = vst [vmem:[%s5076 + $0x60] sm:$0xff] %v5442
  %5475 = vst [vmem:[%s5076 + $0x68] sm:$0xff] %v5443
  %5476 = vst [vmem:[%s5076 + $0x70] sm:$0xff] %v5444
  %5477 = vst [vmem:[%s5076 + $0x78] sm:$0xff] %v5445
  %5478 = vst [vmem:[%s5076 + $0x80] sm:$0xff] %v5446
  %5479 = vst [vmem:[%s5076 + $0x88] sm:$0xff] %v5447
  %5480 = vst [vmem:[%s5076 + $0x90] sm:$0xff] %v5448
  %5481 = vst [vmem:[%s5076 + $0x98] sm:$0xff] %v5449
  %5482 = vst [vmem:[%s5076 + $0xa0] sm:$0xff] %v5450
  %5483 = vst [vmem:[%s5076 + $0xa8] sm:$0xff] %v5451
  %5484 = vst [vmem:[%s5076 + $0xb0] sm:$0xff] %v5452
  %5485 = vst [vmem:[%s5076 + $0xb8] sm:$0xff] %v5453
  %5486 = vst [vmem:[%s5076 + $0xc0] sm:$0xff] %v5454
  %5487 = vst [vmem:[%s5076 + $0xc8] sm:$0xff] %v5455
  %5488 = vst [vmem:[%s5076 + $0xd0] sm:$0xff] %v5456
  %5489 = vst [vmem:[%s5076 + $0xd8] sm:$0xff] %v5457
  %5490 = vst [vmem:[%s5076 + $0xe0] sm:$0xff] %v5458
  %5491 = vst [vmem:[%s5076 + $0xe8] sm:$0xff] %v5459
  %5492 = vst [vmem:[%s5076 + $0xf0] sm:$0xff] %v5460
  %5493 = vst [vmem:[%s5076 + $0xf8] sm:$0xff] %v5461
  %v5494 = vld [vmem:[%s5076] sm:$0xff]
  %v5495 = vld [vmem:[%s5076 + $0x8] sm:$0xff]
  %v5496 = vld [vmem:[%s5076 + $0x10] sm:$0xff]
  %v5497 = vld [vmem:[%s5076 + $0x18] sm:$0xff]
  %v5498 = vld [vmem:[%s5076 + $0x20] sm:$0xff]
  %v5499 = vld [vmem:[%s5076 + $0x28] sm:$0xff]
  %v5500 = vld [vmem:[%s5076 + $0x30] sm:$0xff]
  %v5501 = vld [vmem:[%s5076 + $0x38] sm:$0xff]
  %v5502 = vld [vmem:[%s5076 + $0x40] sm:$0xff]
  %v5503 = vld [vmem:[%s5076 + $0x48] sm:$0xff]
  %v5504 = vld [vmem:[%s5076 + $0x50] sm:$0xff]
  %v5505 = vld [vmem:[%s5076 + $0x58] sm:$0xff]
  %v5506 = vld [vmem:[%s5076 + $0x60] sm:$0xff]
  %v5507 = vld [vmem:[%s5076 + $0x68] sm:$0xff]
  %v5508 = vld [vmem:[%s5076 + $0x70] sm:$0xff]
  %v5509 = vld [vmem:[%s5076 + $0x78] sm:$0xff]
  %v5510 = vld [vmem:[%s5076 + $0x80] sm:$0xff]
  %v5511 = vld [vmem:[%s5076 + $0x88] sm:$0xff]
  %v5512 = vld [vmem:[%s5076 + $0x90] sm:$0xff]
  %v5513 = vld [vmem:[%s5076 + $0x98] sm:$0xff]
  %v5514 = vld [vmem:[%s5076 + $0xa0] sm:$0xff]
  %v5515 = vld [vmem:[%s5076 + $0xa8] sm:$0xff]
  %v5516 = vld [vmem:[%s5076 + $0xb0] sm:$0xff]
  %v5517 = vld [vmem:[%s5076 + $0xb8] sm:$0xff]
  %v5518 = vld [vmem:[%s5076 + $0xc0] sm:$0xff]
  %v5519 = vld [vmem:[%s5076 + $0xc8] sm:$0xff]
  %v5520 = vld [vmem:[%s5076 + $0xd0] sm:$0xff]
  %v5521 = vld [vmem:[%s5076 + $0xd8] sm:$0xff]
  %v5522 = vld [vmem:[%s5076 + $0xe0] sm:$0xff]
  %v5523 = vld [vmem:[%s5076 + $0xe8] sm:$0xff]
  %v5524 = vld [vmem:[%s5076 + $0xf0] sm:$0xff]
  %v5525 = vld [vmem:[%s5076 + $0xf8] sm:$0xff]
  %v5526 = vld [vmem:[%s1613] sm:$0xf]
  %v5527 = vld [vmem:[%s1613 + $0x4] sm:$0xf]
  %v5528 = vld [vmem:[%s1613 + $0x8] sm:$0xf]
  %v5529 = vld [vmem:[%s1613 + $0xc] sm:$0xf]
  %v5530 = vld [vmem:[%s1613 + $0x10] sm:$0xf]
  %v5531 = vld [vmem:[%s1613 + $0x14] sm:$0xf]
  %v5532 = vld [vmem:[%s1613 + $0x18] sm:$0xf]
  %v5533 = vld [vmem:[%s1613 + $0x1c] sm:$0xf]
  %v5534 = vld [vmem:[%s1613 + $0x20] sm:$0xf]
  %v5535 = vld [vmem:[%s1613 + $0x24] sm:$0xf]
  %v5536 = vld [vmem:[%s1613 + $0x28] sm:$0xf]
  %v5537 = vld [vmem:[%s1613 + $0x2c] sm:$0xf]
  %v5538 = vld [vmem:[%s1613 + $0x30] sm:$0xf]
  %v5539 = vld [vmem:[%s1613 + $0x34] sm:$0xf]
  %v5540 = vld [vmem:[%s1613 + $0x38] sm:$0xf]
  %v5541 = vld [vmem:[%s1613 + $0x3c] sm:$0xf]
  %v5544 = vunpack.c.l.b16 %v5072
  %v5545 = vunpack.c.l.b16 %v5073
  %v5546 = vpack.c.b16 %v5545, %v5544
  %v5564 = vunpack.c.l.b16 %v5526
  %v5565 = vunpack.c.l.b16 %v5527
  %v5566 = vunpack.c.l.b16 %v5528
  %v5567 = vunpack.c.l.b16 %v5529
  %v5568 = vunpack.c.l.b16 %v5530
  %v5569 = vunpack.c.l.b16 %v5531
  %v5570 = vunpack.c.l.b16 %v5532
  %v5571 = vunpack.c.l.b16 %v5533
  %v5572 = vunpack.c.l.b16 %v5534
  %v5573 = vunpack.c.l.b16 %v5535
  %v5574 = vunpack.c.l.b16 %v5536
  %v5575 = vunpack.c.l.b16 %v5537
  %v5576 = vunpack.c.l.b16 %v5538
  %v5577 = vunpack.c.l.b16 %v5539
  %v5578 = vunpack.c.l.b16 %v5540
  %v5579 = vunpack.c.l.b16 %v5541
  %v5580 = vpack.c.b16 %v5565, %v5564
  %v5581 = vpack.c.b16 %v5567, %v5566
  %v5582 = vpack.c.b16 %v5569, %v5568
  %v5583 = vpack.c.b16 %v5571, %v5570
  %v5584 = vpack.c.b16 %v5573, %v5572
  %v5585 = vpack.c.b16 %v5575, %v5574
  %v5586 = vpack.c.b16 %v5577, %v5576
  %v5587 = vpack.c.b16 %v5579, %v5578
  %5596 = vmatprep.subr.bf16.mxu0 0
  %5597 = vmatpush1.bf16.msra.mxu0 %v5580
  %5598 = vmatprep.subr.bf16.mxu0 0
  %5599 = vmatpush1.bf16.msra.mxu0 %v5581
  %5600 = vmatprep.subr.bf16.mxu0 0
  %5601 = vmatpush1.bf16.msra.mxu0 %v5582
  %5602 = vmatprep.subr.bf16.mxu0 0
  %5603 = vmatpush1.bf16.msra.mxu0 %v5583
  %5604 = vmatprep.subr.bf16.mxu0 0
  %5605 = vmatpush1.bf16.msra.mxu0 %v5584
  %5606 = vmatprep.subr.bf16.mxu0 0
  %5607 = vmatpush1.bf16.msra.mxu0 %v5585
  %5608 = vmatprep.subr.bf16.mxu0 0
  %5609 = vmatpush1.bf16.msra.mxu0 %v5586
  %5610 = vmatprep.subr.bf16.mxu0 0
  %5611 = vmatpush1.bf16.msra.mxu0 %v5587
  %5612 = vmatprep.subr.bf16.mxu0 0
  %5613 = vmatpush1.bf16.msra.mxu0 0
  %5614 = vmatprep.subr.bf16.mxu0 0
  %5615 = vmatpush1.bf16.msra.mxu0 0
  %5616 = vmatprep.subr.bf16.mxu0 0
  %5617 = vmatpush1.bf16.msra.mxu0 0
  %5618 = vmatprep.subr.bf16.mxu0 0
  %5619 = vmatpush1.bf16.msra.mxu0 0
  %5620 = vmatprep.subr.bf16.mxu0 0
  %5621 = vmatpush1.bf16.msra.mxu0 0
  %5622 = vmatprep.subr.bf16.mxu0 0
  %5623 = vmatpush1.bf16.msra.mxu0 0
  %5624 = vmatprep.subr.bf16.mxu0 0
  %5625 = vmatpush1.bf16.msra.mxu0 0
  %5626 = vmatprep.subr.bf16.mxu0 0
  %5627 = vmatpush1.bf16.msra.mxu0 0
  %5628 = vmatprep.mubr.bf16.mxu0 0
  %5629 = vmatmul.mubr.bf16.gmra.mrb[0].mxu0 %v5190
  %v5630 = vpop.f32.mrb[0].mxu0
  %v5631 = vadd.f32 0.0, %v5630
  %v5632 = vpop.f32.mrb[0].mxu0
  %v5633 = vpop.f32.mrb[0].mxu0
  %v5634 = vadd.f32 0.0, %v5633
  %v5635 = vpop.f32.mrb[0].mxu0
  %5636 = vmatprep.mubr.bf16.mxu0 0
  %5637 = vmatmul.mubr.bf16.gmra.mrb[0].mxu0 %v5191
  %v5638 = vpop.f32.mrb[0].mxu0
  %v5639 = vadd.f32 0.0, %v5638
  %v5640 = vpop.f32.mrb[0].mxu0
  %v5641 = vpop.f32.mrb[0].mxu0
  %v5642 = vadd.f32 0.0, %v5641
  %v5643 = vpop.f32.mrb[0].mxu0
  %5644 = vmatprep.mubr.bf16.mxu0 0
  %5645 = vmatmul.mubr.bf16.gmra.mrb[0].mxu0 %v5192
  %v5646 = vpop.f32.mrb[0].mxu0
  %v5647 = vadd.f32 0.0, %v5646
  %v5648 = vpop.f32.mrb[0].mxu0
  %v5649 = vpop.f32.mrb[0].mxu0
  %v5650 = vadd.f32 0.0, %v5649
  %v5651 = vpop.f32.mrb[0].mxu0
  %5652 = vmatprep.mubr.bf16.mxu0 0
  %5653 = vmatmul.mubr.bf16.gmra.mrb[0].mxu0 %v5193
  %v5654 = vpop.f32.mrb[0].mxu0
  %v5655 = vadd.f32 0.0, %v5654
  %v5656 = vpop.f32.mrb[0].mxu0
  %v5657 = vpop.f32.mrb[0].mxu0
  %v5658 = vadd.f32 0.0, %v5657
  %v5659 = vpop.f32.mrb[0].mxu0
  %5660 = vmatprep.mubr.bf16.mxu0 0
  %5661 = vmatmul.mubr.bf16.gmra.mrb[0].mxu0 %v5194
  %v5662 = vpop.f32.mrb[0].mxu0
  %v5663 = vadd.f32 0.0, %v5662
  %v5664 = vpop.f32.mrb[0].mxu0
  %v5665 = vpop.f32.mrb[0].mxu0
  %v5666 = vadd.f32 0.0, %v5665
  %v5667 = vpop.f32.mrb[0].mxu0
  %5668 = vmatprep.mubr.bf16.mxu0 0
  %5669 = vmatmul.mubr.bf16.gmra.mrb[0].mxu0 %v5195
  %v5670 = vpop.f32.mrb[0].mxu0
  %v5671 = vadd.f32 0.0, %v5670
  %v5672 = vpop.f32.mrb[0].mxu0
  %v5673 = vpop.f32.mrb[0].mxu0
  %v5674 = vadd.f32 0.0, %v5673
  %v5675 = vpop.f32.mrb[0].mxu0
  %5676 = vmatprep.mubr.bf16.mxu0 0
  %5677 = vmatmul.mubr.bf16.gmra.mrb[0].mxu0 %v5196
  %v5678 = vpop.f32.mrb[0].mxu0
  %v5679 = vadd.f32 0.0, %v5678
  %v5680 = vpop.f32.mrb[0].mxu0
  %v5681 = vpop.f32.mrb[0].mxu0
  %v5682 = vadd.f32 0.0, %v5681
  %v5683 = vpop.f32.mrb[0].mxu0
  %5684 = vmatprep.mubr.bf16.mxu0 0
  %5685 = vmatmul.mubr.bf16.gmra.mrb[0].mxu0 %v5197
  %v5686 = vpop.f32.mrb[0].mxu0
  %v5687 = vadd.f32 0.0, %v5686
  %v5688 = vpop.f32.mrb[0].mxu0
  %v5689 = vpop.f32.mrb[0].mxu0
  %v5690 = vadd.f32 0.0, %v5689
  %v5691 = vpop.f32.mrb[0].mxu0
  %5692 = vmatprep.mubr.bf16.mxu0 0
  %5693 = vmatmul.mubr.bf16.gmra.mrb[0].mxu0 %v5198
  %v5694 = vpop.f32.mrb[0].mxu0
  %v5695 = vadd.f32 0.0, %v5694
  %v5696 = vpop.f32.mrb[0].mxu0
  %v5697 = vpop.f32.mrb[0].mxu0
  %v5698 = vadd.f32 0.0, %v5697
  %v5699 = vpop.f32.mrb[0].mxu0
  %5700 = vmatprep.mubr.bf16.mxu0 0
  %5701 = vmatmul.mubr.bf16.gmra.mrb[0].mxu0 %v5199
  %v5702 = vpop.f32.mrb[0].mxu0
  %v5703 = vadd.f32 0.0, %v5702
  %v5704 = vpop.f32.mrb[0].mxu0
  %v5705 = vpop.f32.mrb[0].mxu0
  %v5706 = vadd.f32 0.0, %v5705
  %v5707 = vpop.f32.mrb[0].mxu0
  %5708 = vmatprep.mubr.bf16.mxu0 0
  %5709 = vmatmul.mubr.bf16.gmra.mrb[0].mxu0 %v5200
  %v5710 = vpop.f32.mrb[0].mxu0
  %v5711 = vadd.f32 0.0, %v5710
  %v5712 = vpop.f32.mrb[0].mxu0
  %v5713 = vpop.f32.mrb[0].mxu0
  %v5714 = vadd.f32 0.0, %v5713
  %v5715 = vpop.f32.mrb[0].mxu0
  %5716 = vmatprep.mubr.bf16.mxu0 0
  %5717 = vmatmul.mubr.bf16.gmra.mrb[0].mxu0 %v5201
  %v5718 = vpop.f32.mrb[0].mxu0
  %v5719 = vadd.f32 0.0, %v5718
  %v5720 = vpop.f32.mrb[0].mxu0
  %v5721 = vpop.f32.mrb[0].mxu0
  %v5722 = vadd.f32 0.0, %v5721
  %v5723 = vpop.f32.mrb[0].mxu0
  %5724 = vmatprep.mubr.bf16.mxu0 0
  %5725 = vmatmul.mubr.bf16.gmra.mrb[0].mxu0 %v5202
  %v5726 = vpop.f32.mrb[0].mxu0
  %v5727 = vadd.f32 0.0, %v5726
  %v5728 = vpop.f32.mrb[0].mxu0
  %v5729 = vpop.f32.mrb[0].mxu0
  %v5730 = vadd.f32 0.0, %v5729
  %v5731 = vpop.f32.mrb[0].mxu0
  %5732 = vmatprep.mubr.bf16.mxu0 0
  %5733 = vmatmul.mubr.bf16.gmra.mrb[0].mxu0 %v5203
  %v5734 = vpop.f32.mrb[0].mxu0
  %v5735 = vadd.f32 0.0, %v5734
  %v5736 = vpop.f32.mrb[0].mxu0
  %v5737 = vpop.f32.mrb[0].mxu0
  %v5738 = vadd.f32 0.0, %v5737
  %v5739 = vpop.f32.mrb[0].mxu0
  %5740 = vmatprep.mubr.bf16.mxu0 0
  %5741 = vmatmul.mubr.bf16.gmra.mrb[0].mxu0 %v5204
  %v5742 = vpop.f32.mrb[0].mxu0
  %v5743 = vadd.f32 0.0, %v5742
  %v5744 = vpop.f32.mrb[0].mxu0
  %v5745 = vpop.f32.mrb[0].mxu0
  %v5746 = vadd.f32 0.0, %v5745
  %v5747 = vpop.f32.mrb[0].mxu0
  %5748 = vmatprep.mubr.bf16.mxu0 0
  %5749 = vmatmul.mubr.bf16.gmra.mrb[0].mxu0 %v5546
  %v5750 = vpop.f32.mrb[0].mxu0
  %v5751 = vadd.f32 0.0, %v5750
  %v5752 = vpop.f32.mrb[0].mxu0
  %v5753 = vpop.f32.mrb[0].mxu0
  %v5754 = vadd.f32 0.0, %v5753
  %v5755 = vpop.f32.mrb[0].mxu0
  %5756 = vdwg.mxu0
  %v5757 = vadd.f32 %v5494, %v5631
  %v5758 = vadd.f32 %v5495, %v5634
  %v5759 = vadd.f32 %v5496, %v5639
  %v5760 = vadd.f32 %v5497, %v5642
  %v5761 = vadd.f32 %v5498, %v5647
  %v5762 = vadd.f32 %v5499, %v5650
  %v5763 = vadd.f32 %v5500, %v5655
  %v5764 = vadd.f32 %v5501, %v5658
  %v5765 = vadd.f32 %v5502, %v5663
  %v5766 = vadd.f32 %v5503, %v5666
  %v5767 = vadd.f32 %v5504, %v5671
  %v5768 = vadd.f32 %v5505, %v5674
  %v5769 = vadd.f32 %v5506, %v5679
  %v5770 = vadd.f32 %v5507, %v5682
  %v5771 = vadd.f32 %v5508, %v5687
  %v5772 = vadd.f32 %v5509, %v5690
  %v5773 = vadd.f32 %v5510, %v5695
  %v5774 = vadd.f32 %v5511, %v5698
  %v5775 = vadd.f32 %v5512, %v5703
  %v5776 = vadd.f32 %v5513, %v5706
  %v5777 = vadd.f32 %v5514, %v5711
  %v5778 = vadd.f32 %v5515, %v5714
  %v5779 = vadd.f32 %v5516, %v5719
  %v5780 = vadd.f32 %v5517, %v5722
  %v5781 = vadd.f32 %v5518, %v5727
  %v5782 = vadd.f32 %v5519, %v5730
  %v5783 = vadd.f32 %v5520, %v5735
  %v5784 = vadd.f32 %v5521, %v5738
  %v5785 = vadd.f32 %v5522, %v5743
  %v5786 = vadd.f32 %v5523, %v5746
  %v5787 = vadd.f32 %v5524, %v5751
  %v5788 = vadd.f32 %v5525, %v5754
  %5789 = vst [vmem:[%s5076] sm:$0xff] %v5757
  %5790 = vst [vmem:[%s5076 + $0x8] sm:$0xff] %v5758
  %5791 = vst [vmem:[%s5076 + $0x10] sm:$0xff] %v5759
  %5792 = vst [vmem:[%s5076 + $0x18] sm:$0xff] %v5760
  %5793 = vst [vmem:[%s5076 + $0x20] sm:$0xff] %v5761
  %5794 = vst [vmem:[%s5076 + $0x28] sm:$0xff] %v5762
  %5795 = vst [vmem:[%s5076 + $0x30] sm:$0xff] %v5763
  %5796 = vst [vmem:[%s5076 + $0x38] sm:$0xff] %v5764
  %5797 = vst [vmem:[%s5076 + $0x40] sm:$0xff] %v5765
  %5798 = vst [vmem:[%s5076 + $0x48] sm:$0xff] %v5766
  %5799 = vst [vmem:[%s5076 + $0x50] sm:$0xff] %v5767
  %5800 = vst [vmem:[%s5076 + $0x58] sm:$0xff] %v5768
  %5801 = vst [vmem:[%s5076 + $0x60] sm:$0xff] %v5769
  %5802 = vst [vmem:[%s5076 + $0x68] sm:$0xff] %v5770
  %5803 = vst [vmem:[%s5076 + $0x70] sm:$0xff] %v5771
  %5804 = vst [vmem:[%s5076 + $0x78] sm:$0xff] %v5772
  %5805 = vst [vmem:[%s5076 + $0x80] sm:$0xff] %v5773
  %5806 = vst [vmem:[%s5076 + $0x88] sm:$0xff] %v5774
  %5807 = vst [vmem:[%s5076 + $0x90] sm:$0xff] %v5775
  %5808 = vst [vmem:[%s5076 + $0x98] sm:$0xff] %v5776
  %5809 = vst [vmem:[%s5076 + $0xa0] sm:$0xff] %v5777
  %5810 = vst [vmem:[%s5076 + $0xa8] sm:$0xff] %v5778
  %5811 = vst [vmem:[%s5076 + $0xb0] sm:$0xff] %v5779
  %5812 = vst [vmem:[%s5076 + $0xb8] sm:$0xff] %v5780
  %5813 = vst [vmem:[%s5076 + $0xc0] sm:$0xff] %v5781
  %5814 = vst [vmem:[%s5076 + $0xc8] sm:$0xff] %v5782
  %5815 = vst [vmem:[%s5076 + $0xd0] sm:$0xff] %v5783
  %5816 = vst [vmem:[%s5076 + $0xd8] sm:$0xff] %v5784
  %5817 = vst [vmem:[%s5076 + $0xe0] sm:$0xff] %v5785
  %5818 = vst [vmem:[%s5076 + $0xe8] sm:$0xff] %v5786
  %5819 = vst [vmem:[%s5076 + $0xf0] sm:$0xff] %v5787
  %5820 = vst [vmem:[%s5076 + $0xf8] sm:$0xff] %v5788
  %v5821 = vld [vmem:[%s5076] sm:$0xff]
  %v5822 = vld [vmem:[%s5076 + $0x8] sm:$0xff]
  %v5823 = vld [vmem:[%s5076 + $0x10] sm:$0xff]
  %v5824 = vld [vmem:[%s5076 + $0x18] sm:$0xff]
  %v5825 = vld [vmem:[%s5076 + $0x20] sm:$0xff]
  %v5826 = vld [vmem:[%s5076 + $0x28] sm:$0xff]
  %v5827 = vld [vmem:[%s5076 + $0x30] sm:$0xff]
  %v5828 = vld [vmem:[%s5076 + $0x38] sm:$0xff]
  %v5829 = vld [vmem:[%s5076 + $0x40] sm:$0xff]
  %v5830 = vld [vmem:[%s5076 + $0x48] sm:$0xff]
  %v5831 = vld [vmem:[%s5076 + $0x50] sm:$0xff]
  %v5832 = vld [vmem:[%s5076 + $0x58] sm:$0xff]
  %v5833 = vld [vmem:[%s5076 + $0x60] sm:$0xff]
  %v5834 = vld [vmem:[%s5076 + $0x68] sm:$0xff]
  %v5835 = vld [vmem:[%s5076 + $0x70] sm:$0xff]
  %v5836 = vld [vmem:[%s5076 + $0x78] sm:$0xff]
  %v5837 = vld [vmem:[%s5076 + $0x80] sm:$0xff]
  %v5838 = vld [vmem:[%s5076 + $0x88] sm:$0xff]
  %v5839 = vld [vmem:[%s5076 + $0x90] sm:$0xff]
  %v5840 = vld [vmem:[%s5076 + $0x98] sm:$0xff]
  %v5841 = vld [vmem:[%s5076 + $0xa0] sm:$0xff]
  %v5842 = vld [vmem:[%s5076 + $0xa8] sm:$0xff]
  %v5843 = vld [vmem:[%s5076 + $0xb0] sm:$0xff]
  %v5844 = vld [vmem:[%s5076 + $0xb8] sm:$0xff]
  %v5845 = vld [vmem:[%s5076 + $0xc0] sm:$0xff]
  %v5846 = vld [vmem:[%s5076 + $0xc8] sm:$0xff]
  %v5847 = vld [vmem:[%s5076 + $0xd0] sm:$0xff]
  %v5848 = vld [vmem:[%s5076 + $0xd8] sm:$0xff]
  %v5849 = vld [vmem:[%s5076 + $0xe0] sm:$0xff]
  %v5850 = vld [vmem:[%s5076 + $0xe8] sm:$0xff]
  %v5851 = vld [vmem:[%s5076 + $0xf0] sm:$0xff]
  %v5852 = vld [vmem:[%s5076 + $0xf8] sm:$0xff]
  %v5853 = vld [vmem:[%s1941] sm:$0xf]
  %v5854 = vld [vmem:[%s1941 + $0x4] sm:$0xf]
  %v5855 = vld [vmem:[%s1941 + $0x8] sm:$0xf]
  %v5856 = vld [vmem:[%s1941 + $0xc] sm:$0xf]
  %v5857 = vld [vmem:[%s1941 + $0x10] sm:$0xf]
  %v5858 = vld [vmem:[%s1941 + $0x14] sm:$0xf]
  %v5859 = vld [vmem:[%s1941 + $0x18] sm:$0xf]
  %v5860 = vld [vmem:[%s1941 + $0x1c] sm:$0xf]
  %v5861 = vld [vmem:[%s1941 + $0x20] sm:$0xf]
  %v5862 = vld [vmem:[%s1941 + $0x24] sm:$0xf]
  %v5863 = vld [vmem:[%s1941 + $0x28] sm:$0xf]
  %v5864 = vld [vmem:[%s1941 + $0x2c] sm:$0xf]
  %v5865 = vld [vmem:[%s1941 + $0x30] sm:$0xf]
  %v5866 = vld [vmem:[%s1941 + $0x34] sm:$0xf]
  %v5867 = vld [vmem:[%s1941 + $0x38] sm:$0xf]
  %v5868 = vld [vmem:[%s1941 + $0x3c] sm:$0xf]
  %v5871 = vunpack.c.l.b16 %v5074
  %v5872 = vunpack.c.l.b16 %v5075
  %v5873 = vpack.c.b16 %v5872, %v5871
  %v5891 = vunpack.c.l.b16 %v5853
  %v5892 = vunpack.c.l.b16 %v5854
  %v5893 = vunpack.c.l.b16 %v5855
  %v5894 = vunpack.c.l.b16 %v5856
  %v5895 = vunpack.c.l.b16 %v5857
  %v5896 = vunpack.c.l.b16 %v5858
  %v5897 = vunpack.c.l.b16 %v5859
  %v5898 = vunpack.c.l.b16 %v5860
  %v5899 = vunpack.c.l.b16 %v5861
  %v5900 = vunpack.c.l.b16 %v5862
  %v5901 = vunpack.c.l.b16 %v5863
  %v5902 = vunpack.c.l.b16 %v5864
  %v5903 = vunpack.c.l.b16 %v5865
  %v5904 = vunpack.c.l.b16 %v5866
  %v5905 = vunpack.c.l.b16 %v5867
  %v5906 = vunpack.c.l.b16 %v5868
  %v5907 = vpack.c.b16 %v5892, %v5891
  %v5908 = vpack.c.b16 %v5894, %v5893
  %v5909 = vpack.c.b16 %v5896, %v5895
  %v5910 = vpack.c.b16 %v5898, %v5897
  %v5911 = vpack.c.b16 %v5900, %v5899
  %v5912 = vpack.c.b16 %v5902, %v5901
  %v5913 = vpack.c.b16 %v5904, %v5903
  %v5914 = vpack.c.b16 %v5906, %v5905
  %5923 = vmatprep.subr.bf16.mxu0 0
  %5924 = vmatpush1.bf16.msra.mxu0 %v5907
  %5925 = vmatprep.subr.bf16.mxu0 0
  %5926 = vmatpush1.bf16.msra.mxu0 %v5908
  %5927 = vmatprep.subr.bf16.mxu0 0
  %5928 = vmatpush1.bf16.msra.mxu0 %v5909
  %5929 = vmatprep.subr.bf16.mxu0 0
  %5930 = vmatpush1.bf16.msra.mxu0 %v5910
  %5931 = vmatprep.subr.bf16.mxu0 0
  %5932 = vmatpush1.bf16.msra.mxu0 %v5911
  %5933 = vmatprep.subr.bf16.mxu0 0
  %5934 = vmatpush1.bf16.msra.mxu0 %v5912
  %5935 = vmatprep.subr.bf16.mxu0 0
  %5936 = vmatpush1.bf16.msra.mxu0 %v5913
  %5937 = vmatprep.subr.bf16.mxu0 0
  %5938 = vmatpush1.bf16.msra.mxu0 %v5914
  %5939 = vmatprep.subr.bf16.mxu0 0
  %5940 = vmatpush1.bf16.msra.mxu0 0
  %5941 = vmatprep.subr.bf16.mxu0 0
  %5942 = vmatpush1.bf16.msra.mxu0 0
  %5943 = vmatprep.subr.bf16.mxu0 0
  %5944 = vmatpush1.bf16.msra.mxu0 0
  %5945 = vmatprep.subr.bf16.mxu0 0
  %5946 = vmatpush1.bf16.msra.mxu0 0
  %5947 = vmatprep.subr.bf16.mxu0 0
  %5948 = vmatpush1.bf16.msra.mxu0 0
  %5949 = vmatprep.subr.bf16.mxu0 0
  %5950 = vmatpush1.bf16.msra.mxu0 0
  %5951 = vmatprep.subr.bf16.mxu0 0
  %5952 = vmatpush1.bf16.msra.mxu0 0
  %5953 = vmatprep.subr.bf16.mxu0 0
  %5954 = vmatpush1.bf16.msra.mxu0 0
  %5955 = vmatprep.mubr.bf16.mxu0 0
  %5956 = vmatmul.mubr.bf16.gmra.mrb[0].mxu0 %v5191
  %v5957 = vpop.f32.mrb[0].mxu0
  %v5958 = vadd.f32 0.0, %v5957
  %v5959 = vpop.f32.mrb[0].mxu0
  %v5960 = vpop.f32.mrb[0].mxu0
  %v5961 = vadd.f32 0.0, %v5960
  %v5962 = vpop.f32.mrb[0].mxu0
  %5963 = vmatprep.mubr.bf16.mxu0 0
  %5964 = vmatmul.mubr.bf16.gmra.mrb[0].mxu0 %v5192
  %v5965 = vpop.f32.mrb[0].mxu0
  %v5966 = vadd.f32 0.0, %v5965
  %v5967 = vpop.f32.mrb[0].mxu0
  %v5968 = vpop.f32.mrb[0].mxu0
  %v5969 = vadd.f32 0.0, %v5968
  %v5970 = vpop.f32.mrb[0].mxu0
  %5971 = vmatprep.mubr.bf16.mxu0 0
  %5972 = vmatmul.mubr.bf16.gmra.mrb[0].mxu0 %v5193
  %v5973 = vpop.f32.mrb[0].mxu0
  %v5974 = vadd.f32 0.0, %v5973
  %v5975 = vpop.f32.mrb[0].mxu0
  %v5976 = vpop.f32.mrb[0].mxu0
  %v5977 = vadd.f32 0.0, %v5976
  %v5978 = vpop.f32.mrb[0].mxu0
  %5979 = vmatprep.mubr.bf16.mxu0 0
  %5980 = vmatmul.mubr.bf16.gmra.mrb[0].mxu0 %v5194
  %v5981 = vpop.f32.mrb[0].mxu0
  %v5982 = vadd.f32 0.0, %v5981
  %v5983 = vpop.f32.mrb[0].mxu0
  %v5984 = vpop.f32.mrb[0].mxu0
  %v5985 = vadd.f32 0.0, %v5984
  %v5986 = vpop.f32.mrb[0].mxu0
  %5987 = vmatprep.mubr.bf16.mxu0 0
  %5988 = vmatmul.mubr.bf16.gmra.mrb[0].mxu0 %v5195
  %v5989 = vpop.f32.mrb[0].mxu0
  %v5990 = vadd.f32 0.0, %v5989
  %v5991 = vpop.f32.mrb[0].mxu0
  %v5992 = vpop.f32.mrb[0].mxu0
  %v5993 = vadd.f32 0.0, %v5992
  %v5994 = vpop.f32.mrb[0].mxu0
  %5995 = vmatprep.mubr.bf16.mxu0 0
  %5996 = vmatmul.mubr.bf16.gmra.mrb[0].mxu0 %v5196
  %v5997 = vpop.f32.mrb[0].mxu0
  %v5998 = vadd.f32 0.0, %v5997
  %v5999 = vpop.f32.mrb[0].mxu0
  %v6000 = vpop.f32.mrb[0].mxu0
  %v6001 = vadd.f32 0.0, %v6000
  %v6002 = vpop.f32.mrb[0].mxu0
  %6003 = vmatprep.mubr.bf16.mxu0 0
  %6004 = vmatmul.mubr.bf16.gmra.mrb[0].mxu0 %v5197
  %v6005 = vpop.f32.mrb[0].mxu0
  %v6006 = vadd.f32 0.0, %v6005
  %v6007 = vpop.f32.mrb[0].mxu0
  %v6008 = vpop.f32.mrb[0].mxu0
  %v6009 = vadd.f32 0.0, %v6008
  %v6010 = vpop.f32.mrb[0].mxu0
  %6011 = vmatprep.mubr.bf16.mxu0 0
  %6012 = vmatmul.mubr.bf16.gmra.mrb[0].mxu0 %v5198
  %v6013 = vpop.f32.mrb[0].mxu0
  %v6014 = vadd.f32 0.0, %v6013
  %v6015 = vpop.f32.mrb[0].mxu0
  %v6016 = vpop.f32.mrb[0].mxu0
  %v6017 = vadd.f32 0.0, %v6016
  %v6018 = vpop.f32.mrb[0].mxu0
  %6019 = vmatprep.mubr.bf16.mxu0 0
  %6020 = vmatmul.mubr.bf16.gmra.mrb[0].mxu0 %v5199
  %v6021 = vpop.f32.mrb[0].mxu0
  %v6022 = vadd.f32 0.0, %v6021
  %v6023 = vpop.f32.mrb[0].mxu0
  %v6024 = vpop.f32.mrb[0].mxu0
  %v6025 = vadd.f32 0.0, %v6024
  %v6026 = vpop.f32.mrb[0].mxu0
  %6027 = vmatprep.mubr.bf16.mxu0 0
  %6028 = vmatmul.mubr.bf16.gmra.mrb[0].mxu0 %v5200
  %v6029 = vpop.f32.mrb[0].mxu0
  %v6030 = vadd.f32 0.0, %v6029
  %v6031 = vpop.f32.mrb[0].mxu0
  %v6032 = vpop.f32.mrb[0].mxu0
  %v6033 = vadd.f32 0.0, %v6032
  %v6034 = vpop.f32.mrb[0].mxu0
  %6035 = vmatprep.mubr.bf16.mxu0 0
  %6036 = vmatmul.mubr.bf16.gmra.mrb[0].mxu0 %v5201
  %v6037 = vpop.f32.mrb[0].mxu0
  %v6038 = vadd.f32 0.0, %v6037
  %v6039 = vpop.f32.mrb[0].mxu0
  %v6040 = vpop.f32.mrb[0].mxu0
  %v6041 = vadd.f32 0.0, %v6040
  %v6042 = vpop.f32.mrb[0].mxu0
  %6043 = vmatprep.mubr.bf16.mxu0 0
  %6044 = vmatmul.mubr.bf16.gmra.mrb[0].mxu0 %v5202
  %v6045 = vpop.f32.mrb[0].mxu0
  %v6046 = vadd.f32 0.0, %v6045
  %v6047 = vpop.f32.mrb[0].mxu0
  %v6048 = vpop.f32.mrb[0].mxu0
  %v6049 = vadd.f32 0.0, %v6048
  %v6050 = vpop.f32.mrb[0].mxu0
  %6051 = vmatprep.mubr.bf16.mxu0 0
  %6052 = vmatmul.mubr.bf16.gmra.mrb[0].mxu0 %v5203
  %v6053 = vpop.f32.mrb[0].mxu0
  %v6054 = vadd.f32 0.0, %v6053
  %v6055 = vpop.f32.mrb[0].mxu0
  %v6056 = vpop.f32.mrb[0].mxu0
  %v6057 = vadd.f32 0.0, %v6056
  %v6058 = vpop.f32.mrb[0].mxu0
  %6059 = vmatprep.mubr.bf16.mxu0 0
  %6060 = vmatmul.mubr.bf16.gmra.mrb[0].mxu0 %v5204
  %v6061 = vpop.f32.mrb[0].mxu0
  %v6062 = vadd.f32 0.0, %v6061
  %v6063 = vpop.f32.mrb[0].mxu0
  %v6064 = vpop.f32.mrb[0].mxu0
  %v6065 = vadd.f32 0.0, %v6064
  %v6066 = vpop.f32.mrb[0].mxu0
  %6067 = vmatprep.mubr.bf16.mxu0 0
  %6068 = vmatmul.mubr.bf16.gmra.mrb[0].mxu0 %v5546
  %v6069 = vpop.f32.mrb[0].mxu0
  %v6070 = vadd.f32 0.0, %v6069
  %v6071 = vpop.f32.mrb[0].mxu0
  %v6072 = vpop.f32.mrb[0].mxu0
  %v6073 = vadd.f32 0.0, %v6072
  %v6074 = vpop.f32.mrb[0].mxu0
  %6075 = vmatprep.mubr.bf16.mxu0 0
  %6076 = vmatmul.mubr.bf16.gmra.mrb[0].mxu0 %v5873
  %v6077 = vpop.f32.mrb[0].mxu0
  %v6078 = vadd.f32 0.0, %v6077
  %v6079 = vpop.f32.mrb[0].mxu0
  %v6080 = vpop.f32.mrb[0].mxu0
  %v6081 = vadd.f32 0.0, %v6080
  %v6082 = vpop.f32.mrb[0].mxu0
  %6083 = vdwg.mxu0
  %v6084 = vadd.f32 %v5821, %v5958
  %v6085 = vadd.f32 %v5822, %v5961
  %v6086 = vadd.f32 %v5823, %v5966
  %v6087 = vadd.f32 %v5824, %v5969
  %v6088 = vadd.f32 %v5825, %v5974
  %v6089 = vadd.f32 %v5826, %v5977
  %v6090 = vadd.f32 %v5827, %v5982
  %v6091 = vadd.f32 %v5828, %v5985
  %v6092 = vadd.f32 %v5829, %v5990
  %v6093 = vadd.f32 %v5830, %v5993
  %v6094 = vadd.f32 %v5831, %v5998
  %v6095 = vadd.f32 %v5832, %v6001
  %v6096 = vadd.f32 %v5833, %v6006
  %v6097 = vadd.f32 %v5834, %v6009
  %v6098 = vadd.f32 %v5835, %v6014
  %v6099 = vadd.f32 %v5836, %v6017
  %v6100 = vadd.f32 %v5837, %v6022
  %v6101 = vadd.f32 %v5838, %v6025
  %v6102 = vadd.f32 %v5839, %v6030
  %v6103 = vadd.f32 %v5840, %v6033
  %v6104 = vadd.f32 %v5841, %v6038
  %v6105 = vadd.f32 %v5842, %v6041
  %v6106 = vadd.f32 %v5843, %v6046
  %v6107 = vadd.f32 %v5844, %v6049
  %v6108 = vadd.f32 %v5845, %v6054
  %v6109 = vadd.f32 %v5846, %v6057
  %v6110 = vadd.f32 %v5847, %v6062
  %v6111 = vadd.f32 %v5848, %v6065
  %v6112 = vadd.f32 %v5849, %v6070
  %v6113 = vadd.f32 %v5850, %v6073
  %v6114 = vadd.f32 %v5851, %v6078
  %v6115 = vadd.f32 %v5852, %v6081
  %6116 = vst [vmem:[%s5076] sm:$0xff] %v6084
  %6117 = vst [vmem:[%s5076 + $0x8] sm:$0xff] %v6085
  %6118 = vst [vmem:[%s5076 + $0x10] sm:$0xff] %v6086
  %6119 = vst [vmem:[%s5076 + $0x18] sm:$0xff] %v6087
  %6120 = vst [vmem:[%s5076 + $0x20] sm:$0xff] %v6088
  %6121 = vst [vmem:[%s5076 + $0x28] sm:$0xff] %v6089
  %6122 = vst [vmem:[%s5076 + $0x30] sm:$0xff] %v6090
  %6123 = vst [vmem:[%s5076 + $0x38] sm:$0xff] %v6091
  %6124 = vst [vmem:[%s5076 + $0x40] sm:$0xff] %v6092
  %6125 = vst [vmem:[%s5076 + $0x48] sm:$0xff] %v6093
  %6126 = vst [vmem:[%s5076 + $0x50] sm:$0xff] %v6094
  %6127 = vst [vmem:[%s5076 + $0x58] sm:$0xff] %v6095
  %6128 = vst [vmem:[%s5076 + $0x60] sm:$0xff] %v6096
  %6129 = vst [vmem:[%s5076 + $0x68] sm:$0xff] %v6097
  %6130 = vst [vmem:[%s5076 + $0x70] sm:$0xff] %v6098
  %6131 = vst [vmem:[%s5076 + $0x78] sm:$0xff] %v6099
  %6132 = vst [vmem:[%s5076 + $0x80] sm:$0xff] %v6100
  %6133 = vst [vmem:[%s5076 + $0x88] sm:$0xff] %v6101
  %6134 = vst [vmem:[%s5076 + $0x90] sm:$0xff] %v6102
  %6135 = vst [vmem:[%s5076 + $0x98] sm:$0xff] %v6103
  %6136 = vst [vmem:[%s5076 + $0xa0] sm:$0xff] %v6104
  %6137 = vst [vmem:[%s5076 + $0xa8] sm:$0xff] %v6105
  %6138 = vst [vmem:[%s5076 + $0xb0] sm:$0xff] %v6106
  %6139 = vst [vmem:[%s5076 + $0xb8] sm:$0xff] %v6107
  %6140 = vst [vmem:[%s5076 + $0xc0] sm:$0xff] %v6108
  %6141 = vst [vmem:[%s5076 + $0xc8] sm:$0xff] %v6109
  %6142 = vst [vmem:[%s5076 + $0xd0] sm:$0xff] %v6110
  %6143 = vst [vmem:[%s5076 + $0xd8] sm:$0xff] %v6111
  %6144 = vst [vmem:[%s5076 + $0xe0] sm:$0xff] %v6112
  %6145 = vst [vmem:[%s5076 + $0xe8] sm:$0xff] %v6113
  %6146 = vst [vmem:[%s5076 + $0xf0] sm:$0xff] %v6114
  %6147 = vst [vmem:[%s5076 + $0xf8] sm:$0xff] %v6115
  %v6148 = vld [vmem:[%s5039] sm:$0xf]
  %v6149 = vld [vmem:[%s5039 + $0x4] sm:$0xf]
  %v6150 = vld [vmem:[%s5039 + $0x8] sm:$0x1]
  %v6151 = vld [vmem:[%s5039 + $0xc] sm:$0xf]
  %v6152 = vld [vmem:[%s5039 + $0x10] sm:$0xf]
  %v6153 = vld [vmem:[%s5039 + $0x14] sm:$0x1]
  %v6154 = vld [vmem:[%s5039 + $0x18] sm:$0xf]
  %v6155 = vld [vmem:[%s5039 + $0x1c] sm:$0xf]
  %v6156 = vld [vmem:[%s5039 + $0x20] sm:$0x1]
  %v6157 = vld [vmem:[%s5039 + $0x24] sm:$0xf]
  %v6158 = vld [vmem:[%s5039 + $0x28] sm:$0xf]
  %v6159 = vld [vmem:[%s5039 + $0x2c] sm:$0x1]
  %v6160 = vld [vmem:[%s5039 + $0x30] sm:$0xf]
  %v6161 = vld [vmem:[%s5039 + $0x34] sm:$0xf]
  %v6162 = vld [vmem:[%s5039 + $0x38] sm:$0x1]
  %v6163 = vld [vmem:[%s5039 + $0x3c] sm:$0xf]
  %v6164 = vld [vmem:[%s5039 + $0x40] sm:$0xf]
  %v6165 = vld [vmem:[%s5039 + $0x44] sm:$0x1]
  %v6166 = vld [vmem:[%s5039 + $0x48] sm:$0xf]
  %v6167 = vld [vmem:[%s5039 + $0x4c] sm:$0xf]
  %v6168 = vld [vmem:[%s5039 + $0x50] sm:$0x1]
  %v6169 = vld [vmem:[%s5039 + $0x54] sm:$0xf]
  %v6170 = vld [vmem:[%s5039 + $0x58] sm:$0xf]
  %v6171 = vld [vmem:[%s5039 + $0x5c] sm:$0x1]
  %v6172 = vld [vmem:[%s5039 + $0x60] sm:$0xf]
  %v6173 = vld [vmem:[%s5039 + $0x64] sm:$0xf]
  %v6174 = vld [vmem:[%s5039 + $0x68] sm:$0x1]
  %v6175 = vld [vmem:[%s5039 + $0x6c] sm:$0xf]
  %v6176 = vld [vmem:[%s5039 + $0x70] sm:$0xf]
  %v6177 = vld [vmem:[%s5039 + $0x74] sm:$0x1]
  %v6178 = vld [vmem:[%s5039 + $0x78] sm:$0xf]
  %v6179 = vld [vmem:[%s5039 + $0x7c] sm:$0xf]
  %v6180 = vld [vmem:[%s5039 + $0x80] sm:$0x1]
  %v6181 = vld [vmem:[%s5039 + $0x84] sm:$0xf]
  %v6182 = vld [vmem:[%s5039 + $0x88] sm:$0xf]
  %v6183 = vld [vmem:[%s5039 + $0x8c] sm:$0x1]
  %v6184 = vld [vmem:[%s5039 + $0x90] sm:$0xf]
  %v6185 = vld [vmem:[%s5039 + $0x94] sm:$0xf]
  %v6186 = vld [vmem:[%s5039 + $0x98] sm:$0x1]
  %v6187 = vld [vmem:[%s5039 + $0x9c] sm:$0xf]
  %v6188 = vld [vmem:[%s5039 + $0xa0] sm:$0xf]
  %v6189 = vld [vmem:[%s5039 + $0xa4] sm:$0x1]
  %v6190 = vld [vmem:[%s5039 + $0xa8] sm:$0xf]
  %v6191 = vld [vmem:[%s5039 + $0xac] sm:$0xf]
  %v6192 = vld [vmem:[%s5039 + $0xb0] sm:$0x1]
  %v6193 = vld [vmem:[%s5039 + $0xb4] sm:$0xf]
  %v6194 = vld [vmem:[%s5039 + $0xb8] sm:$0xf]
  %v6195 = vld [vmem:[%s5039 + $0xbc] sm:$0x1]
  %v6196 = vld [vmem:[%s5039 + $0xc0] sm:$0xf]
  %v6197 = vld [vmem:[%s5039 + $0xc4] sm:$0xf]
  %v6198 = vld [vmem:[%s5039 + $0xc8] sm:$0x1]
  %v6199 = vld [vmem:[%s5039 + $0xcc] sm:$0xf]
  %v6200 = vld [vmem:[%s5039 + $0xd0] sm:$0xf]
  %v6201 = vld [vmem:[%s5039 + $0xd4] sm:$0x1]
  %v6203 = vshrl.u32 %v6148, 16
  %v6205 = vrot.slane %v6203, 4
  %v6206 = vshll.u32 %v6148, 16
  %v6208 = vrot.slane %v6206, 5
  %v6209 = vor.u32 %v6205, %v6208
  %v6210 = vrot.slane %v6209, 4
  %v6212 = vshll.u32 %v6149, 16
  %v6214 = vrot.slane %v6212, 5
  %v6215 = vsel %vm2293, %v6210, %v6214
  %v6216 = vshrl.u32 %v6149, 16
  %v6218 = vrot.slane %v6216, 4
  %v6219 = vor.u32 %v6218, %v6214
  %v6220 = vrot.slane %v6219, 4
  %v6222 = vshll.u32 %v6150, 16
  %v6224 = vrot.slane %v6222, 5
  %v6225 = vsel %vm2293, %v6220, %v6224
  %v6227 = vshrl.u32 %v6151, 16
  %v6229 = vrot.slane %v6227, 4
  %v6230 = vshll.u32 %v6151, 16
  %v6232 = vrot.slane %v6230, 5
  %v6233 = vor.u32 %v6229, %v6232
  %v6234 = vrot.slane %v6233, 4
  %v6236 = vshll.u32 %v6152, 16
  %v6238 = vrot.slane %v6236, 5
  %v6239 = vsel %vm2293, %v6234, %v6238
  %v6240 = vshrl.u32 %v6152, 16
  %v6242 = vrot.slane %v6240, 4
  %v6243 = vor.u32 %v6242, %v6238
  %v6244 = vrot.slane %v6243, 4
  %v6246 = vshll.u32 %v6153, 16
  %v6248 = vrot.slane %v6246, 5
  %v6249 = vsel %vm2293, %v6244, %v6248
  %v6251 = vshrl.u32 %v6154, 16
  %v6253 = vrot.slane %v6251, 4
  %v6254 = vshll.u32 %v6154, 16
  %v6256 = vrot.slane %v6254, 5
  %v6257 = vor.u32 %v6253, %v6256
  %v6258 = vrot.slane %v6257, 4
  %v6260 = vshll.u32 %v6155, 16
  %v6262 = vrot.slane %v6260, 5
  %v6263 = vsel %vm2293, %v6258, %v6262
  %v6264 = vshrl.u32 %v6155, 16
  %v6266 = vrot.slane %v6264, 4
  %v6267 = vor.u32 %v6266, %v6262
  %v6268 = vrot.slane %v6267, 4
  %v6270 = vshll.u32 %v6156, 16
  %v6272 = vrot.slane %v6270, 5
  %v6273 = vsel %vm2293, %v6268, %v6272
  %v6275 = vshrl.u32 %v6157, 16
  %v6277 = vrot.slane %v6275, 4
  %v6278 = vshll.u32 %v6157, 16
  %v6280 = vrot.slane %v6278, 5
  %v6281 = vor.u32 %v6277, %v6280
  %v6282 = vrot.slane %v6281, 4
  %v6284 = vshll.u32 %v6158, 16
  %v6286 = vrot.slane %v6284, 5
  %v6287 = vsel %vm2293, %v6282, %v6286
  %v6288 = vshrl.u32 %v6158, 16
  %v6290 = vrot.slane %v6288, 4
  %v6291 = vor.u32 %v6290, %v6286
  %v6292 = vrot.slane %v6291, 4
  %v6294 = vshll.u32 %v6159, 16
  %v6296 = vrot.slane %v6294, 5
  %v6297 = vsel %vm2293, %v6292, %v6296
  %v6299 = vshrl.u32 %v6160, 16
  %v6301 = vrot.slane %v6299, 4
  %v6302 = vshll.u32 %v6160, 16
  %v6304 = vrot.slane %v6302, 5
  %v6305 = vor.u32 %v6301, %v6304
  %v6306 = vrot.slane %v6305, 4
  %v6308 = vshll.u32 %v6161, 16
  %v6310 = vrot.slane %v6308, 5
  %v6311 = vsel %vm2293, %v6306, %v6310
  %v6312 = vshrl.u32 %v6161, 16
  %v6314 = vrot.slane %v6312, 4
  %v6315 = vor.u32 %v6314, %v6310
  %v6316 = vrot.slane %v6315, 4
  %v6318 = vshll.u32 %v6162, 16
  %v6320 = vrot.slane %v6318, 5
  %v6321 = vsel %vm2293, %v6316, %v6320
  %v6323 = vshrl.u32 %v6163, 16
  %v6325 = vrot.slane %v6323, 4
  %v6326 = vshll.u32 %v6163, 16
  %v6328 = vrot.slane %v6326, 5
  %v6329 = vor.u32 %v6325, %v6328
  %v6330 = vrot.slane %v6329, 4
  %v6332 = vshll.u32 %v6164, 16
  %v6334 = vrot.slane %v6332, 5
  %v6335 = vsel %vm2293, %v6330, %v6334
  %v6336 = vshrl.u32 %v6164, 16
  %v6338 = vrot.slane %v6336, 4
  %v6339 = vor.u32 %v6338, %v6334
  %v6340 = vrot.slane %v6339, 4
  %v6342 = vshll.u32 %v6165, 16
  %v6344 = vrot.slane %v6342, 5
  %v6345 = vsel %vm2293, %v6340, %v6344
  %v6347 = vshrl.u32 %v6166, 16
  %v6349 = vrot.slane %v6347, 4
  %v6350 = vshll.u32 %v6166, 16
  %v6352 = vrot.slane %v6350, 5
  %v6353 = vor.u32 %v6349, %v6352
  %v6354 = vrot.slane %v6353, 4
  %v6356 = vshll.u32 %v6167, 16
  %v6358 = vrot.slane %v6356, 5
  %v6359 = vsel %vm2293, %v6354, %v6358
  %v6360 = vshrl.u32 %v6167, 16
  %v6362 = vrot.slane %v6360, 4
  %v6363 = vor.u32 %v6362, %v6358
  %v6364 = vrot.slane %v6363, 4
  %v6366 = vshll.u32 %v6168, 16
  %v6368 = vrot.slane %v6366, 5
  %v6369 = vsel %vm2293, %v6364, %v6368
  %v6371 = vshrl.u32 %v6169, 16
  %v6373 = vrot.slane %v6371, 4
  %v6374 = vshll.u32 %v6169, 16
  %v6376 = vrot.slane %v6374, 5
  %v6377 = vor.u32 %v6373, %v6376
  %v6378 = vrot.slane %v6377, 4
  %v6380 = vshll.u32 %v6170, 16
  %v6382 = vrot.slane %v6380, 5
  %v6383 = vsel %vm2293, %v6378, %v6382
  %v6384 = vshrl.u32 %v6170, 16
  %v6386 = vrot.slane %v6384, 4
  %v6387 = vor.u32 %v6386, %v6382
  %v6388 = vrot.slane %v6387, 4
  %v6390 = vshll.u32 %v6171, 16
  %v6392 = vrot.slane %v6390, 5
  %v6393 = vsel %vm2293, %v6388, %v6392
  %v6395 = vshrl.u32 %v6172, 16
  %v6397 = vrot.slane %v6395, 4
  %v6398 = vshll.u32 %v6172, 16
  %v6400 = vrot.slane %v6398, 5
  %v6401 = vor.u32 %v6397, %v6400
  %v6402 = vrot.slane %v6401, 4
  %v6404 = vshll.u32 %v6173, 16
  %v6406 = vrot.slane %v6404, 5
  %v6407 = vsel %vm2293, %v6402, %v6406
  %v6408 = vshrl.u32 %v6173, 16
  %v6410 = vrot.slane %v6408, 4
  %v6411 = vor.u32 %v6410, %v6406
  %v6412 = vrot.slane %v6411, 4
  %v6414 = vshll.u32 %v6174, 16
  %v6416 = vrot.slane %v6414, 5
  %v6417 = vsel %vm2293, %v6412, %v6416
  %v6419 = vshrl.u32 %v6175, 16
  %v6421 = vrot.slane %v6419, 4
  %v6422 = vshll.u32 %v6175, 16
  %v6424 = vrot.slane %v6422, 5
  %v6425 = vor.u32 %v6421, %v6424
  %v6426 = vrot.slane %v6425, 4
  %v6428 = vshll.u32 %v6176, 16
  %v6430 = vrot.slane %v6428, 5
  %v6431 = vsel %vm2293, %v6426, %v6430
  %v6432 = vshrl.u32 %v6176, 16
  %v6434 = vrot.slane %v6432, 4
  %v6435 = vor.u32 %v6434, %v6430
  %v6436 = vrot.slane %v6435, 4
  %v6438 = vshll.u32 %v6177, 16
  %v6440 = vrot.slane %v6438, 5
  %v6441 = vsel %vm2293, %v6436, %v6440
  %v6443 = vshrl.u32 %v6178, 16
  %v6445 = vrot.slane %v6443, 4
  %v6446 = vshll.u32 %v6178, 16
  %v6448 = vrot.slane %v6446, 5
  %v6449 = vor.u32 %v6445, %v6448
  %v6450 = vrot.slane %v6449, 4
  %v6452 = vshll.u32 %v6179, 16
  %v6454 = vrot.slane %v6452, 5
  %v6455 = vsel %vm2293, %v6450, %v6454
  %v6456 = vshrl.u32 %v6179, 16
  %v6458 = vrot.slane %v6456, 4
  %v6459 = vor.u32 %v6458, %v6454
  %v6460 = vrot.slane %v6459, 4
  %v6462 = vshll.u32 %v6180, 16
  %v6464 = vrot.slane %v6462, 5
  %v6465 = vsel %vm2293, %v6460, %v6464
  %v6467 = vshrl.u32 %v6181, 16
  %v6469 = vrot.slane %v6467, 4
  %v6470 = vshll.u32 %v6181, 16
  %v6472 = vrot.slane %v6470, 5
  %v6473 = vor.u32 %v6469, %v6472
  %v6474 = vrot.slane %v6473, 4
  %v6476 = vshll.u32 %v6182, 16
  %v6478 = vrot.slane %v6476, 5
  %v6479 = vsel %vm2293, %v6474, %v6478
  %v6480 = vshrl.u32 %v6182, 16
  %v6482 = vrot.slane %v6480, 4
  %v6483 = vor.u32 %v6482, %v6478
  %v6484 = vrot.slane %v6483, 4
  %v6486 = vshll.u32 %v6183, 16
  %v6488 = vrot.slane %v6486, 5
  %v6489 = vsel %vm2293, %v6484, %v6488
  %v6491 = vshrl.u32 %v6184, 16
  %v6493 = vrot.slane %v6491, 4
  %v6494 = vshll.u32 %v6184, 16
  %v6496 = vrot.slane %v6494, 5
  %v6497 = vor.u32 %v6493, %v6496
  %v6498 = vrot.slane %v6497, 4
  %v6500 = vshll.u32 %v6185, 16
  %v6502 = vrot.slane %v6500, 5
  %v6503 = vsel %vm2293, %v6498, %v6502
  %v6504 = vshrl.u32 %v6185, 16
  %v6506 = vrot.slane %v6504, 4
  %v6507 = vor.u32 %v6506, %v6502
  %v6508 = vrot.slane %v6507, 4
  %v6510 = vshll.u32 %v6186, 16
  %v6512 = vrot.slane %v6510, 5
  %v6513 = vsel %vm2293, %v6508, %v6512
  %v6515 = vshrl.u32 %v6187, 16
  %v6517 = vrot.slane %v6515, 4
  %v6518 = vshll.u32 %v6187, 16
  %v6520 = vrot.slane %v6518, 5
  %v6521 = vor.u32 %v6517, %v6520
  %v6522 = vrot.slane %v6521, 4
  %v6524 = vshll.u32 %v6188, 16
  %v6526 = vrot.slane %v6524, 5
  %v6527 = vsel %vm2293, %v6522, %v6526
  %v6528 = vshrl.u32 %v6188, 16
  %v6530 = vrot.slane %v6528, 4
  %v6531 = vor.u32 %v6530, %v6526
  %v6532 = vrot.slane %v6531, 4
  %v6534 = vshll.u32 %v6189, 16
  %v6536 = vrot.slane %v6534, 5
  %v6537 = vsel %vm2293, %v6532, %v6536
  %v6539 = vshrl.u32 %v6190, 16
  %v6541 = vrot.slane %v6539, 4
  %v6542 = vshll.u32 %v6190, 16
  %v6544 = vrot.slane %v6542, 5
  %v6545 = vor.u32 %v6541, %v6544
  %v6546 = vrot.slane %v6545, 4
  %v6548 = vshll.u32 %v6191, 16
  %v6550 = vrot.slane %v6548, 5
  %v6551 = vsel %vm2293, %v6546, %v6550
  %v6552 = vshrl.u32 %v6191, 16
  %v6554 = vrot.slane %v6552, 4
  %v6555 = vor.u32 %v6554, %v6550
  %v6556 = vrot.slane %v6555, 4
  %v6558 = vshll.u32 %v6192, 16
  %v6560 = vrot.slane %v6558, 5
  %v6561 = vsel %vm2293, %v6556, %v6560
  %v6563 = vshrl.u32 %v6193, 16
  %v6565 = vrot.slane %v6563, 4
  %v6566 = vshll.u32 %v6193, 16
  %v6568 = vrot.slane %v6566, 5
  %v6569 = vor.u32 %v6565, %v6568
  %v6570 = vrot.slane %v6569, 4
  %v6572 = vshll.u32 %v6194, 16
  %v6574 = vrot.slane %v6572, 5
  %v6575 = vsel %vm2293, %v6570, %v6574
  %v6576 = vshrl.u32 %v6194, 16
  %v6578 = vrot.slane %v6576, 4
  %v6579 = vor.u32 %v6578, %v6574
  %v6580 = vrot.slane %v6579, 4
  %v6582 = vshll.u32 %v6195, 16
  %v6584 = vrot.slane %v6582, 5
  %v6585 = vsel %vm2293, %v6580, %v6584
  %v6587 = vshrl.u32 %v6196, 16
  %v6589 = vrot.slane %v6587, 4
  %v6590 = vshll.u32 %v6196, 16
  %v6592 = vrot.slane %v6590, 5
  %v6593 = vor.u32 %v6589, %v6592
  %v6594 = vrot.slane %v6593, 4
  %v6596 = vshll.u32 %v6197, 16
  %v6598 = vrot.slane %v6596, 5
  %v6599 = vsel %vm2293, %v6594, %v6598
  %v6600 = vshrl.u32 %v6197, 16
  %v6602 = vrot.slane %v6600, 4
  %v6603 = vor.u32 %v6602, %v6598
  %v6604 = vrot.slane %v6603, 4
  %v6606 = vshll.u32 %v6198, 16
  %v6608 = vrot.slane %v6606, 5
  %v6609 = vsel %vm2293, %v6604, %v6608
  %v6611 = vshrl.u32 %v6199, 16
  %v6613 = vrot.slane %v6611, 4
  %v6614 = vshll.u32 %v6199, 16
  %v6616 = vrot.slane %v6614, 5
  %v6617 = vor.u32 %v6613, %v6616
  %v6618 = vrot.slane %v6617, 4
  %v6620 = vshll.u32 %v6200, 16
  %v6622 = vrot.slane %v6620, 5
  %v6623 = vsel %vm2293, %v6618, %v6622
  %v6624 = vshrl.u32 %v6200, 16
  %v6626 = vrot.slane %v6624, 4
  %v6627 = vor.u32 %v6626, %v6622
  %v6628 = vrot.slane %v6627, 4
  %v6630 = vshll.u32 %v6201, 16
  %v6632 = vrot.slane %v6630, 5
  %v6633 = vsel %vm2293, %v6628, %v6632
  %v6634 = vld [vmem:[%s5076] sm:$0xff]
  %v6635 = vld [vmem:[%s5076 + $0x8] sm:$0xff]
  %v6636 = vld [vmem:[%s5076 + $0x10] sm:$0xff]
  %v6637 = vld [vmem:[%s5076 + $0x18] sm:$0xff]
  %v6638 = vld [vmem:[%s5076 + $0x20] sm:$0xff]
  %v6639 = vld [vmem:[%s5076 + $0x28] sm:$0xff]
  %v6640 = vld [vmem:[%s5076 + $0x30] sm:$0xff]
  %v6641 = vld [vmem:[%s5076 + $0x38] sm:$0xff]
  %v6642 = vld [vmem:[%s5076 + $0x40] sm:$0xff]
  %v6643 = vld [vmem:[%s5076 + $0x48] sm:$0xff]
  %v6644 = vld [vmem:[%s5076 + $0x50] sm:$0xff]
  %v6645 = vld [vmem:[%s5076 + $0x58] sm:$0xff]
  %v6646 = vld [vmem:[%s5076 + $0x60] sm:$0xff]
  %v6647 = vld [vmem:[%s5076 + $0x68] sm:$0xff]
  %v6648 = vld [vmem:[%s5076 + $0x70] sm:$0xff]
  %v6649 = vld [vmem:[%s5076 + $0x78] sm:$0xff]
  %v6650 = vld [vmem:[%s5076 + $0x80] sm:$0xff]
  %v6651 = vld [vmem:[%s5076 + $0x88] sm:$0xff]
  %v6652 = vld [vmem:[%s5076 + $0x90] sm:$0xff]
  %v6653 = vld [vmem:[%s5076 + $0x98] sm:$0xff]
  %v6654 = vld [vmem:[%s5076 + $0xa0] sm:$0xff]
  %v6655 = vld [vmem:[%s5076 + $0xa8] sm:$0xff]
  %v6656 = vld [vmem:[%s5076 + $0xb0] sm:$0xff]
  %v6657 = vld [vmem:[%s5076 + $0xb8] sm:$0xff]
  %v6658 = vld [vmem:[%s5076 + $0xc0] sm:$0xff]
  %v6659 = vld [vmem:[%s5076 + $0xc8] sm:$0xff]
  %v6660 = vld [vmem:[%s5076 + $0xd0] sm:$0xff]
  %v6661 = vld [vmem:[%s5076 + $0xd8] sm:$0xff]
  %v6662 = vld [vmem:[%s5076 + $0xe0] sm:$0xff]
  %v6663 = vld [vmem:[%s5076 + $0xe8] sm:$0xff]
  %v6664 = vld [vmem:[%s5076 + $0xf0] sm:$0xff]
  %v6665 = vld [vmem:[%s5076 + $0xf8] sm:$0xff]
  %v6666 = vld [vmem:[%s2758] sm:$0xf]
  %v6667 = vld [vmem:[%s2758 + $0x4] sm:$0xf]
  %v6668 = vld [vmem:[%s2758 + $0x8] sm:$0xf]
  %v6669 = vld [vmem:[%s2758 + $0xc] sm:$0xf]
  %v6670 = vld [vmem:[%s2758 + $0x10] sm:$0xf]
  %v6671 = vld [vmem:[%s2758 + $0x14] sm:$0xf]
  %v6672 = vld [vmem:[%s2758 + $0x18] sm:$0xf]
  %v6673 = vld [vmem:[%s2758 + $0x1c] sm:$0xf]
  %v6674 = vld [vmem:[%s2758 + $0x20] sm:$0xf]
  %v6675 = vld [vmem:[%s2758 + $0x24] sm:$0xf]
  %v6676 = vld [vmem:[%s2758 + $0x28] sm:$0xf]
  %v6677 = vld [vmem:[%s2758 + $0x2c] sm:$0xf]
  %v6678 = vld [vmem:[%s2758 + $0x30] sm:$0xf]
  %v6679 = vld [vmem:[%s2758 + $0x34] sm:$0xf]
  %v6680 = vld [vmem:[%s2758 + $0x38] sm:$0xf]
  %v6681 = vld [vmem:[%s2758 + $0x3c] sm:$0xf]
  %v6682 = vunpack.c.l.b16 %v6215
  %v6683 = vunpack.c.l.b16 %v6225
  %v6684 = vunpack.c.l.b16 %v6239
  %v6685 = vunpack.c.l.b16 %v6249
  %v6686 = vunpack.c.l.b16 %v6263
  %v6687 = vunpack.c.l.b16 %v6273
  %v6688 = vunpack.c.l.b16 %v6287
  %v6689 = vunpack.c.l.b16 %v6297
  %v6690 = vunpack.c.l.b16 %v6311
  %v6691 = vunpack.c.l.b16 %v6321
  %v6692 = vunpack.c.l.b16 %v6335
  %v6693 = vunpack.c.l.b16 %v6345
  %v6694 = vunpack.c.l.b16 %v6359
  %v6695 = vunpack.c.l.b16 %v6369
  %v6696 = vunpack.c.l.b16 %v6383
  %v6697 = vunpack.c.l.b16 %v6393
  %v6698 = vunpack.c.l.b16 %v6407
  %v6699 = vunpack.c.l.b16 %v6417
  %v6700 = vunpack.c.l.b16 %v6431
  %v6701 = vunpack.c.l.b16 %v6441
  %v6702 = vunpack.c.l.b16 %v6455
  %v6703 = vunpack.c.l.b16 %v6465
  %v6704 = vunpack.c.l.b16 %v6479
  %v6705 = vunpack.c.l.b16 %v6489
  %v6706 = vunpack.c.l.b16 %v6503
  %v6707 = vunpack.c.l.b16 %v6513
  %v6708 = vunpack.c.l.b16 %v6527
  %v6709 = vunpack.c.l.b16 %v6537
  %v6710 = vunpack.c.l.b16 %v6551
  %v6711 = vunpack.c.l.b16 %v6561
  %v6712 = vunpack.c.l.b16 %v6575
  %v6713 = vunpack.c.l.b16 %v6585
  %v6714 = vpack.c.b16 %v6683, %v6682
  %v6715 = vpack.c.b16 %v6685, %v6684
  %v6716 = vpack.c.b16 %v6687, %v6686
  %v6717 = vpack.c.b16 %v6689, %v6688
  %v6718 = vpack.c.b16 %v6691, %v6690
  %v6719 = vpack.c.b16 %v6693, %v6692
  %v6720 = vpack.c.b16 %v6695, %v6694
  %v6721 = vpack.c.b16 %v6697, %v6696
  %v6722 = vpack.c.b16 %v6699, %v6698
  %v6723 = vpack.c.b16 %v6701, %v6700
  %v6724 = vpack.c.b16 %v6703, %v6702
  %v6725 = vpack.c.b16 %v6705, %v6704
  %v6726 = vpack.c.b16 %v6707, %v6706
  %v6727 = vpack.c.b16 %v6709, %v6708
  %v6728 = vpack.c.b16 %v6711, %v6710
  %v6729 = vpack.c.b16 %v6713, %v6712
  %v6762 = vunpack.c.l.b16 %v6666
  %v6763 = vunpack.c.l.b16 %v6667
  %v6764 = vunpack.c.l.b16 %v6668
  %v6765 = vunpack.c.l.b16 %v6669
  %v6766 = vunpack.c.l.b16 %v6670
  %v6767 = vunpack.c.l.b16 %v6671
  %v6768 = vunpack.c.l.b16 %v6672
  %v6769 = vunpack.c.l.b16 %v6673
  %v6770 = vunpack.c.l.b16 %v6674
  %v6771 = vunpack.c.l.b16 %v6675
  %v6772 = vunpack.c.l.b16 %v6676
  %v6773 = vunpack.c.l.b16 %v6677
  %v6774 = vunpack.c.l.b16 %v6678
  %v6775 = vunpack.c.l.b16 %v6679
  %v6776 = vunpack.c.l.b16 %v6680
  %v6777 = vunpack.c.l.b16 %v6681
  %v6778 = vpack.c.b16 %v6763, %v6762
  %v6779 = vpack.c.b16 %v6765, %v6764
  %v6780 = vpack.c.b16 %v6767, %v6766
  %v6781 = vpack.c.b16 %v6769, %v6768
  %v6782 = vpack.c.b16 %v6771, %v6770
  %v6783 = vpack.c.b16 %v6773, %v6772
  %v6784 = vpack.c.b16 %v6775, %v6774
  %v6785 = vpack.c.b16 %v6777, %v6776
  %6794 = vmatprep.subr.bf16.mxu0 0
  %6795 = vmatpush1.bf16.msra.mxu0 %v6778
  %6796 = vmatprep.subr.bf16.mxu0 0
  %6797 = vmatpush1.bf16.msra.mxu0 %v6779
  %6798 = vmatprep.subr.bf16.mxu0 0
  %6799 = vmatpush1.bf16.msra.mxu0 %v6780
  %6800 = vmatprep.subr.bf16.mxu0 0
  %6801 = vmatpush1.bf16.msra.mxu0 %v6781
  %6802 = vmatprep.subr.bf16.mxu0 0
  %6803 = vmatpush1.bf16.msra.mxu0 %v6782
  %6804 = vmatprep.subr.bf16.mxu0 0
  %6805 = vmatpush1.bf16.msra.mxu0 %v6783
  %6806 = vmatprep.subr.bf16.mxu0 0
  %6807 = vmatpush1.bf16.msra.mxu0 %v6784
  %6808 = vmatprep.subr.bf16.mxu0 0
  %6809 = vmatpush1.bf16.msra.mxu0 %v6785
  %6810 = vmatprep.subr.bf16.mxu0 0
  %6811 = vmatpush1.bf16.msra.mxu0 0
  %6812 = vmatprep.subr.bf16.mxu0 0
  %6813 = vmatpush1.bf16.msra.mxu0 0
  %6814 = vmatprep.subr.bf16.mxu0 0
  %6815 = vmatpush1.bf16.msra.mxu0 0
  %6816 = vmatprep.subr.bf16.mxu0 0
  %6817 = vmatpush1.bf16.msra.mxu0 0
  %6818 = vmatprep.subr.bf16.mxu0 0
  %6819 = vmatpush1.bf16.msra.mxu0 0
  %6820 = vmatprep.subr.bf16.mxu0 0
  %6821 = vmatpush1.bf16.msra.mxu0 0
  %6822 = vmatprep.subr.bf16.mxu0 0
  %6823 = vmatpush1.bf16.msra.mxu0 0
  %6824 = vmatprep.subr.bf16.mxu0 0
  %6825 = vmatpush1.bf16.msra.mxu0 0
  %6826 = vmatprep.mubr.bf16.mxu0 0
  %6827 = vmatmul.mubr.bf16.gmra.mrb[0].mxu0 %v6714
  %v6828 = vpop.f32.mrb[0].mxu0
  %v6829 = vadd.f32 0.0, %v6828
  %v6830 = vpop.f32.mrb[0].mxu0
  %v6831 = vpop.f32.mrb[0].mxu0
  %v6832 = vadd.f32 0.0, %v6831
  %v6833 = vpop.f32.mrb[0].mxu0
  %6834 = vmatprep.mubr.bf16.mxu0 0
  %6835 = vmatmul.mubr.bf16.gmra.mrb[0].mxu0 %v6715
  %v6836 = vpop.f32.mrb[0].mxu0
  %v6837 = vadd.f32 0.0, %v6836
  %v6838 = vpop.f32.mrb[0].mxu0
  %v6839 = vpop.f32.mrb[0].mxu0
  %v6840 = vadd.f32 0.0, %v6839
  %v6841 = vpop.f32.mrb[0].mxu0
  %6842 = vmatprep.mubr.bf16.mxu0 0
  %6843 = vmatmul.mubr.bf16.gmra.mrb[0].mxu0 %v6716
  %v6844 = vpop.f32.mrb[0].mxu0
  %v6845 = vadd.f32 0.0, %v6844
  %v6846 = vpop.f32.mrb[0].mxu0
  %v6847 = vpop.f32.mrb[0].mxu0
  %v6848 = vadd.f32 0.0, %v6847
  %v6849 = vpop.f32.mrb[0].mxu0
  %6850 = vmatprep.mubr.bf16.mxu0 0
  %6851 = vmatmul.mubr.bf16.gmra.mrb[0].mxu0 %v6717
  %v6852 = vpop.f32.mrb[0].mxu0
  %v6853 = vadd.f32 0.0, %v6852
  %v6854 = vpop.f32.mrb[0].mxu0
  %v6855 = vpop.f32.mrb[0].mxu0
  %v6856 = vadd.f32 0.0, %v6855
  %v6857 = vpop.f32.mrb[0].mxu0
  %6858 = vmatprep.mubr.bf16.mxu0 0
  %6859 = vmatmul.mubr.bf16.gmra.mrb[0].mxu0 %v6718
  %v6860 = vpop.f32.mrb[0].mxu0
  %v6861 = vadd.f32 0.0, %v6860
  %v6862 = vpop.f32.mrb[0].mxu0
  %v6863 = vpop.f32.mrb[0].mxu0
  %v6864 = vadd.f32 0.0, %v6863
  %v6865 = vpop.f32.mrb[0].mxu0
  %6866 = vmatprep.mubr.bf16.mxu0 0
  %6867 = vmatmul.mubr.bf16.gmra.mrb[0].mxu0 %v6719
  %v6868 = vpop.f32.mrb[0].mxu0
  %v6869 = vadd.f32 0.0, %v6868
  %v6870 = vpop.f32.mrb[0].mxu0
  %v6871 = vpop.f32.mrb[0].mxu0
  %v6872 = vadd.f32 0.0, %v6871
  %v6873 = vpop.f32.mrb[0].mxu0
  %6874 = vmatprep.mubr.bf16.mxu0 0
  %6875 = vmatmul.mubr.bf16.gmra.mrb[0].mxu0 %v6720
  %v6876 = vpop.f32.mrb[0].mxu0
  %v6877 = vadd.f32 0.0, %v6876
  %v6878 = vpop.f32.mrb[0].mxu0
  %v6879 = vpop.f32.mrb[0].mxu0
  %v6880 = vadd.f32 0.0, %v6879
  %v6881 = vpop.f32.mrb[0].mxu0
  %6882 = vmatprep.mubr.bf16.mxu0 0
  %6883 = vmatmul.mubr.bf16.gmra.mrb[0].mxu0 %v6721
  %v6884 = vpop.f32.mrb[0].mxu0
  %v6885 = vadd.f32 0.0, %v6884
  %v6886 = vpop.f32.mrb[0].mxu0
  %v6887 = vpop.f32.mrb[0].mxu0
  %v6888 = vadd.f32 0.0, %v6887
  %v6889 = vpop.f32.mrb[0].mxu0
  %6890 = vmatprep.mubr.bf16.mxu0 0
  %6891 = vmatmul.mubr.bf16.gmra.mrb[0].mxu0 %v6722
  %v6892 = vpop.f32.mrb[0].mxu0
  %v6893 = vadd.f32 0.0, %v6892
  %v6894 = vpop.f32.mrb[0].mxu0
  %v6895 = vpop.f32.mrb[0].mxu0
  %v6896 = vadd.f32 0.0, %v6895
  %v6897 = vpop.f32.mrb[0].mxu0
  %6898 = vmatprep.mubr.bf16.mxu0 0
  %6899 = vmatmul.mubr.bf16.gmra.mrb[0].mxu0 %v6723
  %v6900 = vpop.f32.mrb[0].mxu0
  %v6901 = vadd.f32 0.0, %v6900
  %v6902 = vpop.f32.mrb[0].mxu0
  %v6903 = vpop.f32.mrb[0].mxu0
  %v6904 = vadd.f32 0.0, %v6903
  %v6905 = vpop.f32.mrb[0].mxu0
  %6906 = vmatprep.mubr.bf16.mxu0 0
  %6907 = vmatmul.mubr.bf16.gmra.mrb[0].mxu0 %v6724
  %v6908 = vpop.f32.mrb[0].mxu0
  %v6909 = vadd.f32 0.0, %v6908
  %v6910 = vpop.f32.mrb[0].mxu0
  %v6911 = vpop.f32.mrb[0].mxu0
  %v6912 = vadd.f32 0.0, %v6911
  %v6913 = vpop.f32.mrb[0].mxu0
  %6914 = vmatprep.mubr.bf16.mxu0 0
  %6915 = vmatmul.mubr.bf16.gmra.mrb[0].mxu0 %v6725
  %v6916 = vpop.f32.mrb[0].mxu0
  %v6917 = vadd.f32 0.0, %v6916
  %v6918 = vpop.f32.mrb[0].mxu0
  %v6919 = vpop.f32.mrb[0].mxu0
  %v6920 = vadd.f32 0.0, %v6919
  %v6921 = vpop.f32.mrb[0].mxu0
  %6922 = vmatprep.mubr.bf16.mxu0 0
  %6923 = vmatmul.mubr.bf16.gmra.mrb[0].mxu0 %v6726
  %v6924 = vpop.f32.mrb[0].mxu0
  %v6925 = vadd.f32 0.0, %v6924
  %v6926 = vpop.f32.mrb[0].mxu0
  %v6927 = vpop.f32.mrb[0].mxu0
  %v6928 = vadd.f32 0.0, %v6927
  %v6929 = vpop.f32.mrb[0].mxu0
  %6930 = vmatprep.mubr.bf16.mxu0 0
  %6931 = vmatmul.mubr.bf16.gmra.mrb[0].mxu0 %v6727
  %v6932 = vpop.f32.mrb[0].mxu0
  %v6933 = vadd.f32 0.0, %v6932
  %v6934 = vpop.f32.mrb[0].mxu0
  %v6935 = vpop.f32.mrb[0].mxu0
  %v6936 = vadd.f32 0.0, %v6935
  %v6937 = vpop.f32.mrb[0].mxu0
  %6938 = vmatprep.mubr.bf16.mxu0 0
  %6939 = vmatmul.mubr.bf16.gmra.mrb[0].mxu0 %v6728
  %v6940 = vpop.f32.mrb[0].mxu0
  %v6941 = vadd.f32 0.0, %v6940
  %v6942 = vpop.f32.mrb[0].mxu0
  %v6943 = vpop.f32.mrb[0].mxu0
  %v6944 = vadd.f32 0.0, %v6943
  %v6945 = vpop.f32.mrb[0].mxu0
  %6946 = vmatprep.mubr.bf16.mxu0 0
  %6947 = vmatmul.mubr.bf16.gmra.mrb[0].mxu0 %v6729
  %v6948 = vpop.f32.mrb[0].mxu0
  %v6949 = vadd.f32 0.0, %v6948
  %v6950 = vpop.f32.mrb[0].mxu0
  %v6951 = vpop.f32.mrb[0].mxu0
  %v6952 = vadd.f32 0.0, %v6951
  %v6953 = vpop.f32.mrb[0].mxu0
  %6954 = vdwg.mxu0
  %v6955 = vadd.f32 %v6634, %v6829
  %v6956 = vadd.f32 %v6635, %v6832
  %v6957 = vadd.f32 %v6636, %v6837
  %v6958 = vadd.f32 %v6637, %v6840
  %v6959 = vadd.f32 %v6638, %v6845
  %v6960 = vadd.f32 %v6639, %v6848
  %v6961 = vadd.f32 %v6640, %v6853
  %v6962 = vadd.f32 %v6641, %v6856
  %v6963 = vadd.f32 %v6642, %v6861
  %v6964 = vadd.f32 %v6643, %v6864
  %v6965 = vadd.f32 %v6644, %v6869
  %v6966 = vadd.f32 %v6645, %v6872
  %v6967 = vadd.f32 %v6646, %v6877
  %v6968 = vadd.f32 %v6647, %v6880
  %v6969 = vadd.f32 %v6648, %v6885
  %v6970 = vadd.f32 %v6649, %v6888
  %v6971 = vadd.f32 %v6650, %v6893
  %v6972 = vadd.f32 %v6651, %v6896
  %v6973 = vadd.f32 %v6652, %v6901
  %v6974 = vadd.f32 %v6653, %v6904
  %v6975 = vadd.f32 %v6654, %v6909
  %v6976 = vadd.f32 %v6655, %v6912
  %v6977 = vadd.f32 %v6656, %v6917
  %v6978 = vadd.f32 %v6657, %v6920
  %v6979 = vadd.f32 %v6658, %v6925
  %v6980 = vadd.f32 %v6659, %v6928
  %v6981 = vadd.f32 %v6660, %v6933
  %v6982 = vadd.f32 %v6661, %v6936
  %v6983 = vadd.f32 %v6662, %v6941
  %v6984 = vadd.f32 %v6663, %v6944
  %v6985 = vadd.f32 %v6664, %v6949
  %v6986 = vadd.f32 %v6665, %v6952
  %6987 = vst [vmem:[%s5076] sm:$0xff] %v6955
  %6988 = vst [vmem:[%s5076 + $0x8] sm:$0xff] %v6956
  %6989 = vst [vmem:[%s5076 + $0x10] sm:$0xff] %v6957
  %6990 = vst [vmem:[%s5076 + $0x18] sm:$0xff] %v6958
  %6991 = vst [vmem:[%s5076 + $0x20] sm:$0xff] %v6959
  %6992 = vst [vmem:[%s5076 + $0x28] sm:$0xff] %v6960
  %6993 = vst [vmem:[%s5076 + $0x30] sm:$0xff] %v6961
  %6994 = vst [vmem:[%s5076 + $0x38] sm:$0xff] %v6962
  %6995 = vst [vmem:[%s5076 + $0x40] sm:$0xff] %v6963
  %6996 = vst [vmem:[%s5076 + $0x48] sm:$0xff] %v6964
  %6997 = vst [vmem:[%s5076 + $0x50] sm:$0xff] %v6965
  %6998 = vst [vmem:[%s5076 + $0x58] sm:$0xff] %v6966
  %6999 = vst [vmem:[%s5076 + $0x60] sm:$0xff] %v6967
  %7000 = vst [vmem:[%s5076 + $0x68] sm:$0xff] %v6968
  %7001 = vst [vmem:[%s5076 + $0x70] sm:$0xff] %v6969
  %7002 = vst [vmem:[%s5076 + $0x78] sm:$0xff] %v6970
  %7003 = vst [vmem:[%s5076 + $0x80] sm:$0xff] %v6971
  %7004 = vst [vmem:[%s5076 + $0x88] sm:$0xff] %v6972
  %7005 = vst [vmem:[%s5076 + $0x90] sm:$0xff] %v6973
  %7006 = vst [vmem:[%s5076 + $0x98] sm:$0xff] %v6974
  %7007 = vst [vmem:[%s5076 + $0xa0] sm:$0xff] %v6975
  %7008 = vst [vmem:[%s5076 + $0xa8] sm:$0xff] %v6976
  %7009 = vst [vmem:[%s5076 + $0xb0] sm:$0xff] %v6977
  %7010 = vst [vmem:[%s5076 + $0xb8] sm:$0xff] %v6978
  %7011 = vst [vmem:[%s5076 + $0xc0] sm:$0xff] %v6979
  %7012 = vst [vmem:[%s5076 + $0xc8] sm:$0xff] %v6980
  %7013 = vst [vmem:[%s5076 + $0xd0] sm:$0xff] %v6981
  %7014 = vst [vmem:[%s5076 + $0xd8] sm:$0xff] %v6982
  %7015 = vst [vmem:[%s5076 + $0xe0] sm:$0xff] %v6983
  %7016 = vst [vmem:[%s5076 + $0xe8] sm:$0xff] %v6984
  %7017 = vst [vmem:[%s5076 + $0xf0] sm:$0xff] %v6985
  %7018 = vst [vmem:[%s5076 + $0xf8] sm:$0xff] %v6986
  %v7019 = vld [vmem:[%s5076] sm:$0xff]
  %v7020 = vld [vmem:[%s5076 + $0x8] sm:$0xff]
  %v7021 = vld [vmem:[%s5076 + $0x10] sm:$0xff]
  %v7022 = vld [vmem:[%s5076 + $0x18] sm:$0xff]
  %v7023 = vld [vmem:[%s5076 + $0x20] sm:$0xff]
  %v7024 = vld [vmem:[%s5076 + $0x28] sm:$0xff]
  %v7025 = vld [vmem:[%s5076 + $0x30] sm:$0xff]
  %v7026 = vld [vmem:[%s5076 + $0x38] sm:$0xff]
  %v7027 = vld [vmem:[%s5076 + $0x40] sm:$0xff]
  %v7028 = vld [vmem:[%s5076 + $0x48] sm:$0xff]
  %v7029 = vld [vmem:[%s5076 + $0x50] sm:$0xff]
  %v7030 = vld [vmem:[%s5076 + $0x58] sm:$0xff]
  %v7031 = vld [vmem:[%s5076 + $0x60] sm:$0xff]
  %v7032 = vld [vmem:[%s5076 + $0x68] sm:$0xff]
  %v7033 = vld [vmem:[%s5076 + $0x70] sm:$0xff]
  %v7034 = vld [vmem:[%s5076 + $0x78] sm:$0xff]
  %v7035 = vld [vmem:[%s5076 + $0x80] sm:$0xff]
  %v7036 = vld [vmem:[%s5076 + $0x88] sm:$0xff]
  %v7037 = vld [vmem:[%s5076 + $0x90] sm:$0xff]
  %v7038 = vld [vmem:[%s5076 + $0x98] sm:$0xff]
  %v7039 = vld [vmem:[%s5076 + $0xa0] sm:$0xff]
  %v7040 = vld [vmem:[%s5076 + $0xa8] sm:$0xff]
  %v7041 = vld [vmem:[%s5076 + $0xb0] sm:$0xff]
  %v7042 = vld [vmem:[%s5076 + $0xb8] sm:$0xff]
  %v7043 = vld [vmem:[%s5076 + $0xc0] sm:$0xff]
  %v7044 = vld [vmem:[%s5076 + $0xc8] sm:$0xff]
  %v7045 = vld [vmem:[%s5076 + $0xd0] sm:$0xff]
  %v7046 = vld [vmem:[%s5076 + $0xd8] sm:$0xff]
  %v7047 = vld [vmem:[%s5076 + $0xe0] sm:$0xff]
  %v7048 = vld [vmem:[%s5076 + $0xe8] sm:$0xff]
  %v7049 = vld [vmem:[%s5076 + $0xf0] sm:$0xff]
  %v7050 = vld [vmem:[%s5076 + $0xf8] sm:$0xff]
  %v7051 = vld [vmem:[%s3144] sm:$0xf]
  %v7052 = vld [vmem:[%s3144 + $0x4] sm:$0xf]
  %v7053 = vld [vmem:[%s3144 + $0x8] sm:$0xf]
  %v7054 = vld [vmem:[%s3144 + $0xc] sm:$0xf]
  %v7055 = vld [vmem:[%s3144 + $0x10] sm:$0xf]
  %v7056 = vld [vmem:[%s3144 + $0x14] sm:$0xf]
  %v7057 = vld [vmem:[%s3144 + $0x18] sm:$0xf]
  %v7058 = vld [vmem:[%s3144 + $0x1c] sm:$0xf]
  %v7059 = vld [vmem:[%s3144 + $0x20] sm:$0xf]
  %v7060 = vld [vmem:[%s3144 + $0x24] sm:$0xf]
  %v7061 = vld [vmem:[%s3144 + $0x28] sm:$0xf]
  %v7062 = vld [vmem:[%s3144 + $0x2c] sm:$0xf]
  %v7063 = vld [vmem:[%s3144 + $0x30] sm:$0xf]
  %v7064 = vld [vmem:[%s3144 + $0x34] sm:$0xf]
  %v7065 = vld [vmem:[%s3144 + $0x38] sm:$0xf]
  %v7066 = vld [vmem:[%s3144 + $0x3c] sm:$0xf]
  %v7067 = vunpack.c.l.b16 %v6599
  %v7068 = vunpack.c.l.b16 %v6609
  %v7069 = vpack.c.b16 %v7068, %v7067
  %v7087 = vunpack.c.l.b16 %v7051
  %v7088 = vunpack.c.l.b16 %v7052
  %v7089 = vunpack.c.l.b16 %v7053
  %v7090 = vunpack.c.l.b16 %v7054
  %v7091 = vunpack.c.l.b16 %v7055
  %v7092 = vunpack.c.l.b16 %v7056
  %v7093 = vunpack.c.l.b16 %v7057
  %v7094 = vunpack.c.l.b16 %v7058
  %v7095 = vunpack.c.l.b16 %v7059
  %v7096 = vunpack.c.l.b16 %v7060
  %v7097 = vunpack.c.l.b16 %v7061
  %v7098 = vunpack.c.l.b16 %v7062
  %v7099 = vunpack.c.l.b16 %v7063
  %v7100 = vunpack.c.l.b16 %v7064
  %v7101 = vunpack.c.l.b16 %v7065
  %v7102 = vunpack.c.l.b16 %v7066
  %v7103 = vpack.c.b16 %v7088, %v7087
  %v7104 = vpack.c.b16 %v7090, %v7089
  %v7105 = vpack.c.b16 %v7092, %v7091
  %v7106 = vpack.c.b16 %v7094, %v7093
  %v7107 = vpack.c.b16 %v7096, %v7095
  %v7108 = vpack.c.b16 %v7098, %v7097
  %v7109 = vpack.c.b16 %v7100, %v7099
  %v7110 = vpack.c.b16 %v7102, %v7101
  %7119 = vmatprep.subr.bf16.mxu0 0
  %7120 = vmatpush1.bf16.msra.mxu0 %v7103
  %7121 = vmatprep.subr.bf16.mxu0 0
  %7122 = vmatpush1.bf16.msra.mxu0 %v7104
  %7123 = vmatprep.subr.bf16.mxu0 0
  %7124 = vmatpush1.bf16.msra.mxu0 %v7105
  %7125 = vmatprep.subr.bf16.mxu0 0
  %7126 = vmatpush1.bf16.msra.mxu0 %v7106
  %7127 = vmatprep.subr.bf16.mxu0 0
  %7128 = vmatpush1.bf16.msra.mxu0 %v7107
  %7129 = vmatprep.subr.bf16.mxu0 0
  %7130 = vmatpush1.bf16.msra.mxu0 %v7108
  %7131 = vmatprep.subr.bf16.mxu0 0
  %7132 = vmatpush1.bf16.msra.mxu0 %v7109
  %7133 = vmatprep.subr.bf16.mxu0 0
  %7134 = vmatpush1.bf16.msra.mxu0 %v7110
  %7135 = vmatprep.subr.bf16.mxu0 0
  %7136 = vmatpush1.bf16.msra.mxu0 0
  %7137 = vmatprep.subr.bf16.mxu0 0
  %7138 = vmatpush1.bf16.msra.mxu0 0
  %7139 = vmatprep.subr.bf16.mxu0 0
  %7140 = vmatpush1.bf16.msra.mxu0 0
  %7141 = vmatprep.subr.bf16.mxu0 0
  %7142 = vmatpush1.bf16.msra.mxu0 0
  %7143 = vmatprep.subr.bf16.mxu0 0
  %7144 = vmatpush1.bf16.msra.mxu0 0
  %7145 = vmatprep.subr.bf16.mxu0 0
  %7146 = vmatpush1.bf16.msra.mxu0 0
  %7147 = vmatprep.subr.bf16.mxu0 0
  %7148 = vmatpush1.bf16.msra.mxu0 0
  %7149 = vmatprep.subr.bf16.mxu0 0
  %7150 = vmatpush1.bf16.msra.mxu0 0
  %7151 = vmatprep.mubr.bf16.mxu0 0
  %7152 = vmatmul.mubr.bf16.gmra.mrb[0].mxu0 %v6715
  %v7153 = vpop.f32.mrb[0].mxu0
  %v7154 = vadd.f32 0.0, %v7153
  %v7155 = vpop.f32.mrb[0].mxu0
  %v7156 = vpop.f32.mrb[0].mxu0
  %v7157 = vadd.f32 0.0, %v7156
  %v7158 = vpop.f32.mrb[0].mxu0
  %7159 = vmatprep.mubr.bf16.mxu0 0
  %7160 = vmatmul.mubr.bf16.gmra.mrb[0].mxu0 %v6716
  %v7161 = vpop.f32.mrb[0].mxu0
  %v7162 = vadd.f32 0.0, %v7161
  %v7163 = vpop.f32.mrb[0].mxu0
  %v7164 = vpop.f32.mrb[0].mxu0
  %v7165 = vadd.f32 0.0, %v7164
  %v7166 = vpop.f32.mrb[0].mxu0
  %7167 = vmatprep.mubr.bf16.mxu0 0
  %7168 = vmatmul.mubr.bf16.gmra.mrb[0].mxu0 %v6717
  %v7169 = vpop.f32.mrb[0].mxu0
  %v7170 = vadd.f32 0.0, %v7169
  %v7171 = vpop.f32.mrb[0].mxu0
  %v7172 = vpop.f32.mrb[0].mxu0
  %v7173 = vadd.f32 0.0, %v7172
  %v7174 = vpop.f32.mrb[0].mxu0
  %7175 = vmatprep.mubr.bf16.mxu0 0
  %7176 = vmatmul.mubr.bf16.gmra.mrb[0].mxu0 %v6718
  %v7177 = vpop.f32.mrb[0].mxu0
  %v7178 = vadd.f32 0.0, %v7177
  %v7179 = vpop.f32.mrb[0].mxu0
  %v7180 = vpop.f32.mrb[0].mxu0
  %v7181 = vadd.f32 0.0, %v7180
  %v7182 = vpop.f32.mrb[0].mxu0
  %7183 = vmatprep.mubr.bf16.mxu0 0
  %7184 = vmatmul.mubr.bf16.gmra.mrb[0].mxu0 %v6719
  %v7185 = vpop.f32.mrb[0].mxu0
  %v7186 = vadd.f32 0.0, %v7185
  %v7187 = vpop.f32.mrb[0].mxu0
  %v7188 = vpop.f32.mrb[0].mxu0
  %v7189 = vadd.f32 0.0, %v7188
  %v7190 = vpop.f32.mrb[0].mxu0
  %7191 = vmatprep.mubr.bf16.mxu0 0
  %7192 = vmatmul.mubr.bf16.gmra.mrb[0].mxu0 %v6720
  %v7193 = vpop.f32.mrb[0].mxu0
  %v7194 = vadd.f32 0.0, %v7193
  %v7195 = vpop.f32.mrb[0].mxu0
  %v7196 = vpop.f32.mrb[0].mxu0
  %v7197 = vadd.f32 0.0, %v7196
  %v7198 = vpop.f32.mrb[0].mxu0
  %7199 = vmatprep.mubr.bf16.mxu0 0
  %7200 = vmatmul.mubr.bf16.gmra.mrb[0].mxu0 %v6721
  %v7201 = vpop.f32.mrb[0].mxu0
  %v7202 = vadd.f32 0.0, %v7201
  %v7203 = vpop.f32.mrb[0].mxu0
  %v7204 = vpop.f32.mrb[0].mxu0
  %v7205 = vadd.f32 0.0, %v7204
  %v7206 = vpop.f32.mrb[0].mxu0
  %7207 = vmatprep.mubr.bf16.mxu0 0
  %7208 = vmatmul.mubr.bf16.gmra.mrb[0].mxu0 %v6722
  %v7209 = vpop.f32.mrb[0].mxu0
  %v7210 = vadd.f32 0.0, %v7209
  %v7211 = vpop.f32.mrb[0].mxu0
  %v7212 = vpop.f32.mrb[0].mxu0
  %v7213 = vadd.f32 0.0, %v7212
  %v7214 = vpop.f32.mrb[0].mxu0
  %7215 = vmatprep.mubr.bf16.mxu0 0
  %7216 = vmatmul.mubr.bf16.gmra.mrb[0].mxu0 %v6723
  %v7217 = vpop.f32.mrb[0].mxu0
  %v7218 = vadd.f32 0.0, %v7217
  %v7219 = vpop.f32.mrb[0].mxu0
  %v7220 = vpop.f32.mrb[0].mxu0
  %v7221 = vadd.f32 0.0, %v7220
  %v7222 = vpop.f32.mrb[0].mxu0
  %7223 = vmatprep.mubr.bf16.mxu0 0
  %7224 = vmatmul.mubr.bf16.gmra.mrb[0].mxu0 %v6724
  %v7225 = vpop.f32.mrb[0].mxu0
  %v7226 = vadd.f32 0.0, %v7225
  %v7227 = vpop.f32.mrb[0].mxu0
  %v7228 = vpop.f32.mrb[0].mxu0
  %v7229 = vadd.f32 0.0, %v7228
  %v7230 = vpop.f32.mrb[0].mxu0
  %7231 = vmatprep.mubr.bf16.mxu0 0
  %7232 = vmatmul.mubr.bf16.gmra.mrb[0].mxu0 %v6725
  %v7233 = vpop.f32.mrb[0].mxu0
  %v7234 = vadd.f32 0.0, %v7233
  %v7235 = vpop.f32.mrb[0].mxu0
  %v7236 = vpop.f32.mrb[0].mxu0
  %v7237 = vadd.f32 0.0, %v7236
  %v7238 = vpop.f32.mrb[0].mxu0
  %7239 = vmatprep.mubr.bf16.mxu0 0
  %7240 = vmatmul.mubr.bf16.gmra.mrb[0].mxu0 %v6726
  %v7241 = vpop.f32.mrb[0].mxu0
  %v7242 = vadd.f32 0.0, %v7241
  %v7243 = vpop.f32.mrb[0].mxu0
  %v7244 = vpop.f32.mrb[0].mxu0
  %v7245 = vadd.f32 0.0, %v7244
  %v7246 = vpop.f32.mrb[0].mxu0
  %7247 = vmatprep.mubr.bf16.mxu0 0
  %7248 = vmatmul.mubr.bf16.gmra.mrb[0].mxu0 %v6727
  %v7249 = vpop.f32.mrb[0].mxu0
  %v7250 = vadd.f32 0.0, %v7249
  %v7251 = vpop.f32.mrb[0].mxu0
  %v7252 = vpop.f32.mrb[0].mxu0
  %v7253 = vadd.f32 0.0, %v7252
  %v7254 = vpop.f32.mrb[0].mxu0
  %7255 = vmatprep.mubr.bf16.mxu0 0
  %7256 = vmatmul.mubr.bf16.gmra.mrb[0].mxu0 %v6728
  %v7257 = vpop.f32.mrb[0].mxu0
  %v7258 = vadd.f32 0.0, %v7257
  %v7259 = vpop.f32.mrb[0].mxu0
  %v7260 = vpop.f32.mrb[0].mxu0
  %v7261 = vadd.f32 0.0, %v7260
  %v7262 = vpop.f32.mrb[0].mxu0
  %7263 = vmatprep.mubr.bf16.mxu0 0
  %7264 = vmatmul.mubr.bf16.gmra.mrb[0].mxu0 %v6729
  %v7265 = vpop.f32.mrb[0].mxu0
  %v7266 = vadd.f32 0.0, %v7265
  %v7267 = vpop.f32.mrb[0].mxu0
  %v7268 = vpop.f32.mrb[0].mxu0
  %v7269 = vadd.f32 0.0, %v7268
  %v7270 = vpop.f32.mrb[0].mxu0
  %7271 = vmatprep.mubr.bf16.mxu0 0
  %7272 = vmatmul.mubr.bf16.gmra.mrb[0].mxu0 %v7069
  %v7273 = vpop.f32.mrb[0].mxu0
  %v7274 = vadd.f32 0.0, %v7273
  %v7275 = vpop.f32.mrb[0].mxu0
  %v7276 = vpop.f32.mrb[0].mxu0
  %v7277 = vadd.f32 0.0, %v7276
  %v7278 = vpop.f32.mrb[0].mxu0
  %7279 = vdwg.mxu0
  %v7280 = vadd.f32 %v7019, %v7154
  %v7281 = vadd.f32 %v7020, %v7157
  %v7282 = vadd.f32 %v7021, %v7162
  %v7283 = vadd.f32 %v7022, %v7165
  %v7284 = vadd.f32 %v7023, %v7170
  %v7285 = vadd.f32 %v7024, %v7173
  %v7286 = vadd.f32 %v7025, %v7178
  %v7287 = vadd.f32 %v7026, %v7181
  %v7288 = vadd.f32 %v7027, %v7186
  %v7289 = vadd.f32 %v7028, %v7189
  %v7290 = vadd.f32 %v7029, %v7194
  %v7291 = vadd.f32 %v7030, %v7197
  %v7292 = vadd.f32 %v7031, %v7202
  %v7293 = vadd.f32 %v7032, %v7205
  %v7294 = vadd.f32 %v7033, %v7210
  %v7295 = vadd.f32 %v7034, %v7213
  %v7296 = vadd.f32 %v7035, %v7218
  %v7297 = vadd.f32 %v7036, %v7221
  %v7298 = vadd.f32 %v7037, %v7226
  %v7299 = vadd.f32 %v7038, %v7229
  %v7300 = vadd.f32 %v7039, %v7234
  %v7301 = vadd.f32 %v7040, %v7237
  %v7302 = vadd.f32 %v7041, %v7242
  %v7303 = vadd.f32 %v7042, %v7245
  %v7304 = vadd.f32 %v7043, %v7250
  %v7305 = vadd.f32 %v7044, %v7253
  %v7306 = vadd.f32 %v7045, %v7258
  %v7307 = vadd.f32 %v7046, %v7261
  %v7308 = vadd.f32 %v7047, %v7266
  %v7309 = vadd.f32 %v7048, %v7269
  %v7310 = vadd.f32 %v7049, %v7274
  %v7311 = vadd.f32 %v7050, %v7277
  %7312 = vst [vmem:[%s5076] sm:$0xff] %v7280
  %7313 = vst [vmem:[%s5076 + $0x8] sm:$0xff] %v7281
  %7314 = vst [vmem:[%s5076 + $0x10] sm:$0xff] %v7282
  %7315 = vst [vmem:[%s5076 + $0x18] sm:$0xff] %v7283
  %7316 = vst [vmem:[%s5076 + $0x20] sm:$0xff] %v7284
  %7317 = vst [vmem:[%s5076 + $0x28] sm:$0xff] %v7285
  %7318 = vst [vmem:[%s5076 + $0x30] sm:$0xff] %v7286
  %7319 = vst [vmem:[%s5076 + $0x38] sm:$0xff] %v7287
  %7320 = vst [vmem:[%s5076 + $0x40] sm:$0xff] %v7288
  %7321 = vst [vmem:[%s5076 + $0x48] sm:$0xff] %v7289
  %7322 = vst [vmem:[%s5076 + $0x50] sm:$0xff] %v7290
  %7323 = vst [vmem:[%s5076 + $0x58] sm:$0xff] %v7291
  %7324 = vst [vmem:[%s5076 + $0x60] sm:$0xff] %v7292
  %7325 = vst [vmem:[%s5076 + $0x68] sm:$0xff] %v7293
  %7326 = vst [vmem:[%s5076 + $0x70] sm:$0xff] %v7294
  %7327 = vst [vmem:[%s5076 + $0x78] sm:$0xff] %v7295
  %7328 = vst [vmem:[%s5076 + $0x80] sm:$0xff] %v7296
  %7329 = vst [vmem:[%s5076 + $0x88] sm:$0xff] %v7297
  %7330 = vst [vmem:[%s5076 + $0x90] sm:$0xff] %v7298
  %7331 = vst [vmem:[%s5076 + $0x98] sm:$0xff] %v7299
  %7332 = vst [vmem:[%s5076 + $0xa0] sm:$0xff] %v7300
  %7333 = vst [vmem:[%s5076 + $0xa8] sm:$0xff] %v7301
  %7334 = vst [vmem:[%s5076 + $0xb0] sm:$0xff] %v7302
  %7335 = vst [vmem:[%s5076 + $0xb8] sm:$0xff] %v7303
  %7336 = vst [vmem:[%s5076 + $0xc0] sm:$0xff] %v7304
  %7337 = vst [vmem:[%s5076 + $0xc8] sm:$0xff] %v7305
  %7338 = vst [vmem:[%s5076 + $0xd0] sm:$0xff] %v7306
  %7339 = vst [vmem:[%s5076 + $0xd8] sm:$0xff] %v7307
  %7340 = vst [vmem:[%s5076 + $0xe0] sm:$0xff] %v7308
  %7341 = vst [vmem:[%s5076 + $0xe8] sm:$0xff] %v7309
  %7342 = vst [vmem:[%s5076 + $0xf0] sm:$0xff] %v7310
  %7343 = vst [vmem:[%s5076 + $0xf8] sm:$0xff] %v7311
  %v7344 = vld [vmem:[%s5076] sm:$0xff]
  %v7345 = vld [vmem:[%s5076 + $0x8] sm:$0xff]
  %v7346 = vld [vmem:[%s5076 + $0x10] sm:$0xff]
  %v7347 = vld [vmem:[%s5076 + $0x18] sm:$0xff]
  %v7348 = vld [vmem:[%s5076 + $0x20] sm:$0xff]
  %v7349 = vld [vmem:[%s5076 + $0x28] sm:$0xff]
  %v7350 = vld [vmem:[%s5076 + $0x30] sm:$0xff]
  %v7351 = vld [vmem:[%s5076 + $0x38] sm:$0xff]
  %v7352 = vld [vmem:[%s5076 + $0x40] sm:$0xff]
  %v7353 = vld [vmem:[%s5076 + $0x48] sm:$0xff]
  %v7354 = vld [vmem:[%s5076 + $0x50] sm:$0xff]
  %v7355 = vld [vmem:[%s5076 + $0x58] sm:$0xff]
  %v7356 = vld [vmem:[%s5076 + $0x60] sm:$0xff]
  %v7357 = vld [vmem:[%s5076 + $0x68] sm:$0xff]
  %v7358 = vld [vmem:[%s5076 + $0x70] sm:$0xff]
  %v7359 = vld [vmem:[%s5076 + $0x78] sm:$0xff]
  %v7360 = vld [vmem:[%s5076 + $0x80] sm:$0xff]
  %v7361 = vld [vmem:[%s5076 + $0x88] sm:$0xff]
  %v7362 = vld [vmem:[%s5076 + $0x90] sm:$0xff]
  %v7363 = vld [vmem:[%s5076 + $0x98] sm:$0xff]
  %v7364 = vld [vmem:[%s5076 + $0xa0] sm:$0xff]
  %v7365 = vld [vmem:[%s5076 + $0xa8] sm:$0xff]
  %v7366 = vld [vmem:[%s5076 + $0xb0] sm:$0xff]
  %v7367 = vld [vmem:[%s5076 + $0xb8] sm:$0xff]
  %v7368 = vld [vmem:[%s5076 + $0xc0] sm:$0xff]
  %v7369 = vld [vmem:[%s5076 + $0xc8] sm:$0xff]
  %v7370 = vld [vmem:[%s5076 + $0xd0] sm:$0xff]
  %v7371 = vld [vmem:[%s5076 + $0xd8] sm:$0xff]
  %v7372 = vld [vmem:[%s5076 + $0xe0] sm:$0xff]
  %v7373 = vld [vmem:[%s5076 + $0xe8] sm:$0xff]
  %v7374 = vld [vmem:[%s5076 + $0xf0] sm:$0xff]
  %v7375 = vld [vmem:[%s5076 + $0xf8] sm:$0xff]
  %v7376 = vld [vmem:[%s3470] sm:$0xf]
  %v7377 = vld [vmem:[%s3470 + $0x4] sm:$0xf]
  %v7378 = vld [vmem:[%s3470 + $0x8] sm:$0xf]
  %v7379 = vld [vmem:[%s3470 + $0xc] sm:$0xf]
  %v7380 = vld [vmem:[%s3470 + $0x10] sm:$0xf]
  %v7381 = vld [vmem:[%s3470 + $0x14] sm:$0xf]
  %v7382 = vld [vmem:[%s3470 + $0x18] sm:$0xf]
  %v7383 = vld [vmem:[%s3470 + $0x1c] sm:$0xf]
  %v7384 = vld [vmem:[%s3470 + $0x20] sm:$0xf]
  %v7385 = vld [vmem:[%s3470 + $0x24] sm:$0xf]
  %v7386 = vld [vmem:[%s3470 + $0x28] sm:$0xf]
  %v7387 = vld [vmem:[%s3470 + $0x2c] sm:$0xf]
  %v7388 = vld [vmem:[%s3470 + $0x30] sm:$0xf]
  %v7389 = vld [vmem:[%s3470 + $0x34] sm:$0xf]
  %v7390 = vld [vmem:[%s3470 + $0x38] sm:$0xf]
  %v7391 = vld [vmem:[%s3470 + $0x3c] sm:$0xf]
  %v7392 = vunpack.c.l.b16 %v6623
  %v7393 = vunpack.c.l.b16 %v6633
  %v7394 = vpack.c.b16 %v7393, %v7392
  %v7412 = vunpack.c.l.b16 %v7376
  %v7413 = vunpack.c.l.b16 %v7377
  %v7414 = vunpack.c.l.b16 %v7378
  %v7415 = vunpack.c.l.b16 %v7379
  %v7416 = vunpack.c.l.b16 %v7380
  %v7417 = vunpack.c.l.b16 %v7381
  %v7418 = vunpack.c.l.b16 %v7382
  %v7419 = vunpack.c.l.b16 %v7383
  %v7420 = vunpack.c.l.b16 %v7384
  %v7421 = vunpack.c.l.b16 %v7385
  %v7422 = vunpack.c.l.b16 %v7386
  %v7423 = vunpack.c.l.b16 %v7387
  %v7424 = vunpack.c.l.b16 %v7388
  %v7425 = vunpack.c.l.b16 %v7389
  %v7426 = vunpack.c.l.b16 %v7390
  %v7427 = vunpack.c.l.b16 %v7391
  %v7428 = vpack.c.b16 %v7413, %v7412
  %v7429 = vpack.c.b16 %v7415, %v7414
  %v7430 = vpack.c.b16 %v7417, %v7416
  %v7431 = vpack.c.b16 %v7419, %v7418
  %v7432 = vpack.c.b16 %v7421, %v7420
  %v7433 = vpack.c.b16 %v7423, %v7422
  %v7434 = vpack.c.b16 %v7425, %v7424
  %v7435 = vpack.c.b16 %v7427, %v7426
  %7444 = vmatprep.subr.bf16.mxu0 0
  %7445 = vmatpush1.bf16.msra.mxu0 %v7428
  %7446 = vmatprep.subr.bf16.mxu0 0
  %7447 = vmatpush1.bf16.msra.mxu0 %v7429
  %7448 = vmatprep.subr.bf16.mxu0 0
  %7449 = vmatpush1.bf16.msra.mxu0 %v7430
  %7450 = vmatprep.subr.bf16.mxu0 0
  %7451 = vmatpush1.bf16.msra.mxu0 %v7431
  %7452 = vmatprep.subr.bf16.mxu0 0
  %7453 = vmatpush1.bf16.msra.mxu0 %v7432
  %7454 = vmatprep.subr.bf16.mxu0 0
  %7455 = vmatpush1.bf16.msra.mxu0 %v7433
  %7456 = vmatprep.subr.bf16.mxu0 0
  %7457 = vmatpush1.bf16.msra.mxu0 %v7434
  %7458 = vmatprep.subr.bf16.mxu0 0
  %7459 = vmatpush1.bf16.msra.mxu0 %v7435
  %7460 = vmatprep.subr.bf16.mxu0 0
  %7461 = vmatpush1.bf16.msra.mxu0 0
  %7462 = vmatprep.subr.bf16.mxu0 0
  %7463 = vmatpush1.bf16.msra.mxu0 0
  %7464 = vmatprep.subr.bf16.mxu0 0
  %7465 = vmatpush1.bf16.msra.mxu0 0
  %7466 = vmatprep.subr.bf16.mxu0 0
  %7467 = vmatpush1.bf16.msra.mxu0 0
  %7468 = vmatprep.subr.bf16.mxu0 0
  %7469 = vmatpush1.bf16.msra.mxu0 0
  %7470 = vmatprep.subr.bf16.mxu0 0
  %7471 = vmatpush1.bf16.msra.mxu0 0
  %7472 = vmatprep.subr.bf16.mxu0 0
  %7473 = vmatpush1.bf16.msra.mxu0 0
  %7474 = vmatprep.subr.bf16.mxu0 0
  %7475 = vmatpush1.bf16.msra.mxu0 0
  %7476 = vmatprep.mubr.bf16.mxu0 0
  %7477 = vmatmul.mubr.bf16.gmra.mrb[0].mxu0 %v6716
  %v7478 = vpop.f32.mrb[0].mxu0
  %v7479 = vadd.f32 0.0, %v7478
  %v7480 = vpop.f32.mrb[0].mxu0
  %v7481 = vpop.f32.mrb[0].mxu0
  %v7482 = vadd.f32 0.0, %v7481
  %v7483 = vpop.f32.mrb[0].mxu0
  %7484 = vmatprep.mubr.bf16.mxu0 0
  %7485 = vmatmul.mubr.bf16.gmra.mrb[0].mxu0 %v6717
  %v7486 = vpop.f32.mrb[0].mxu0
  %v7487 = vadd.f32 0.0, %v7486
  %v7488 = vpop.f32.mrb[0].mxu0
  %v7489 = vpop.f32.mrb[0].mxu0
  %v7490 = vadd.f32 0.0, %v7489
  %v7491 = vpop.f32.mrb[0].mxu0
  %7492 = vmatprep.mubr.bf16.mxu0 0
  %7493 = vmatmul.mubr.bf16.gmra.mrb[0].mxu0 %v6718
  %v7494 = vpop.f32.mrb[0].mxu0
  %v7495 = vadd.f32 0.0, %v7494
  %v7496 = vpop.f32.mrb[0].mxu0
  %v7497 = vpop.f32.mrb[0].mxu0
  %v7498 = vadd.f32 0.0, %v7497
  %v7499 = vpop.f32.mrb[0].mxu0
  %7500 = vmatprep.mubr.bf16.mxu0 0
  %7501 = vmatmul.mubr.bf16.gmra.mrb[0].mxu0 %v6719
  %v7502 = vpop.f32.mrb[0].mxu0
  %v7503 = vadd.f32 0.0, %v7502
  %v7504 = vpop.f32.mrb[0].mxu0
  %v7505 = vpop.f32.mrb[0].mxu0
  %v7506 = vadd.f32 0.0, %v7505
  %v7507 = vpop.f32.mrb[0].mxu0
  %7508 = vmatprep.mubr.bf16.mxu0 0
  %7509 = vmatmul.mubr.bf16.gmra.mrb[0].mxu0 %v6720
  %v7510 = vpop.f32.mrb[0].mxu0
  %v7511 = vadd.f32 0.0, %v7510
  %v7512 = vpop.f32.mrb[0].mxu0
  %v7513 = vpop.f32.mrb[0].mxu0
  %v7514 = vadd.f32 0.0, %v7513
  %v7515 = vpop.f32.mrb[0].mxu0
  %7516 = vmatprep.mubr.bf16.mxu0 0
  %7517 = vmatmul.mubr.bf16.gmra.mrb[0].mxu0 %v6721
  %v7518 = vpop.f32.mrb[0].mxu0
  %v7519 = vadd.f32 0.0, %v7518
  %v7520 = vpop.f32.mrb[0].mxu0
  %v7521 = vpop.f32.mrb[0].mxu0
  %v7522 = vadd.f32 0.0, %v7521
  %v7523 = vpop.f32.mrb[0].mxu0
  %7524 = vmatprep.mubr.bf16.mxu0 0
  %7525 = vmatmul.mubr.bf16.gmra.mrb[0].mxu0 %v6722
  %v7526 = vpop.f32.mrb[0].mxu0
  %v7527 = vadd.f32 0.0, %v7526
  %v7528 = vpop.f32.mrb[0].mxu0
  %v7529 = vpop.f32.mrb[0].mxu0
  %v7530 = vadd.f32 0.0, %v7529
  %v7531 = vpop.f32.mrb[0].mxu0
  %7532 = vmatprep.mubr.bf16.mxu0 0
  %7533 = vmatmul.mubr.bf16.gmra.mrb[0].mxu0 %v6723
  %v7534 = vpop.f32.mrb[0].mxu0
  %v7535 = vadd.f32 0.0, %v7534
  %v7536 = vpop.f32.mrb[0].mxu0
  %v7537 = vpop.f32.mrb[0].mxu0
  %v7538 = vadd.f32 0.0, %v7537
  %v7539 = vpop.f32.mrb[0].mxu0
  %7540 = vmatprep.mubr.bf16.mxu0 0
  %7541 = vmatmul.mubr.bf16.gmra.mrb[0].mxu0 %v6724
  %v7542 = vpop.f32.mrb[0].mxu0
  %v7543 = vadd.f32 0.0, %v7542
  %v7544 = vpop.f32.mrb[0].mxu0
  %v7545 = vpop.f32.mrb[0].mxu0
  %v7546 = vadd.f32 0.0, %v7545
  %v7547 = vpop.f32.mrb[0].mxu0
  %7548 = vmatprep.mubr.bf16.mxu0 0
  %7549 = vmatmul.mubr.bf16.gmra.mrb[0].mxu0 %v6725
  %v7550 = vpop.f32.mrb[0].mxu0
  %v7551 = vadd.f32 0.0, %v7550
  %v7552 = vpop.f32.mrb[0].mxu0
  %v7553 = vpop.f32.mrb[0].mxu0
  %v7554 = vadd.f32 0.0, %v7553
  %v7555 = vpop.f32.mrb[0].mxu0
  %7556 = vmatprep.mubr.bf16.mxu0 0
  %7557 = vmatmul.mubr.bf16.gmra.mrb[0].mxu0 %v6726
  %v7558 = vpop.f32.mrb[0].mxu0
  %v7559 = vadd.f32 0.0, %v7558
  %v7560 = vpop.f32.mrb[0].mxu0
  %v7561 = vpop.f32.mrb[0].mxu0
  %v7562 = vadd.f32 0.0, %v7561
  %v7563 = vpop.f32.mrb[0].mxu0
  %7564 = vmatprep.mubr.bf16.mxu0 0
  %7565 = vmatmul.mubr.bf16.gmra.mrb[0].mxu0 %v6727
  %v7566 = vpop.f32.mrb[0].mxu0
  %v7567 = vadd.f32 0.0, %v7566
  %v7568 = vpop.f32.mrb[0].mxu0
  %v7569 = vpop.f32.mrb[0].mxu0
  %v7570 = vadd.f32 0.0, %v7569
  %v7571 = vpop.f32.mrb[0].mxu0
  %7572 = vmatprep.mubr.bf16.mxu0 0
  %7573 = vmatmul.mubr.bf16.gmra.mrb[0].mxu0 %v6728
  %v7574 = vpop.f32.mrb[0].mxu0
  %v7575 = vadd.f32 0.0, %v7574
  %v7576 = vpop.f32.mrb[0].mxu0
  %v7577 = vpop.f32.mrb[0].mxu0
  %v7578 = vadd.f32 0.0, %v7577
  %v7579 = vpop.f32.mrb[0].mxu0
  %7580 = vmatprep.mubr.bf16.mxu0 0
  %7581 = vmatmul.mubr.bf16.gmra.mrb[0].mxu0 %v6729
  %v7582 = vpop.f32.mrb[0].mxu0
  %v7583 = vadd.f32 0.0, %v7582
  %v7584 = vpop.f32.mrb[0].mxu0
  %v7585 = vpop.f32.mrb[0].mxu0
  %v7586 = vadd.f32 0.0, %v7585
  %v7587 = vpop.f32.mrb[0].mxu0
  %7588 = vmatprep.mubr.bf16.mxu0 0
  %7589 = vmatmul.mubr.bf16.gmra.mrb[0].mxu0 %v7069
  %v7590 = vpop.f32.mrb[0].mxu0
  %v7591 = vadd.f32 0.0, %v7590
  %v7592 = vpop.f32.mrb[0].mxu0
  %v7593 = vpop.f32.mrb[0].mxu0
  %v7594 = vadd.f32 0.0, %v7593
  %v7595 = vpop.f32.mrb[0].mxu0
  %7596 = vmatprep.mubr.bf16.mxu0 0
  %7597 = vmatmul.mubr.bf16.gmra.mrb[0].mxu0 %v7394
  %v7598 = vpop.f32.mrb[0].mxu0
  %v7599 = vadd.f32 0.0, %v7598
  %v7600 = vpop.f32.mrb[0].mxu0
  %v7601 = vpop.f32.mrb[0].mxu0
  %v7602 = vadd.f32 0.0, %v7601
  %v7603 = vpop.f32.mrb[0].mxu0
  %7604 = vdwg.mxu0
  %v7605 = vadd.f32 %v7344, %v7479
  %v7606 = vadd.f32 %v7345, %v7482
  %v7607 = vadd.f32 %v7346, %v7487
  %v7608 = vadd.f32 %v7347, %v7490
  %v7609 = vadd.f32 %v7348, %v7495
  %v7610 = vadd.f32 %v7349, %v7498
  %v7611 = vadd.f32 %v7350, %v7503
  %v7612 = vadd.f32 %v7351, %v7506
  %v7613 = vadd.f32 %v7352, %v7511
  %v7614 = vadd.f32 %v7353, %v7514
  %v7615 = vadd.f32 %v7354, %v7519
  %v7616 = vadd.f32 %v7355, %v7522
  %v7617 = vadd.f32 %v7356, %v7527
  %v7618 = vadd.f32 %v7357, %v7530
  %v7619 = vadd.f32 %v7358, %v7535
  %v7620 = vadd.f32 %v7359, %v7538
  %v7621 = vadd.f32 %v7360, %v7543
  %v7622 = vadd.f32 %v7361, %v7546
  %v7623 = vadd.f32 %v7362, %v7551
  %v7624 = vadd.f32 %v7363, %v7554
  %v7625 = vadd.f32 %v7364, %v7559
  %v7626 = vadd.f32 %v7365, %v7562
  %v7627 = vadd.f32 %v7366, %v7567
  %v7628 = vadd.f32 %v7367, %v7570
  %v7629 = vadd.f32 %v7368, %v7575
  %v7630 = vadd.f32 %v7369, %v7578
  %v7631 = vadd.f32 %v7370, %v7583
  %v7632 = vadd.f32 %v7371, %v7586
  %v7633 = vadd.f32 %v7372, %v7591
  %v7634 = vadd.f32 %v7373, %v7594
  %v7635 = vadd.f32 %v7374, %v7599
  %v7636 = vadd.f32 %v7375, %v7602
  %7637 = vst [vmem:[%s5076] sm:$0xff] %v7605
  %7638 = vst [vmem:[%s5076 + $0x8] sm:$0xff] %v7606
  %7639 = vst [vmem:[%s5076 + $0x10] sm:$0xff] %v7607
  %7640 = vst [vmem:[%s5076 + $0x18] sm:$0xff] %v7608
  %7641 = vst [vmem:[%s5076 + $0x20] sm:$0xff] %v7609
  %7642 = vst [vmem:[%s5076 + $0x28] sm:$0xff] %v7610
  %7643 = vst [vmem:[%s5076 + $0x30] sm:$0xff] %v7611
  %7644 = vst [vmem:[%s5076 + $0x38] sm:$0xff] %v7612
  %7645 = vst [vmem:[%s5076 + $0x40] sm:$0xff] %v7613
  %7646 = vst [vmem:[%s5076 + $0x48] sm:$0xff] %v7614
  %7647 = vst [vmem:[%s5076 + $0x50] sm:$0xff] %v7615
  %7648 = vst [vmem:[%s5076 + $0x58] sm:$0xff] %v7616
  %7649 = vst [vmem:[%s5076 + $0x60] sm:$0xff] %v7617
  %7650 = vst [vmem:[%s5076 + $0x68] sm:$0xff] %v7618
  %7651 = vst [vmem:[%s5076 + $0x70] sm:$0xff] %v7619
  %7652 = vst [vmem:[%s5076 + $0x78] sm:$0xff] %v7620
  %7653 = vst [vmem:[%s5076 + $0x80] sm:$0xff] %v7621
  %7654 = vst [vmem:[%s5076 + $0x88] sm:$0xff] %v7622
  %7655 = vst [vmem:[%s5076 + $0x90] sm:$0xff] %v7623
  %7656 = vst [vmem:[%s5076 + $0x98] sm:$0xff] %v7624
  %7657 = vst [vmem:[%s5076 + $0xa0] sm:$0xff] %v7625
  %7658 = vst [vmem:[%s5076 + $0xa8] sm:$0xff] %v7626
  %7659 = vst [vmem:[%s5076 + $0xb0] sm:$0xff] %v7627
  %7660 = vst [vmem:[%s5076 + $0xb8] sm:$0xff] %v7628
  %7661 = vst [vmem:[%s5076 + $0xc0] sm:$0xff] %v7629
  %7662 = vst [vmem:[%s5076 + $0xc8] sm:$0xff] %v7630
  %7663 = vst [vmem:[%s5076 + $0xd0] sm:$0xff] %v7631
  %7664 = vst [vmem:[%s5076 + $0xd8] sm:$0xff] %v7632
  %7665 = vst [vmem:[%s5076 + $0xe0] sm:$0xff] %v7633
  %7666 = vst [vmem:[%s5076 + $0xe8] sm:$0xff] %v7634
  %7667 = vst [vmem:[%s5076 + $0xf0] sm:$0xff] %v7635
  %7668 = vst [vmem:[%s5076 + $0xf8] sm:$0xff] %v7636
  %v7669 = vld [vmem:[%s5039] sm:$0xe]
  %v7670 = vld [vmem:[%s5039 + $0x4] sm:$0xf]
  %v7671 = vld [vmem:[%s5039 + $0x8] sm:$0x1]
  %v7672 = vld [vmem:[%s5039 + $0xc] sm:$0xe]
  %v7673 = vld [vmem:[%s5039 + $0x10] sm:$0xf]
  %v7674 = vld [vmem:[%s5039 + $0x14] sm:$0x1]
  %v7675 = vld [vmem:[%s5039 + $0x18] sm:$0xe]
  %v7676 = vld [vmem:[%s5039 + $0x1c] sm:$0xf]
  %v7677 = vld [vmem:[%s5039 + $0x20] sm:$0x1]
  %v7678 = vld [vmem:[%s5039 + $0x24] sm:$0xe]
  %v7679 = vld [vmem:[%s5039 + $0x28] sm:$0xf]
  %v7680 = vld [vmem:[%s5039 + $0x2c] sm:$0x1]
  %v7681 = vld [vmem:[%s5039 + $0x30] sm:$0xe]
  %v7682 = vld [vmem:[%s5039 + $0x34] sm:$0xf]
  %v7683 = vld [vmem:[%s5039 + $0x38] sm:$0x1]
  %v7684 = vld [vmem:[%s5039 + $0x3c] sm:$0xe]
  %v7685 = vld [vmem:[%s5039 + $0x40] sm:$0xf]
  %v7686 = vld [vmem:[%s5039 + $0x44] sm:$0x1]
  %v7687 = vld [vmem:[%s5039 + $0x48] sm:$0xe]
  %v7688 = vld [vmem:[%s5039 + $0x4c] sm:$0xf]
  %v7689 = vld [vmem:[%s5039 + $0x50] sm:$0x1]
  %v7690 = vld [vmem:[%s5039 + $0x54] sm:$0xe]
  %v7691 = vld [vmem:[%s5039 + $0x58] sm:$0xf]
  %v7692 = vld [vmem:[%s5039 + $0x5c] sm:$0x1]
  %v7693 = vld [vmem:[%s5039 + $0x60] sm:$0xe]
  %v7694 = vld [vmem:[%s5039 + $0x64] sm:$0xf]
  %v7695 = vld [vmem:[%s5039 + $0x68] sm:$0x1]
  %v7696 = vld [vmem:[%s5039 + $0x6c] sm:$0xe]
  %v7697 = vld [vmem:[%s5039 + $0x70] sm:$0xf]
  %v7698 = vld [vmem:[%s5039 + $0x74] sm:$0x1]
  %v7699 = vld [vmem:[%s5039 + $0x78] sm:$0xe]
  %v7700 = vld [vmem:[%s5039 + $0x7c] sm:$0xf]
  %v7701 = vld [vmem:[%s5039 + $0x80] sm:$0x1]
  %v7702 = vld [vmem:[%s5039 + $0x84] sm:$0xe]
  %v7703 = vld [vmem:[%s5039 + $0x88] sm:$0xf]
  %v7704 = vld [vmem:[%s5039 + $0x8c] sm:$0x1]
  %v7705 = vld [vmem:[%s5039 + $0x90] sm:$0xe]
  %v7706 = vld [vmem:[%s5039 + $0x94] sm:$0xf]
  %v7707 = vld [vmem:[%s5039 + $0x98] sm:$0x1]
  %v7708 = vld [vmem:[%s5039 + $0x9c] sm:$0xe]
  %v7709 = vld [vmem:[%s5039 + $0xa0] sm:$0xf]
  %v7710 = vld [vmem:[%s5039 + $0xa4] sm:$0x1]
  %v7711 = vld [vmem:[%s5039 + $0xa8] sm:$0xe]
  %v7712 = vld [vmem:[%s5039 + $0xac] sm:$0xf]
  %v7713 = vld [vmem:[%s5039 + $0xb0] sm:$0x1]
  %v7714 = vld [vmem:[%s5039 + $0xb4] sm:$0xe]
  %v7715 = vld [vmem:[%s5039 + $0xb8] sm:$0xf]
  %v7716 = vld [vmem:[%s5039 + $0xbc] sm:$0x1]
  %v7717 = vld [vmem:[%s5039 + $0xc0] sm:$0xe]
  %v7718 = vld [vmem:[%s5039 + $0xc4] sm:$0xf]
  %v7719 = vld [vmem:[%s5039 + $0xc8] sm:$0x1]
  %v7720 = vld [vmem:[%s5039 + $0xcc] sm:$0xe]
  %v7721 = vld [vmem:[%s5039 + $0xd0] sm:$0xf]
  %v7722 = vld [vmem:[%s5039 + $0xd4] sm:$0x1]
  %v7777 = vrot.slane %v7669, 5
  %v7778 = vrot.slane %v7777, 4
  %v7779 = vrot.slane %v7670, 5
  %v7780 = vsel %vm3874, %v7778, %v7779
  %v7781 = vrot.slane %v7779, 4
  %v7782 = vrot.slane %v7671, 5
  %v7783 = vsel %vm3874, %v7781, %v7782
  %v7784 = vrot.slane %v7672, 5
  %v7785 = vrot.slane %v7784, 4
  %v7786 = vrot.slane %v7673, 5
  %v7787 = vsel %vm3874, %v7785, %v7786
  %v7788 = vrot.slane %v7786, 4
  %v7789 = vrot.slane %v7674, 5
  %v7790 = vsel %vm3874, %v7788, %v7789
  %v7791 = vrot.slane %v7675, 5
  %v7792 = vrot.slane %v7791, 4
  %v7793 = vrot.slane %v7676, 5
  %v7794 = vsel %vm3874, %v7792, %v7793
  %v7795 = vrot.slane %v7793, 4
  %v7796 = vrot.slane %v7677, 5
  %v7797 = vsel %vm3874, %v7795, %v7796
  %v7798 = vrot.slane %v7678, 5
  %v7799 = vrot.slane %v7798, 4
  %v7800 = vrot.slane %v7679, 5
  %v7801 = vsel %vm3874, %v7799, %v7800
  %v7802 = vrot.slane %v7800, 4
  %v7803 = vrot.slane %v7680, 5
  %v7804 = vsel %vm3874, %v7802, %v7803
  %v7805 = vrot.slane %v7681, 5
  %v7806 = vrot.slane %v7805, 4
  %v7807 = vrot.slane %v7682, 5
  %v7808 = vsel %vm3874, %v7806, %v7807
  %v7809 = vrot.slane %v7807, 4
  %v7810 = vrot.slane %v7683, 5
  %v7811 = vsel %vm3874, %v7809, %v7810
  %v7812 = vrot.slane %v7684, 5
  %v7813 = vrot.slane %v7812, 4
  %v7814 = vrot.slane %v7685, 5
  %v7815 = vsel %vm3874, %v7813, %v7814
  %v7816 = vrot.slane %v7814, 4
  %v7817 = vrot.slane %v7686, 5
  %v7818 = vsel %vm3874, %v7816, %v7817
  %v7819 = vrot.slane %v7687, 5
  %v7820 = vrot.slane %v7819, 4
  %v7821 = vrot.slane %v7688, 5
  %v7822 = vsel %vm3874, %v7820, %v7821
  %v7823 = vrot.slane %v7821, 4
  %v7824 = vrot.slane %v7689, 5
  %v7825 = vsel %vm3874, %v7823, %v7824
  %v7826 = vrot.slane %v7690, 5
  %v7827 = vrot.slane %v7826, 4
  %v7828 = vrot.slane %v7691, 5
  %v7829 = vsel %vm3874, %v7827, %v7828
  %v7830 = vrot.slane %v7828, 4
  %v7831 = vrot.slane %v7692, 5
  %v7832 = vsel %vm3874, %v7830, %v7831
  %v7833 = vrot.slane %v7693, 5
  %v7834 = vrot.slane %v7833, 4
  %v7835 = vrot.slane %v7694, 5
  %v7836 = vsel %vm3874, %v7834, %v7835
  %v7837 = vrot.slane %v7835, 4
  %v7838 = vrot.slane %v7695, 5
  %v7839 = vsel %vm3874, %v7837, %v7838
  %v7840 = vrot.slane %v7696, 5
  %v7841 = vrot.slane %v7840, 4
  %v7842 = vrot.slane %v7697, 5
  %v7843 = vsel %vm3874, %v7841, %v7842
  %v7844 = vrot.slane %v7842, 4
  %v7845 = vrot.slane %v7698, 5
  %v7846 = vsel %vm3874, %v7844, %v7845
  %v7847 = vrot.slane %v7699, 5
  %v7848 = vrot.slane %v7847, 4
  %v7849 = vrot.slane %v7700, 5
  %v7850 = vsel %vm3874, %v7848, %v7849
  %v7851 = vrot.slane %v7849, 4
  %v7852 = vrot.slane %v7701, 5
  %v7853 = vsel %vm3874, %v7851, %v7852
  %v7854 = vrot.slane %v7702, 5
  %v7855 = vrot.slane %v7854, 4
  %v7856 = vrot.slane %v7703, 5
  %v7857 = vsel %vm3874, %v7855, %v7856
  %v7858 = vrot.slane %v7856, 4
  %v7859 = vrot.slane %v7704, 5
  %v7860 = vsel %vm3874, %v7858, %v7859
  %v7861 = vrot.slane %v7705, 5
  %v7862 = vrot.slane %v7861, 4
  %v7863 = vrot.slane %v7706, 5
  %v7864 = vsel %vm3874, %v7862, %v7863
  %v7865 = vrot.slane %v7863, 4
  %v7866 = vrot.slane %v7707, 5
  %v7867 = vsel %vm3874, %v7865, %v7866
  %v7868 = vrot.slane %v7708, 5
  %v7869 = vrot.slane %v7868, 4
  %v7870 = vrot.slane %v7709, 5
  %v7871 = vsel %vm3874, %v7869, %v7870
  %v7872 = vrot.slane %v7870, 4
  %v7873 = vrot.slane %v7710, 5
  %v7874 = vsel %vm3874, %v7872, %v7873
  %v7875 = vrot.slane %v7711, 5
  %v7876 = vrot.slane %v7875, 4
  %v7877 = vrot.slane %v7712, 5
  %v7878 = vsel %vm3874, %v7876, %v7877
  %v7879 = vrot.slane %v7877, 4
  %v7880 = vrot.slane %v7713, 5
  %v7881 = vsel %vm3874, %v7879, %v7880
  %v7882 = vrot.slane %v7714, 5
  %v7883 = vrot.slane %v7882, 4
  %v7884 = vrot.slane %v7715, 5
  %v7885 = vsel %vm3874, %v7883, %v7884
  %v7886 = vrot.slane %v7884, 4
  %v7887 = vrot.slane %v7716, 5
  %v7888 = vsel %vm3874, %v7886, %v7887
  %v7889 = vrot.slane %v7717, 5
  %v7890 = vrot.slane %v7889, 4
  %v7891 = vrot.slane %v7718, 5
  %v7892 = vsel %vm3874, %v7890, %v7891
  %v7893 = vrot.slane %v7891, 4
  %v7894 = vrot.slane %v7719, 5
  %v7895 = vsel %vm3874, %v7893, %v7894
  %v7896 = vrot.slane %v7720, 5
  %v7897 = vrot.slane %v7896, 4
  %v7898 = vrot.slane %v7721, 5
  %v7899 = vsel %vm3874, %v7897, %v7898
  %v7900 = vrot.slane %v7898, 4
  %v7901 = vrot.slane %v7722, 5
  %v7902 = vsel %vm3874, %v7900, %v7901
  %v7903 = vld [vmem:[%s5076] sm:$0xff]
  %v7904 = vld [vmem:[%s5076 + $0x8] sm:$0xff]
  %v7905 = vld [vmem:[%s5076 + $0x10] sm:$0xff]
  %v7906 = vld [vmem:[%s5076 + $0x18] sm:$0xff]
  %v7907 = vld [vmem:[%s5076 + $0x20] sm:$0xff]
  %v7908 = vld [vmem:[%s5076 + $0x28] sm:$0xff]
  %v7909 = vld [vmem:[%s5076 + $0x30] sm:$0xff]
  %v7910 = vld [vmem:[%s5076 + $0x38] sm:$0xff]
  %v7911 = vld [vmem:[%s5076 + $0x40] sm:$0xff]
  %v7912 = vld [vmem:[%s5076 + $0x48] sm:$0xff]
  %v7913 = vld [vmem:[%s5076 + $0x50] sm:$0xff]
  %v7914 = vld [vmem:[%s5076 + $0x58] sm:$0xff]
  %v7915 = vld [vmem:[%s5076 + $0x60] sm:$0xff]
  %v7916 = vld [vmem:[%s5076 + $0x68] sm:$0xff]
  %v7917 = vld [vmem:[%s5076 + $0x70] sm:$0xff]
  %v7918 = vld [vmem:[%s5076 + $0x78] sm:$0xff]
  %v7919 = vld [vmem:[%s5076 + $0x80] sm:$0xff]
  %v7920 = vld [vmem:[%s5076 + $0x88] sm:$0xff]
  %v7921 = vld [vmem:[%s5076 + $0x90] sm:$0xff]
  %v7922 = vld [vmem:[%s5076 + $0x98] sm:$0xff]
  %v7923 = vld [vmem:[%s5076 + $0xa0] sm:$0xff]
  %v7924 = vld [vmem:[%s5076 + $0xa8] sm:$0xff]
  %v7925 = vld [vmem:[%s5076 + $0xb0] sm:$0xff]
  %v7926 = vld [vmem:[%s5076 + $0xb8] sm:$0xff]
  %v7927 = vld [vmem:[%s5076 + $0xc0] sm:$0xff]
  %v7928 = vld [vmem:[%s5076 + $0xc8] sm:$0xff]
  %v7929 = vld [vmem:[%s5076 + $0xd0] sm:$0xff]
  %v7930 = vld [vmem:[%s5076 + $0xd8] sm:$0xff]
  %v7931 = vld [vmem:[%s5076 + $0xe0] sm:$0xff]
  %v7932 = vld [vmem:[%s5076 + $0xe8] sm:$0xff]
  %v7933 = vld [vmem:[%s5076 + $0xf0] sm:$0xff]
  %v7934 = vld [vmem:[%s5076 + $0xf8] sm:$0xff]
  %v7935 = vld [vmem:[%s4033] sm:$0xf]
  %v7936 = vld [vmem:[%s4033 + $0x4] sm:$0xf]
  %v7937 = vld [vmem:[%s4033 + $0x8] sm:$0xf]
  %v7938 = vld [vmem:[%s4033 + $0xc] sm:$0xf]
  %v7939 = vld [vmem:[%s4033 + $0x10] sm:$0xf]
  %v7940 = vld [vmem:[%s4033 + $0x14] sm:$0xf]
  %v7941 = vld [vmem:[%s4033 + $0x18] sm:$0xf]
  %v7942 = vld [vmem:[%s4033 + $0x1c] sm:$0xf]
  %v7943 = vld [vmem:[%s4033 + $0x20] sm:$0xf]
  %v7944 = vld [vmem:[%s4033 + $0x24] sm:$0xf]
  %v7945 = vld [vmem:[%s4033 + $0x28] sm:$0xf]
  %v7946 = vld [vmem:[%s4033 + $0x2c] sm:$0xf]
  %v7947 = vld [vmem:[%s4033 + $0x30] sm:$0xf]
  %v7948 = vld [vmem:[%s4033 + $0x34] sm:$0xf]
  %v7949 = vld [vmem:[%s4033 + $0x38] sm:$0xf]
  %v7950 = vld [vmem:[%s4033 + $0x3c] sm:$0xf]
  %v7951 = vunpack.c.l.b16 %v7780
  %v7952 = vunpack.c.l.b16 %v7783
  %v7953 = vunpack.c.l.b16 %v7787
  %v7954 = vunpack.c.l.b16 %v7790
  %v7955 = vunpack.c.l.b16 %v7794
  %v7956 = vunpack.c.l.b16 %v7797
  %v7957 = vunpack.c.l.b16 %v7801
  %v7958 = vunpack.c.l.b16 %v7804
  %v7959 = vunpack.c.l.b16 %v7808
  %v7960 = vunpack.c.l.b16 %v7811
  %v7961 = vunpack.c.l.b16 %v7815
  %v7962 = vunpack.c.l.b16 %v7818
  %v7963 = vunpack.c.l.b16 %v7822
  %v7964 = vunpack.c.l.b16 %v7825
  %v7965 = vunpack.c.l.b16 %v7829
  %v7966 = vunpack.c.l.b16 %v7832
  %v7967 = vunpack.c.l.b16 %v7836
  %v7968 = vunpack.c.l.b16 %v7839
  %v7969 = vunpack.c.l.b16 %v7843
  %v7970 = vunpack.c.l.b16 %v7846
  %v7971 = vunpack.c.l.b16 %v7850
  %v7972 = vunpack.c.l.b16 %v7853
  %v7973 = vunpack.c.l.b16 %v7857
  %v7974 = vunpack.c.l.b16 %v7860
  %v7975 = vunpack.c.l.b16 %v7864
  %v7976 = vunpack.c.l.b16 %v7867
  %v7977 = vunpack.c.l.b16 %v7871
  %v7978 = vunpack.c.l.b16 %v7874
  %v7979 = vunpack.c.l.b16 %v7878
  %v7980 = vunpack.c.l.b16 %v7881
  %v7981 = vunpack.c.l.b16 %v7885
  %v7982 = vunpack.c.l.b16 %v7888
  %v7983 = vpack.c.b16 %v7952, %v7951
  %v7984 = vpack.c.b16 %v7954, %v7953
  %v7985 = vpack.c.b16 %v7956, %v7955
  %v7986 = vpack.c.b16 %v7958, %v7957
  %v7987 = vpack.c.b16 %v7960, %v7959
  %v7988 = vpack.c.b16 %v7962, %v7961
  %v7989 = vpack.c.b16 %v7964, %v7963
  %v7990 = vpack.c.b16 %v7966, %v7965
  %v7991 = vpack.c.b16 %v7968, %v7967
  %v7992 = vpack.c.b16 %v7970, %v7969
  %v7993 = vpack.c.b16 %v7972, %v7971
  %v7994 = vpack.c.b16 %v7974, %v7973
  %v7995 = vpack.c.b16 %v7976, %v7975
  %v7996 = vpack.c.b16 %v7978, %v7977
  %v7997 = vpack.c.b16 %v7980, %v7979
  %v7998 = vpack.c.b16 %v7982, %v7981
  %v8031 = vunpack.c.l.b16 %v7935
  %v8032 = vunpack.c.l.b16 %v7936
  %v8033 = vunpack.c.l.b16 %v7937
  %v8034 = vunpack.c.l.b16 %v7938
  %v8035 = vunpack.c.l.b16 %v7939
  %v8036 = vunpack.c.l.b16 %v7940
  %v8037 = vunpack.c.l.b16 %v7941
  %v8038 = vunpack.c.l.b16 %v7942
  %v8039 = vunpack.c.l.b16 %v7943
  %v8040 = vunpack.c.l.b16 %v7944
  %v8041 = vunpack.c.l.b16 %v7945
  %v8042 = vunpack.c.l.b16 %v7946
  %v8043 = vunpack.c.l.b16 %v7947
  %v8044 = vunpack.c.l.b16 %v7948
  %v8045 = vunpack.c.l.b16 %v7949
  %v8046 = vunpack.c.l.b16 %v7950
  %v8047 = vpack.c.b16 %v8032, %v8031
  %v8048 = vpack.c.b16 %v8034, %v8033
  %v8049 = vpack.c.b16 %v8036, %v8035
  %v8050 = vpack.c.b16 %v8038, %v8037
  %v8051 = vpack.c.b16 %v8040, %v8039
  %v8052 = vpack.c.b16 %v8042, %v8041
  %v8053 = vpack.c.b16 %v8044, %v8043
  %v8054 = vpack.c.b16 %v8046, %v8045
  %8063 = vmatprep.subr.bf16.mxu0 0
  %8064 = vmatpush1.bf16.msra.mxu0 %v8047
  %8065 = vmatprep.subr.bf16.mxu0 0
  %8066 = vmatpush1.bf16.msra.mxu0 %v8048
  %8067 = vmatprep.subr.bf16.mxu0 0
  %8068 = vmatpush1.bf16.msra.mxu0 %v8049
  %8069 = vmatprep.subr.bf16.mxu0 0
  %8070 = vmatpush1.bf16.msra.mxu0 %v8050
  %8071 = vmatprep.subr.bf16.mxu0 0
  %8072 = vmatpush1.bf16.msra.mxu0 %v8051
  %8073 = vmatprep.subr.bf16.mxu0 0
  %8074 = vmatpush1.bf16.msra.mxu0 %v8052
  %8075 = vmatprep.subr.bf16.mxu0 0
  %8076 = vmatpush1.bf16.msra.mxu0 %v8053
  %8077 = vmatprep.subr.bf16.mxu0 0
  %8078 = vmatpush1.bf16.msra.mxu0 %v8054
  %8079 = vmatprep.subr.bf16.mxu0 0
  %8080 = vmatpush1.bf16.msra.mxu0 0
  %8081 = vmatprep.subr.bf16.mxu0 0
  %8082 = vmatpush1.bf16.msra.mxu0 0
  %8083 = vmatprep.subr.bf16.mxu0 0
  %8084 = vmatpush1.bf16.msra.mxu0 0
  %8085 = vmatprep.subr.bf16.mxu0 0
  %8086 = vmatpush1.bf16.msra.mxu0 0
  %8087 = vmatprep.subr.bf16.mxu0 0
  %8088 = vmatpush1.bf16.msra.mxu0 0
  %8089 = vmatprep.subr.bf16.mxu0 0
  %8090 = vmatpush1.bf16.msra.mxu0 0
  %8091 = vmatprep.subr.bf16.mxu0 0
  %8092 = vmatpush1.bf16.msra.mxu0 0
  %8093 = vmatprep.subr.bf16.mxu0 0
  %8094 = vmatpush1.bf16.msra.mxu0 0
  %8095 = vmatprep.mubr.bf16.mxu0 0
  %8096 = vmatmul.mubr.bf16.gmra.mrb[0].mxu0 %v7983
  %v8097 = vpop.f32.mrb[0].mxu0
  %v8098 = vadd.f32 0.0, %v8097
  %v8099 = vpop.f32.mrb[0].mxu0
  %v8100 = vpop.f32.mrb[0].mxu0
  %v8101 = vadd.f32 0.0, %v8100
  %v8102 = vpop.f32.mrb[0].mxu0
  %8103 = vmatprep.mubr.bf16.mxu0 0
  %8104 = vmatmul.mubr.bf16.gmra.mrb[0].mxu0 %v7984
  %v8105 = vpop.f32.mrb[0].mxu0
  %v8106 = vadd.f32 0.0, %v8105
  %v8107 = vpop.f32.mrb[0].mxu0
  %v8108 = vpop.f32.mrb[0].mxu0
  %v8109 = vadd.f32 0.0, %v8108
  %v8110 = vpop.f32.mrb[0].mxu0
  %8111 = vmatprep.mubr.bf16.mxu0 0
  %8112 = vmatmul.mubr.bf16.gmra.mrb[0].mxu0 %v7985
  %v8113 = vpop.f32.mrb[0].mxu0
  %v8114 = vadd.f32 0.0, %v8113
  %v8115 = vpop.f32.mrb[0].mxu0
  %v8116 = vpop.f32.mrb[0].mxu0
  %v8117 = vadd.f32 0.0, %v8116
  %v8118 = vpop.f32.mrb[0].mxu0
  %8119 = vmatprep.mubr.bf16.mxu0 0
  %8120 = vmatmul.mubr.bf16.gmra.mrb[0].mxu0 %v7986
  %v8121 = vpop.f32.mrb[0].mxu0
  %v8122 = vadd.f32 0.0, %v8121
  %v8123 = vpop.f32.mrb[0].mxu0
  %v8124 = vpop.f32.mrb[0].mxu0
  %v8125 = vadd.f32 0.0, %v8124
  %v8126 = vpop.f32.mrb[0].mxu0
  %8127 = vmatprep.mubr.bf16.mxu0 0
  %8128 = vmatmul.mubr.bf16.gmra.mrb[0].mxu0 %v7987
  %v8129 = vpop.f32.mrb[0].mxu0
  %v8130 = vadd.f32 0.0, %v8129
  %v8131 = vpop.f32.mrb[0].mxu0
  %v8132 = vpop.f32.mrb[0].mxu0
  %v8133 = vadd.f32 0.0, %v8132
  %v8134 = vpop.f32.mrb[0].mxu0
  %8135 = vmatprep.mubr.bf16.mxu0 0
  %8136 = vmatmul.mubr.bf16.gmra.mrb[0].mxu0 %v7988
  %v8137 = vpop.f32.mrb[0].mxu0
  %v8138 = vadd.f32 0.0, %v8137
  %v8139 = vpop.f32.mrb[0].mxu0
  %v8140 = vpop.f32.mrb[0].mxu0
  %v8141 = vadd.f32 0.0, %v8140
  %v8142 = vpop.f32.mrb[0].mxu0
  %8143 = vmatprep.mubr.bf16.mxu0 0
  %8144 = vmatmul.mubr.bf16.gmra.mrb[0].mxu0 %v7989
  %v8145 = vpop.f32.mrb[0].mxu0
  %v8146 = vadd.f32 0.0, %v8145
  %v8147 = vpop.f32.mrb[0].mxu0
  %v8148 = vpop.f32.mrb[0].mxu0
  %v8149 = vadd.f32 0.0, %v8148
  %v8150 = vpop.f32.mrb[0].mxu0
  %8151 = vmatprep.mubr.bf16.mxu0 0
  %8152 = vmatmul.mubr.bf16.gmra.mrb[0].mxu0 %v7990
  %v8153 = vpop.f32.mrb[0].mxu0
  %v8154 = vadd.f32 0.0, %v8153
  %v8155 = vpop.f32.mrb[0].mxu0
  %v8156 = vpop.f32.mrb[0].mxu0
  %v8157 = vadd.f32 0.0, %v8156
  %v8158 = vpop.f32.mrb[0].mxu0
  %8159 = vmatprep.mubr.bf16.mxu0 0
  %8160 = vmatmul.mubr.bf16.gmra.mrb[0].mxu0 %v7991
  %v8161 = vpop.f32.mrb[0].mxu0
  %v8162 = vadd.f32 0.0, %v8161
  %v8163 = vpop.f32.mrb[0].mxu0
  %v8164 = vpop.f32.mrb[0].mxu0
  %v8165 = vadd.f32 0.0, %v8164
  %v8166 = vpop.f32.mrb[0].mxu0
  %8167 = vmatprep.mubr.bf16.mxu0 0
  %8168 = vmatmul.mubr.bf16.gmra.mrb[0].mxu0 %v7992
  %v8169 = vpop.f32.mrb[0].mxu0
  %v8170 = vadd.f32 0.0, %v8169
  %v8171 = vpop.f32.mrb[0].mxu0
  %v8172 = vpop.f32.mrb[0].mxu0
  %v8173 = vadd.f32 0.0, %v8172
  %v8174 = vpop.f32.mrb[0].mxu0
  %8175 = vmatprep.mubr.bf16.mxu0 0
  %8176 = vmatmul.mubr.bf16.gmra.mrb[0].mxu0 %v7993
  %v8177 = vpop.f32.mrb[0].mxu0
  %v8178 = vadd.f32 0.0, %v8177
  %v8179 = vpop.f32.mrb[0].mxu0
  %v8180 = vpop.f32.mrb[0].mxu0
  %v8181 = vadd.f32 0.0, %v8180
  %v8182 = vpop.f32.mrb[0].mxu0
  %8183 = vmatprep.mubr.bf16.mxu0 0
  %8184 = vmatmul.mubr.bf16.gmra.mrb[0].mxu0 %v7994
  %v8185 = vpop.f32.mrb[0].mxu0
  %v8186 = vadd.f32 0.0, %v8185
  %v8187 = vpop.f32.mrb[0].mxu0
  %v8188 = vpop.f32.mrb[0].mxu0
  %v8189 = vadd.f32 0.0, %v8188
  %v8190 = vpop.f32.mrb[0].mxu0
  %8191 = vmatprep.mubr.bf16.mxu0 0
  %8192 = vmatmul.mubr.bf16.gmra.mrb[0].mxu0 %v7995
  %v8193 = vpop.f32.mrb[0].mxu0
  %v8194 = vadd.f32 0.0, %v8193
  %v8195 = vpop.f32.mrb[0].mxu0
  %v8196 = vpop.f32.mrb[0].mxu0
  %v8197 = vadd.f32 0.0, %v8196
  %v8198 = vpop.f32.mrb[0].mxu0
  %8199 = vmatprep.mubr.bf16.mxu0 0
  %8200 = vmatmul.mubr.bf16.gmra.mrb[0].mxu0 %v7996
  %v8201 = vpop.f32.mrb[0].mxu0
  %v8202 = vadd.f32 0.0, %v8201
  %v8203 = vpop.f32.mrb[0].mxu0
  %v8204 = vpop.f32.mrb[0].mxu0
  %v8205 = vadd.f32 0.0, %v8204
  %v8206 = vpop.f32.mrb[0].mxu0
  %8207 = vmatprep.mubr.bf16.mxu0 0
  %8208 = vmatmul.mubr.bf16.gmra.mrb[0].mxu0 %v7997
  %v8209 = vpop.f32.mrb[0].mxu0
  %v8210 = vadd.f32 0.0, %v8209
  %v8211 = vpop.f32.mrb[0].mxu0
  %v8212 = vpop.f32.mrb[0].mxu0
  %v8213 = vadd.f32 0.0, %v8212
  %v8214 = vpop.f32.mrb[0].mxu0
  %8215 = vmatprep.mubr.bf16.mxu0 0
  %8216 = vmatmul.mubr.bf16.gmra.mrb[0].mxu0 %v7998
  %v8217 = vpop.f32.mrb[0].mxu0
  %v8218 = vadd.f32 0.0, %v8217
  %v8219 = vpop.f32.mrb[0].mxu0
  %v8220 = vpop.f32.mrb[0].mxu0
  %v8221 = vadd.f32 0.0, %v8220
  %v8222 = vpop.f32.mrb[0].mxu0
  %8223 = vdwg.mxu0
  %v8224 = vadd.f32 %v7903, %v8098
  %v8225 = vadd.f32 %v7904, %v8101
  %v8226 = vadd.f32 %v7905, %v8106
  %v8227 = vadd.f32 %v7906, %v8109
  %v8228 = vadd.f32 %v7907, %v8114
  %v8229 = vadd.f32 %v7908, %v8117
  %v8230 = vadd.f32 %v7909, %v8122
  %v8231 = vadd.f32 %v7910, %v8125
  %v8232 = vadd.f32 %v7911, %v8130
  %v8233 = vadd.f32 %v7912, %v8133
  %v8234 = vadd.f32 %v7913, %v8138
  %v8235 = vadd.f32 %v7914, %v8141
  %v8236 = vadd.f32 %v7915, %v8146
  %v8237 = vadd.f32 %v7916, %v8149
  %v8238 = vadd.f32 %v7917, %v8154
  %v8239 = vadd.f32 %v7918, %v8157
  %v8240 = vadd.f32 %v7919, %v8162
  %v8241 = vadd.f32 %v7920, %v8165
  %v8242 = vadd.f32 %v7921, %v8170
  %v8243 = vadd.f32 %v7922, %v8173
  %v8244 = vadd.f32 %v7923, %v8178
  %v8245 = vadd.f32 %v7924, %v8181
  %v8246 = vadd.f32 %v7925, %v8186
  %v8247 = vadd.f32 %v7926, %v8189
  %v8248 = vadd.f32 %v7927, %v8194
  %v8249 = vadd.f32 %v7928, %v8197
  %v8250 = vadd.f32 %v7929, %v8202
  %v8251 = vadd.f32 %v7930, %v8205
  %v8252 = vadd.f32 %v7931, %v8210
  %v8253 = vadd.f32 %v7932, %v8213
  %v8254 = vadd.f32 %v7933, %v8218
  %v8255 = vadd.f32 %v7934, %v8221
  %8256 = vst [vmem:[%s5076] sm:$0xff] %v8224
  %8257 = vst [vmem:[%s5076 + $0x8] sm:$0xff] %v8225
  %8258 = vst [vmem:[%s5076 + $0x10] sm:$0xff] %v8226
  %8259 = vst [vmem:[%s5076 + $0x18] sm:$0xff] %v8227
  %8260 = vst [vmem:[%s5076 + $0x20] sm:$0xff] %v8228
  %8261 = vst [vmem:[%s5076 + $0x28] sm:$0xff] %v8229
  %8262 = vst [vmem:[%s5076 + $0x30] sm:$0xff] %v8230
  %8263 = vst [vmem:[%s5076 + $0x38] sm:$0xff] %v8231
  %8264 = vst [vmem:[%s5076 + $0x40] sm:$0xff] %v8232
  %8265 = vst [vmem:[%s5076 + $0x48] sm:$0xff] %v8233
  %8266 = vst [vmem:[%s5076 + $0x50] sm:$0xff] %v8234
  %8267 = vst [vmem:[%s5076 + $0x58] sm:$0xff] %v8235
  %8268 = vst [vmem:[%s5076 + $0x60] sm:$0xff] %v8236
  %8269 = vst [vmem:[%s5076 + $0x68] sm:$0xff] %v8237
  %8270 = vst [vmem:[%s5076 + $0x70] sm:$0xff] %v8238
  %8271 = vst [vmem:[%s5076 + $0x78] sm:$0xff] %v8239
  %8272 = vst [vmem:[%s5076 + $0x80] sm:$0xff] %v8240
  %8273 = vst [vmem:[%s5076 + $0x88] sm:$0xff] %v8241
  %8274 = vst [vmem:[%s5076 + $0x90] sm:$0xff] %v8242
  %8275 = vst [vmem:[%s5076 + $0x98] sm:$0xff] %v8243
  %8276 = vst [vmem:[%s5076 + $0xa0] sm:$0xff] %v8244
  %8277 = vst [vmem:[%s5076 + $0xa8] sm:$0xff] %v8245
  %8278 = vst [vmem:[%s5076 + $0xb0] sm:$0xff] %v8246
  %8279 = vst [vmem:[%s5076 + $0xb8] sm:$0xff] %v8247
  %8280 = vst [vmem:[%s5076 + $0xc0] sm:$0xff] %v8248
  %8281 = vst [vmem:[%s5076 + $0xc8] sm:$0xff] %v8249
  %8282 = vst [vmem:[%s5076 + $0xd0] sm:$0xff] %v8250
  %8283 = vst [vmem:[%s5076 + $0xd8] sm:$0xff] %v8251
  %8284 = vst [vmem:[%s5076 + $0xe0] sm:$0xff] %v8252
  %8285 = vst [vmem:[%s5076 + $0xe8] sm:$0xff] %v8253
  %8286 = vst [vmem:[%s5076 + $0xf0] sm:$0xff] %v8254
  %8287 = vst [vmem:[%s5076 + $0xf8] sm:$0xff] %v8255
  %v8288 = vld [vmem:[%s5076] sm:$0xff]
  %v8289 = vld [vmem:[%s5076 + $0x8] sm:$0xff]
  %v8290 = vld [vmem:[%s5076 + $0x10] sm:$0xff]
  %v8291 = vld [vmem:[%s5076 + $0x18] sm:$0xff]
  %v8292 = vld [vmem:[%s5076 + $0x20] sm:$0xff]
  %v8293 = vld [vmem:[%s5076 + $0x28] sm:$0xff]
  %v8294 = vld [vmem:[%s5076 + $0x30] sm:$0xff]
  %v8295 = vld [vmem:[%s5076 + $0x38] sm:$0xff]
  %v8296 = vld [vmem:[%s5076 + $0x40] sm:$0xff]
  %v8297 = vld [vmem:[%s5076 + $0x48] sm:$0xff]
  %v8298 = vld [vmem:[%s5076 + $0x50] sm:$0xff]
  %v8299 = vld [vmem:[%s5076 + $0x58] sm:$0xff]
  %v8300 = vld [vmem:[%s5076 + $0x60] sm:$0xff]
  %v8301 = vld [vmem:[%s5076 + $0x68] sm:$0xff]
  %v8302 = vld [vmem:[%s5076 + $0x70] sm:$0xff]
  %v8303 = vld [vmem:[%s5076 + $0x78] sm:$0xff]
  %v8304 = vld [vmem:[%s5076 + $0x80] sm:$0xff]
  %v8305 = vld [vmem:[%s5076 + $0x88] sm:$0xff]
  %v8306 = vld [vmem:[%s5076 + $0x90] sm:$0xff]
  %v8307 = vld [vmem:[%s5076 + $0x98] sm:$0xff]
  %v8308 = vld [vmem:[%s5076 + $0xa0] sm:$0xff]
  %v8309 = vld [vmem:[%s5076 + $0xa8] sm:$0xff]
  %v8310 = vld [vmem:[%s5076 + $0xb0] sm:$0xff]
  %v8311 = vld [vmem:[%s5076 + $0xb8] sm:$0xff]
  %v8312 = vld [vmem:[%s5076 + $0xc0] sm:$0xff]
  %v8313 = vld [vmem:[%s5076 + $0xc8] sm:$0xff]
  %v8314 = vld [vmem:[%s5076 + $0xd0] sm:$0xff]
  %v8315 = vld [vmem:[%s5076 + $0xd8] sm:$0xff]
  %v8316 = vld [vmem:[%s5076 + $0xe0] sm:$0xff]
  %v8317 = vld [vmem:[%s5076 + $0xe8] sm:$0xff]
  %v8318 = vld [vmem:[%s5076 + $0xf0] sm:$0xff]
  %v8319 = vld [vmem:[%s5076 + $0xf8] sm:$0xff]
  %v8320 = vld [vmem:[%s4419] sm:$0xf]
  %v8321 = vld [vmem:[%s4419 + $0x4] sm:$0xf]
  %v8322 = vld [vmem:[%s4419 + $0x8] sm:$0xf]
  %v8323 = vld [vmem:[%s4419 + $0xc] sm:$0xf]
  %v8324 = vld [vmem:[%s4419 + $0x10] sm:$0xf]
  %v8325 = vld [vmem:[%s4419 + $0x14] sm:$0xf]
  %v8326 = vld [vmem:[%s4419 + $0x18] sm:$0xf]
  %v8327 = vld [vmem:[%s4419 + $0x1c] sm:$0xf]
  %v8328 = vld [vmem:[%s4419 + $0x20] sm:$0xf]
  %v8329 = vld [vmem:[%s4419 + $0x24] sm:$0xf]
  %v8330 = vld [vmem:[%s4419 + $0x28] sm:$0xf]
  %v8331 = vld [vmem:[%s4419 + $0x2c] sm:$0xf]
  %v8332 = vld [vmem:[%s4419 + $0x30] sm:$0xf]
  %v8333 = vld [vmem:[%s4419 + $0x34] sm:$0xf]
  %v8334 = vld [vmem:[%s4419 + $0x38] sm:$0xf]
  %v8335 = vld [vmem:[%s4419 + $0x3c] sm:$0xf]
  %v8336 = vunpack.c.l.b16 %v7892
  %v8337 = vunpack.c.l.b16 %v7895
  %v8338 = vpack.c.b16 %v8337, %v8336
  %v8356 = vunpack.c.l.b16 %v8320
  %v8357 = vunpack.c.l.b16 %v8321
  %v8358 = vunpack.c.l.b16 %v8322
  %v8359 = vunpack.c.l.b16 %v8323
  %v8360 = vunpack.c.l.b16 %v8324
  %v8361 = vunpack.c.l.b16 %v8325
  %v8362 = vunpack.c.l.b16 %v8326
  %v8363 = vunpack.c.l.b16 %v8327
  %v8364 = vunpack.c.l.b16 %v8328
  %v8365 = vunpack.c.l.b16 %v8329
  %v8366 = vunpack.c.l.b16 %v8330
  %v8367 = vunpack.c.l.b16 %v8331
  %v8368 = vunpack.c.l.b16 %v8332
  %v8369 = vunpack.c.l.b16 %v8333
  %v8370 = vunpack.c.l.b16 %v8334
  %v8371 = vunpack.c.l.b16 %v8335
  %v8372 = vpack.c.b16 %v8357, %v8356
  %v8373 = vpack.c.b16 %v8359, %v8358
  %v8374 = vpack.c.b16 %v8361, %v8360
  %v8375 = vpack.c.b16 %v8363, %v8362
  %v8376 = vpack.c.b16 %v8365, %v8364
  %v8377 = vpack.c.b16 %v8367, %v8366
  %v8378 = vpack.c.b16 %v8369, %v8368
  %v8379 = vpack.c.b16 %v8371, %v8370
  %8388 = vmatprep.subr.bf16.mxu0 0
  %8389 = vmatpush1.bf16.msra.mxu0 %v8372
  %8390 = vmatprep.subr.bf16.mxu0 0
  %8391 = vmatpush1.bf16.msra.mxu0 %v8373
  %8392 = vmatprep.subr.bf16.mxu0 0
  %8393 = vmatpush1.bf16.msra.mxu0 %v8374
  %8394 = vmatprep.subr.bf16.mxu0 0
  %8395 = vmatpush1.bf16.msra.mxu0 %v8375
  %8396 = vmatprep.subr.bf16.mxu0 0
  %8397 = vmatpush1.bf16.msra.mxu0 %v8376
  %8398 = vmatprep.subr.bf16.mxu0 0
  %8399 = vmatpush1.bf16.msra.mxu0 %v8377
  %8400 = vmatprep.subr.bf16.mxu0 0
  %8401 = vmatpush1.bf16.msra.mxu0 %v8378
  %8402 = vmatprep.subr.bf16.mxu0 0
  %8403 = vmatpush1.bf16.msra.mxu0 %v8379
  %8404 = vmatprep.subr.bf16.mxu0 0
  %8405 = vmatpush1.bf16.msra.mxu0 0
  %8406 = vmatprep.subr.bf16.mxu0 0
  %8407 = vmatpush1.bf16.msra.mxu0 0
  %8408 = vmatprep.subr.bf16.mxu0 0
  %8409 = vmatpush1.bf16.msra.mxu0 0
  %8410 = vmatprep.subr.bf16.mxu0 0
  %8411 = vmatpush1.bf16.msra.mxu0 0
  %8412 = vmatprep.subr.bf16.mxu0 0
  %8413 = vmatpush1.bf16.msra.mxu0 0
  %8414 = vmatprep.subr.bf16.mxu0 0
  %8415 = vmatpush1.bf16.msra.mxu0 0
  %8416 = vmatprep.subr.bf16.mxu0 0
  %8417 = vmatpush1.bf16.msra.mxu0 0
  %8418 = vmatprep.subr.bf16.mxu0 0
  %8419 = vmatpush1.bf16.msra.mxu0 0
  %8420 = vmatprep.mubr.bf16.mxu0 0
  %8421 = vmatmul.mubr.bf16.gmra.mrb[0].mxu0 %v7984
  %v8422 = vpop.f32.mrb[0].mxu0
  %v8423 = vadd.f32 0.0, %v8422
  %v8424 = vpop.f32.mrb[0].mxu0
  %v8425 = vpop.f32.mrb[0].mxu0
  %v8426 = vadd.f32 0.0, %v8425
  %v8427 = vpop.f32.mrb[0].mxu0
  %8428 = vmatprep.mubr.bf16.mxu0 0
  %8429 = vmatmul.mubr.bf16.gmra.mrb[0].mxu0 %v7985
  %v8430 = vpop.f32.mrb[0].mxu0
  %v8431 = vadd.f32 0.0, %v8430
  %v8432 = vpop.f32.mrb[0].mxu0
  %v8433 = vpop.f32.mrb[0].mxu0
  %v8434 = vadd.f32 0.0, %v8433
  %v8435 = vpop.f32.mrb[0].mxu0
  %8436 = vmatprep.mubr.bf16.mxu0 0
  %8437 = vmatmul.mubr.bf16.gmra.mrb[0].mxu0 %v7986
  %v8438 = vpop.f32.mrb[0].mxu0
  %v8439 = vadd.f32 0.0, %v8438
  %v8440 = vpop.f32.mrb[0].mxu0
  %v8441 = vpop.f32.mrb[0].mxu0
  %v8442 = vadd.f32 0.0, %v8441
  %v8443 = vpop.f32.mrb[0].mxu0
  %8444 = vmatprep.mubr.bf16.mxu0 0
  %8445 = vmatmul.mubr.bf16.gmra.mrb[0].mxu0 %v7987
  %v8446 = vpop.f32.mrb[0].mxu0
  %v8447 = vadd.f32 0.0, %v8446
  %v8448 = vpop.f32.mrb[0].mxu0
  %v8449 = vpop.f32.mrb[0].mxu0
  %v8450 = vadd.f32 0.0, %v8449
  %v8451 = vpop.f32.mrb[0].mxu0
  %8452 = vmatprep.mubr.bf16.mxu0 0
  %8453 = vmatmul.mubr.bf16.gmra.mrb[0].mxu0 %v7988
  %v8454 = vpop.f32.mrb[0].mxu0
  %v8455 = vadd.f32 0.0, %v8454
  %v8456 = vpop.f32.mrb[0].mxu0
  %v8457 = vpop.f32.mrb[0].mxu0
  %v8458 = vadd.f32 0.0, %v8457
  %v8459 = vpop.f32.mrb[0].mxu0
  %8460 = vmatprep.mubr.bf16.mxu0 0
  %8461 = vmatmul.mubr.bf16.gmra.mrb[0].mxu0 %v7989
  %v8462 = vpop.f32.mrb[0].mxu0
  %v8463 = vadd.f32 0.0, %v8462
  %v8464 = vpop.f32.mrb[0].mxu0
  %v8465 = vpop.f32.mrb[0].mxu0
  %v8466 = vadd.f32 0.0, %v8465
  %v8467 = vpop.f32.mrb[0].mxu0
  %8468 = vmatprep.mubr.bf16.mxu0 0
  %8469 = vmatmul.mubr.bf16.gmra.mrb[0].mxu0 %v7990
  %v8470 = vpop.f32.mrb[0].mxu0
  %v8471 = vadd.f32 0.0, %v8470
  %v8472 = vpop.f32.mrb[0].mxu0
  %v8473 = vpop.f32.mrb[0].mxu0
  %v8474 = vadd.f32 0.0, %v8473
  %v8475 = vpop.f32.mrb[0].mxu0
  %8476 = vmatprep.mubr.bf16.mxu0 0
  %8477 = vmatmul.mubr.bf16.gmra.mrb[0].mxu0 %v7991
  %v8478 = vpop.f32.mrb[0].mxu0
  %v8479 = vadd.f32 0.0, %v8478
  %v8480 = vpop.f32.mrb[0].mxu0
  %v8481 = vpop.f32.mrb[0].mxu0
  %v8482 = vadd.f32 0.0, %v8481
  %v8483 = vpop.f32.mrb[0].mxu0
  %8484 = vmatprep.mubr.bf16.mxu0 0
  %8485 = vmatmul.mubr.bf16.gmra.mrb[0].mxu0 %v7992
  %v8486 = vpop.f32.mrb[0].mxu0
  %v8487 = vadd.f32 0.0, %v8486
  %v8488 = vpop.f32.mrb[0].mxu0
  %v8489 = vpop.f32.mrb[0].mxu0
  %v8490 = vadd.f32 0.0, %v8489
  %v8491 = vpop.f32.mrb[0].mxu0
  %8492 = vmatprep.mubr.bf16.mxu0 0
  %8493 = vmatmul.mubr.bf16.gmra.mrb[0].mxu0 %v7993
  %v8494 = vpop.f32.mrb[0].mxu0
  %v8495 = vadd.f32 0.0, %v8494
  %v8496 = vpop.f32.mrb[0].mxu0
  %v8497 = vpop.f32.mrb[0].mxu0
  %v8498 = vadd.f32 0.0, %v8497
  %v8499 = vpop.f32.mrb[0].mxu0
  %8500 = vmatprep.mubr.bf16.mxu0 0
  %8501 = vmatmul.mubr.bf16.gmra.mrb[0].mxu0 %v7994
  %v8502 = vpop.f32.mrb[0].mxu0
  %v8503 = vadd.f32 0.0, %v8502
  %v8504 = vpop.f32.mrb[0].mxu0
  %v8505 = vpop.f32.mrb[0].mxu0
  %v8506 = vadd.f32 0.0, %v8505
  %v8507 = vpop.f32.mrb[0].mxu0
  %8508 = vmatprep.mubr.bf16.mxu0 0
  %8509 = vmatmul.mubr.bf16.gmra.mrb[0].mxu0 %v7995
  %v8510 = vpop.f32.mrb[0].mxu0
  %v8511 = vadd.f32 0.0, %v8510
  %v8512 = vpop.f32.mrb[0].mxu0
  %v8513 = vpop.f32.mrb[0].mxu0
  %v8514 = vadd.f32 0.0, %v8513
  %v8515 = vpop.f32.mrb[0].mxu0
  %8516 = vmatprep.mubr.bf16.mxu0 0
  %8517 = vmatmul.mubr.bf16.gmra.mrb[0].mxu0 %v7996
  %v8518 = vpop.f32.mrb[0].mxu0
  %v8519 = vadd.f32 0.0, %v8518
  %v8520 = vpop.f32.mrb[0].mxu0
  %v8521 = vpop.f32.mrb[0].mxu0
  %v8522 = vadd.f32 0.0, %v8521
  %v8523 = vpop.f32.mrb[0].mxu0
  %8524 = vmatprep.mubr.bf16.mxu0 0
  %8525 = vmatmul.mubr.bf16.gmra.mrb[0].mxu0 %v7997
  %v8526 = vpop.f32.mrb[0].mxu0
  %v8527 = vadd.f32 0.0, %v8526
  %v8528 = vpop.f32.mrb[0].mxu0
  %v8529 = vpop.f32.mrb[0].mxu0
  %v8530 = vadd.f32 0.0, %v8529
  %v8531 = vpop.f32.mrb[0].mxu0
  %8532 = vmatprep.mubr.bf16.mxu0 0
  %8533 = vmatmul.mubr.bf16.gmra.mrb[0].mxu0 %v7998
  %v8534 = vpop.f32.mrb[0].mxu0
  %v8535 = vadd.f32 0.0, %v8534
  %v8536 = vpop.f32.mrb[0].mxu0
  %v8537 = vpop.f32.mrb[0].mxu0
  %v8538 = vadd.f32 0.0, %v8537
  %v8539 = vpop.f32.mrb[0].mxu0
  %8540 = vmatprep.mubr.bf16.mxu0 0
  %8541 = vmatmul.mubr.bf16.gmra.mrb[0].mxu0 %v8338
  %v8542 = vpop.f32.mrb[0].mxu0
  %v8543 = vadd.f32 0.0, %v8542
  %v8544 = vpop.f32.mrb[0].mxu0
  %v8545 = vpop.f32.mrb[0].mxu0
  %v8546 = vadd.f32 0.0, %v8545
  %v8547 = vpop.f32.mrb[0].mxu0
  %8548 = vdwg.mxu0
  %v8549 = vadd.f32 %v8288, %v8423
  %v8550 = vadd.f32 %v8289, %v8426
  %v8551 = vadd.f32 %v8290, %v8431
  %v8552 = vadd.f32 %v8291, %v8434
  %v8553 = vadd.f32 %v8292, %v8439
  %v8554 = vadd.f32 %v8293, %v8442
  %v8555 = vadd.f32 %v8294, %v8447
  %v8556 = vadd.f32 %v8295, %v8450
  %v8557 = vadd.f32 %v8296, %v8455
  %v8558 = vadd.f32 %v8297, %v8458
  %v8559 = vadd.f32 %v8298, %v8463
  %v8560 = vadd.f32 %v8299, %v8466
  %v8561 = vadd.f32 %v8300, %v8471
  %v8562 = vadd.f32 %v8301, %v8474
  %v8563 = vadd.f32 %v8302, %v8479
  %v8564 = vadd.f32 %v8303, %v8482
  %v8565 = vadd.f32 %v8304, %v8487
  %v8566 = vadd.f32 %v8305, %v8490
  %v8567 = vadd.f32 %v8306, %v8495
  %v8568 = vadd.f32 %v8307, %v8498
  %v8569 = vadd.f32 %v8308, %v8503
  %v8570 = vadd.f32 %v8309, %v8506
  %v8571 = vadd.f32 %v8310, %v8511
  %v8572 = vadd.f32 %v8311, %v8514
  %v8573 = vadd.f32 %v8312, %v8519
  %v8574 = vadd.f32 %v8313, %v8522
  %v8575 = vadd.f32 %v8314, %v8527
  %v8576 = vadd.f32 %v8315, %v8530
  %v8577 = vadd.f32 %v8316, %v8535
  %v8578 = vadd.f32 %v8317, %v8538
  %v8579 = vadd.f32 %v8318, %v8543
  %v8580 = vadd.f32 %v8319, %v8546
  %8581 = vst [vmem:[%s5076] sm:$0xff] %v8549
  %8582 = vst [vmem:[%s5076 + $0x8] sm:$0xff] %v8550
  %8583 = vst [vmem:[%s5076 + $0x10] sm:$0xff] %v8551
  %8584 = vst [vmem:[%s5076 + $0x18] sm:$0xff] %v8552
  %8585 = vst [vmem:[%s5076 + $0x20] sm:$0xff] %v8553
  %8586 = vst [vmem:[%s5076 + $0x28] sm:$0xff] %v8554
  %8587 = vst [vmem:[%s5076 + $0x30] sm:$0xff] %v8555
  %8588 = vst [vmem:[%s5076 + $0x38] sm:$0xff] %v8556
  %8589 = vst [vmem:[%s5076 + $0x40] sm:$0xff] %v8557
  %8590 = vst [vmem:[%s5076 + $0x48] sm:$0xff] %v8558
  %8591 = vst [vmem:[%s5076 + $0x50] sm:$0xff] %v8559
  %8592 = vst [vmem:[%s5076 + $0x58] sm:$0xff] %v8560
  %8593 = vst [vmem:[%s5076 + $0x60] sm:$0xff] %v8561
  %8594 = vst [vmem:[%s5076 + $0x68] sm:$0xff] %v8562
  %8595 = vst [vmem:[%s5076 + $0x70] sm:$0xff] %v8563
  %8596 = vst [vmem:[%s5076 + $0x78] sm:$0xff] %v8564
  %8597 = vst [vmem:[%s5076 + $0x80] sm:$0xff] %v8565
  %8598 = vst [vmem:[%s5076 + $0x88] sm:$0xff] %v8566
  %8599 = vst [vmem:[%s5076 + $0x90] sm:$0xff] %v8567
  %8600 = vst [vmem:[%s5076 + $0x98] sm:$0xff] %v8568
  %8601 = vst [vmem:[%s5076 + $0xa0] sm:$0xff] %v8569
  %8602 = vst [vmem:[%s5076 + $0xa8] sm:$0xff] %v8570
  %8603 = vst [vmem:[%s5076 + $0xb0] sm:$0xff] %v8571
  %8604 = vst [vmem:[%s5076 + $0xb8] sm:$0xff] %v8572
  %8605 = vst [vmem:[%s5076 + $0xc0] sm:$0xff] %v8573
  %8606 = vst [vmem:[%s5076 + $0xc8] sm:$0xff] %v8574
  %8607 = vst [vmem:[%s5076 + $0xd0] sm:$0xff] %v8575
  %8608 = vst [vmem:[%s5076 + $0xd8] sm:$0xff] %v8576
  %8609 = vst [vmem:[%s5076 + $0xe0] sm:$0xff] %v8577
  %8610 = vst [vmem:[%s5076 + $0xe8] sm:$0xff] %v8578
  %8611 = vst [vmem:[%s5076 + $0xf0] sm:$0xff] %v8579
  %8612 = vst [vmem:[%s5076 + $0xf8] sm:$0xff] %v8580
  %v8613 = vld [vmem:[%s5076] sm:$0xff]
  %v8614 = vld [vmem:[%s5076 + $0x8] sm:$0xff]
  %v8615 = vld [vmem:[%s5076 + $0x10] sm:$0xff]
  %v8616 = vld [vmem:[%s5076 + $0x18] sm:$0xff]
  %v8617 = vld [vmem:[%s5076 + $0x20] sm:$0xff]
  %v8618 = vld [vmem:[%s5076 + $0x28] sm:$0xff]
  %v8619 = vld [vmem:[%s5076 + $0x30] sm:$0xff]
  %v8620 = vld [vmem:[%s5076 + $0x38] sm:$0xff]
  %v8621 = vld [vmem:[%s5076 + $0x40] sm:$0xff]
  %v8622 = vld [vmem:[%s5076 + $0x48] sm:$0xff]
  %v8623 = vld [vmem:[%s5076 + $0x50] sm:$0xff]
  %v8624 = vld [vmem:[%s5076 + $0x58] sm:$0xff]
  %v8625 = vld [vmem:[%s5076 + $0x60] sm:$0xff]
  %v8626 = vld [vmem:[%s5076 + $0x68] sm:$0xff]
  %v8627 = vld [vmem:[%s5076 + $0x70] sm:$0xff]
  %v8628 = vld [vmem:[%s5076 + $0x78] sm:$0xff]
  %v8629 = vld [vmem:[%s5076 + $0x80] sm:$0xff]
  %v8630 = vld [vmem:[%s5076 + $0x88] sm:$0xff]
  %v8631 = vld [vmem:[%s5076 + $0x90] sm:$0xff]
  %v8632 = vld [vmem:[%s5076 + $0x98] sm:$0xff]
  %v8633 = vld [vmem:[%s5076 + $0xa0] sm:$0xff]
  %v8634 = vld [vmem:[%s5076 + $0xa8] sm:$0xff]
  %v8635 = vld [vmem:[%s5076 + $0xb0] sm:$0xff]
  %v8636 = vld [vmem:[%s5076 + $0xb8] sm:$0xff]
  %v8637 = vld [vmem:[%s5076 + $0xc0] sm:$0xff]
  %v8638 = vld [vmem:[%s5076 + $0xc8] sm:$0xff]
  %v8639 = vld [vmem:[%s5076 + $0xd0] sm:$0xff]
  %v8640 = vld [vmem:[%s5076 + $0xd8] sm:$0xff]
  %v8641 = vld [vmem:[%s5076 + $0xe0] sm:$0xff]
  %v8642 = vld [vmem:[%s5076 + $0xe8] sm:$0xff]
  %v8643 = vld [vmem:[%s5076 + $0xf0] sm:$0xff]
  %v8644 = vld [vmem:[%s5076 + $0xf8] sm:$0xff]
  %v8645 = vld [vmem:[%s4745] sm:$0xf]
  %v8646 = vld [vmem:[%s4745 + $0x4] sm:$0xf]
  %v8647 = vld [vmem:[%s4745 + $0x8] sm:$0xf]
  %v8648 = vld [vmem:[%s4745 + $0xc] sm:$0xf]
  %v8649 = vld [vmem:[%s4745 + $0x10] sm:$0xf]
  %v8650 = vld [vmem:[%s4745 + $0x14] sm:$0xf]
  %v8651 = vld [vmem:[%s4745 + $0x18] sm:$0xf]
  %v8652 = vld [vmem:[%s4745 + $0x1c] sm:$0xf]
  %v8653 = vld [vmem:[%s4745 + $0x20] sm:$0xf]
  %v8654 = vld [vmem:[%s4745 + $0x24] sm:$0xf]
  %v8655 = vld [vmem:[%s4745 + $0x28] sm:$0xf]
  %v8656 = vld [vmem:[%s4745 + $0x2c] sm:$0xf]
  %v8657 = vld [vmem:[%s4745 + $0x30] sm:$0xf]
  %v8658 = vld [vmem:[%s4745 + $0x34] sm:$0xf]
  %v8659 = vld [vmem:[%s4745 + $0x38] sm:$0xf]
  %v8660 = vld [vmem:[%s4745 + $0x3c] sm:$0xf]
  %v8661 = vunpack.c.l.b16 %v7899
  %v8662 = vunpack.c.l.b16 %v7902
  %v8663 = vpack.c.b16 %v8662, %v8661
  %v8681 = vunpack.c.l.b16 %v8645
  %v8682 = vunpack.c.l.b16 %v8646
  %v8683 = vunpack.c.l.b16 %v8647
  %v8684 = vunpack.c.l.b16 %v8648
  %v8685 = vunpack.c.l.b16 %v8649
  %v8686 = vunpack.c.l.b16 %v8650
  %v8687 = vunpack.c.l.b16 %v8651
  %v8688 = vunpack.c.l.b16 %v8652
  %v8689 = vunpack.c.l.b16 %v8653
  %v8690 = vunpack.c.l.b16 %v8654
  %v8691 = vunpack.c.l.b16 %v8655
  %v8692 = vunpack.c.l.b16 %v8656
  %v8693 = vunpack.c.l.b16 %v8657
  %v8694 = vunpack.c.l.b16 %v8658
  %v8695 = vunpack.c.l.b16 %v8659
  %v8696 = vunpack.c.l.b16 %v8660
  %v8697 = vpack.c.b16 %v8682, %v8681
  %v8698 = vpack.c.b16 %v8684, %v8683
  %v8699 = vpack.c.b16 %v8686, %v8685
  %v8700 = vpack.c.b16 %v8688, %v8687
  %v8701 = vpack.c.b16 %v8690, %v8689
  %v8702 = vpack.c.b16 %v8692, %v8691
  %v8703 = vpack.c.b16 %v8694, %v8693
  %v8704 = vpack.c.b16 %v8696, %v8695
  %8713 = vmatprep.subr.bf16.mxu0 0
  %8714 = vmatpush1.bf16.msra.mxu0 %v8697
  %8715 = vmatprep.subr.bf16.mxu0 0
  %8716 = vmatpush1.bf16.msra.mxu0 %v8698
  %8717 = vmatprep.subr.bf16.mxu0 0
  %8718 = vmatpush1.bf16.msra.mxu0 %v8699
  %8719 = vmatprep.subr.bf16.mxu0 0
  %8720 = vmatpush1.bf16.msra.mxu0 %v8700
  %8721 = vmatprep.subr.bf16.mxu0 0
  %8722 = vmatpush1.bf16.msra.mxu0 %v8701
  %8723 = vmatprep.subr.bf16.mxu0 0
  %8724 = vmatpush1.bf16.msra.mxu0 %v8702
  %8725 = vmatprep.subr.bf16.mxu0 0
  %8726 = vmatpush1.bf16.msra.mxu0 %v8703
  %8727 = vmatprep.subr.bf16.mxu0 0
  %8728 = vmatpush1.bf16.msra.mxu0 %v8704
  %8729 = vmatprep.subr.bf16.mxu0 0
  %8730 = vmatpush1.bf16.msra.mxu0 0
  %8731 = vmatprep.subr.bf16.mxu0 0
  %8732 = vmatpush1.bf16.msra.mxu0 0
  %8733 = vmatprep.subr.bf16.mxu0 0
  %8734 = vmatpush1.bf16.msra.mxu0 0
  %8735 = vmatprep.subr.bf16.mxu0 0
  %8736 = vmatpush1.bf16.msra.mxu0 0
  %8737 = vmatprep.subr.bf16.mxu0 0
  %8738 = vmatpush1.bf16.msra.mxu0 0
  %8739 = vmatprep.subr.bf16.mxu0 0
  %8740 = vmatpush1.bf16.msra.mxu0 0
  %8741 = vmatprep.subr.bf16.mxu0 0
  %8742 = vmatpush1.bf16.msra.mxu0 0
  %8743 = vmatprep.subr.bf16.mxu0 0
  %8744 = vmatpush1.bf16.msra.mxu0 0
  %8745 = vmatprep.mubr.bf16.mxu0 0
  %8746 = vmatmul.mubr.bf16.gmra.mrb[0].mxu0 %v7985
  %v8747 = vpop.f32.mrb[0].mxu0
  %v8748 = vadd.f32 0.0, %v8747
  %v8749 = vpop.f32.mrb[0].mxu0
  %v8750 = vpop.f32.mrb[0].mxu0
  %v8751 = vadd.f32 0.0, %v8750
  %v8752 = vpop.f32.mrb[0].mxu0
  %8753 = vmatprep.mubr.bf16.mxu0 0
  %8754 = vmatmul.mubr.bf16.gmra.mrb[0].mxu0 %v7986
  %v8755 = vpop.f32.mrb[0].mxu0
  %v8756 = vadd.f32 0.0, %v8755
  %v8757 = vpop.f32.mrb[0].mxu0
  %v8758 = vpop.f32.mrb[0].mxu0
  %v8759 = vadd.f32 0.0, %v8758
  %v8760 = vpop.f32.mrb[0].mxu0
  %8761 = vmatprep.mubr.bf16.mxu0 0
  %8762 = vmatmul.mubr.bf16.gmra.mrb[0].mxu0 %v7987
  %v8763 = vpop.f32.mrb[0].mxu0
  %v8764 = vadd.f32 0.0, %v8763
  %v8765 = vpop.f32.mrb[0].mxu0
  %v8766 = vpop.f32.mrb[0].mxu0
  %v8767 = vadd.f32 0.0, %v8766
  %v8768 = vpop.f32.mrb[0].mxu0
  %8769 = vmatprep.mubr.bf16.mxu0 0
  %8770 = vmatmul.mubr.bf16.gmra.mrb[0].mxu0 %v7988
  %v8771 = vpop.f32.mrb[0].mxu0
  %v8772 = vadd.f32 0.0, %v8771
  %v8773 = vpop.f32.mrb[0].mxu0
  %v8774 = vpop.f32.mrb[0].mxu0
  %v8775 = vadd.f32 0.0, %v8774
  %v8776 = vpop.f32.mrb[0].mxu0
  %8777 = vmatprep.mubr.bf16.mxu0 0
  %8778 = vmatmul.mubr.bf16.gmra.mrb[0].mxu0 %v7989
  %v8779 = vpop.f32.mrb[0].mxu0
  %v8780 = vadd.f32 0.0, %v8779
  %v8781 = vpop.f32.mrb[0].mxu0
  %v8782 = vpop.f32.mrb[0].mxu0
  %v8783 = vadd.f32 0.0, %v8782
  %v8784 = vpop.f32.mrb[0].mxu0
  %8785 = vmatprep.mubr.bf16.mxu0 0
  %8786 = vmatmul.mubr.bf16.gmra.mrb[0].mxu0 %v7990
  %v8787 = vpop.f32.mrb[0].mxu0
  %v8788 = vadd.f32 0.0, %v8787
  %v8789 = vpop.f32.mrb[0].mxu0
  %v8790 = vpop.f32.mrb[0].mxu0
  %v8791 = vadd.f32 0.0, %v8790
  %v8792 = vpop.f32.mrb[0].mxu0
  %8793 = vmatprep.mubr.bf16.mxu0 0
  %8794 = vmatmul.mubr.bf16.gmra.mrb[0].mxu0 %v7991
  %v8795 = vpop.f32.mrb[0].mxu0
  %v8796 = vadd.f32 0.0, %v8795
  %v8797 = vpop.f32.mrb[0].mxu0
  %v8798 = vpop.f32.mrb[0].mxu0
  %v8799 = vadd.f32 0.0, %v8798
  %v8800 = vpop.f32.mrb[0].mxu0
  %8801 = vmatprep.mubr.bf16.mxu0 0
  %8802 = vmatmul.mubr.bf16.gmra.mrb[0].mxu0 %v7992
  %v8803 = vpop.f32.mrb[0].mxu0
  %v8804 = vadd.f32 0.0, %v8803
  %v8805 = vpop.f32.mrb[0].mxu0
  %v8806 = vpop.f32.mrb[0].mxu0
  %v8807 = vadd.f32 0.0, %v8806
  %v8808 = vpop.f32.mrb[0].mxu0
  %8809 = vmatprep.mubr.bf16.mxu0 0
  %8810 = vmatmul.mubr.bf16.gmra.mrb[0].mxu0 %v7993
  %v8811 = vpop.f32.mrb[0].mxu0
  %v8812 = vadd.f32 0.0, %v8811
  %v8813 = vpop.f32.mrb[0].mxu0
  %v8814 = vpop.f32.mrb[0].mxu0
  %v8815 = vadd.f32 0.0, %v8814
  %v8816 = vpop.f32.mrb[0].mxu0
  %8817 = vmatprep.mubr.bf16.mxu0 0
  %8818 = vmatmul.mubr.bf16.gmra.mrb[0].mxu0 %v7994
  %v8819 = vpop.f32.mrb[0].mxu0
  %v8820 = vadd.f32 0.0, %v8819
  %v8821 = vpop.f32.mrb[0].mxu0
  %v8822 = vpop.f32.mrb[0].mxu0
  %v8823 = vadd.f32 0.0, %v8822
  %v8824 = vpop.f32.mrb[0].mxu0
  %8825 = vmatprep.mubr.bf16.mxu0 0
  %8826 = vmatmul.mubr.bf16.gmra.mrb[0].mxu0 %v7995
  %v8827 = vpop.f32.mrb[0].mxu0
  %v8828 = vadd.f32 0.0, %v8827
  %v8829 = vpop.f32.mrb[0].mxu0
  %v8830 = vpop.f32.mrb[0].mxu0
  %v8831 = vadd.f32 0.0, %v8830
  %v8832 = vpop.f32.mrb[0].mxu0
  %8833 = vmatprep.mubr.bf16.mxu0 0
  %8834 = vmatmul.mubr.bf16.gmra.mrb[0].mxu0 %v7996
  %v8835 = vpop.f32.mrb[0].mxu0
  %v8836 = vadd.f32 0.0, %v8835
  %v8837 = vpop.f32.mrb[0].mxu0
  %v8838 = vpop.f32.mrb[0].mxu0
  %v8839 = vadd.f32 0.0, %v8838
  %v8840 = vpop.f32.mrb[0].mxu0
  %8841 = vmatprep.mubr.bf16.mxu0 0
  %8842 = vmatmul.mubr.bf16.gmra.mrb[0].mxu0 %v7997
  %v8843 = vpop.f32.mrb[0].mxu0
  %v8844 = vadd.f32 0.0, %v8843
  %v8845 = vpop.f32.mrb[0].mxu0
  %v8846 = vpop.f32.mrb[0].mxu0
  %v8847 = vadd.f32 0.0, %v8846
  %v8848 = vpop.f32.mrb[0].mxu0
  %8849 = vmatprep.mubr.bf16.mxu0 0
  %8850 = vmatmul.mubr.bf16.gmra.mrb[0].mxu0 %v7998
  %v8851 = vpop.f32.mrb[0].mxu0
  %v8852 = vadd.f32 0.0, %v8851
  %v8853 = vpop.f32.mrb[0].mxu0
  %v8854 = vpop.f32.mrb[0].mxu0
  %v8855 = vadd.f32 0.0, %v8854
  %v8856 = vpop.f32.mrb[0].mxu0
  %8857 = vmatprep.mubr.bf16.mxu0 0
  %8858 = vmatmul.mubr.bf16.gmra.mrb[0].mxu0 %v8338
  %v8859 = vpop.f32.mrb[0].mxu0
  %v8860 = vadd.f32 0.0, %v8859
  %v8861 = vpop.f32.mrb[0].mxu0
  %v8862 = vpop.f32.mrb[0].mxu0
  %v8863 = vadd.f32 0.0, %v8862
  %v8864 = vpop.f32.mrb[0].mxu0
  %8865 = vmatprep.mubr.bf16.mxu0 0
  %8866 = vmatmul.mubr.bf16.gmra.mrb[0].mxu0 %v8663
  %v8867 = vpop.f32.mrb[0].mxu0
  %v8868 = vadd.f32 0.0, %v8867
  %v8869 = vpop.f32.mrb[0].mxu0
  %v8870 = vpop.f32.mrb[0].mxu0
  %v8871 = vadd.f32 0.0, %v8870
  %v8872 = vpop.f32.mrb[0].mxu0
  %8873 = vdwg.mxu0
  %v8874 = vadd.f32 %v8613, %v8748
  %v8875 = vadd.f32 %v8614, %v8751
  %v8876 = vadd.f32 %v8615, %v8756
  %v8877 = vadd.f32 %v8616, %v8759
  %v8878 = vadd.f32 %v8617, %v8764
  %v8879 = vadd.f32 %v8618, %v8767
  %v8880 = vadd.f32 %v8619, %v8772
  %v8881 = vadd.f32 %v8620, %v8775
  %v8882 = vadd.f32 %v8621, %v8780
  %v8883 = vadd.f32 %v8622, %v8783
  %v8884 = vadd.f32 %v8623, %v8788
  %v8885 = vadd.f32 %v8624, %v8791
  %v8886 = vadd.f32 %v8625, %v8796
  %v8887 = vadd.f32 %v8626, %v8799
  %v8888 = vadd.f32 %v8627, %v8804
  %v8889 = vadd.f32 %v8628, %v8807
  %v8890 = vadd.f32 %v8629, %v8812
  %v8891 = vadd.f32 %v8630, %v8815
  %v8892 = vadd.f32 %v8631, %v8820
  %v8893 = vadd.f32 %v8632, %v8823
  %v8894 = vadd.f32 %v8633, %v8828
  %v8895 = vadd.f32 %v8634, %v8831
  %v8896 = vadd.f32 %v8635, %v8836
  %v8897 = vadd.f32 %v8636, %v8839
  %v8898 = vadd.f32 %v8637, %v8844
  %v8899 = vadd.f32 %v8638, %v8847
  %v8900 = vadd.f32 %v8639, %v8852
  %v8901 = vadd.f32 %v8640, %v8855
  %v8902 = vadd.f32 %v8641, %v8860
  %v8903 = vadd.f32 %v8642, %v8863
  %v8904 = vadd.f32 %v8643, %v8868
  %v8905 = vadd.f32 %v8644, %v8871
  %8906 = vst [vmem:[%s5076] sm:$0xff] %v8874
  %8907 = vst [vmem:[%s5076 + $0x8] sm:$0xff] %v8875
  %8908 = vst [vmem:[%s5076 + $0x10] sm:$0xff] %v8876
  %8909 = vst [vmem:[%s5076 + $0x18] sm:$0xff] %v8877
  %8910 = vst [vmem:[%s5076 + $0x20] sm:$0xff] %v8878
  %8911 = vst [vmem:[%s5076 + $0x28] sm:$0xff] %v8879
  %8912 = vst [vmem:[%s5076 + $0x30] sm:$0xff] %v8880
  %8913 = vst [vmem:[%s5076 + $0x38] sm:$0xff] %v8881
  %8914 = vst [vmem:[%s5076 + $0x40] sm:$0xff] %v8882
  %8915 = vst [vmem:[%s5076 + $0x48] sm:$0xff] %v8883
  %8916 = vst [vmem:[%s5076 + $0x50] sm:$0xff] %v8884
  %8917 = vst [vmem:[%s5076 + $0x58] sm:$0xff] %v8885
  %8918 = vst [vmem:[%s5076 + $0x60] sm:$0xff] %v8886
  %8919 = vst [vmem:[%s5076 + $0x68] sm:$0xff] %v8887
  %8920 = vst [vmem:[%s5076 + $0x70] sm:$0xff] %v8888
  %8921 = vst [vmem:[%s5076 + $0x78] sm:$0xff] %v8889
  %8922 = vst [vmem:[%s5076 + $0x80] sm:$0xff] %v8890
  %8923 = vst [vmem:[%s5076 + $0x88] sm:$0xff] %v8891
  %8924 = vst [vmem:[%s5076 + $0x90] sm:$0xff] %v8892
  %8925 = vst [vmem:[%s5076 + $0x98] sm:$0xff] %v8893
  %8926 = vst [vmem:[%s5076 + $0xa0] sm:$0xff] %v8894
  %8927 = vst [vmem:[%s5076 + $0xa8] sm:$0xff] %v8895
  %8928 = vst [vmem:[%s5076 + $0xb0] sm:$0xff] %v8896
  %8929 = vst [vmem:[%s5076 + $0xb8] sm:$0xff] %v8897
  %8930 = vst [vmem:[%s5076 + $0xc0] sm:$0xff] %v8898
  %8931 = vst [vmem:[%s5076 + $0xc8] sm:$0xff] %v8899
  %8932 = vst [vmem:[%s5076 + $0xd0] sm:$0xff] %v8900
  %8933 = vst [vmem:[%s5076 + $0xd8] sm:$0xff] %v8901
  %8934 = vst [vmem:[%s5076 + $0xe0] sm:$0xff] %v8902
  %8935 = vst [vmem:[%s5076 + $0xe8] sm:$0xff] %v8903
  %8936 = vst [vmem:[%s5076 + $0xf0] sm:$0xff] %v8904
  %8937 = vst [vmem:[%s5076 + $0xf8] sm:$0xff] %v8905
  // Predicated region
  $region18: #{yolo_block_forward.8} parent=0 // pred_check
    %p8938 = pneg %p15
  $region19: #{yolo_block_forward.8} parent=0 // pred_check_branch
    %8940 = sbr.rel (%p8938) target = $region21
  $region20: #{yolo_block_forward.8} parent=0 // pred_region
    %v8941 = vld [vmem:[#allocation3] sm:$0xff]
    %v8942 = vld [vmem:[#allocation3 + $0x8] sm:$0xff]
    %v8943 = vld [vmem:[#allocation3 + $0x10] sm:$0xff]
    %v8944 = vld [vmem:[#allocation3 + $0x18] sm:$0xff]
    %v8945 = vld [vmem:[#allocation3 + $0x20] sm:$0xff]
    %v8946 = vld [vmem:[#allocation3 + $0x28] sm:$0xff]
    %v8947 = vld [vmem:[#allocation3 + $0x30] sm:$0xff]
    %v8948 = vld [vmem:[#allocation3 + $0x38] sm:$0xff]
    %v8949 = vld [vmem:[#allocation3 + $0x40] sm:$0xff]
    %v8950 = vld [vmem:[#allocation3 + $0x48] sm:$0xff]
    %v8951 = vld [vmem:[#allocation3 + $0x50] sm:$0xff]
    %v8952 = vld [vmem:[#allocation3 + $0x58] sm:$0xff]
    %v8953 = vld [vmem:[#allocation3 + $0x60] sm:$0xff]
    %v8954 = vld [vmem:[#allocation3 + $0x68] sm:$0xff]
    %v8955 = vld [vmem:[#allocation3 + $0x70] sm:$0xff]
    %v8956 = vld [vmem:[#allocation3 + $0x78] sm:$0xff]
    %v8957 = vld [vmem:[#allocation3 + $0x80] sm:$0xff]
    %v8958 = vld [vmem:[#allocation3 + $0x88] sm:$0xff]
    %v8959 = vld [vmem:[#allocation3 + $0x90] sm:$0xff]
    %v8960 = vld [vmem:[#allocation3 + $0x98] sm:$0xff]
    %v8961 = vld [vmem:[#allocation3 + $0xa0] sm:$0xff]
    %v8962 = vld [vmem:[#allocation3 + $0xa8] sm:$0xff]
    %v8963 = vld [vmem:[#allocation3 + $0xb0] sm:$0xff]
    %v8964 = vld [vmem:[#allocation3 + $0xb8] sm:$0xff]
    %v8965 = vld [vmem:[#allocation3 + $0xc0] sm:$0xff]
    %v8966 = vld [vmem:[#allocation3 + $0xc8] sm:$0xff]
    %v8967 = vld [vmem:[#allocation3 + $0xd0] sm:$0xff]
    %v8968 = vld [vmem:[#allocation3 + $0xd8] sm:$0xff]
    %v8969 = vld [vmem:[#allocation3 + $0xe0] sm:$0xff]
    %v8970 = vld [vmem:[#allocation3 + $0xe8] sm:$0xff]
    %v8971 = vld [vmem:[#allocation3 + $0xf0] sm:$0xff]
    %v8972 = vld [vmem:[#allocation3 + $0xf8] sm:$0xff]
    %v8973 = vld [vmem:[#allocation3 + $0x100] sm:$0xff]
    %v8974 = vld [vmem:[#allocation3 + $0x108] sm:$0xff]
    %v8975 = vld [vmem:[#allocation3 + $0x110] sm:$0xff]
    %v8976 = vld [vmem:[#allocation3 + $0x118] sm:$0xff]
    %v8977 = vld [vmem:[#allocation3 + $0x120] sm:$0xff]
    %v8978 = vld [vmem:[#allocation3 + $0x128] sm:$0xff]
    %v8979 = vld [vmem:[#allocation3 + $0x130] sm:$0xff]
    %v8980 = vld [vmem:[#allocation3 + $0x138] sm:$0xff]
    %v8981 = vld [vmem:[#allocation3 + $0x140] sm:$0xff]
    %v8982 = vld [vmem:[#allocation3 + $0x148] sm:$0xff]
    %v8983 = vld [vmem:[#allocation3 + $0x150] sm:$0xff]
    %v8984 = vld [vmem:[#allocation3 + $0x158] sm:$0xff]
    %v8985 = vld [vmem:[#allocation3 + $0x160] sm:$0xff]
    %v8986 = vld [vmem:[#allocation3 + $0x168] sm:$0xff]
    %v8987 = vld [vmem:[#allocation3 + $0x170] sm:$0xff]
    %v8988 = vld [vmem:[#allocation3 + $0x178] sm:$0xff]
    %v8989 = vld [vmem:[#allocation3 + $0x180] sm:$0xff]
    %v8990 = vld [vmem:[#allocation3 + $0x188] sm:$0xff]
    %v8991 = vld [vmem:[#allocation3 + $0x190] sm:$0xff]
    %v8992 = vld [vmem:[#allocation3 + $0x198] sm:$0xff]
    %v8993 = vld [vmem:[#allocation3 + $0x1a0] sm:$0xff]
    %v8994 = vld [vmem:[#allocation3 + $0x1a8] sm:$0xff]
    %v8995 = vld [vmem:[#allocation3 + $0x1b0] sm:$0xff]
    %v8996 = vld [vmem:[#allocation3 + $0x1b8] sm:$0xff]
    %v8997 = vld [vmem:[#allocation3 + $0x1c0] sm:$0xff]
    %v8998 = vld [vmem:[#allocation3 + $0x1c8] sm:$0xff]
    %v8999 = vld [vmem:[#allocation3 + $0x1d0] sm:$0xff]
    %v9000 = vld [vmem:[#allocation3 + $0x1d8] sm:$0xff]
    %v9001 = vld [vmem:[#allocation3 + $0x1e0] sm:$0xff]
    %v9002 = vld [vmem:[#allocation3 + $0x1e8] sm:$0xff]
    %v9003 = vld [vmem:[#allocation3 + $0x1f0] sm:$0xff]
    %v9004 = vld [vmem:[#allocation3 + $0x1f8] sm:$0xff]
    %v9005 = vld [vmem:[%s2] sm:$0x1]
    %v9007 = vlaneseq
    %v9008 = vshrl.u32 %v9007, 7
    %v9009 = vsub.s32 0, %v9008
    %v9010 = vrot.slane %v9005, %v9009
    %v9012 = vadd.f32 %v8941, %v9010
    %v9013 = vadd.f32 %v8942, %v9010
    %v9014 = vadd.f32 %v8943, %v9010
    %v9015 = vadd.f32 %v8944, %v9010
    %v9016 = vadd.f32 %v8945, %v9010
    %v9017 = vadd.f32 %v8946, %v9010
    %v9018 = vadd.f32 %v8947, %v9010
    %v9019 = vadd.f32 %v8948, %v9010
    %v9020 = vadd.f32 %v8949, %v9010
    %v9021 = vadd.f32 %v8950, %v9010
    %v9022 = vadd.f32 %v8951, %v9010
    %v9023 = vadd.f32 %v8952, %v9010
    %v9024 = vadd.f32 %v8953, %v9010
    %v9025 = vadd.f32 %v8954, %v9010
    %v9026 = vadd.f32 %v8955, %v9010
    %v9027 = vadd.f32 %v8956, %v9010
    %v9028 = vadd.f32 %v8957, %v9010
    %v9029 = vadd.f32 %v8958, %v9010
    %v9030 = vadd.f32 %v8959, %v9010
    %v9031 = vadd.f32 %v8960, %v9010
    %v9032 = vadd.f32 %v8961, %v9010
    %v9033 = vadd.f32 %v8962, %v9010
    %v9034 = vadd.f32 %v8963, %v9010
    %v9035 = vadd.f32 %v8964, %v9010
    %v9036 = vadd.f32 %v8965, %v9010
    %v9037 = vadd.f32 %v8966, %v9010
    %v9038 = vadd.f32 %v8967, %v9010
    %v9039 = vadd.f32 %v8968, %v9010
    %v9040 = vadd.f32 %v8969, %v9010
    %v9041 = vadd.f32 %v8970, %v9010
    %v9042 = vadd.f32 %v8971, %v9010
    %v9043 = vadd.f32 %v8972, %v9010
    %v9044 = vadd.f32 %v8973, %v9010
    %v9045 = vadd.f32 %v8974, %v9010
    %v9046 = vadd.f32 %v8975, %v9010
    %v9047 = vadd.f32 %v8976, %v9010
    %v9048 = vadd.f32 %v8977, %v9010
    %v9049 = vadd.f32 %v8978, %v9010
    %v9050 = vadd.f32 %v8979, %v9010
    %v9051 = vadd.f32 %v8980, %v9010
    %v9052 = vadd.f32 %v8981, %v9010
    %v9053 = vadd.f32 %v8982, %v9010
    %v9054 = vadd.f32 %v8983, %v9010
    %v9055 = vadd.f32 %v8984, %v9010
    %v9056 = vadd.f32 %v8985, %v9010
    %v9057 = vadd.f32 %v8986, %v9010
    %v9058 = vadd.f32 %v8987, %v9010
    %v9059 = vadd.f32 %v8988, %v9010
    %v9060 = vadd.f32 %v8989, %v9010
    %v9061 = vadd.f32 %v8990, %v9010
    %v9062 = vadd.f32 %v8991, %v9010
    %v9063 = vadd.f32 %v8992, %v9010
    %v9064 = vadd.f32 %v8993, %v9010
    %v9065 = vadd.f32 %v8994, %v9010
    %v9066 = vadd.f32 %v8995, %v9010
    %v9067 = vadd.f32 %v8996, %v9010
    %v9068 = vadd.f32 %v8997, %v9010
    %v9069 = vadd.f32 %v8998, %v9010
    %v9070 = vadd.f32 %v8999, %v9010
    %v9071 = vadd.f32 %v9000, %v9010
    %v9072 = vadd.f32 %v9001, %v9010
    %v9073 = vadd.f32 %v9002, %v9010
    %v9074 = vadd.f32 %v9003, %v9010
    %v9075 = vadd.f32 %v9004, %v9010
    %vm9076 = vcmp.ge.f32.partialorder %v9012, 0.0
    %vm9077 = vcmp.ge.f32.partialorder %v9013, 0.0
    %vm9078 = vcmp.ge.f32.partialorder %v9014, 0.0
    %vm9079 = vcmp.ge.f32.partialorder %v9015, 0.0
    %vm9080 = vcmp.ge.f32.partialorder %v9016, 0.0
    %vm9081 = vcmp.ge.f32.partialorder %v9017, 0.0
    %vm9082 = vcmp.ge.f32.partialorder %v9018, 0.0
    %vm9083 = vcmp.ge.f32.partialorder %v9019, 0.0
    %vm9084 = vcmp.ge.f32.partialorder %v9020, 0.0
    %vm9085 = vcmp.ge.f32.partialorder %v9021, 0.0
    %vm9086 = vcmp.ge.f32.partialorder %v9022, 0.0
    %vm9087 = vcmp.ge.f32.partialorder %v9023, 0.0
    %vm9088 = vcmp.ge.f32.partialorder %v9024, 0.0
    %vm9089 = vcmp.ge.f32.partialorder %v9025, 0.0
    %vm9090 = vcmp.ge.f32.partialorder %v9026, 0.0
    %vm9091 = vcmp.ge.f32.partialorder %v9027, 0.0
    %vm9092 = vcmp.ge.f32.partialorder %v9028, 0.0
    %vm9093 = vcmp.ge.f32.partialorder %v9029, 0.0
    %vm9094 = vcmp.ge.f32.partialorder %v9030, 0.0
    %vm9095 = vcmp.ge.f32.partialorder %v9031, 0.0
    %vm9096 = vcmp.ge.f32.partialorder %v9032, 0.0
    %vm9097 = vcmp.ge.f32.partialorder %v9033, 0.0
    %vm9098 = vcmp.ge.f32.partialorder %v9034, 0.0
    %vm9099 = vcmp.ge.f32.partialorder %v9035, 0.0
    %vm9100 = vcmp.ge.f32.partialorder %v9036, 0.0
    %vm9101 = vcmp.ge.f32.partialorder %v9037, 0.0
    %vm9102 = vcmp.ge.f32.partialorder %v9038, 0.0
    %vm9103 = vcmp.ge.f32.partialorder %v9039, 0.0
    %vm9104 = vcmp.ge.f32.partialorder %v9040, 0.0
    %vm9105 = vcmp.ge.f32.partialorder %v9041, 0.0
    %vm9106 = vcmp.ge.f32.partialorder %v9042, 0.0
    %vm9107 = vcmp.ge.f32.partialorder %v9043, 0.0
    %vm9108 = vcmp.ge.f32.partialorder %v9044, 0.0
    %vm9109 = vcmp.ge.f32.partialorder %v9045, 0.0
    %vm9110 = vcmp.ge.f32.partialorder %v9046, 0.0
    %vm9111 = vcmp.ge.f32.partialorder %v9047, 0.0
    %vm9112 = vcmp.ge.f32.partialorder %v9048, 0.0
    %vm9113 = vcmp.ge.f32.partialorder %v9049, 0.0
    %vm9114 = vcmp.ge.f32.partialorder %v9050, 0.0
    %vm9115 = vcmp.ge.f32.partialorder %v9051, 0.0
    %vm9116 = vcmp.ge.f32.partialorder %v9052, 0.0
    %vm9117 = vcmp.ge.f32.partialorder %v9053, 0.0
    %vm9118 = vcmp.ge.f32.partialorder %v9054, 0.0
    %vm9119 = vcmp.ge.f32.partialorder %v9055, 0.0
    %vm9120 = vcmp.ge.f32.partialorder %v9056, 0.0
    %vm9121 = vcmp.ge.f32.partialorder %v9057, 0.0
    %vm9122 = vcmp.ge.f32.partialorder %v9058, 0.0
    %vm9123 = vcmp.ge.f32.partialorder %v9059, 0.0
    %vm9124 = vcmp.ge.f32.partialorder %v9060, 0.0
    %vm9125 = vcmp.ge.f32.partialorder %v9061, 0.0
    %vm9126 = vcmp.ge.f32.partialorder %v9062, 0.0
    %vm9127 = vcmp.ge.f32.partialorder %v9063, 0.0
    %vm9128 = vcmp.ge.f32.partialorder %v9064, 0.0
    %vm9129 = vcmp.ge.f32.partialorder %v9065, 0.0
    %vm9130 = vcmp.ge.f32.partialorder %v9066, 0.0
    %vm9131 = vcmp.ge.f32.partialorder %v9067, 0.0
    %vm9132 = vcmp.ge.f32.partialorder %v9068, 0.0
    %vm9133 = vcmp.ge.f32.partialorder %v9069, 0.0
    %vm9134 = vcmp.ge.f32.partialorder %v9070, 0.0
    %vm9135 = vcmp.ge.f32.partialorder %v9071, 0.0
    %vm9136 = vcmp.ge.f32.partialorder %v9072, 0.0
    %vm9137 = vcmp.ge.f32.partialorder %v9073, 0.0
    %vm9138 = vcmp.ge.f32.partialorder %v9074, 0.0
    %vm9139 = vcmp.ge.f32.partialorder %v9075, 0.0
    %v9140 = vmul.f32 %v9012, 0.1
    %v9141 = vmul.f32 %v9013, 0.1
    %v9142 = vmul.f32 %v9014, 0.1
    %v9143 = vmul.f32 %v9015, 0.1
    %v9144 = vmul.f32 %v9016, 0.1
    %v9145 = vmul.f32 %v9017, 0.1
    %v9146 = vmul.f32 %v9018, 0.1
    %v9147 = vmul.f32 %v9019, 0.1
    %v9148 = vmul.f32 %v9020, 0.1
    %v9149 = vmul.f32 %v9021, 0.1
    %v9150 = vmul.f32 %v9022, 0.1
    %v9151 = vmul.f32 %v9023, 0.1
    %v9152 = vmul.f32 %v9024, 0.1
    %v9153 = vmul.f32 %v9025, 0.1
    %v9154 = vmul.f32 %v9026, 0.1
    %v9155 = vmul.f32 %v9027, 0.1
    %v9156 = vmul.f32 %v9028, 0.1
    %v9157 = vmul.f32 %v9029, 0.1
    %v9158 = vmul.f32 %v9030, 0.1
    %v9159 = vmul.f32 %v9031, 0.1
    %v9160 = vmul.f32 %v9032, 0.1
    %v9161 = vmul.f32 %v9033, 0.1
    %v9162 = vmul.f32 %v9034, 0.1
    %v9163 = vmul.f32 %v9035, 0.1
    %v9164 = vmul.f32 %v9036, 0.1
    %v9165 = vmul.f32 %v9037, 0.1
    %v9166 = vmul.f32 %v9038, 0.1
    %v9167 = vmul.f32 %v9039, 0.1
    %v9168 = vmul.f32 %v9040, 0.1
    %v9169 = vmul.f32 %v9041, 0.1
    %v9170 = vmul.f32 %v9042, 0.1
    %v9171 = vmul.f32 %v9043, 0.1
    %v9172 = vmul.f32 %v9044, 0.1
    %v9173 = vmul.f32 %v9045, 0.1
    %v9174 = vmul.f32 %v9046, 0.1
    %v9175 = vmul.f32 %v9047, 0.1
    %v9176 = vmul.f32 %v9048, 0.1
    %v9177 = vmul.f32 %v9049, 0.1
    %v9178 = vmul.f32 %v9050, 0.1
    %v9179 = vmul.f32 %v9051, 0.1
    %v9180 = vmul.f32 %v9052, 0.1
    %v9181 = vmul.f32 %v9053, 0.1
    %v9182 = vmul.f32 %v9054, 0.1
    %v9183 = vmul.f32 %v9055, 0.1
    %v9184 = vmul.f32 %v9056, 0.1
    %v9185 = vmul.f32 %v9057, 0.1
    %v9186 = vmul.f32 %v9058, 0.1
    %v9187 = vmul.f32 %v9059, 0.1
    %v9188 = vmul.f32 %v9060, 0.1
    %v9189 = vmul.f32 %v9061, 0.1
    %v9190 = vmul.f32 %v9062, 0.1
    %v9191 = vmul.f32 %v9063, 0.1
    %v9192 = vmul.f32 %v9064, 0.1
    %v9193 = vmul.f32 %v9065, 0.1
    %v9194 = vmul.f32 %v9066, 0.1
    %v9195 = vmul.f32 %v9067, 0.1
    %v9196 = vmul.f32 %v9068, 0.1
    %v9197 = vmul.f32 %v9069, 0.1
    %v9198 = vmul.f32 %v9070, 0.1
    %v9199 = vmul.f32 %v9071, 0.1
    %v9200 = vmul.f32 %v9072, 0.1
    %v9201 = vmul.f32 %v9073, 0.1
    %v9202 = vmul.f32 %v9074, 0.1
    %v9203 = vmul.f32 %v9075, 0.1
    %v9204 = vsel %vm9076, %v9012, %v9140
    %v9205 = vsel %vm9077, %v9013, %v9141
    %v9206 = vsel %vm9078, %v9014, %v9142
    %v9207 = vsel %vm9079, %v9015, %v9143
    %v9208 = vsel %vm9080, %v9016, %v9144
    %v9209 = vsel %vm9081, %v9017, %v9145
    %v9210 = vsel %vm9082, %v9018, %v9146
    %v9211 = vsel %vm9083, %v9019, %v9147
    %v9212 = vsel %vm9084, %v9020, %v9148
    %v9213 = vsel %vm9085, %v9021, %v9149
    %v9214 = vsel %vm9086, %v9022, %v9150
    %v9215 = vsel %vm9087, %v9023, %v9151
    %v9216 = vsel %vm9088, %v9024, %v9152
    %v9217 = vsel %vm9089, %v9025, %v9153
    %v9218 = vsel %vm9090, %v9026, %v9154
    %v9219 = vsel %vm9091, %v9027, %v9155
    %v9220 = vsel %vm9092, %v9028, %v9156
    %v9221 = vsel %vm9093, %v9029, %v9157
    %v9222 = vsel %vm9094, %v9030, %v9158
    %v9223 = vsel %vm9095, %v9031, %v9159
    %v9224 = vsel %vm9096, %v9032, %v9160
    %v9225 = vsel %vm9097, %v9033, %v9161
    %v9226 = vsel %vm9098, %v9034, %v9162
    %v9227 = vsel %vm9099, %v9035, %v9163
    %v9228 = vsel %vm9100, %v9036, %v9164
    %v9229 = vsel %vm9101, %v9037, %v9165
    %v9230 = vsel %vm9102, %v9038, %v9166
    %v9231 = vsel %vm9103, %v9039, %v9167
    %v9232 = vsel %vm9104, %v9040, %v9168
    %v9233 = vsel %vm9105, %v9041, %v9169
    %v9234 = vsel %vm9106, %v9042, %v9170
    %v9235 = vsel %vm9107, %v9043, %v9171
    %v9236 = vsel %vm9108, %v9044, %v9172
    %v9237 = vsel %vm9109, %v9045, %v9173
    %v9238 = vsel %vm9110, %v9046, %v9174
    %v9239 = vsel %vm9111, %v9047, %v9175
    %v9240 = vsel %vm9112, %v9048, %v9176
    %v9241 = vsel %vm9113, %v9049, %v9177
    %v9242 = vsel %vm9114, %v9050, %v9178
    %v9243 = vsel %vm9115, %v9051, %v9179
    %v9244 = vsel %vm9116, %v9052, %v9180
    %v9245 = vsel %vm9117, %v9053, %v9181
    %v9246 = vsel %vm9118, %v9054, %v9182
    %v9247 = vsel %vm9119, %v9055, %v9183
    %v9248 = vsel %vm9120, %v9056, %v9184
    %v9249 = vsel %vm9121, %v9057, %v9185
    %v9250 = vsel %vm9122, %v9058, %v9186
    %v9251 = vsel %vm9123, %v9059, %v9187
    %v9252 = vsel %vm9124, %v9060, %v9188
    %v9253 = vsel %vm9125, %v9061, %v9189
    %v9254 = vsel %vm9126, %v9062, %v9190
    %v9255 = vsel %vm9127, %v9063, %v9191
    %v9256 = vsel %vm9128, %v9064, %v9192
    %v9257 = vsel %vm9129, %v9065, %v9193
    %v9258 = vsel %vm9130, %v9066, %v9194
    %v9259 = vsel %vm9131, %v9067, %v9195
    %v9260 = vsel %vm9132, %v9068, %v9196
    %v9261 = vsel %vm9133, %v9069, %v9197
    %v9262 = vsel %vm9134, %v9070, %v9198
    %v9263 = vsel %vm9135, %v9071, %v9199
    %v9264 = vsel %vm9136, %v9072, %v9200
    %v9265 = vsel %vm9137, %v9073, %v9201
    %v9266 = vsel %vm9138, %v9074, %v9202
    %v9267 = vsel %vm9139, %v9075, %v9203
    %v9268 = vpack.c.bf16 %v9205, %v9204
    %v9269 = vpack.c.bf16 %v9207, %v9206
    %v9270 = vpack.c.bf16 %v9209, %v9208
    %v9271 = vpack.c.bf16 %v9211, %v9210
    %v9272 = vpack.c.bf16 %v9213, %v9212
    %v9273 = vpack.c.bf16 %v9215, %v9214
    %v9274 = vpack.c.bf16 %v9217, %v9216
    %v9275 = vpack.c.bf16 %v9219, %v9218
    %v9276 = vpack.c.bf16 %v9221, %v9220
    %v9277 = vpack.c.bf16 %v9223, %v9222
    %v9278 = vpack.c.bf16 %v9225, %v9224
    %v9279 = vpack.c.bf16 %v9227, %v9226
    %v9280 = vpack.c.bf16 %v9229, %v9228
    %v9281 = vpack.c.bf16 %v9231, %v9230
    %v9282 = vpack.c.bf16 %v9233, %v9232
    %v9283 = vpack.c.bf16 %v9235, %v9234
    %v9284 = vpack.c.bf16 %v9237, %v9236
    %v9285 = vpack.c.bf16 %v9239, %v9238
    %v9286 = vpack.c.bf16 %v9241, %v9240
    %v9287 = vpack.c.bf16 %v9243, %v9242
    %v9288 = vpack.c.bf16 %v9245, %v9244
    %v9289 = vpack.c.bf16 %v9247, %v9246
    %v9290 = vpack.c.bf16 %v9249, %v9248
    %v9291 = vpack.c.bf16 %v9251, %v9250
    %v9292 = vpack.c.bf16 %v9253, %v9252
    %v9293 = vpack.c.bf16 %v9255, %v9254
    %v9294 = vpack.c.bf16 %v9257, %v9256
    %v9295 = vpack.c.bf16 %v9259, %v9258
    %v9296 = vpack.c.bf16 %v9261, %v9260
    %v9297 = vpack.c.bf16 %v9263, %v9262
    %v9298 = vpack.c.bf16 %v9265, %v9264
    %v9299 = vpack.c.bf16 %v9267, %v9266
    %v9332 = vunpack.c.l.b16 %v9268
    %v9333 = vunpack.c.h.b16 %v9268
    %v9334 = vunpack.c.l.b16 %v9269
    %v9335 = vunpack.c.h.b16 %v9269
    %v9336 = vunpack.c.l.b16 %v9270
    %v9337 = vunpack.c.h.b16 %v9270
    %v9338 = vunpack.c.l.b16 %v9271
    %v9339 = vunpack.c.h.b16 %v9271
    %v9340 = vunpack.c.l.b16 %v9272
    %v9341 = vunpack.c.h.b16 %v9272
    %v9342 = vunpack.c.l.b16 %v9273
    %v9343 = vunpack.c.h.b16 %v9273
    %v9344 = vunpack.c.l.b16 %v9274
    %v9345 = vunpack.c.h.b16 %v9274
    %v9346 = vunpack.c.l.b16 %v9275
    %v9347 = vunpack.c.h.b16 %v9275
    %v9348 = vunpack.c.l.b16 %v9276
    %v9349 = vunpack.c.h.b16 %v9276
    %v9350 = vunpack.c.l.b16 %v9277
    %v9351 = vunpack.c.h.b16 %v9277
    %v9352 = vunpack.c.l.b16 %v9278
    %v9353 = vunpack.c.h.b16 %v9278
    %v9354 = vunpack.c.l.b16 %v9279
    %v9355 = vunpack.c.h.b16 %v9279
    %v9356 = vunpack.c.l.b16 %v9280
    %v9357 = vunpack.c.h.b16 %v9280
    %v9358 = vunpack.c.l.b16 %v9281
    %v9359 = vunpack.c.h.b16 %v9281
    %v9360 = vunpack.c.l.b16 %v9282
    %v9361 = vunpack.c.h.b16 %v9282
    %v9362 = vunpack.c.l.b16 %v9283
    %v9363 = vunpack.c.h.b16 %v9283
    %v9364 = vunpack.c.l.b16 %v9284
    %v9365 = vunpack.c.h.b16 %v9284
    %v9366 = vunpack.c.l.b16 %v9285
    %v9367 = vunpack.c.h.b16 %v9285
    %v9368 = vunpack.c.l.b16 %v9286
    %v9369 = vunpack.c.h.b16 %v9286
    %v9370 = vunpack.c.l.b16 %v9287
    %v9371 = vunpack.c.h.b16 %v9287
    %v9372 = vunpack.c.l.b16 %v9288
    %v9373 = vunpack.c.h.b16 %v9288
    %v9374 = vunpack.c.l.b16 %v9289
    %v9375 = vunpack.c.h.b16 %v9289
    %v9376 = vunpack.c.l.b16 %v9290
    %v9377 = vunpack.c.h.b16 %v9290
    %v9378 = vunpack.c.l.b16 %v9291
    %v9379 = vunpack.c.h.b16 %v9291
    %v9380 = vunpack.c.l.b16 %v9292
    %v9381 = vunpack.c.h.b16 %v9292
    %v9382 = vunpack.c.l.b16 %v9293
    %v9383 = vunpack.c.h.b16 %v9293
    %v9384 = vunpack.c.l.b16 %v9294
    %v9385 = vunpack.c.h.b16 %v9294
    %v9386 = vunpack.c.l.b16 %v9295
    %v9387 = vunpack.c.h.b16 %v9295
    %v9388 = vunpack.c.l.b16 %v9296
    %v9389 = vunpack.c.h.b16 %v9296
    %v9390 = vunpack.c.l.b16 %v9297
    %v9391 = vunpack.c.h.b16 %v9297
    %v9392 = vunpack.c.l.b16 %v9298
    %v9393 = vunpack.c.h.b16 %v9298
    %v9394 = vunpack.c.l.b16 %v9299
    %v9395 = vunpack.c.h.b16 %v9299
    %v9396 = vpack.c.b16 %v9332, %v9332
    %v9397 = vpack.c.b16 %v9333, %v9333
    %v9398 = vpack.c.b16 %v9334, %v9334
    %v9399 = vpack.c.b16 %v9335, %v9335
    %v9400 = vpack.c.b16 %v9336, %v9336
    %v9401 = vpack.c.b16 %v9337, %v9337
    %v9402 = vpack.c.b16 %v9338, %v9338
    %v9403 = vpack.c.b16 %v9339, %v9339
    %v9404 = vpack.c.b16 %v9340, %v9340
    %v9405 = vpack.c.b16 %v9341, %v9341
    %v9406 = vpack.c.b16 %v9342, %v9342
    %v9407 = vpack.c.b16 %v9343, %v9343
    %v9408 = vpack.c.b16 %v9344, %v9344
    %v9409 = vpack.c.b16 %v9345, %v9345
    %v9410 = vpack.c.b16 %v9346, %v9346
    %v9411 = vpack.c.b16 %v9347, %v9347
    %v9412 = vpack.c.b16 %v9348, %v9348
    %v9413 = vpack.c.b16 %v9349, %v9349
    %v9414 = vpack.c.b16 %v9350, %v9350
    %v9415 = vpack.c.b16 %v9351, %v9351
    %v9416 = vpack.c.b16 %v9352, %v9352
    %v9417 = vpack.c.b16 %v9353, %v9353
    %v9418 = vpack.c.b16 %v9354, %v9354
    %v9419 = vpack.c.b16 %v9355, %v9355
    %v9420 = vpack.c.b16 %v9356, %v9356
    %v9421 = vpack.c.b16 %v9357, %v9357
    %v9422 = vpack.c.b16 %v9358, %v9358
    %v9423 = vpack.c.b16 %v9359, %v9359
    %v9424 = vpack.c.b16 %v9360, %v9360
    %v9425 = vpack.c.b16 %v9361, %v9361
    %v9426 = vpack.c.b16 %v9362, %v9362
    %v9427 = vpack.c.b16 %v9363, %v9363
    %v9428 = vpack.c.b16 %v9364, %v9364
    %v9429 = vpack.c.b16 %v9365, %v9365
    %v9430 = vpack.c.b16 %v9366, %v9366
    %v9431 = vpack.c.b16 %v9367, %v9367
    %v9432 = vpack.c.b16 %v9368, %v9368
    %v9433 = vpack.c.b16 %v9369, %v9369
    %v9434 = vpack.c.b16 %v9370, %v9370
    %v9435 = vpack.c.b16 %v9371, %v9371
    %v9436 = vpack.c.b16 %v9372, %v9372
    %v9437 = vpack.c.b16 %v9373, %v9373
    %v9438 = vpack.c.b16 %v9374, %v9374
    %v9439 = vpack.c.b16 %v9375, %v9375
    %v9440 = vpack.c.b16 %v9376, %v9376
    %v9441 = vpack.c.b16 %v9377, %v9377
    %v9442 = vpack.c.b16 %v9378, %v9378
    %v9443 = vpack.c.b16 %v9379, %v9379
    %v9444 = vpack.c.b16 %v9380, %v9380
    %v9445 = vpack.c.b16 %v9381, %v9381
    %v9446 = vpack.c.b16 %v9382, %v9382
    %v9447 = vpack.c.b16 %v9383, %v9383
    %v9448 = vpack.c.b16 %v9384, %v9384
    %v9449 = vpack.c.b16 %v9385, %v9385
    %v9450 = vpack.c.b16 %v9386, %v9386
    %v9451 = vpack.c.b16 %v9387, %v9387
    %v9452 = vpack.c.b16 %v9388, %v9388
    %v9453 = vpack.c.b16 %v9389, %v9389
    %v9454 = vpack.c.b16 %v9390, %v9390
    %v9455 = vpack.c.b16 %v9391, %v9391
    %v9456 = vpack.c.b16 %v9392, %v9392
    %v9457 = vpack.c.b16 %v9393, %v9393
    %v9458 = vpack.c.b16 %v9394, %v9394
    %v9459 = vpack.c.b16 %v9395, %v9395
    %9524 = vst [vmem:[%s3] sm:$0xf] %v9396
    %9525 = vst [vmem:[%s3 + $0x4] sm:$0xf] %v9397
    %9526 = vst [vmem:[%s3 + $0x8] sm:$0xf] %v9398
    %9527 = vst [vmem:[%s3 + $0xc] sm:$0xf] %v9399
    %9528 = vst [vmem:[%s3 + $0x10] sm:$0xf] %v9400
    %9529 = vst [vmem:[%s3 + $0x14] sm:$0xf] %v9401
    %9530 = vst [vmem:[%s3 + $0x18] sm:$0xf] %v9402
    %9531 = vst [vmem:[%s3 + $0x1c] sm:$0xf] %v9403
    %9532 = vst [vmem:[%s3 + $0x20] sm:$0xf] %v9404
    %9533 = vst [vmem:[%s3 + $0x24] sm:$0xf] %v9405
    %9534 = vst [vmem:[%s3 + $0x28] sm:$0xf] %v9406
    %9535 = vst [vmem:[%s3 + $0x2c] sm:$0xf] %v9407
    %9536 = vst [vmem:[%s3 + $0x30] sm:$0xf] %v9408
    %9537 = vst [vmem:[%s3 + $0x34] sm:$0xf] %v9409
    %9538 = vst [vmem:[%s3 + $0x38] sm:$0xf] %v9410
    %9539 = vst [vmem:[%s3 + $0x3c] sm:$0xf] %v9411
    %9540 = vst [vmem:[%s3 + $0x40] sm:$0xf] %v9412
    %9541 = vst [vmem:[%s3 + $0x44] sm:$0xf] %v9413
    %9542 = vst [vmem:[%s3 + $0x48] sm:$0xf] %v9414
    %9543 = vst [vmem:[%s3 + $0x4c] sm:$0xf] %v9415
    %9544 = vst [vmem:[%s3 + $0x50] sm:$0xf] %v9416
    %9545 = vst [vmem:[%s3 + $0x54] sm:$0xf] %v9417
    %9546 = vst [vmem:[%s3 + $0x58] sm:$0xf] %v9418
    %9547 = vst [vmem:[%s3 + $0x5c] sm:$0xf] %v9419
    %9548 = vst [vmem:[%s3 + $0x60] sm:$0xf] %v9420
    %9549 = vst [vmem:[%s3 + $0x64] sm:$0xf] %v9421
    %9550 = vst [vmem:[%s3 + $0x68] sm:$0xf] %v9422
    %9551 = vst [vmem:[%s3 + $0x6c] sm:$0xf] %v9423
    %9552 = vst [vmem:[%s3 + $0x70] sm:$0xf] %v9424
    %9553 = vst [vmem:[%s3 + $0x74] sm:$0xf] %v9425
    %9554 = vst [vmem:[%s3 + $0x78] sm:$0xf] %v9426
    %9555 = vst [vmem:[%s3 + $0x7c] sm:$0xf] %v9427
    %9556 = vst [vmem:[%s3 + $0x80] sm:$0xf] %v9428
    %9557 = vst [vmem:[%s3 + $0x84] sm:$0xf] %v9429
    %9558 = vst [vmem:[%s3 + $0x88] sm:$0xf] %v9430
    %9559 = vst [vmem:[%s3 + $0x8c] sm:$0xf] %v9431
    %9560 = vst [vmem:[%s3 + $0x90] sm:$0xf] %v9432
    %9561 = vst [vmem:[%s3 + $0x94] sm:$0xf] %v9433
    %9562 = vst [vmem:[%s3 + $0x98] sm:$0xf] %v9434
    %9563 = vst [vmem:[%s3 + $0x9c] sm:$0xf] %v9435
    %9564 = vst [vmem:[%s3 + $0xa0] sm:$0xf] %v9436
    %9565 = vst [vmem:[%s3 + $0xa4] sm:$0xf] %v9437
    %9566 = vst [vmem:[%s3 + $0xa8] sm:$0xf] %v9438
    %9567 = vst [vmem:[%s3 + $0xac] sm:$0xf] %v9439
    %9568 = vst [vmem:[%s3 + $0xb0] sm:$0xf] %v9440
    %9569 = vst [vmem:[%s3 + $0xb4] sm:$0xf] %v9441
    %9570 = vst [vmem:[%s3 + $0xb8] sm:$0xf] %v9442
    %9571 = vst [vmem:[%s3 + $0xbc] sm:$0xf] %v9443
    %9572 = vst [vmem:[%s3 + $0xc0] sm:$0xf] %v9444
    %9573 = vst [vmem:[%s3 + $0xc4] sm:$0xf] %v9445
    %9574 = vst [vmem:[%s3 + $0xc8] sm:$0xf] %v9446
    %9575 = vst [vmem:[%s3 + $0xcc] sm:$0xf] %v9447
    %9576 = vst [vmem:[%s3 + $0xd0] sm:$0xf] %v9448
    %9577 = vst [vmem:[%s3 + $0xd4] sm:$0xf] %v9449
    %9578 = vst [vmem:[%s3 + $0xd8] sm:$0xf] %v9450
    %9579 = vst [vmem:[%s3 + $0xdc] sm:$0xf] %v9451
    %9580 = vst [vmem:[%s3 + $0xe0] sm:$0xf] %v9452
    %9581 = vst [vmem:[%s3 + $0xe4] sm:$0xf] %v9453
    %9582 = vst [vmem:[%s3 + $0xe8] sm:$0xf] %v9454
    %9583 = vst [vmem:[%s3 + $0xec] sm:$0xf] %v9455
    %9584 = vst [vmem:[%s3 + $0xf0] sm:$0xf] %v9456
    %9585 = vst [vmem:[%s3 + $0xf4] sm:$0xf] %v9457
    %9586 = vst [vmem:[%s3 + $0xf8] sm:$0xf] %v9458
    %9587 = vst [vmem:[%s3 + $0xfc] sm:$0xf] %v9459
  $region21: #{yolo_block_forward.8} parent=0 // pred_fallthru
    _
  // Predicated region
  $region22: #{yolo_block_forward.8} parent=0 // pred_check
    _
  $region23: #{yolo_block_forward.8} parent=0 // pred_check_branch
    %9589 = sbr.rel (0) target = $region25
  $region24: #{yolo_block_forward.8} parent=0 // pred_region
    _
  $region25: #{yolo_block_forward.8} parent=0 // pred_fallthru
    _
  // Predicated region
  $region26: #{yolo_block_forward.8} parent=0 // pred_check
    _
  $region27: #{yolo_block_forward.8} parent=0 // pred_check_branch
    %9591 = sbr.rel (0) target = $region29
  $region28: #{yolo_block_forward.8} parent=0 // pred_region
    _
  $region29: #{yolo_block_forward.8} parent=0 // pred_fallthru
    _

</llo_original>
